<compile_context>
chip_gen: v5e
topology: v5e:2x2
jax: 0.10.0
libtpu: 0.0.40
codegen_flags: <defaults>
</compile_context>

<pallas_src>
import functools
import math

import jax
import jax.numpy as jnp
from jax import lax
from jax.experimental import pallas as pl
from jax.experimental.pallas import tpu as pltpu


# ----------------------------------------------------------------------------
# In-kernel building blocks (operate on f32 values resident in VMEM / vregs)
# ----------------------------------------------------------------------------
def _conv3_part(x, w_ref, c_lo, c_hi):
    """3-tap 1D conv (zero padded) of x:(L, c) against input-channel columns
    [c_lo:c_hi) of w_ref:(3, Cin, Cout).  Returns f32 (L, Cout)."""
    L, c = x.shape
    zero = jnp.zeros((1, c), jnp.float32)
    xp = jnp.concatenate([zero, x, zero], axis=0)          # (L + 2, c) halo
    full = (c_lo == 0) and (c_hi == w_ref.shape[1])
    acc = None
    for t in range(3):                                     # static unroll
        wt = w_ref[t] if full else w_ref[t, c_lo:c_hi, :]
        y = jnp.dot(xp[t:t + L, :], wt, preferred_element_type=jnp.float32)
        acc = y if acc is None else acc + y                # no zeros-init
    return acc


def _conv_bn_relu(x, w_ref, b_ref):
    y = _conv3_part(x, w_ref, 0, w_ref.shape[1]) + b_ref[...]
    return jnp.maximum(y, 0.0)


def _conv_bn_relu_split(x_up, x_skip, w_ref, b_ref):
    """First conv of an up block: consumes cat([up, skip], channel) without
    materializing the concat (weight split along Cin, two matmul groups)."""
    c_up = x_up.shape[1]
    c_in = w_ref.shape[1]
    y = (_conv3_part(x_up, w_ref, 0, c_up)
         + _conv3_part(x_skip, w_ref, c_up, c_in)
         + b_ref[...])
    return jnp.maximum(y, 0.0)


def _maxpool2(x):
    """MaxPool1d(kernel_size=2) via two iota-generated 0/1 row-selection
    matrices on the MXU (exact, no strided sublane loads, no reshapes)."""
    L, _ = x.shape
    Lo = L // 2
    rows = lax.broadcasted_iota(jnp.int32, (Lo, L), 0)
    cols = lax.broadcasted_iota(jnp.int32, (Lo, L), 1)
    sel_even = jnp.where(cols == 2 * rows, 1.0, 0.0)
    sel_odd = jnp.where(cols == 2 * rows + 1, 1.0, 0.0)
    even = jnp.dot(sel_even, x, preferred_element_type=jnp.float32)
    odd = jnp.dot(sel_odd, x, preferred_element_type=jnp.float32)
    return jnp.maximum(even, odd)


def _upsample_linear2(x):
    """2x linear upsample matching F.interpolate(mode='linear',
    scale_factor=2, align_corners=False); interpolation matrix generated
    in-kernel from iota (no HBM constant)."""
    Lc, _ = x.shape
    Lo = 2 * Lc
    i = lax.broadcasted_iota(jnp.int32, (Lo, Lc), 0).astype(jnp.float32)
    j = lax.broadcasted_iota(jnp.int32, (Lo, Lc), 1).astype(jnp.float32)
    src = jnp.maximum(0.5 * i - 0.25, 0.0)
    j0 = jnp.floor(src)
    frac = src - j0
    j1 = jnp.minimum(j0 + 1.0, float(Lc - 1))
    m = jnp.where(j == j0, 1.0 - frac, 0.0) + jnp.where(j == j1, frac, 0.0)
    return jnp.dot(m, x, preferred_element_type=jnp.float32)


# ----------------------------------------------------------------------------
# Fused whole-network kernel (one batch sample per grid step)
# ----------------------------------------------------------------------------
def _unet_fused_kernel(x_ref, *refs, layout):
    o_ref = refs[-1]
    wb_refs = refs[:-1]
    pos = [0]

    def take():
        w, b = wb_refs[pos[0]], wb_refs[pos[0] + 1]
        pos[0] += 2
        return w, b

    x = x_ref[0]                                           # (L, Cin) f32

    skips = []
    for n_convs in layout["down"]:
        for _ in range(n_convs):
            w, b = take()
            x = _conv_bn_relu(x, w, b)
        # TODO(synk): Dropout (p=0.1) is eval-mode identity; training-mode
        # randomness / BatchNorm batch statistics not reproduced.
        skips.append(x)
        x = _maxpool2(x)                                   # fused pool

    for _ in range(layout["bottom"]):
        w, b = take()
        x = _conv_bn_relu(x, w, b)

    for lvl in range(len(layout["up"])):
        skip = skips[-(lvl + 1)]
        x = _upsample_linear2(x)
        assert x.shape[0] == skip.shape[0]                 # pad_if_required no-op
        w, b = take()
        x = _conv_bn_relu_split(x, skip, w, b)             # concat-free
        for _ in range(layout["up"][lvl] - 1):
            w, b = take()
            x = _conv_bn_relu(x, w, b)

    w, b = take()                                          # 1x1 cls head, no act
    assert pos[0] == len(wb_refs)
    y = jnp.dot(x, w[0], preferred_element_type=jnp.float32) + b[...]
    o_ref[0] = y.astype(o_ref.dtype)


# ----------------------------------------------------------------------------
# Wrapper (single pallas_call for the whole forward pass)
# ----------------------------------------------------------------------------
def _broadcast_spec(shape):
    nd = len(shape)
    return pl.BlockSpec(shape, lambda n, _nd=nd: (0,) * _nd)


def generic_unet_forward(x_ncl, params):
    """x_ncl: (N, C, L) like PyTorch; returns logits (N, out_ch, L)."""
    N, c_in, L = x_ncl.shape
    n_levels = len(params["down"])
    # TODO(synk): pad_if_required general-L path not implemented; require L
    # divisible by 2**n_levels so every upsample exactly matches its skip.
    assert L % (2 ** n_levels) == 0, (L, n_levels)

    x = jnp.transpose(x_ncl, (0, 2, 1))                    # NCL -> NLC

    flat, layout = [], {"down": [], "bottom": 0, "up": []}
    for block in params["down"]:
        layout["down"].append(len(block))
        for w, b in block:
            flat += [w, b]
    layout["bottom"] = len(params["bottom"])
    for w, b in params["bottom"]:
        flat += [w, b]
    for block in params["up"]:
        layout["up"].append(len(block))
        for w, b in block:
            flat += [w, b]
    w_cls, b_cls = params["cls"]
    flat += [w_cls, b_cls]
    out_ch = w_cls.shape[-1]

    in_specs = [pl.BlockSpec((1, L, c_in), lambda n: (n, 0, 0))]
    in_specs += [_broadcast_spec(p.shape) for p in flat]

    out = pl.pallas_call(
        functools.partial(_unet_fused_kernel, layout=layout),
        out_shape=jax.ShapeDtypeStruct((N, L, out_ch), jnp.float32),
        grid=(N,),
        in_specs=in_specs,
        out_specs=pl.BlockSpec((1, L, out_ch), lambda n: (n, 0, 0)),
        compiler_params=pltpu.CompilerParams(
            dimension_semantics=("parallel",),      # one sample per v7x core
            vmem_limit_bytes=32 * 1024 * 1024,      # headroom on v5e/v6e/v7x
        ),
    )(x, *flat)
    return jnp.transpose(out, (0, 2, 1))                   # back to (N, out_ch, L)


# ----------------------------------------------------------------------------
# Deterministic parameter construction (mirrors GenericUnet.__init__ defaults);
# eval-mode BatchNorm folded into conv weights/bias.
# ----------------------------------------------------------------------------
def _make_conv_bn(key, cin, cout, k):
    k1, k2, k3, k4, k5, k6 = jax.random.split(key, 6)
    bound = 1.0 / math.sqrt(cin * k)
    w = jax.random.uniform(k1, (k, cin, cout), jnp.float32, -bound, bound)
    conv_b = jax.random.uniform(k2, (cout,), jnp.float32, -bound, bound)
    gamma = 1.0 + 0.1 * jax.random.normal(k3, (cout,), jnp.float32)
    beta = 0.1 * jax.random.normal(k4, (cout,), jnp.float32)
    r_mean = 0.1 * jax.random.normal(k5, (cout,), jnp.float32)
    r_var = jnp.abs(1.0 + 0.1 * jax.random.normal(k6, (cout,), jnp.float32))
    scale = gamma / jnp.sqrt(r_var + 1e-5)
    w_folded = w * scale[None, None, :]            # BN scale folded into conv
    bias = beta + (conv_b - r_mean) * scale
    return w_folded, bias.reshape(1, cout)


def _make_final_conv(key, cin, cout):
    k1, k2 = jax.random.split(key)
    bound = 1.0 / math.sqrt(cin)
    w = jax.random.uniform(k1, (1, cin, cout), jnp.float32, -bound, bound)
    b = jax.random.uniform(k2, (cout,), jnp.float32, -bound, bound)
    return w, b.reshape(1, cout)


def make_generic_unet_params(key, out_ch, in_ch,
                             channels=(16, 32, 64, 128, 256), repetitions=2):
    down_channels = [in_ch] + list(channels)[:-1]
    up_channels = [channels[0]] + list(channels)[:-1]
    bottom_channels = channels[-1]
    keys = iter(jax.random.split(key, 64))

    def make_block(chs):
        return [_make_conv_bn(next(keys), chs[i], chs[i + 1], 3)
                for i in range(len(chs) - 1)]

    params = {"down": [], "up": []}
    depth = 0
    while depth < len(channels) - 1:
        chs = [down_channels[depth]] + repetitions * [down_channels[depth + 1]]
        params["down"].append(make_block(chs))
        depth += 1
    chs = ([down_channels[depth]] + (repetitions - 1) * [bottom_channels]
           + [up_channels[depth]])
    params["bottom"] = make_block(chs)
    while depth > 0:
        depth -= 1
        chs = ([up_channels[depth + 1] + down_channels[depth + 1]]
               + (repetitions - 1) * [up_channels[depth + 1]]
               + [up_channels[depth]])
        params["up"].append(make_block(chs))
    params["cls"] = _make_final_conv(next(keys), up_channels[0], out_ch)
    return params


# ----------------------------------------------------------------------------
if __name__ == "__main__":
    key = jax.random.PRNGKey(0)
    k_param, k_data = jax.random.split(key)

    in_ch, out_ch = 4, 3
    batch, length = 2, 32   # length divisible by 2**4 (four pooling levels)

    params = make_generic_unet_params(k_param, out_ch=out_ch, in_ch=in_ch)
    x = jax.random.normal(k_data, (batch, in_ch, length), dtype=jnp.float32)

    out = generic_unet_forward(x, params)
    out = jax.block_until_ready(out)
    assert out.shape == (batch, out_ch, length), out.shape
    assert bool(jnp.all(jnp.isfinite(out)))
    print("KERNEL_OK")
</pallas_src>

<mosaic_0001>
module attributes {stable_mosaic.version = 11 : i64} {
  func.func @_unet_fused_kernel(%arg0: i32, %arg1: memref<1x32x4xf32, #tpu.memory_space<vmem>>, %arg2: memref<3x4x16xf32, #tpu.memory_space<vmem>>, %arg3: memref<1x16xf32, #tpu.memory_space<vmem>>, %arg4: memref<3x16x16xf32, #tpu.memory_space<vmem>>, %arg5: memref<1x16xf32, #tpu.memory_space<vmem>>, %arg6: memref<3x16x32xf32, #tpu.memory_space<vmem>>, %arg7: memref<1x32xf32, #tpu.memory_space<vmem>>, %arg8: memref<3x32x32xf32, #tpu.memory_space<vmem>>, %arg9: memref<1x32xf32, #tpu.memory_space<vmem>>, %arg10: memref<3x32x64xf32, #tpu.memory_space<vmem>>, %arg11: memref<1x64xf32, #tpu.memory_space<vmem>>, %arg12: memref<3x64x64xf32, #tpu.memory_space<vmem>>, %arg13: memref<1x64xf32, #tpu.memory_space<vmem>>, %arg14: memref<3x64x128xf32, #tpu.memory_space<vmem>>, %arg15: memref<1x128xf32, #tpu.memory_space<vmem>>, %arg16: memref<3x128x128xf32, #tpu.memory_space<vmem>>, %arg17: memref<1x128xf32, #tpu.memory_space<vmem>>, %arg18: memref<3x128x256xf32, #tpu.memory_space<vmem>>, %arg19: memref<1x256xf32, #tpu.memory_space<vmem>>, %arg20: memref<3x256x128xf32, #tpu.memory_space<vmem>>, %arg21: memref<1x128xf32, #tpu.memory_space<vmem>>, %arg22: memref<3x256x128xf32, #tpu.memory_space<vmem>>, %arg23: memref<1x128xf32, #tpu.memory_space<vmem>>, %arg24: memref<3x128x64xf32, #tpu.memory_space<vmem>>, %arg25: memref<1x64xf32, #tpu.memory_space<vmem>>, %arg26: memref<3x128x64xf32, #tpu.memory_space<vmem>>, %arg27: memref<1x64xf32, #tpu.memory_space<vmem>>, %arg28: memref<3x64x32xf32, #tpu.memory_space<vmem>>, %arg29: memref<1x32xf32, #tpu.memory_space<vmem>>, %arg30: memref<3x64x32xf32, #tpu.memory_space<vmem>>, %arg31: memref<1x32xf32, #tpu.memory_space<vmem>>, %arg32: memref<3x32x16xf32, #tpu.memory_space<vmem>>, %arg33: memref<1x16xf32, #tpu.memory_space<vmem>>, %arg34: memref<3x32x16xf32, #tpu.memory_space<vmem>>, %arg35: memref<1x16xf32, #tpu.memory_space<vmem>>, %arg36: memref<3x16x16xf32, #tpu.memory_space<vmem>>, %arg37: memref<1x16xf32, #tpu.memory_space<vmem>>, %arg38: memref<1x16x3xf32, #tpu.memory_space<vmem>>, %arg39: memref<1x3xf32, #tpu.memory_space<vmem>>, %arg40: memref<1x32x3xf32, #tpu.memory_space<vmem>>) attributes {dimension_semantics = [#tpu.dimension_semantics<parallel>], iteration_bounds = array<i64: 2>, scalar_prefetch = 0 : i64, scratch_operands = 0 : i64, tpu.core_type = #tpu.core_type<tc>, window_params = [{transform_indices = @transform_0, window_bounds = array<i64: 1, 32, 4>}, {pipeline_mode = #tpu.pipeline_mode<synchronous>, transform_indices = @transform_1, window_bounds = array<i64: 3, 4, 16>}, {pipeline_mode = #tpu.pipeline_mode<synchronous>, transform_indices = @transform_2, window_bounds = array<i64: 1, 16>}, {pipeline_mode = #tpu.pipeline_mode<synchronous>, transform_indices = @transform_3, window_bounds = array<i64: 3, 16, 16>}, {pipeline_mode = #tpu.pipeline_mode<synchronous>, transform_indices = @transform_4, window_bounds = array<i64: 1, 16>}, {pipeline_mode = #tpu.pipeline_mode<synchronous>, transform_indices = @transform_5, window_bounds = array<i64: 3, 16, 32>}, {pipeline_mode = #tpu.pipeline_mode<synchronous>, transform_indices = @transform_6, window_bounds = array<i64: 1, 32>}, {pipeline_mode = #tpu.pipeline_mode<synchronous>, transform_indices = @transform_7, window_bounds = array<i64: 3, 32, 32>}, {pipeline_mode = #tpu.pipeline_mode<synchronous>, transform_indices = @transform_8, window_bounds = array<i64: 1, 32>}, {pipeline_mode = #tpu.pipeline_mode<synchronous>, transform_indices = @transform_9, window_bounds = array<i64: 3, 32, 64>}, {pipeline_mode = #tpu.pipeline_mode<synchronous>, transform_indices = @transform_10, window_bounds = array<i64: 1, 64>}, {pipeline_mode = #tpu.pipeline_mode<synchronous>, transform_indices = @transform_11, window_bounds = array<i64: 3, 64, 64>}, {pipeline_mode = #tpu.pipeline_mode<synchronous>, transform_indices = @transform_12, window_bounds = array<i64: 1, 64>}, {pipeline_mode = #tpu.pipeline_mode<synchronous>, transform_indices = @transform_13, window_bounds = array<i64: 3, 64, 128>}, {pipeline_mode = #tpu.pipeline_mode<synchronous>, transform_indices = @transform_14, window_bounds = array<i64: 1, 128>}, {pipeline_mode = #tpu.pipeline_mode<synchronous>, transform_indices = @transform_15, window_bounds = array<i64: 3, 128, 128>}, {pipeline_mode = #tpu.pipeline_mode<synchronous>, transform_indices = @transform_16, window_bounds = array<i64: 1, 128>}, {pipeline_mode = #tpu.pipeline_mode<synchronous>, transform_indices = @transform_17, window_bounds = array<i64: 3, 128, 256>}, {pipeline_mode = #tpu.pipeline_mode<synchronous>, transform_indices = @transform_18, window_bounds = array<i64: 1, 256>}, {pipeline_mode = #tpu.pipeline_mode<synchronous>, transform_indices = @transform_19, window_bounds = array<i64: 3, 256, 128>}, {pipeline_mode = #tpu.pipeline_mode<synchronous>, transform_indices = @transform_20, window_bounds = array<i64: 1, 128>}, {pipeline_mode = #tpu.pipeline_mode<synchronous>, transform_indices = @transform_21, window_bounds = array<i64: 3, 256, 128>}, {pipeline_mode = #tpu.pipeline_mode<synchronous>, transform_indices = @transform_22, window_bounds = array<i64: 1, 128>}, {pipeline_mode = #tpu.pipeline_mode<synchronous>, transform_indices = @transform_23, window_bounds = array<i64: 3, 128, 64>}, {pipeline_mode = #tpu.pipeline_mode<synchronous>, transform_indices = @transform_24, window_bounds = array<i64: 1, 64>}, {pipeline_mode = #tpu.pipeline_mode<synchronous>, transform_indices = @transform_25, window_bounds = array<i64: 3, 128, 64>}, {pipeline_mode = #tpu.pipeline_mode<synchronous>, transform_indices = @transform_26, window_bounds = array<i64: 1, 64>}, {pipeline_mode = #tpu.pipeline_mode<synchronous>, transform_indices = @transform_27, window_bounds = array<i64: 3, 64, 32>}, {pipeline_mode = #tpu.pipeline_mode<synchronous>, transform_indices = @transform_28, window_bounds = array<i64: 1, 32>}, {pipeline_mode = #tpu.pipeline_mode<synchronous>, transform_indices = @transform_29, window_bounds = array<i64: 3, 64, 32>}, {pipeline_mode = #tpu.pipeline_mode<synchronous>, transform_indices = @transform_30, window_bounds = array<i64: 1, 32>}, {pipeline_mode = #tpu.pipeline_mode<synchronous>, transform_indices = @transform_31, window_bounds = array<i64: 3, 32, 16>}, {pipeline_mode = #tpu.pipeline_mode<synchronous>, transform_indices = @transform_32, window_bounds = array<i64: 1, 16>}, {pipeline_mode = #tpu.pipeline_mode<synchronous>, transform_indices = @transform_33, window_bounds = array<i64: 3, 32, 16>}, {pipeline_mode = #tpu.pipeline_mode<synchronous>, transform_indices = @transform_34, window_bounds = array<i64: 1, 16>}, {pipeline_mode = #tpu.pipeline_mode<synchronous>, transform_indices = @transform_35, window_bounds = array<i64: 3, 16, 16>}, {pipeline_mode = #tpu.pipeline_mode<synchronous>, transform_indices = @transform_36, window_bounds = array<i64: 1, 16>}, {pipeline_mode = #tpu.pipeline_mode<synchronous>, transform_indices = @transform_37, window_bounds = array<i64: 1, 16, 3>}, {pipeline_mode = #tpu.pipeline_mode<synchronous>, transform_indices = @transform_38, window_bounds = array<i64: 1, 3>}, {transform_indices = @transform_39, window_bounds = array<i64: 1, 32, 3>}]} {
    %c0 = arith.constant 0 : index
    %c0_0 = arith.constant 0 : index
    %c0_1 = arith.constant 0 : index
    %0 = vector.load %arg1[%c0, %c0_0, %c0_1] : memref<1x32x4xf32, #tpu.memory_space<vmem>>, vector<1x32x4xf32>
    %1 = vector.shape_cast %0 : vector<1x32x4xf32> to vector<32x4xf32>
    %cst = arith.constant 0.000000e+00 : f32
    %2 = vector.broadcast %cst : f32 to vector<1x4xf32>
    %3 = tpu.concatenate %2, %1, %2 in 0 : vector<1x4xf32>, vector<32x4xf32>, vector<1x4xf32> -> vector<34x4xf32>
    %c0_2 = arith.constant 0 : index
    %c0_3 = arith.constant 0 : index
    %c0_4 = arith.constant 0 : index
    %4 = vector.load %arg2[%c0_2, %c0_3, %c0_4] : memref<3x4x16xf32, #tpu.memory_space<vmem>>, vector<1x4x16xf32>
    %5 = vector.shape_cast %4 : vector<1x4x16xf32> to vector<4x16xf32>
    %6 = vector.extract_strided_slice %3 {offsets = [0, 0], sizes = [32, 4], strides = [1, 1]} : vector<34x4xf32> to vector<32x4xf32>
    %cst_5 = arith.constant dense<0.000000e+00> : vector<32x16xf32>
    %7 = tpu.matmul %6, %5, %cst_5 {dimension_numbers = #tpu.dot_dimension_numbers<[1], [0], [0], [1], [0, 0, 1, 1], [], []>} : vector<32x4xf32>, vector<4x16xf32>, vector<32x16xf32> -> vector<32x16xf32>
    %c1 = arith.constant 1 : index
    %c0_6 = arith.constant 0 : index
    %c0_7 = arith.constant 0 : index
    %8 = vector.load %arg2[%c1, %c0_6, %c0_7] : memref<3x4x16xf32, #tpu.memory_space<vmem>>, vector<1x4x16xf32>
    %9 = vector.shape_cast %8 : vector<1x4x16xf32> to vector<4x16xf32>
    %10 = vector.extract_strided_slice %3 {offsets = [1, 0], sizes = [32, 4], strides = [1, 1]} : vector<34x4xf32> to vector<32x4xf32>
    %cst_8 = arith.constant dense<0.000000e+00> : vector<32x16xf32>
    %11 = tpu.matmul %10, %9, %cst_8 {dimension_numbers = #tpu.dot_dimension_numbers<[1], [0], [0], [1], [0, 0, 1, 1], [], []>} : vector<32x4xf32>, vector<4x16xf32>, vector<32x16xf32> -> vector<32x16xf32>
    %12 = arith.addf %7, %11 : vector<32x16xf32>
    %c2 = arith.constant 2 : index
    %c0_9 = arith.constant 0 : index
    %c0_10 = arith.constant 0 : index
    %13 = vector.load %arg2[%c2, %c0_9, %c0_10] : memref<3x4x16xf32, #tpu.memory_space<vmem>>, vector<1x4x16xf32>
    %14 = vector.shape_cast %13 : vector<1x4x16xf32> to vector<4x16xf32>
    %15 = vector.extract_strided_slice %3 {offsets = [2, 0], sizes = [32, 4], strides = [1, 1]} : vector<34x4xf32> to vector<32x4xf32>
    %cst_11 = arith.constant dense<0.000000e+00> : vector<32x16xf32>
    %16 = tpu.matmul %15, %14, %cst_11 {dimension_numbers = #tpu.dot_dimension_numbers<[1], [0], [0], [1], [0, 0, 1, 1], [], []>} : vector<32x4xf32>, vector<4x16xf32>, vector<32x16xf32> -> vector<32x16xf32>
    %17 = arith.addf %12, %16 : vector<32x16xf32>
    %c0_12 = arith.constant 0 : index
    %c0_13 = arith.constant 0 : index
    %18 = vector.load %arg3[%c0_12, %c0_13] : memref<1x16xf32, #tpu.memory_space<vmem>>, vector<1x16xf32>
    %19 = vector.broadcast %18 : vector<1x16xf32> to vector<32x16xf32>
    %20 = arith.addf %17, %19 : vector<32x16xf32>
    %cst_14 = arith.constant 0.000000e+00 : f32
    %21 = vector.broadcast %cst_14 : f32 to vector<32x16xf32>
    %22 = arith.maximumf %20, %21 : vector<32x16xf32>
    %cst_15 = arith.constant 0.000000e+00 : f32
    %23 = vector.broadcast %cst_15 : f32 to vector<1x16xf32>
    %24 = tpu.concatenate %23, %22, %23 in 0 : vector<1x16xf32>, vector<32x16xf32>, vector<1x16xf32> -> vector<34x16xf32>
    %c0_16 = arith.constant 0 : index
    %c0_17 = arith.constant 0 : index
    %c0_18 = arith.constant 0 : index
    %25 = vector.load %arg4[%c0_16, %c0_17, %c0_18] : memref<3x16x16xf32, #tpu.memory_space<vmem>>, vector<1x16x16xf32>
    %26 = vector.shape_cast %25 : vector<1x16x16xf32> to vector<16x16xf32>
    %27 = vector.extract_strided_slice %24 {offsets = [0, 0], sizes = [32, 16], strides = [1, 1]} : vector<34x16xf32> to vector<32x16xf32>
    %cst_19 = arith.constant dense<0.000000e+00> : vector<32x16xf32>
    %28 = tpu.matmul %27, %26, %cst_19 {dimension_numbers = #tpu.dot_dimension_numbers<[1], [0], [0], [1], [0, 0, 1, 1], [], []>} : vector<32x16xf32>, vector<16x16xf32>, vector<32x16xf32> -> vector<32x16xf32>
    %c1_20 = arith.constant 1 : index
    %c0_21 = arith.constant 0 : index
    %c0_22 = arith.constant 0 : index
    %29 = vector.load %arg4[%c1_20, %c0_21, %c0_22] : memref<3x16x16xf32, #tpu.memory_space<vmem>>, vector<1x16x16xf32>
    %30 = vector.shape_cast %29 : vector<1x16x16xf32> to vector<16x16xf32>
    %31 = vector.extract_strided_slice %24 {offsets = [1, 0], sizes = [32, 16], strides = [1, 1]} : vector<34x16xf32> to vector<32x16xf32>
    %cst_23 = arith.constant dense<0.000000e+00> : vector<32x16xf32>
    %32 = tpu.matmul %31, %30, %cst_23 {dimension_numbers = #tpu.dot_dimension_numbers<[1], [0], [0], [1], [0, 0, 1, 1], [], []>} : vector<32x16xf32>, vector<16x16xf32>, vector<32x16xf32> -> vector<32x16xf32>
    %33 = arith.addf %28, %32 : vector<32x16xf32>
    %c2_24 = arith.constant 2 : index
    %c0_25 = arith.constant 0 : index
    %c0_26 = arith.constant 0 : index
    %34 = vector.load %arg4[%c2_24, %c0_25, %c0_26] : memref<3x16x16xf32, #tpu.memory_space<vmem>>, vector<1x16x16xf32>
    %35 = vector.shape_cast %34 : vector<1x16x16xf32> to vector<16x16xf32>
    %36 = vector.extract_strided_slice %24 {offsets = [2, 0], sizes = [32, 16], strides = [1, 1]} : vector<34x16xf32> to vector<32x16xf32>
    %cst_27 = arith.constant dense<0.000000e+00> : vector<32x16xf32>
    %37 = tpu.matmul %36, %35, %cst_27 {dimension_numbers = #tpu.dot_dimension_numbers<[1], [0], [0], [1], [0, 0, 1, 1], [], []>} : vector<32x16xf32>, vector<16x16xf32>, vector<32x16xf32> -> vector<32x16xf32>
    %38 = arith.addf %33, %37 : vector<32x16xf32>
    %c0_28 = arith.constant 0 : index
    %c0_29 = arith.constant 0 : index
    %39 = vector.load %arg5[%c0_28, %c0_29] : memref<1x16xf32, #tpu.memory_space<vmem>>, vector<1x16xf32>
    %40 = vector.broadcast %39 : vector<1x16xf32> to vector<32x16xf32>
    %41 = arith.addf %38, %40 : vector<32x16xf32>
    %cst_30 = arith.constant 0.000000e+00 : f32
    %42 = vector.broadcast %cst_30 : f32 to vector<32x16xf32>
    %43 = arith.maximumf %41, %42 : vector<32x16xf32>
    %44 = tpu.iota {dimensions = array<i32: 0>} : vector<16x32xi32>
    %45 = tpu.iota {dimensions = array<i32: 1>} : vector<16x32xi32>
    %c2_i32 = arith.constant 2 : i32
    %46 = vector.broadcast %c2_i32 : i32 to vector<16x32xi32>
    %47 = arith.muli %46, %44 : vector<16x32xi32>
    %48 = arith.cmpi eq, %45, %47 : vector<16x32xi32>
    %cst_31 = arith.constant 1.000000e+00 : f32
    %cst_32 = arith.constant 0.000000e+00 : f32
    %49 = vector.broadcast %cst_31 : f32 to vector<16x32xf32>
    %50 = vector.broadcast %cst_32 : f32 to vector<16x32xf32>
    %51 = arith.select %48, %49, %50 : vector<16x32xi1>, vector<16x32xf32>
    %c2_i32_33 = arith.constant 2 : i32
    %52 = vector.broadcast %c2_i32_33 : i32 to vector<16x32xi32>
    %53 = arith.muli %52, %44 : vector<16x32xi32>
    %c1_i32 = arith.constant 1 : i32
    %54 = vector.broadcast %c1_i32 : i32 to vector<16x32xi32>
    %55 = arith.addi %53, %54 : vector<16x32xi32>
    %56 = arith.cmpi eq, %45, %55 : vector<16x32xi32>
    %cst_34 = arith.constant 1.000000e+00 : f32
    %cst_35 = arith.constant 0.000000e+00 : f32
    %57 = vector.broadcast %cst_34 : f32 to vector<16x32xf32>
    %58 = vector.broadcast %cst_35 : f32 to vector<16x32xf32>
    %59 = arith.select %56, %57, %58 : vector<16x32xi1>, vector<16x32xf32>
    %cst_36 = arith.constant dense<0.000000e+00> : vector<16x16xf32>
    %60 = tpu.matmul %51, %43, %cst_36 {dimension_numbers = #tpu.dot_dimension_numbers<[1], [0], [0], [1], [0, 0, 1, 1], [], []>} : vector<16x32xf32>, vector<32x16xf32>, vector<16x16xf32> -> vector<16x16xf32>
    %cst_37 = arith.constant dense<0.000000e+00> : vector<16x16xf32>
    %61 = tpu.matmul %59, %43, %cst_37 {dimension_numbers = #tpu.dot_dimension_numbers<[1], [0], [0], [1], [0, 0, 1, 1], [], []>} : vector<16x32xf32>, vector<32x16xf32>, vector<16x16xf32> -> vector<16x16xf32>
    %62 = arith.maximumf %60, %61 : vector<16x16xf32>
    %cst_38 = arith.constant 0.000000e+00 : f32
    %63 = vector.broadcast %cst_38 : f32 to vector<1x16xf32>
    %64 = tpu.concatenate %63, %62, %63 in 0 : vector<1x16xf32>, vector<16x16xf32>, vector<1x16xf32> -> vector<18x16xf32>
    %c0_39 = arith.constant 0 : index
    %c0_40 = arith.constant 0 : index
    %c0_41 = arith.constant 0 : index
    %65 = vector.load %arg6[%c0_39, %c0_40, %c0_41] : memref<3x16x32xf32, #tpu.memory_space<vmem>>, vector<1x16x32xf32>
    %66 = vector.shape_cast %65 : vector<1x16x32xf32> to vector<16x32xf32>
    %67 = vector.extract_strided_slice %64 {offsets = [0, 0], sizes = [16, 16], strides = [1, 1]} : vector<18x16xf32> to vector<16x16xf32>
    %cst_42 = arith.constant dense<0.000000e+00> : vector<16x32xf32>
    %68 = tpu.matmul %67, %66, %cst_42 {dimension_numbers = #tpu.dot_dimension_numbers<[1], [0], [0], [1], [0, 0, 1, 1], [], []>} : vector<16x16xf32>, vector<16x32xf32>, vector<16x32xf32> -> vector<16x32xf32>
    %c1_43 = arith.constant 1 : index
    %c0_44 = arith.constant 0 : index
    %c0_45 = arith.constant 0 : index
    %69 = vector.load %arg6[%c1_43, %c0_44, %c0_45] : memref<3x16x32xf32, #tpu.memory_space<vmem>>, vector<1x16x32xf32>
    %70 = vector.shape_cast %69 : vector<1x16x32xf32> to vector<16x32xf32>
    %71 = vector.extract_strided_slice %64 {offsets = [1, 0], sizes = [16, 16], strides = [1, 1]} : vector<18x16xf32> to vector<16x16xf32>
    %cst_46 = arith.constant dense<0.000000e+00> : vector<16x32xf32>
    %72 = tpu.matmul %71, %70, %cst_46 {dimension_numbers = #tpu.dot_dimension_numbers<[1], [0], [0], [1], [0, 0, 1, 1], [], []>} : vector<16x16xf32>, vector<16x32xf32>, vector<16x32xf32> -> vector<16x32xf32>
    %73 = arith.addf %68, %72 : vector<16x32xf32>
    %c2_47 = arith.constant 2 : index
    %c0_48 = arith.constant 0 : index
    %c0_49 = arith.constant 0 : index
    %74 = vector.load %arg6[%c2_47, %c0_48, %c0_49] : memref<3x16x32xf32, #tpu.memory_space<vmem>>, vector<1x16x32xf32>
    %75 = vector.shape_cast %74 : vector<1x16x32xf32> to vector<16x32xf32>
    %76 = vector.extract_strided_slice %64 {offsets = [2, 0], sizes = [16, 16], strides = [1, 1]} : vector<18x16xf32> to vector<16x16xf32>
    %cst_50 = arith.constant dense<0.000000e+00> : vector<16x32xf32>
    %77 = tpu.matmul %76, %75, %cst_50 {dimension_numbers = #tpu.dot_dimension_numbers<[1], [0], [0], [1], [0, 0, 1, 1], [], []>} : vector<16x16xf32>, vector<16x32xf32>, vector<16x32xf32> -> vector<16x32xf32>
    %78 = arith.addf %73, %77 : vector<16x32xf32>
    %c0_51 = arith.constant 0 : index
    %c0_52 = arith.constant 0 : index
    %79 = vector.load %arg7[%c0_51, %c0_52] : memref<1x32xf32, #tpu.memory_space<vmem>>, vector<1x32xf32>
    %80 = vector.broadcast %79 : vector<1x32xf32> to vector<16x32xf32>
    %81 = arith.addf %78, %80 : vector<16x32xf32>
    %cst_53 = arith.constant 0.000000e+00 : f32
    %82 = vector.broadcast %cst_53 : f32 to vector<16x32xf32>
    %83 = arith.maximumf %81, %82 : vector<16x32xf32>
    %cst_54 = arith.constant 0.000000e+00 : f32
    %84 = vector.broadcast %cst_54 : f32 to vector<1x32xf32>
    %85 = tpu.concatenate %84, %83, %84 in 0 : vector<1x32xf32>, vector<16x32xf32>, vector<1x32xf32> -> vector<18x32xf32>
    %c0_55 = arith.constant 0 : index
    %c0_56 = arith.constant 0 : index
    %c0_57 = arith.constant 0 : index
    %86 = vector.load %arg8[%c0_55, %c0_56, %c0_57] : memref<3x32x32xf32, #tpu.memory_space<vmem>>, vector<1x32x32xf32>
    %87 = vector.shape_cast %86 : vector<1x32x32xf32> to vector<32x32xf32>
    %88 = vector.extract_strided_slice %85 {offsets = [0, 0], sizes = [16, 32], strides = [1, 1]} : vector<18x32xf32> to vector<16x32xf32>
    %cst_58 = arith.constant dense<0.000000e+00> : vector<16x32xf32>
    %89 = tpu.matmul %88, %87, %cst_58 {dimension_numbers = #tpu.dot_dimension_numbers<[1], [0], [0], [1], [0, 0, 1, 1], [], []>} : vector<16x32xf32>, vector<32x32xf32>, vector<16x32xf32> -> vector<16x32xf32>
    %c1_59 = arith.constant 1 : index
    %c0_60 = arith.constant 0 : index
    %c0_61 = arith.constant 0 : index
    %90 = vector.load %arg8[%c1_59, %c0_60, %c0_61] : memref<3x32x32xf32, #tpu.memory_space<vmem>>, vector<1x32x32xf32>
    %91 = vector.shape_cast %90 : vector<1x32x32xf32> to vector<32x32xf32>
    %92 = vector.extract_strided_slice %85 {offsets = [1, 0], sizes = [16, 32], strides = [1, 1]} : vector<18x32xf32> to vector<16x32xf32>
    %cst_62 = arith.constant dense<0.000000e+00> : vector<16x32xf32>
    %93 = tpu.matmul %92, %91, %cst_62 {dimension_numbers = #tpu.dot_dimension_numbers<[1], [0], [0], [1], [0, 0, 1, 1], [], []>} : vector<16x32xf32>, vector<32x32xf32>, vector<16x32xf32> -> vector<16x32xf32>
    %94 = arith.addf %89, %93 : vector<16x32xf32>
    %c2_63 = arith.constant 2 : index
    %c0_64 = arith.constant 0 : index
    %c0_65 = arith.constant 0 : index
    %95 = vector.load %arg8[%c2_63, %c0_64, %c0_65] : memref<3x32x32xf32, #tpu.memory_space<vmem>>, vector<1x32x32xf32>
    %96 = vector.shape_cast %95 : vector<1x32x32xf32> to vector<32x32xf32>
    %97 = vector.extract_strided_slice %85 {offsets = [2, 0], sizes = [16, 32], strides = [1, 1]} : vector<18x32xf32> to vector<16x32xf32>
    %cst_66 = arith.constant dense<0.000000e+00> : vector<16x32xf32>
    %98 = tpu.matmul %97, %96, %cst_66 {dimension_numbers = #tpu.dot_dimension_numbers<[1], [0], [0], [1], [0, 0, 1, 1], [], []>} : vector<16x32xf32>, vector<32x32xf32>, vector<16x32xf32> -> vector<16x32xf32>
    %99 = arith.addf %94, %98 : vector<16x32xf32>
    %c0_67 = arith.constant 0 : index
    %c0_68 = arith.constant 0 : index
    %100 = vector.load %arg9[%c0_67, %c0_68] : memref<1x32xf32, #tpu.memory_space<vmem>>, vector<1x32xf32>
    %101 = vector.broadcast %100 : vector<1x32xf32> to vector<16x32xf32>
    %102 = arith.addf %99, %101 : vector<16x32xf32>
    %cst_69 = arith.constant 0.000000e+00 : f32
    %103 = vector.broadcast %cst_69 : f32 to vector<16x32xf32>
    %104 = arith.maximumf %102, %103 : vector<16x32xf32>
    %105 = tpu.iota {dimensions = array<i32: 0>} : vector<8x16xi32>
    %106 = tpu.iota {dimensions = array<i32: 1>} : vector<8x16xi32>
    %c2_i32_70 = arith.constant 2 : i32
    %107 = vector.broadcast %c2_i32_70 : i32 to vector<8x16xi32>
    %108 = arith.muli %107, %105 : vector<8x16xi32>
    %109 = arith.cmpi eq, %106, %108 : vector<8x16xi32>
    %cst_71 = arith.constant 1.000000e+00 : f32
    %cst_72 = arith.constant 0.000000e+00 : f32
    %110 = vector.broadcast %cst_71 : f32 to vector<8x16xf32>
    %111 = vector.broadcast %cst_72 : f32 to vector<8x16xf32>
    %112 = arith.select %109, %110, %111 : vector<8x16xi1>, vector<8x16xf32>
    %c2_i32_73 = arith.constant 2 : i32
    %113 = vector.broadcast %c2_i32_73 : i32 to vector<8x16xi32>
    %114 = arith.muli %113, %105 : vector<8x16xi32>
    %c1_i32_74 = arith.constant 1 : i32
    %115 = vector.broadcast %c1_i32_74 : i32 to vector<8x16xi32>
    %116 = arith.addi %114, %115 : vector<8x16xi32>
    %117 = arith.cmpi eq, %106, %116 : vector<8x16xi32>
    %cst_75 = arith.constant 1.000000e+00 : f32
    %cst_76 = arith.constant 0.000000e+00 : f32
    %118 = vector.broadcast %cst_75 : f32 to vector<8x16xf32>
    %119 = vector.broadcast %cst_76 : f32 to vector<8x16xf32>
    %120 = arith.select %117, %118, %119 : vector<8x16xi1>, vector<8x16xf32>
    %cst_77 = arith.constant dense<0.000000e+00> : vector<8x32xf32>
    %121 = tpu.matmul %112, %104, %cst_77 {dimension_numbers = #tpu.dot_dimension_numbers<[1], [0], [0], [1], [0, 0, 1, 1], [], []>} : vector<8x16xf32>, vector<16x32xf32>, vector<8x32xf32> -> vector<8x32xf32>
    %cst_78 = arith.constant dense<0.000000e+00> : vector<8x32xf32>
    %122 = tpu.matmul %120, %104, %cst_78 {dimension_numbers = #tpu.dot_dimension_numbers<[1], [0], [0], [1], [0, 0, 1, 1], [], []>} : vector<8x16xf32>, vector<16x32xf32>, vector<8x32xf32> -> vector<8x32xf32>
    %123 = arith.maximumf %121, %122 : vector<8x32xf32>
    %cst_79 = arith.constant 0.000000e+00 : f32
    %124 = vector.broadcast %cst_79 : f32 to vector<1x32xf32>
    %125 = tpu.concatenate %124, %123, %124 in 0 : vector<1x32xf32>, vector<8x32xf32>, vector<1x32xf32> -> vector<10x32xf32>
    %c0_80 = arith.constant 0 : index
    %c0_81 = arith.constant 0 : index
    %c0_82 = arith.constant 0 : index
    %126 = vector.load %arg10[%c0_80, %c0_81, %c0_82] : memref<3x32x64xf32, #tpu.memory_space<vmem>>, vector<1x32x64xf32>
    %127 = vector.shape_cast %126 : vector<1x32x64xf32> to vector<32x64xf32>
    %128 = vector.extract_strided_slice %125 {offsets = [0, 0], sizes = [8, 32], strides = [1, 1]} : vector<10x32xf32> to vector<8x32xf32>
    %cst_83 = arith.constant dense<0.000000e+00> : vector<8x64xf32>
    %129 = tpu.matmul %128, %127, %cst_83 {dimension_numbers = #tpu.dot_dimension_numbers<[1], [0], [0], [1], [0, 0, 1, 1], [], []>} : vector<8x32xf32>, vector<32x64xf32>, vector<8x64xf32> -> vector<8x64xf32>
    %c1_84 = arith.constant 1 : index
    %c0_85 = arith.constant 0 : index
    %c0_86 = arith.constant 0 : index
    %130 = vector.load %arg10[%c1_84, %c0_85, %c0_86] : memref<3x32x64xf32, #tpu.memory_space<vmem>>, vector<1x32x64xf32>
    %131 = vector.shape_cast %130 : vector<1x32x64xf32> to vector<32x64xf32>
    %132 = vector.extract_strided_slice %125 {offsets = [1, 0], sizes = [8, 32], strides = [1, 1]} : vector<10x32xf32> to vector<8x32xf32>
    %cst_87 = arith.constant dense<0.000000e+00> : vector<8x64xf32>
    %133 = tpu.matmul %132, %131, %cst_87 {dimension_numbers = #tpu.dot_dimension_numbers<[1], [0], [0], [1], [0, 0, 1, 1], [], []>} : vector<8x32xf32>, vector<32x64xf32>, vector<8x64xf32> -> vector<8x64xf32>
    %134 = arith.addf %129, %133 : vector<8x64xf32>
    %c2_88 = arith.constant 2 : index
    %c0_89 = arith.constant 0 : index
    %c0_90 = arith.constant 0 : index
    %135 = vector.load %arg10[%c2_88, %c0_89, %c0_90] : memref<3x32x64xf32, #tpu.memory_space<vmem>>, vector<1x32x64xf32>
    %136 = vector.shape_cast %135 : vector<1x32x64xf32> to vector<32x64xf32>
    %137 = vector.extract_strided_slice %125 {offsets = [2, 0], sizes = [8, 32], strides = [1, 1]} : vector<10x32xf32> to vector<8x32xf32>
    %cst_91 = arith.constant dense<0.000000e+00> : vector<8x64xf32>
    %138 = tpu.matmul %137, %136, %cst_91 {dimension_numbers = #tpu.dot_dimension_numbers<[1], [0], [0], [1], [0, 0, 1, 1], [], []>} : vector<8x32xf32>, vector<32x64xf32>, vector<8x64xf32> -> vector<8x64xf32>
    %139 = arith.addf %134, %138 : vector<8x64xf32>
    %c0_92 = arith.constant 0 : index
    %c0_93 = arith.constant 0 : index
    %140 = vector.load %arg11[%c0_92, %c0_93] : memref<1x64xf32, #tpu.memory_space<vmem>>, vector<1x64xf32>
    %141 = vector.broadcast %140 : vector<1x64xf32> to vector<8x64xf32>
    %142 = arith.addf %139, %141 : vector<8x64xf32>
    %cst_94 = arith.constant 0.000000e+00 : f32
    %143 = vector.broadcast %cst_94 : f32 to vector<8x64xf32>
    %144 = arith.maximumf %142, %143 : vector<8x64xf32>
    %cst_95 = arith.constant 0.000000e+00 : f32
    %145 = vector.broadcast %cst_95 : f32 to vector<1x64xf32>
    %146 = tpu.concatenate %145, %144, %145 in 0 : vector<1x64xf32>, vector<8x64xf32>, vector<1x64xf32> -> vector<10x64xf32>
    %c0_96 = arith.constant 0 : index
    %c0_97 = arith.constant 0 : index
    %c0_98 = arith.constant 0 : index
    %147 = vector.load %arg12[%c0_96, %c0_97, %c0_98] : memref<3x64x64xf32, #tpu.memory_space<vmem>>, vector<1x64x64xf32>
    %148 = vector.shape_cast %147 : vector<1x64x64xf32> to vector<64x64xf32>
    %149 = vector.extract_strided_slice %146 {offsets = [0, 0], sizes = [8, 64], strides = [1, 1]} : vector<10x64xf32> to vector<8x64xf32>
    %cst_99 = arith.constant dense<0.000000e+00> : vector<8x64xf32>
    %150 = tpu.matmul %149, %148, %cst_99 {dimension_numbers = #tpu.dot_dimension_numbers<[1], [0], [0], [1], [0, 0, 1, 1], [], []>} : vector<8x64xf32>, vector<64x64xf32>, vector<8x64xf32> -> vector<8x64xf32>
    %c1_100 = arith.constant 1 : index
    %c0_101 = arith.constant 0 : index
    %c0_102 = arith.constant 0 : index
    %151 = vector.load %arg12[%c1_100, %c0_101, %c0_102] : memref<3x64x64xf32, #tpu.memory_space<vmem>>, vector<1x64x64xf32>
    %152 = vector.shape_cast %151 : vector<1x64x64xf32> to vector<64x64xf32>
    %153 = vector.extract_strided_slice %146 {offsets = [1, 0], sizes = [8, 64], strides = [1, 1]} : vector<10x64xf32> to vector<8x64xf32>
    %cst_103 = arith.constant dense<0.000000e+00> : vector<8x64xf32>
    %154 = tpu.matmul %153, %152, %cst_103 {dimension_numbers = #tpu.dot_dimension_numbers<[1], [0], [0], [1], [0, 0, 1, 1], [], []>} : vector<8x64xf32>, vector<64x64xf32>, vector<8x64xf32> -> vector<8x64xf32>
    %155 = arith.addf %150, %154 : vector<8x64xf32>
    %c2_104 = arith.constant 2 : index
    %c0_105 = arith.constant 0 : index
    %c0_106 = arith.constant 0 : index
    %156 = vector.load %arg12[%c2_104, %c0_105, %c0_106] : memref<3x64x64xf32, #tpu.memory_space<vmem>>, vector<1x64x64xf32>
    %157 = vector.shape_cast %156 : vector<1x64x64xf32> to vector<64x64xf32>
    %158 = vector.extract_strided_slice %146 {offsets = [2, 0], sizes = [8, 64], strides = [1, 1]} : vector<10x64xf32> to vector<8x64xf32>
    %cst_107 = arith.constant dense<0.000000e+00> : vector<8x64xf32>
    %159 = tpu.matmul %158, %157, %cst_107 {dimension_numbers = #tpu.dot_dimension_numbers<[1], [0], [0], [1], [0, 0, 1, 1], [], []>} : vector<8x64xf32>, vector<64x64xf32>, vector<8x64xf32> -> vector<8x64xf32>
    %160 = arith.addf %155, %159 : vector<8x64xf32>
    %c0_108 = arith.constant 0 : index
    %c0_109 = arith.constant 0 : index
    %161 = vector.load %arg13[%c0_108, %c0_109] : memref<1x64xf32, #tpu.memory_space<vmem>>, vector<1x64xf32>
    %162 = vector.broadcast %161 : vector<1x64xf32> to vector<8x64xf32>
    %163 = arith.addf %160, %162 : vector<8x64xf32>
    %cst_110 = arith.constant 0.000000e+00 : f32
    %164 = vector.broadcast %cst_110 : f32 to vector<8x64xf32>
    %165 = arith.maximumf %163, %164 : vector<8x64xf32>
    %166 = tpu.iota {dimensions = array<i32: 0>} : vector<4x8xi32>
    %167 = tpu.iota {dimensions = array<i32: 1>} : vector<4x8xi32>
    %c2_i32_111 = arith.constant 2 : i32
    %168 = vector.broadcast %c2_i32_111 : i32 to vector<4x8xi32>
    %169 = arith.muli %168, %166 : vector<4x8xi32>
    %170 = arith.cmpi eq, %167, %169 : vector<4x8xi32>
    %cst_112 = arith.constant 1.000000e+00 : f32
    %cst_113 = arith.constant 0.000000e+00 : f32
    %171 = vector.broadcast %cst_112 : f32 to vector<4x8xf32>
    %172 = vector.broadcast %cst_113 : f32 to vector<4x8xf32>
    %173 = arith.select %170, %171, %172 : vector<4x8xi1>, vector<4x8xf32>
    %c2_i32_114 = arith.constant 2 : i32
    %174 = vector.broadcast %c2_i32_114 : i32 to vector<4x8xi32>
    %175 = arith.muli %174, %166 : vector<4x8xi32>
    %c1_i32_115 = arith.constant 1 : i32
    %176 = vector.broadcast %c1_i32_115 : i32 to vector<4x8xi32>
    %177 = arith.addi %175, %176 : vector<4x8xi32>
    %178 = arith.cmpi eq, %167, %177 : vector<4x8xi32>
    %cst_116 = arith.constant 1.000000e+00 : f32
    %cst_117 = arith.constant 0.000000e+00 : f32
    %179 = vector.broadcast %cst_116 : f32 to vector<4x8xf32>
    %180 = vector.broadcast %cst_117 : f32 to vector<4x8xf32>
    %181 = arith.select %178, %179, %180 : vector<4x8xi1>, vector<4x8xf32>
    %cst_118 = arith.constant dense<0.000000e+00> : vector<4x64xf32>
    %182 = tpu.matmul %173, %165, %cst_118 {dimension_numbers = #tpu.dot_dimension_numbers<[1], [0], [0], [1], [0, 0, 1, 1], [], []>} : vector<4x8xf32>, vector<8x64xf32>, vector<4x64xf32> -> vector<4x64xf32>
    %cst_119 = arith.constant dense<0.000000e+00> : vector<4x64xf32>
    %183 = tpu.matmul %181, %165, %cst_119 {dimension_numbers = #tpu.dot_dimension_numbers<[1], [0], [0], [1], [0, 0, 1, 1], [], []>} : vector<4x8xf32>, vector<8x64xf32>, vector<4x64xf32> -> vector<4x64xf32>
    %184 = arith.maximumf %182, %183 : vector<4x64xf32>
    %cst_120 = arith.constant 0.000000e+00 : f32
    %185 = vector.broadcast %cst_120 : f32 to vector<1x64xf32>
    %186 = tpu.concatenate %185, %184, %185 in 0 : vector<1x64xf32>, vector<4x64xf32>, vector<1x64xf32> -> vector<6x64xf32>
    %c0_121 = arith.constant 0 : index
    %c0_122 = arith.constant 0 : index
    %c0_123 = arith.constant 0 : index
    %187 = vector.load %arg14[%c0_121, %c0_122, %c0_123] : memref<3x64x128xf32, #tpu.memory_space<vmem>>, vector<1x64x128xf32>
    %188 = vector.shape_cast %187 : vector<1x64x128xf32> to vector<64x128xf32>
    %189 = vector.extract_strided_slice %186 {offsets = [0, 0], sizes = [4, 64], strides = [1, 1]} : vector<6x64xf32> to vector<4x64xf32>
    %cst_124 = arith.constant dense<0.000000e+00> : vector<4x128xf32>
    %190 = tpu.matmul %189, %188, %cst_124 {dimension_numbers = #tpu.dot_dimension_numbers<[1], [0], [0], [1], [0, 0, 1, 1], [], []>} : vector<4x64xf32>, vector<64x128xf32>, vector<4x128xf32> -> vector<4x128xf32>
    %c1_125 = arith.constant 1 : index
    %c0_126 = arith.constant 0 : index
    %c0_127 = arith.constant 0 : index
    %191 = vector.load %arg14[%c1_125, %c0_126, %c0_127] : memref<3x64x128xf32, #tpu.memory_space<vmem>>, vector<1x64x128xf32>
    %192 = vector.shape_cast %191 : vector<1x64x128xf32> to vector<64x128xf32>
    %193 = vector.extract_strided_slice %186 {offsets = [1, 0], sizes = [4, 64], strides = [1, 1]} : vector<6x64xf32> to vector<4x64xf32>
    %cst_128 = arith.constant dense<0.000000e+00> : vector<4x128xf32>
    %194 = tpu.matmul %193, %192, %cst_128 {dimension_numbers = #tpu.dot_dimension_numbers<[1], [0], [0], [1], [0, 0, 1, 1], [], []>} : vector<4x64xf32>, vector<64x128xf32>, vector<4x128xf32> -> vector<4x128xf32>
    %195 = arith.addf %190, %194 : vector<4x128xf32>
    %c2_129 = arith.constant 2 : index
    %c0_130 = arith.constant 0 : index
    %c0_131 = arith.constant 0 : index
    %196 = vector.load %arg14[%c2_129, %c0_130, %c0_131] : memref<3x64x128xf32, #tpu.memory_space<vmem>>, vector<1x64x128xf32>
    %197 = vector.shape_cast %196 : vector<1x64x128xf32> to vector<64x128xf32>
    %198 = vector.extract_strided_slice %186 {offsets = [2, 0], sizes = [4, 64], strides = [1, 1]} : vector<6x64xf32> to vector<4x64xf32>
    %cst_132 = arith.constant dense<0.000000e+00> : vector<4x128xf32>
    %199 = tpu.matmul %198, %197, %cst_132 {dimension_numbers = #tpu.dot_dimension_numbers<[1], [0], [0], [1], [0, 0, 1, 1], [], []>} : vector<4x64xf32>, vector<64x128xf32>, vector<4x128xf32> -> vector<4x128xf32>
    %200 = arith.addf %195, %199 : vector<4x128xf32>
    %c0_133 = arith.constant 0 : index
    %c0_134 = arith.constant 0 : index
    %201 = vector.load %arg15[%c0_133, %c0_134] : memref<1x128xf32, #tpu.memory_space<vmem>>, vector<1x128xf32>
    %202 = vector.broadcast %201 : vector<1x128xf32> to vector<4x128xf32>
    %203 = arith.addf %200, %202 : vector<4x128xf32>
    %cst_135 = arith.constant 0.000000e+00 : f32
    %204 = vector.broadcast %cst_135 : f32 to vector<4x128xf32>
    %205 = arith.maximumf %203, %204 : vector<4x128xf32>
    %cst_136 = arith.constant 0.000000e+00 : f32
    %206 = vector.broadcast %cst_136 : f32 to vector<1x128xf32>
    %207 = tpu.concatenate %206, %205, %206 in 0 : vector<1x128xf32>, vector<4x128xf32>, vector<1x128xf32> -> vector<6x128xf32>
    %c0_137 = arith.constant 0 : index
    %c0_138 = arith.constant 0 : index
    %c0_139 = arith.constant 0 : index
    %208 = vector.load %arg16[%c0_137, %c0_138, %c0_139] : memref<3x128x128xf32, #tpu.memory_space<vmem>>, vector<1x128x128xf32>
    %209 = vector.shape_cast %208 : vector<1x128x128xf32> to vector<128x128xf32>
    %210 = vector.extract_strided_slice %207 {offsets = [0, 0], sizes = [4, 128], strides = [1, 1]} : vector<6x128xf32> to vector<4x128xf32>
    %cst_140 = arith.constant dense<0.000000e+00> : vector<4x128xf32>
    %211 = tpu.matmul %210, %209, %cst_140 {dimension_numbers = #tpu.dot_dimension_numbers<[1], [0], [0], [1], [0, 0, 1, 1], [], []>} : vector<4x128xf32>, vector<128x128xf32>, vector<4x128xf32> -> vector<4x128xf32>
    %c1_141 = arith.constant 1 : index
    %c0_142 = arith.constant 0 : index
    %c0_143 = arith.constant 0 : index
    %212 = vector.load %arg16[%c1_141, %c0_142, %c0_143] : memref<3x128x128xf32, #tpu.memory_space<vmem>>, vector<1x128x128xf32>
    %213 = vector.shape_cast %212 : vector<1x128x128xf32> to vector<128x128xf32>
    %214 = vector.extract_strided_slice %207 {offsets = [1, 0], sizes = [4, 128], strides = [1, 1]} : vector<6x128xf32> to vector<4x128xf32>
    %cst_144 = arith.constant dense<0.000000e+00> : vector<4x128xf32>
    %215 = tpu.matmul %214, %213, %cst_144 {dimension_numbers = #tpu.dot_dimension_numbers<[1], [0], [0], [1], [0, 0, 1, 1], [], []>} : vector<4x128xf32>, vector<128x128xf32>, vector<4x128xf32> -> vector<4x128xf32>
    %216 = arith.addf %211, %215 : vector<4x128xf32>
    %c2_145 = arith.constant 2 : index
    %c0_146 = arith.constant 0 : index
    %c0_147 = arith.constant 0 : index
    %217 = vector.load %arg16[%c2_145, %c0_146, %c0_147] : memref<3x128x128xf32, #tpu.memory_space<vmem>>, vector<1x128x128xf32>
    %218 = vector.shape_cast %217 : vector<1x128x128xf32> to vector<128x128xf32>
    %219 = vector.extract_strided_slice %207 {offsets = [2, 0], sizes = [4, 128], strides = [1, 1]} : vector<6x128xf32> to vector<4x128xf32>
    %cst_148 = arith.constant dense<0.000000e+00> : vector<4x128xf32>
    %220 = tpu.matmul %219, %218, %cst_148 {dimension_numbers = #tpu.dot_dimension_numbers<[1], [0], [0], [1], [0, 0, 1, 1], [], []>} : vector<4x128xf32>, vector<128x128xf32>, vector<4x128xf32> -> vector<4x128xf32>
    %221 = arith.addf %216, %220 : vector<4x128xf32>
    %c0_149 = arith.constant 0 : index
    %c0_150 = arith.constant 0 : index
    %222 = vector.load %arg17[%c0_149, %c0_150] : memref<1x128xf32, #tpu.memory_space<vmem>>, vector<1x128xf32>
    %223 = vector.broadcast %222 : vector<1x128xf32> to vector<4x128xf32>
    %224 = arith.addf %221, %223 : vector<4x128xf32>
    %cst_151 = arith.constant 0.000000e+00 : f32
    %225 = vector.broadcast %cst_151 : f32 to vector<4x128xf32>
    %226 = arith.maximumf %224, %225 : vector<4x128xf32>
    %227 = tpu.iota {dimensions = array<i32: 0>} : vector<2x4xi32>
    %228 = tpu.iota {dimensions = array<i32: 1>} : vector<2x4xi32>
    %c2_i32_152 = arith.constant 2 : i32
    %229 = vector.broadcast %c2_i32_152 : i32 to vector<2x4xi32>
    %230 = arith.muli %229, %227 : vector<2x4xi32>
    %231 = arith.cmpi eq, %228, %230 : vector<2x4xi32>
    %cst_153 = arith.constant 1.000000e+00 : f32
    %cst_154 = arith.constant 0.000000e+00 : f32
    %232 = vector.broadcast %cst_153 : f32 to vector<2x4xf32>
    %233 = vector.broadcast %cst_154 : f32 to vector<2x4xf32>
    %234 = arith.select %231, %232, %233 : vector<2x4xi1>, vector<2x4xf32>
    %c2_i32_155 = arith.constant 2 : i32
    %235 = vector.broadcast %c2_i32_155 : i32 to vector<2x4xi32>
    %236 = arith.muli %235, %227 : vector<2x4xi32>
    %c1_i32_156 = arith.constant 1 : i32
    %237 = vector.broadcast %c1_i32_156 : i32 to vector<2x4xi32>
    %238 = arith.addi %236, %237 : vector<2x4xi32>
    %239 = arith.cmpi eq, %228, %238 : vector<2x4xi32>
    %cst_157 = arith.constant 1.000000e+00 : f32
    %cst_158 = arith.constant 0.000000e+00 : f32
    %240 = vector.broadcast %cst_157 : f32 to vector<2x4xf32>
    %241 = vector.broadcast %cst_158 : f32 to vector<2x4xf32>
    %242 = arith.select %239, %240, %241 : vector<2x4xi1>, vector<2x4xf32>
    %cst_159 = arith.constant dense<0.000000e+00> : vector<2x128xf32>
    %243 = tpu.matmul %234, %226, %cst_159 {dimension_numbers = #tpu.dot_dimension_numbers<[1], [0], [0], [1], [0, 0, 1, 1], [], []>} : vector<2x4xf32>, vector<4x128xf32>, vector<2x128xf32> -> vector<2x128xf32>
    %cst_160 = arith.constant dense<0.000000e+00> : vector<2x128xf32>
    %244 = tpu.matmul %242, %226, %cst_160 {dimension_numbers = #tpu.dot_dimension_numbers<[1], [0], [0], [1], [0, 0, 1, 1], [], []>} : vector<2x4xf32>, vector<4x128xf32>, vector<2x128xf32> -> vector<2x128xf32>
    %245 = arith.maximumf %243, %244 : vector<2x128xf32>
    %cst_161 = arith.constant 0.000000e+00 : f32
    %246 = vector.broadcast %cst_161 : f32 to vector<1x128xf32>
    %247 = tpu.concatenate %246, %245, %246 in 0 : vector<1x128xf32>, vector<2x128xf32>, vector<1x128xf32> -> vector<4x128xf32>
    %c0_162 = arith.constant 0 : index
    %c0_163 = arith.constant 0 : index
    %c0_164 = arith.constant 0 : index
    %248 = vector.load %arg18[%c0_162, %c0_163, %c0_164] : memref<3x128x256xf32, #tpu.memory_space<vmem>>, vector<1x128x256xf32>
    %249 = vector.shape_cast %248 : vector<1x128x256xf32> to vector<128x256xf32>
    %250 = vector.extract_strided_slice %247 {offsets = [0, 0], sizes = [2, 128], strides = [1, 1]} : vector<4x128xf32> to vector<2x128xf32>
    %cst_165 = arith.constant dense<0.000000e+00> : vector<2x256xf32>
    %251 = tpu.matmul %250, %249, %cst_165 {dimension_numbers = #tpu.dot_dimension_numbers<[1], [0], [0], [1], [0, 0, 1, 1], [], []>} : vector<2x128xf32>, vector<128x256xf32>, vector<2x256xf32> -> vector<2x256xf32>
    %c1_166 = arith.constant 1 : index
    %c0_167 = arith.constant 0 : index
    %c0_168 = arith.constant 0 : index
    %252 = vector.load %arg18[%c1_166, %c0_167, %c0_168] : memref<3x128x256xf32, #tpu.memory_space<vmem>>, vector<1x128x256xf32>
    %253 = vector.shape_cast %252 : vector<1x128x256xf32> to vector<128x256xf32>
    %254 = vector.extract_strided_slice %247 {offsets = [1, 0], sizes = [2, 128], strides = [1, 1]} : vector<4x128xf32> to vector<2x128xf32>
    %cst_169 = arith.constant dense<0.000000e+00> : vector<2x256xf32>
    %255 = tpu.matmul %254, %253, %cst_169 {dimension_numbers = #tpu.dot_dimension_numbers<[1], [0], [0], [1], [0, 0, 1, 1], [], []>} : vector<2x128xf32>, vector<128x256xf32>, vector<2x256xf32> -> vector<2x256xf32>
    %256 = arith.addf %251, %255 : vector<2x256xf32>
    %c2_170 = arith.constant 2 : index
    %c0_171 = arith.constant 0 : index
    %c0_172 = arith.constant 0 : index
    %257 = vector.load %arg18[%c2_170, %c0_171, %c0_172] : memref<3x128x256xf32, #tpu.memory_space<vmem>>, vector<1x128x256xf32>
    %258 = vector.shape_cast %257 : vector<1x128x256xf32> to vector<128x256xf32>
    %259 = vector.extract_strided_slice %247 {offsets = [2, 0], sizes = [2, 128], strides = [1, 1]} : vector<4x128xf32> to vector<2x128xf32>
    %cst_173 = arith.constant dense<0.000000e+00> : vector<2x256xf32>
    %260 = tpu.matmul %259, %258, %cst_173 {dimension_numbers = #tpu.dot_dimension_numbers<[1], [0], [0], [1], [0, 0, 1, 1], [], []>} : vector<2x128xf32>, vector<128x256xf32>, vector<2x256xf32> -> vector<2x256xf32>
    %261 = arith.addf %256, %260 : vector<2x256xf32>
    %c0_174 = arith.constant 0 : index
    %c0_175 = arith.constant 0 : index
    %262 = vector.load %arg19[%c0_174, %c0_175] : memref<1x256xf32, #tpu.memory_space<vmem>>, vector<1x256xf32>
    %263 = vector.broadcast %262 : vector<1x256xf32> to vector<2x256xf32>
    %264 = arith.addf %261, %263 : vector<2x256xf32>
    %cst_176 = arith.constant 0.000000e+00 : f32
    %265 = vector.broadcast %cst_176 : f32 to vector<2x256xf32>
    %266 = arith.maximumf %264, %265 : vector<2x256xf32>
    %cst_177 = arith.constant 0.000000e+00 : f32
    %267 = vector.broadcast %cst_177 : f32 to vector<1x256xf32>
    %268 = tpu.concatenate %267, %266, %267 in 0 : vector<1x256xf32>, vector<2x256xf32>, vector<1x256xf32> -> vector<4x256xf32>
    %c0_178 = arith.constant 0 : index
    %c0_179 = arith.constant 0 : index
    %c0_180 = arith.constant 0 : index
    %269 = vector.load %arg20[%c0_178, %c0_179, %c0_180] : memref<3x256x128xf32, #tpu.memory_space<vmem>>, vector<1x256x128xf32>
    %270 = vector.shape_cast %269 : vector<1x256x128xf32> to vector<256x128xf32>
    %271 = vector.extract_strided_slice %268 {offsets = [0, 0], sizes = [2, 256], strides = [1, 1]} : vector<4x256xf32> to vector<2x256xf32>
    %cst_181 = arith.constant dense<0.000000e+00> : vector<2x128xf32>
    %272 = tpu.matmul %271, %270, %cst_181 {dimension_numbers = #tpu.dot_dimension_numbers<[1], [0], [0], [1], [0, 0, 1, 1], [], []>} : vector<2x256xf32>, vector<256x128xf32>, vector<2x128xf32> -> vector<2x128xf32>
    %c1_182 = arith.constant 1 : index
    %c0_183 = arith.constant 0 : index
    %c0_184 = arith.constant 0 : index
    %273 = vector.load %arg20[%c1_182, %c0_183, %c0_184] : memref<3x256x128xf32, #tpu.memory_space<vmem>>, vector<1x256x128xf32>
    %274 = vector.shape_cast %273 : vector<1x256x128xf32> to vector<256x128xf32>
    %275 = vector.extract_strided_slice %268 {offsets = [1, 0], sizes = [2, 256], strides = [1, 1]} : vector<4x256xf32> to vector<2x256xf32>
    %cst_185 = arith.constant dense<0.000000e+00> : vector<2x128xf32>
    %276 = tpu.matmul %275, %274, %cst_185 {dimension_numbers = #tpu.dot_dimension_numbers<[1], [0], [0], [1], [0, 0, 1, 1], [], []>} : vector<2x256xf32>, vector<256x128xf32>, vector<2x128xf32> -> vector<2x128xf32>
    %277 = arith.addf %272, %276 : vector<2x128xf32>
    %c2_186 = arith.constant 2 : index
    %c0_187 = arith.constant 0 : index
    %c0_188 = arith.constant 0 : index
    %278 = vector.load %arg20[%c2_186, %c0_187, %c0_188] : memref<3x256x128xf32, #tpu.memory_space<vmem>>, vector<1x256x128xf32>
    %279 = vector.shape_cast %278 : vector<1x256x128xf32> to vector<256x128xf32>
    %280 = vector.extract_strided_slice %268 {offsets = [2, 0], sizes = [2, 256], strides = [1, 1]} : vector<4x256xf32> to vector<2x256xf32>
    %cst_189 = arith.constant dense<0.000000e+00> : vector<2x128xf32>
    %281 = tpu.matmul %280, %279, %cst_189 {dimension_numbers = #tpu.dot_dimension_numbers<[1], [0], [0], [1], [0, 0, 1, 1], [], []>} : vector<2x256xf32>, vector<256x128xf32>, vector<2x128xf32> -> vector<2x128xf32>
    %282 = arith.addf %277, %281 : vector<2x128xf32>
    %c0_190 = arith.constant 0 : index
    %c0_191 = arith.constant 0 : index
    %283 = vector.load %arg21[%c0_190, %c0_191] : memref<1x128xf32, #tpu.memory_space<vmem>>, vector<1x128xf32>
    %284 = vector.broadcast %283 : vector<1x128xf32> to vector<2x128xf32>
    %285 = arith.addf %282, %284 : vector<2x128xf32>
    %cst_192 = arith.constant 0.000000e+00 : f32
    %286 = vector.broadcast %cst_192 : f32 to vector<2x128xf32>
    %287 = arith.maximumf %285, %286 : vector<2x128xf32>
    %288 = tpu.iota {dimensions = array<i32: 0>} : vector<4x2xi32>
    %289 = arith.sitofp %288 : vector<4x2xi32> to vector<4x2xf32>
    %290 = tpu.iota {dimensions = array<i32: 1>} : vector<4x2xi32>
    %291 = arith.sitofp %290 : vector<4x2xi32> to vector<4x2xf32>
    %cst_193 = arith.constant 5.000000e-01 : f32
    %292 = vector.broadcast %cst_193 : f32 to vector<4x2xf32>
    %293 = arith.mulf %292, %289 : vector<4x2xf32>
    %cst_194 = arith.constant 2.500000e-01 : f32
    %294 = vector.broadcast %cst_194 : f32 to vector<4x2xf32>
    %295 = arith.subf %293, %294 : vector<4x2xf32>
    %cst_195 = arith.constant 0.000000e+00 : f32
    %296 = vector.broadcast %cst_195 : f32 to vector<4x2xf32>
    %297 = arith.maximumf %295, %296 : vector<4x2xf32>
    %298 = math.floor %297 : vector<4x2xf32>
    %299 = arith.subf %297, %298 : vector<4x2xf32>
    %cst_196 = arith.constant 1.000000e+00 : f32
    %300 = vector.broadcast %cst_196 : f32 to vector<4x2xf32>
    %301 = arith.addf %298, %300 : vector<4x2xf32>
    %cst_197 = arith.constant 1.000000e+00 : f32
    %302 = vector.broadcast %cst_197 : f32 to vector<4x2xf32>
    %303 = arith.minimumf %301, %302 : vector<4x2xf32>
    %304 = arith.cmpf oeq, %291, %298 : vector<4x2xf32>
    %cst_198 = arith.constant 1.000000e+00 : f32
    %305 = vector.broadcast %cst_198 : f32 to vector<4x2xf32>
    %306 = arith.subf %305, %299 : vector<4x2xf32>
    %cst_199 = arith.constant 0.000000e+00 : f32
    %307 = vector.broadcast %cst_199 : f32 to vector<4x2xf32>
    %308 = arith.select %304, %306, %307 : vector<4x2xi1>, vector<4x2xf32>
    %309 = arith.cmpf oeq, %291, %303 : vector<4x2xf32>
    %cst_200 = arith.constant 0.000000e+00 : f32
    %310 = vector.broadcast %cst_200 : f32 to vector<4x2xf32>
    %311 = arith.select %309, %299, %310 : vector<4x2xi1>, vector<4x2xf32>
    %312 = arith.addf %308, %311 : vector<4x2xf32>
    %cst_201 = arith.constant dense<0.000000e+00> : vector<4x128xf32>
    %313 = tpu.matmul %312, %287, %cst_201 {dimension_numbers = #tpu.dot_dimension_numbers<[1], [0], [0], [1], [0, 0, 1, 1], [], []>} : vector<4x2xf32>, vector<2x128xf32>, vector<4x128xf32> -> vector<4x128xf32>
    %cst_202 = arith.constant 0.000000e+00 : f32
    %314 = vector.broadcast %cst_202 : f32 to vector<1x128xf32>
    %315 = tpu.concatenate %314, %313, %314 in 0 : vector<1x128xf32>, vector<4x128xf32>, vector<1x128xf32> -> vector<6x128xf32>
    %c0_203 = arith.constant 0 : index
    %c0_204 = arith.constant 0 : index
    %c0_205 = arith.constant 0 : index
    %316 = vector.load %arg22[%c0_203, %c0_204, %c0_205] : memref<3x256x128xf32, #tpu.memory_space<vmem>>, vector<1x128x128xf32>
    %317 = vector.shape_cast %316 : vector<1x128x128xf32> to vector<128x128xf32>
    %318 = vector.extract_strided_slice %315 {offsets = [0, 0], sizes = [4, 128], strides = [1, 1]} : vector<6x128xf32> to vector<4x128xf32>
    %cst_206 = arith.constant dense<0.000000e+00> : vector<4x128xf32>
    %319 = tpu.matmul %318, %317, %cst_206 {dimension_numbers = #tpu.dot_dimension_numbers<[1], [0], [0], [1], [0, 0, 1, 1], [], []>} : vector<4x128xf32>, vector<128x128xf32>, vector<4x128xf32> -> vector<4x128xf32>
    %c1_207 = arith.constant 1 : index
    %c0_208 = arith.constant 0 : index
    %c0_209 = arith.constant 0 : index
    %320 = vector.load %arg22[%c1_207, %c0_208, %c0_209] : memref<3x256x128xf32, #tpu.memory_space<vmem>>, vector<1x128x128xf32>
    %321 = vector.shape_cast %320 : vector<1x128x128xf32> to vector<128x128xf32>
    %322 = vector.extract_strided_slice %315 {offsets = [1, 0], sizes = [4, 128], strides = [1, 1]} : vector<6x128xf32> to vector<4x128xf32>
    %cst_210 = arith.constant dense<0.000000e+00> : vector<4x128xf32>
    %323 = tpu.matmul %322, %321, %cst_210 {dimension_numbers = #tpu.dot_dimension_numbers<[1], [0], [0], [1], [0, 0, 1, 1], [], []>} : vector<4x128xf32>, vector<128x128xf32>, vector<4x128xf32> -> vector<4x128xf32>
    %324 = arith.addf %319, %323 : vector<4x128xf32>
    %c2_211 = arith.constant 2 : index
    %c0_212 = arith.constant 0 : index
    %c0_213 = arith.constant 0 : index
    %325 = vector.load %arg22[%c2_211, %c0_212, %c0_213] : memref<3x256x128xf32, #tpu.memory_space<vmem>>, vector<1x128x128xf32>
    %326 = vector.shape_cast %325 : vector<1x128x128xf32> to vector<128x128xf32>
    %327 = vector.extract_strided_slice %315 {offsets = [2, 0], sizes = [4, 128], strides = [1, 1]} : vector<6x128xf32> to vector<4x128xf32>
    %cst_214 = arith.constant dense<0.000000e+00> : vector<4x128xf32>
    %328 = tpu.matmul %327, %326, %cst_214 {dimension_numbers = #tpu.dot_dimension_numbers<[1], [0], [0], [1], [0, 0, 1, 1], [], []>} : vector<4x128xf32>, vector<128x128xf32>, vector<4x128xf32> -> vector<4x128xf32>
    %329 = arith.addf %324, %328 : vector<4x128xf32>
    %cst_215 = arith.constant 0.000000e+00 : f32
    %330 = vector.broadcast %cst_215 : f32 to vector<1x128xf32>
    %331 = tpu.concatenate %330, %226, %330 in 0 : vector<1x128xf32>, vector<4x128xf32>, vector<1x128xf32> -> vector<6x128xf32>
    %c0_216 = arith.constant 0 : index
    %c128 = arith.constant 128 : index
    %c0_217 = arith.constant 0 : index
    %332 = vector.load %arg22[%c0_216, %c128, %c0_217] : memref<3x256x128xf32, #tpu.memory_space<vmem>>, vector<1x128x128xf32>
    %333 = vector.shape_cast %332 : vector<1x128x128xf32> to vector<128x128xf32>
    %334 = vector.extract_strided_slice %331 {offsets = [0, 0], sizes = [4, 128], strides = [1, 1]} : vector<6x128xf32> to vector<4x128xf32>
    %cst_218 = arith.constant dense<0.000000e+00> : vector<4x128xf32>
    %335 = tpu.matmul %334, %333, %cst_218 {dimension_numbers = #tpu.dot_dimension_numbers<[1], [0], [0], [1], [0, 0, 1, 1], [], []>} : vector<4x128xf32>, vector<128x128xf32>, vector<4x128xf32> -> vector<4x128xf32>
    %c1_219 = arith.constant 1 : index
    %c128_220 = arith.constant 128 : index
    %c0_221 = arith.constant 0 : index
    %336 = vector.load %arg22[%c1_219, %c128_220, %c0_221] : memref<3x256x128xf32, #tpu.memory_space<vmem>>, vector<1x128x128xf32>
    %337 = vector.shape_cast %336 : vector<1x128x128xf32> to vector<128x128xf32>
    %338 = vector.extract_strided_slice %331 {offsets = [1, 0], sizes = [4, 128], strides = [1, 1]} : vector<6x128xf32> to vector<4x128xf32>
    %cst_222 = arith.constant dense<0.000000e+00> : vector<4x128xf32>
    %339 = tpu.matmul %338, %337, %cst_222 {dimension_numbers = #tpu.dot_dimension_numbers<[1], [0], [0], [1], [0, 0, 1, 1], [], []>} : vector<4x128xf32>, vector<128x128xf32>, vector<4x128xf32> -> vector<4x128xf32>
    %340 = arith.addf %335, %339 : vector<4x128xf32>
    %c2_223 = arith.constant 2 : index
    %c128_224 = arith.constant 128 : index
    %c0_225 = arith.constant 0 : index
    %341 = vector.load %arg22[%c2_223, %c128_224, %c0_225] : memref<3x256x128xf32, #tpu.memory_space<vmem>>, vector<1x128x128xf32>
    %342 = vector.shape_cast %341 : vector<1x128x128xf32> to vector<128x128xf32>
    %343 = vector.extract_strided_slice %331 {offsets = [2, 0], sizes = [4, 128], strides = [1, 1]} : vector<6x128xf32> to vector<4x128xf32>
    %cst_226 = arith.constant dense<0.000000e+00> : vector<4x128xf32>
    %344 = tpu.matmul %343, %342, %cst_226 {dimension_numbers = #tpu.dot_dimension_numbers<[1], [0], [0], [1], [0, 0, 1, 1], [], []>} : vector<4x128xf32>, vector<128x128xf32>, vector<4x128xf32> -> vector<4x128xf32>
    %345 = arith.addf %340, %344 : vector<4x128xf32>
    %346 = arith.addf %329, %345 : vector<4x128xf32>
    %c0_227 = arith.constant 0 : index
    %c0_228 = arith.constant 0 : index
    %347 = vector.load %arg23[%c0_227, %c0_228] : memref<1x128xf32, #tpu.memory_space<vmem>>, vector<1x128xf32>
    %348 = vector.broadcast %347 : vector<1x128xf32> to vector<4x128xf32>
    %349 = arith.addf %346, %348 : vector<4x128xf32>
    %cst_229 = arith.constant 0.000000e+00 : f32
    %350 = vector.broadcast %cst_229 : f32 to vector<4x128xf32>
    %351 = arith.maximumf %349, %350 : vector<4x128xf32>
    %cst_230 = arith.constant 0.000000e+00 : f32
    %352 = vector.broadcast %cst_230 : f32 to vector<1x128xf32>
    %353 = tpu.concatenate %352, %351, %352 in 0 : vector<1x128xf32>, vector<4x128xf32>, vector<1x128xf32> -> vector<6x128xf32>
    %c0_231 = arith.constant 0 : index
    %c0_232 = arith.constant 0 : index
    %c0_233 = arith.constant 0 : index
    %354 = vector.load %arg24[%c0_231, %c0_232, %c0_233] : memref<3x128x64xf32, #tpu.memory_space<vmem>>, vector<1x128x64xf32>
    %355 = vector.shape_cast %354 : vector<1x128x64xf32> to vector<128x64xf32>
    %356 = vector.extract_strided_slice %353 {offsets = [0, 0], sizes = [4, 128], strides = [1, 1]} : vector<6x128xf32> to vector<4x128xf32>
    %cst_234 = arith.constant dense<0.000000e+00> : vector<4x64xf32>
    %357 = tpu.matmul %356, %355, %cst_234 {dimension_numbers = #tpu.dot_dimension_numbers<[1], [0], [0], [1], [0, 0, 1, 1], [], []>} : vector<4x128xf32>, vector<128x64xf32>, vector<4x64xf32> -> vector<4x64xf32>
    %c1_235 = arith.constant 1 : index
    %c0_236 = arith.constant 0 : index
    %c0_237 = arith.constant 0 : index
    %358 = vector.load %arg24[%c1_235, %c0_236, %c0_237] : memref<3x128x64xf32, #tpu.memory_space<vmem>>, vector<1x128x64xf32>
    %359 = vector.shape_cast %358 : vector<1x128x64xf32> to vector<128x64xf32>
    %360 = vector.extract_strided_slice %353 {offsets = [1, 0], sizes = [4, 128], strides = [1, 1]} : vector<6x128xf32> to vector<4x128xf32>
    %cst_238 = arith.constant dense<0.000000e+00> : vector<4x64xf32>
    %361 = tpu.matmul %360, %359, %cst_238 {dimension_numbers = #tpu.dot_dimension_numbers<[1], [0], [0], [1], [0, 0, 1, 1], [], []>} : vector<4x128xf32>, vector<128x64xf32>, vector<4x64xf32> -> vector<4x64xf32>
    %362 = arith.addf %357, %361 : vector<4x64xf32>
    %c2_239 = arith.constant 2 : index
    %c0_240 = arith.constant 0 : index
    %c0_241 = arith.constant 0 : index
    %363 = vector.load %arg24[%c2_239, %c0_240, %c0_241] : memref<3x128x64xf32, #tpu.memory_space<vmem>>, vector<1x128x64xf32>
    %364 = vector.shape_cast %363 : vector<1x128x64xf32> to vector<128x64xf32>
    %365 = vector.extract_strided_slice %353 {offsets = [2, 0], sizes = [4, 128], strides = [1, 1]} : vector<6x128xf32> to vector<4x128xf32>
    %cst_242 = arith.constant dense<0.000000e+00> : vector<4x64xf32>
    %366 = tpu.matmul %365, %364, %cst_242 {dimension_numbers = #tpu.dot_dimension_numbers<[1], [0], [0], [1], [0, 0, 1, 1], [], []>} : vector<4x128xf32>, vector<128x64xf32>, vector<4x64xf32> -> vector<4x64xf32>
    %367 = arith.addf %362, %366 : vector<4x64xf32>
    %c0_243 = arith.constant 0 : index
    %c0_244 = arith.constant 0 : index
    %368 = vector.load %arg25[%c0_243, %c0_244] : memref<1x64xf32, #tpu.memory_space<vmem>>, vector<1x64xf32>
    %369 = vector.broadcast %368 : vector<1x64xf32> to vector<4x64xf32>
    %370 = arith.addf %367, %369 : vector<4x64xf32>
    %cst_245 = arith.constant 0.000000e+00 : f32
    %371 = vector.broadcast %cst_245 : f32 to vector<4x64xf32>
    %372 = arith.maximumf %370, %371 : vector<4x64xf32>
    %373 = tpu.iota {dimensions = array<i32: 0>} : vector<8x4xi32>
    %374 = arith.sitofp %373 : vector<8x4xi32> to vector<8x4xf32>
    %375 = tpu.iota {dimensions = array<i32: 1>} : vector<8x4xi32>
    %376 = arith.sitofp %375 : vector<8x4xi32> to vector<8x4xf32>
    %cst_246 = arith.constant 5.000000e-01 : f32
    %377 = vector.broadcast %cst_246 : f32 to vector<8x4xf32>
    %378 = arith.mulf %377, %374 : vector<8x4xf32>
    %cst_247 = arith.constant 2.500000e-01 : f32
    %379 = vector.broadcast %cst_247 : f32 to vector<8x4xf32>
    %380 = arith.subf %378, %379 : vector<8x4xf32>
    %cst_248 = arith.constant 0.000000e+00 : f32
    %381 = vector.broadcast %cst_248 : f32 to vector<8x4xf32>
    %382 = arith.maximumf %380, %381 : vector<8x4xf32>
    %383 = math.floor %382 : vector<8x4xf32>
    %384 = arith.subf %382, %383 : vector<8x4xf32>
    %cst_249 = arith.constant 1.000000e+00 : f32
    %385 = vector.broadcast %cst_249 : f32 to vector<8x4xf32>
    %386 = arith.addf %383, %385 : vector<8x4xf32>
    %cst_250 = arith.constant 3.000000e+00 : f32
    %387 = vector.broadcast %cst_250 : f32 to vector<8x4xf32>
    %388 = arith.minimumf %386, %387 : vector<8x4xf32>
    %389 = arith.cmpf oeq, %376, %383 : vector<8x4xf32>
    %cst_251 = arith.constant 1.000000e+00 : f32
    %390 = vector.broadcast %cst_251 : f32 to vector<8x4xf32>
    %391 = arith.subf %390, %384 : vector<8x4xf32>
    %cst_252 = arith.constant 0.000000e+00 : f32
    %392 = vector.broadcast %cst_252 : f32 to vector<8x4xf32>
    %393 = arith.select %389, %391, %392 : vector<8x4xi1>, vector<8x4xf32>
    %394 = arith.cmpf oeq, %376, %388 : vector<8x4xf32>
    %cst_253 = arith.constant 0.000000e+00 : f32
    %395 = vector.broadcast %cst_253 : f32 to vector<8x4xf32>
    %396 = arith.select %394, %384, %395 : vector<8x4xi1>, vector<8x4xf32>
    %397 = arith.addf %393, %396 : vector<8x4xf32>
    %cst_254 = arith.constant dense<0.000000e+00> : vector<8x64xf32>
    %398 = tpu.matmul %397, %372, %cst_254 {dimension_numbers = #tpu.dot_dimension_numbers<[1], [0], [0], [1], [0, 0, 1, 1], [], []>} : vector<8x4xf32>, vector<4x64xf32>, vector<8x64xf32> -> vector<8x64xf32>
    %cst_255 = arith.constant 0.000000e+00 : f32
    %399 = vector.broadcast %cst_255 : f32 to vector<1x64xf32>
    %400 = tpu.concatenate %399, %398, %399 in 0 : vector<1x64xf32>, vector<8x64xf32>, vector<1x64xf32> -> vector<10x64xf32>
    %c0_256 = arith.constant 0 : index
    %c0_257 = arith.constant 0 : index
    %c0_258 = arith.constant 0 : index
    %401 = vector.load %arg26[%c0_256, %c0_257, %c0_258] : memref<3x128x64xf32, #tpu.memory_space<vmem>>, vector<1x64x64xf32>
    %402 = vector.shape_cast %401 : vector<1x64x64xf32> to vector<64x64xf32>
    %403 = vector.extract_strided_slice %400 {offsets = [0, 0], sizes = [8, 64], strides = [1, 1]} : vector<10x64xf32> to vector<8x64xf32>
    %cst_259 = arith.constant dense<0.000000e+00> : vector<8x64xf32>
    %404 = tpu.matmul %403, %402, %cst_259 {dimension_numbers = #tpu.dot_dimension_numbers<[1], [0], [0], [1], [0, 0, 1, 1], [], []>} : vector<8x64xf32>, vector<64x64xf32>, vector<8x64xf32> -> vector<8x64xf32>
    %c1_260 = arith.constant 1 : index
    %c0_261 = arith.constant 0 : index
    %c0_262 = arith.constant 0 : index
    %405 = vector.load %arg26[%c1_260, %c0_261, %c0_262] : memref<3x128x64xf32, #tpu.memory_space<vmem>>, vector<1x64x64xf32>
    %406 = vector.shape_cast %405 : vector<1x64x64xf32> to vector<64x64xf32>
    %407 = vector.extract_strided_slice %400 {offsets = [1, 0], sizes = [8, 64], strides = [1, 1]} : vector<10x64xf32> to vector<8x64xf32>
    %cst_263 = arith.constant dense<0.000000e+00> : vector<8x64xf32>
    %408 = tpu.matmul %407, %406, %cst_263 {dimension_numbers = #tpu.dot_dimension_numbers<[1], [0], [0], [1], [0, 0, 1, 1], [], []>} : vector<8x64xf32>, vector<64x64xf32>, vector<8x64xf32> -> vector<8x64xf32>
    %409 = arith.addf %404, %408 : vector<8x64xf32>
    %c2_264 = arith.constant 2 : index
    %c0_265 = arith.constant 0 : index
    %c0_266 = arith.constant 0 : index
    %410 = vector.load %arg26[%c2_264, %c0_265, %c0_266] : memref<3x128x64xf32, #tpu.memory_space<vmem>>, vector<1x64x64xf32>
    %411 = vector.shape_cast %410 : vector<1x64x64xf32> to vector<64x64xf32>
    %412 = vector.extract_strided_slice %400 {offsets = [2, 0], sizes = [8, 64], strides = [1, 1]} : vector<10x64xf32> to vector<8x64xf32>
    %cst_267 = arith.constant dense<0.000000e+00> : vector<8x64xf32>
    %413 = tpu.matmul %412, %411, %cst_267 {dimension_numbers = #tpu.dot_dimension_numbers<[1], [0], [0], [1], [0, 0, 1, 1], [], []>} : vector<8x64xf32>, vector<64x64xf32>, vector<8x64xf32> -> vector<8x64xf32>
    %414 = arith.addf %409, %413 : vector<8x64xf32>
    %cst_268 = arith.constant 0.000000e+00 : f32
    %415 = vector.broadcast %cst_268 : f32 to vector<1x64xf32>
    %416 = tpu.concatenate %415, %165, %415 in 0 : vector<1x64xf32>, vector<8x64xf32>, vector<1x64xf32> -> vector<10x64xf32>
    %c0_269 = arith.constant 0 : index
    %c64 = arith.constant 64 : index
    %c0_270 = arith.constant 0 : index
    %417 = vector.load %arg26[%c0_269, %c64, %c0_270] : memref<3x128x64xf32, #tpu.memory_space<vmem>>, vector<1x64x64xf32>
    %418 = vector.shape_cast %417 : vector<1x64x64xf32> to vector<64x64xf32>
    %419 = vector.extract_strided_slice %416 {offsets = [0, 0], sizes = [8, 64], strides = [1, 1]} : vector<10x64xf32> to vector<8x64xf32>
    %cst_271 = arith.constant dense<0.000000e+00> : vector<8x64xf32>
    %420 = tpu.matmul %419, %418, %cst_271 {dimension_numbers = #tpu.dot_dimension_numbers<[1], [0], [0], [1], [0, 0, 1, 1], [], []>} : vector<8x64xf32>, vector<64x64xf32>, vector<8x64xf32> -> vector<8x64xf32>
    %c1_272 = arith.constant 1 : index
    %c64_273 = arith.constant 64 : index
    %c0_274 = arith.constant 0 : index
    %421 = vector.load %arg26[%c1_272, %c64_273, %c0_274] : memref<3x128x64xf32, #tpu.memory_space<vmem>>, vector<1x64x64xf32>
    %422 = vector.shape_cast %421 : vector<1x64x64xf32> to vector<64x64xf32>
    %423 = vector.extract_strided_slice %416 {offsets = [1, 0], sizes = [8, 64], strides = [1, 1]} : vector<10x64xf32> to vector<8x64xf32>
    %cst_275 = arith.constant dense<0.000000e+00> : vector<8x64xf32>
    %424 = tpu.matmul %423, %422, %cst_275 {dimension_numbers = #tpu.dot_dimension_numbers<[1], [0], [0], [1], [0, 0, 1, 1], [], []>} : vector<8x64xf32>, vector<64x64xf32>, vector<8x64xf32> -> vector<8x64xf32>
    %425 = arith.addf %420, %424 : vector<8x64xf32>
    %c2_276 = arith.constant 2 : index
    %c64_277 = arith.constant 64 : index
    %c0_278 = arith.constant 0 : index
    %426 = vector.load %arg26[%c2_276, %c64_277, %c0_278] : memref<3x128x64xf32, #tpu.memory_space<vmem>>, vector<1x64x64xf32>
    %427 = vector.shape_cast %426 : vector<1x64x64xf32> to vector<64x64xf32>
    %428 = vector.extract_strided_slice %416 {offsets = [2, 0], sizes = [8, 64], strides = [1, 1]} : vector<10x64xf32> to vector<8x64xf32>
    %cst_279 = arith.constant dense<0.000000e+00> : vector<8x64xf32>
    %429 = tpu.matmul %428, %427, %cst_279 {dimension_numbers = #tpu.dot_dimension_numbers<[1], [0], [0], [1], [0, 0, 1, 1], [], []>} : vector<8x64xf32>, vector<64x64xf32>, vector<8x64xf32> -> vector<8x64xf32>
    %430 = arith.addf %425, %429 : vector<8x64xf32>
    %431 = arith.addf %414, %430 : vector<8x64xf32>
    %c0_280 = arith.constant 0 : index
    %c0_281 = arith.constant 0 : index
    %432 = vector.load %arg27[%c0_280, %c0_281] : memref<1x64xf32, #tpu.memory_space<vmem>>, vector<1x64xf32>
    %433 = vector.broadcast %432 : vector<1x64xf32> to vector<8x64xf32>
    %434 = arith.addf %431, %433 : vector<8x64xf32>
    %cst_282 = arith.constant 0.000000e+00 : f32
    %435 = vector.broadcast %cst_282 : f32 to vector<8x64xf32>
    %436 = arith.maximumf %434, %435 : vector<8x64xf32>
    %cst_283 = arith.constant 0.000000e+00 : f32
    %437 = vector.broadcast %cst_283 : f32 to vector<1x64xf32>
    %438 = tpu.concatenate %437, %436, %437 in 0 : vector<1x64xf32>, vector<8x64xf32>, vector<1x64xf32> -> vector<10x64xf32>
    %c0_284 = arith.constant 0 : index
    %c0_285 = arith.constant 0 : index
    %c0_286 = arith.constant 0 : index
    %439 = vector.load %arg28[%c0_284, %c0_285, %c0_286] : memref<3x64x32xf32, #tpu.memory_space<vmem>>, vector<1x64x32xf32>
    %440 = vector.shape_cast %439 : vector<1x64x32xf32> to vector<64x32xf32>
    %441 = vector.extract_strided_slice %438 {offsets = [0, 0], sizes = [8, 64], strides = [1, 1]} : vector<10x64xf32> to vector<8x64xf32>
    %cst_287 = arith.constant dense<0.000000e+00> : vector<8x32xf32>
    %442 = tpu.matmul %441, %440, %cst_287 {dimension_numbers = #tpu.dot_dimension_numbers<[1], [0], [0], [1], [0, 0, 1, 1], [], []>} : vector<8x64xf32>, vector<64x32xf32>, vector<8x32xf32> -> vector<8x32xf32>
    %c1_288 = arith.constant 1 : index
    %c0_289 = arith.constant 0 : index
    %c0_290 = arith.constant 0 : index
    %443 = vector.load %arg28[%c1_288, %c0_289, %c0_290] : memref<3x64x32xf32, #tpu.memory_space<vmem>>, vector<1x64x32xf32>
    %444 = vector.shape_cast %443 : vector<1x64x32xf32> to vector<64x32xf32>
    %445 = vector.extract_strided_slice %438 {offsets = [1, 0], sizes = [8, 64], strides = [1, 1]} : vector<10x64xf32> to vector<8x64xf32>
    %cst_291 = arith.constant dense<0.000000e+00> : vector<8x32xf32>
    %446 = tpu.matmul %445, %444, %cst_291 {dimension_numbers = #tpu.dot_dimension_numbers<[1], [0], [0], [1], [0, 0, 1, 1], [], []>} : vector<8x64xf32>, vector<64x32xf32>, vector<8x32xf32> -> vector<8x32xf32>
    %447 = arith.addf %442, %446 : vector<8x32xf32>
    %c2_292 = arith.constant 2 : index
    %c0_293 = arith.constant 0 : index
    %c0_294 = arith.constant 0 : index
    %448 = vector.load %arg28[%c2_292, %c0_293, %c0_294] : memref<3x64x32xf32, #tpu.memory_space<vmem>>, vector<1x64x32xf32>
    %449 = vector.shape_cast %448 : vector<1x64x32xf32> to vector<64x32xf32>
    %450 = vector.extract_strided_slice %438 {offsets = [2, 0], sizes = [8, 64], strides = [1, 1]} : vector<10x64xf32> to vector<8x64xf32>
    %cst_295 = arith.constant dense<0.000000e+00> : vector<8x32xf32>
    %451 = tpu.matmul %450, %449, %cst_295 {dimension_numbers = #tpu.dot_dimension_numbers<[1], [0], [0], [1], [0, 0, 1, 1], [], []>} : vector<8x64xf32>, vector<64x32xf32>, vector<8x32xf32> -> vector<8x32xf32>
    %452 = arith.addf %447, %451 : vector<8x32xf32>
    %c0_296 = arith.constant 0 : index
    %c0_297 = arith.constant 0 : index
    %453 = vector.load %arg29[%c0_296, %c0_297] : memref<1x32xf32, #tpu.memory_space<vmem>>, vector<1x32xf32>
    %454 = vector.broadcast %453 : vector<1x32xf32> to vector<8x32xf32>
    %455 = arith.addf %452, %454 : vector<8x32xf32>
    %cst_298 = arith.constant 0.000000e+00 : f32
    %456 = vector.broadcast %cst_298 : f32 to vector<8x32xf32>
    %457 = arith.maximumf %455, %456 : vector<8x32xf32>
    %458 = tpu.iota {dimensions = array<i32: 0>} : vector<16x8xi32>
    %459 = arith.sitofp %458 : vector<16x8xi32> to vector<16x8xf32>
    %460 = tpu.iota {dimensions = array<i32: 1>} : vector<16x8xi32>
    %461 = arith.sitofp %460 : vector<16x8xi32> to vector<16x8xf32>
    %cst_299 = arith.constant 5.000000e-01 : f32
    %462 = vector.broadcast %cst_299 : f32 to vector<16x8xf32>
    %463 = arith.mulf %462, %459 : vector<16x8xf32>
    %cst_300 = arith.constant 2.500000e-01 : f32
    %464 = vector.broadcast %cst_300 : f32 to vector<16x8xf32>
    %465 = arith.subf %463, %464 : vector<16x8xf32>
    %cst_301 = arith.constant 0.000000e+00 : f32
    %466 = vector.broadcast %cst_301 : f32 to vector<16x8xf32>
    %467 = arith.maximumf %465, %466 : vector<16x8xf32>
    %468 = math.floor %467 : vector<16x8xf32>
    %469 = arith.subf %467, %468 : vector<16x8xf32>
    %cst_302 = arith.constant 1.000000e+00 : f32
    %470 = vector.broadcast %cst_302 : f32 to vector<16x8xf32>
    %471 = arith.addf %468, %470 : vector<16x8xf32>
    %cst_303 = arith.constant 7.000000e+00 : f32
    %472 = vector.broadcast %cst_303 : f32 to vector<16x8xf32>
    %473 = arith.minimumf %471, %472 : vector<16x8xf32>
    %474 = arith.cmpf oeq, %461, %468 : vector<16x8xf32>
    %cst_304 = arith.constant 1.000000e+00 : f32
    %475 = vector.broadcast %cst_304 : f32 to vector<16x8xf32>
    %476 = arith.subf %475, %469 : vector<16x8xf32>
    %cst_305 = arith.constant 0.000000e+00 : f32
    %477 = vector.broadcast %cst_305 : f32 to vector<16x8xf32>
    %478 = arith.select %474, %476, %477 : vector<16x8xi1>, vector<16x8xf32>
    %479 = arith.cmpf oeq, %461, %473 : vector<16x8xf32>
    %cst_306 = arith.constant 0.000000e+00 : f32
    %480 = vector.broadcast %cst_306 : f32 to vector<16x8xf32>
    %481 = arith.select %479, %469, %480 : vector<16x8xi1>, vector<16x8xf32>
    %482 = arith.addf %478, %481 : vector<16x8xf32>
    %cst_307 = arith.constant dense<0.000000e+00> : vector<16x32xf32>
    %483 = tpu.matmul %482, %457, %cst_307 {dimension_numbers = #tpu.dot_dimension_numbers<[1], [0], [0], [1], [0, 0, 1, 1], [], []>} : vector<16x8xf32>, vector<8x32xf32>, vector<16x32xf32> -> vector<16x32xf32>
    %cst_308 = arith.constant 0.000000e+00 : f32
    %484 = vector.broadcast %cst_308 : f32 to vector<1x32xf32>
    %485 = tpu.concatenate %484, %483, %484 in 0 : vector<1x32xf32>, vector<16x32xf32>, vector<1x32xf32> -> vector<18x32xf32>
    %c0_309 = arith.constant 0 : index
    %c0_310 = arith.constant 0 : index
    %c0_311 = arith.constant 0 : index
    %486 = vector.load %arg30[%c0_309, %c0_310, %c0_311] : memref<3x64x32xf32, #tpu.memory_space<vmem>>, vector<1x32x32xf32>
    %487 = vector.shape_cast %486 : vector<1x32x32xf32> to vector<32x32xf32>
    %488 = vector.extract_strided_slice %485 {offsets = [0, 0], sizes = [16, 32], strides = [1, 1]} : vector<18x32xf32> to vector<16x32xf32>
    %cst_312 = arith.constant dense<0.000000e+00> : vector<16x32xf32>
    %489 = tpu.matmul %488, %487, %cst_312 {dimension_numbers = #tpu.dot_dimension_numbers<[1], [0], [0], [1], [0, 0, 1, 1], [], []>} : vector<16x32xf32>, vector<32x32xf32>, vector<16x32xf32> -> vector<16x32xf32>
    %c1_313 = arith.constant 1 : index
    %c0_314 = arith.constant 0 : index
    %c0_315 = arith.constant 0 : index
    %490 = vector.load %arg30[%c1_313, %c0_314, %c0_315] : memref<3x64x32xf32, #tpu.memory_space<vmem>>, vector<1x32x32xf32>
    %491 = vector.shape_cast %490 : vector<1x32x32xf32> to vector<32x32xf32>
    %492 = vector.extract_strided_slice %485 {offsets = [1, 0], sizes = [16, 32], strides = [1, 1]} : vector<18x32xf32> to vector<16x32xf32>
    %cst_316 = arith.constant dense<0.000000e+00> : vector<16x32xf32>
    %493 = tpu.matmul %492, %491, %cst_316 {dimension_numbers = #tpu.dot_dimension_numbers<[1], [0], [0], [1], [0, 0, 1, 1], [], []>} : vector<16x32xf32>, vector<32x32xf32>, vector<16x32xf32> -> vector<16x32xf32>
    %494 = arith.addf %489, %493 : vector<16x32xf32>
    %c2_317 = arith.constant 2 : index
    %c0_318 = arith.constant 0 : index
    %c0_319 = arith.constant 0 : index
    %495 = vector.load %arg30[%c2_317, %c0_318, %c0_319] : memref<3x64x32xf32, #tpu.memory_space<vmem>>, vector<1x32x32xf32>
    %496 = vector.shape_cast %495 : vector<1x32x32xf32> to vector<32x32xf32>
    %497 = vector.extract_strided_slice %485 {offsets = [2, 0], sizes = [16, 32], strides = [1, 1]} : vector<18x32xf32> to vector<16x32xf32>
    %cst_320 = arith.constant dense<0.000000e+00> : vector<16x32xf32>
    %498 = tpu.matmul %497, %496, %cst_320 {dimension_numbers = #tpu.dot_dimension_numbers<[1], [0], [0], [1], [0, 0, 1, 1], [], []>} : vector<16x32xf32>, vector<32x32xf32>, vector<16x32xf32> -> vector<16x32xf32>
    %499 = arith.addf %494, %498 : vector<16x32xf32>
    %cst_321 = arith.constant 0.000000e+00 : f32
    %500 = vector.broadcast %cst_321 : f32 to vector<1x32xf32>
    %501 = tpu.concatenate %500, %104, %500 in 0 : vector<1x32xf32>, vector<16x32xf32>, vector<1x32xf32> -> vector<18x32xf32>
    %c0_322 = arith.constant 0 : index
    %c32 = arith.constant 32 : index
    %c0_323 = arith.constant 0 : index
    %502 = vector.load %arg30[%c0_322, %c32, %c0_323] : memref<3x64x32xf32, #tpu.memory_space<vmem>>, vector<1x32x32xf32>
    %503 = vector.shape_cast %502 : vector<1x32x32xf32> to vector<32x32xf32>
    %504 = vector.extract_strided_slice %501 {offsets = [0, 0], sizes = [16, 32], strides = [1, 1]} : vector<18x32xf32> to vector<16x32xf32>
    %cst_324 = arith.constant dense<0.000000e+00> : vector<16x32xf32>
    %505 = tpu.matmul %504, %503, %cst_324 {dimension_numbers = #tpu.dot_dimension_numbers<[1], [0], [0], [1], [0, 0, 1, 1], [], []>} : vector<16x32xf32>, vector<32x32xf32>, vector<16x32xf32> -> vector<16x32xf32>
    %c1_325 = arith.constant 1 : index
    %c32_326 = arith.constant 32 : index
    %c0_327 = arith.constant 0 : index
    %506 = vector.load %arg30[%c1_325, %c32_326, %c0_327] : memref<3x64x32xf32, #tpu.memory_space<vmem>>, vector<1x32x32xf32>
    %507 = vector.shape_cast %506 : vector<1x32x32xf32> to vector<32x32xf32>
    %508 = vector.extract_strided_slice %501 {offsets = [1, 0], sizes = [16, 32], strides = [1, 1]} : vector<18x32xf32> to vector<16x32xf32>
    %cst_328 = arith.constant dense<0.000000e+00> : vector<16x32xf32>
    %509 = tpu.matmul %508, %507, %cst_328 {dimension_numbers = #tpu.dot_dimension_numbers<[1], [0], [0], [1], [0, 0, 1, 1], [], []>} : vector<16x32xf32>, vector<32x32xf32>, vector<16x32xf32> -> vector<16x32xf32>
    %510 = arith.addf %505, %509 : vector<16x32xf32>
    %c2_329 = arith.constant 2 : index
    %c32_330 = arith.constant 32 : index
    %c0_331 = arith.constant 0 : index
    %511 = vector.load %arg30[%c2_329, %c32_330, %c0_331] : memref<3x64x32xf32, #tpu.memory_space<vmem>>, vector<1x32x32xf32>
    %512 = vector.shape_cast %511 : vector<1x32x32xf32> to vector<32x32xf32>
    %513 = vector.extract_strided_slice %501 {offsets = [2, 0], sizes = [16, 32], strides = [1, 1]} : vector<18x32xf32> to vector<16x32xf32>
    %cst_332 = arith.constant dense<0.000000e+00> : vector<16x32xf32>
    %514 = tpu.matmul %513, %512, %cst_332 {dimension_numbers = #tpu.dot_dimension_numbers<[1], [0], [0], [1], [0, 0, 1, 1], [], []>} : vector<16x32xf32>, vector<32x32xf32>, vector<16x32xf32> -> vector<16x32xf32>
    %515 = arith.addf %510, %514 : vector<16x32xf32>
    %516 = arith.addf %499, %515 : vector<16x32xf32>
    %c0_333 = arith.constant 0 : index
    %c0_334 = arith.constant 0 : index
    %517 = vector.load %arg31[%c0_333, %c0_334] : memref<1x32xf32, #tpu.memory_space<vmem>>, vector<1x32xf32>
    %518 = vector.broadcast %517 : vector<1x32xf32> to vector<16x32xf32>
    %519 = arith.addf %516, %518 : vector<16x32xf32>
    %cst_335 = arith.constant 0.000000e+00 : f32
    %520 = vector.broadcast %cst_335 : f32 to vector<16x32xf32>
    %521 = arith.maximumf %519, %520 : vector<16x32xf32>
    %cst_336 = arith.constant 0.000000e+00 : f32
    %522 = vector.broadcast %cst_336 : f32 to vector<1x32xf32>
    %523 = tpu.concatenate %522, %521, %522 in 0 : vector<1x32xf32>, vector<16x32xf32>, vector<1x32xf32> -> vector<18x32xf32>
    %c0_337 = arith.constant 0 : index
    %c0_338 = arith.constant 0 : index
    %c0_339 = arith.constant 0 : index
    %524 = vector.load %arg32[%c0_337, %c0_338, %c0_339] : memref<3x32x16xf32, #tpu.memory_space<vmem>>, vector<1x32x16xf32>
    %525 = vector.shape_cast %524 : vector<1x32x16xf32> to vector<32x16xf32>
    %526 = vector.extract_strided_slice %523 {offsets = [0, 0], sizes = [16, 32], strides = [1, 1]} : vector<18x32xf32> to vector<16x32xf32>
    %cst_340 = arith.constant dense<0.000000e+00> : vector<16x16xf32>
    %527 = tpu.matmul %526, %525, %cst_340 {dimension_numbers = #tpu.dot_dimension_numbers<[1], [0], [0], [1], [0, 0, 1, 1], [], []>} : vector<16x32xf32>, vector<32x16xf32>, vector<16x16xf32> -> vector<16x16xf32>
    %c1_341 = arith.constant 1 : index
    %c0_342 = arith.constant 0 : index
    %c0_343 = arith.constant 0 : index
    %528 = vector.load %arg32[%c1_341, %c0_342, %c0_343] : memref<3x32x16xf32, #tpu.memory_space<vmem>>, vector<1x32x16xf32>
    %529 = vector.shape_cast %528 : vector<1x32x16xf32> to vector<32x16xf32>
    %530 = vector.extract_strided_slice %523 {offsets = [1, 0], sizes = [16, 32], strides = [1, 1]} : vector<18x32xf32> to vector<16x32xf32>
    %cst_344 = arith.constant dense<0.000000e+00> : vector<16x16xf32>
    %531 = tpu.matmul %530, %529, %cst_344 {dimension_numbers = #tpu.dot_dimension_numbers<[1], [0], [0], [1], [0, 0, 1, 1], [], []>} : vector<16x32xf32>, vector<32x16xf32>, vector<16x16xf32> -> vector<16x16xf32>
    %532 = arith.addf %527, %531 : vector<16x16xf32>
    %c2_345 = arith.constant 2 : index
    %c0_346 = arith.constant 0 : index
    %c0_347 = arith.constant 0 : index
    %533 = vector.load %arg32[%c2_345, %c0_346, %c0_347] : memref<3x32x16xf32, #tpu.memory_space<vmem>>, vector<1x32x16xf32>
    %534 = vector.shape_cast %533 : vector<1x32x16xf32> to vector<32x16xf32>
    %535 = vector.extract_strided_slice %523 {offsets = [2, 0], sizes = [16, 32], strides = [1, 1]} : vector<18x32xf32> to vector<16x32xf32>
    %cst_348 = arith.constant dense<0.000000e+00> : vector<16x16xf32>
    %536 = tpu.matmul %535, %534, %cst_348 {dimension_numbers = #tpu.dot_dimension_numbers<[1], [0], [0], [1], [0, 0, 1, 1], [], []>} : vector<16x32xf32>, vector<32x16xf32>, vector<16x16xf32> -> vector<16x16xf32>
    %537 = arith.addf %532, %536 : vector<16x16xf32>
    %c0_349 = arith.constant 0 : index
    %c0_350 = arith.constant 0 : index
    %538 = vector.load %arg33[%c0_349, %c0_350] : memref<1x16xf32, #tpu.memory_space<vmem>>, vector<1x16xf32>
    %539 = vector.broadcast %538 : vector<1x16xf32> to vector<16x16xf32>
    %540 = arith.addf %537, %539 : vector<16x16xf32>
    %cst_351 = arith.constant 0.000000e+00 : f32
    %541 = vector.broadcast %cst_351 : f32 to vector<16x16xf32>
    %542 = arith.maximumf %540, %541 : vector<16x16xf32>
    %543 = tpu.iota {dimensions = array<i32: 0>} : vector<32x16xi32>
    %544 = arith.sitofp %543 : vector<32x16xi32> to vector<32x16xf32>
    %545 = tpu.iota {dimensions = array<i32: 1>} : vector<32x16xi32>
    %546 = arith.sitofp %545 : vector<32x16xi32> to vector<32x16xf32>
    %cst_352 = arith.constant 5.000000e-01 : f32
    %547 = vector.broadcast %cst_352 : f32 to vector<32x16xf32>
    %548 = arith.mulf %547, %544 : vector<32x16xf32>
    %cst_353 = arith.constant 2.500000e-01 : f32
    %549 = vector.broadcast %cst_353 : f32 to vector<32x16xf32>
    %550 = arith.subf %548, %549 : vector<32x16xf32>
    %cst_354 = arith.constant 0.000000e+00 : f32
    %551 = vector.broadcast %cst_354 : f32 to vector<32x16xf32>
    %552 = arith.maximumf %550, %551 : vector<32x16xf32>
    %553 = math.floor %552 : vector<32x16xf32>
    %554 = arith.subf %552, %553 : vector<32x16xf32>
    %cst_355 = arith.constant 1.000000e+00 : f32
    %555 = vector.broadcast %cst_355 : f32 to vector<32x16xf32>
    %556 = arith.addf %553, %555 : vector<32x16xf32>
    %cst_356 = arith.constant 1.500000e+01 : f32
    %557 = vector.broadcast %cst_356 : f32 to vector<32x16xf32>
    %558 = arith.minimumf %556, %557 : vector<32x16xf32>
    %559 = arith.cmpf oeq, %546, %553 : vector<32x16xf32>
    %cst_357 = arith.constant 1.000000e+00 : f32
    %560 = vector.broadcast %cst_357 : f32 to vector<32x16xf32>
    %561 = arith.subf %560, %554 : vector<32x16xf32>
    %cst_358 = arith.constant 0.000000e+00 : f32
    %562 = vector.broadcast %cst_358 : f32 to vector<32x16xf32>
    %563 = arith.select %559, %561, %562 : vector<32x16xi1>, vector<32x16xf32>
    %564 = arith.cmpf oeq, %546, %558 : vector<32x16xf32>
    %cst_359 = arith.constant 0.000000e+00 : f32
    %565 = vector.broadcast %cst_359 : f32 to vector<32x16xf32>
    %566 = arith.select %564, %554, %565 : vector<32x16xi1>, vector<32x16xf32>
    %567 = arith.addf %563, %566 : vector<32x16xf32>
    %cst_360 = arith.constant dense<0.000000e+00> : vector<32x16xf32>
    %568 = tpu.matmul %567, %542, %cst_360 {dimension_numbers = #tpu.dot_dimension_numbers<[1], [0], [0], [1], [0, 0, 1, 1], [], []>} : vector<32x16xf32>, vector<16x16xf32>, vector<32x16xf32> -> vector<32x16xf32>
    %cst_361 = arith.constant 0.000000e+00 : f32
    %569 = vector.broadcast %cst_361 : f32 to vector<1x16xf32>
    %570 = tpu.concatenate %569, %568, %569 in 0 : vector<1x16xf32>, vector<32x16xf32>, vector<1x16xf32> -> vector<34x16xf32>
    %c0_362 = arith.constant 0 : index
    %c0_363 = arith.constant 0 : index
    %c0_364 = arith.constant 0 : index
    %571 = vector.load %arg34[%c0_362, %c0_363, %c0_364] : memref<3x32x16xf32, #tpu.memory_space<vmem>>, vector<1x16x16xf32>
    %572 = vector.shape_cast %571 : vector<1x16x16xf32> to vector<16x16xf32>
    %573 = vector.extract_strided_slice %570 {offsets = [0, 0], sizes = [32, 16], strides = [1, 1]} : vector<34x16xf32> to vector<32x16xf32>
    %cst_365 = arith.constant dense<0.000000e+00> : vector<32x16xf32>
    %574 = tpu.matmul %573, %572, %cst_365 {dimension_numbers = #tpu.dot_dimension_numbers<[1], [0], [0], [1], [0, 0, 1, 1], [], []>} : vector<32x16xf32>, vector<16x16xf32>, vector<32x16xf32> -> vector<32x16xf32>
    %c1_366 = arith.constant 1 : index
    %c0_367 = arith.constant 0 : index
    %c0_368 = arith.constant 0 : index
    %575 = vector.load %arg34[%c1_366, %c0_367, %c0_368] : memref<3x32x16xf32, #tpu.memory_space<vmem>>, vector<1x16x16xf32>
    %576 = vector.shape_cast %575 : vector<1x16x16xf32> to vector<16x16xf32>
    %577 = vector.extract_strided_slice %570 {offsets = [1, 0], sizes = [32, 16], strides = [1, 1]} : vector<34x16xf32> to vector<32x16xf32>
    %cst_369 = arith.constant dense<0.000000e+00> : vector<32x16xf32>
    %578 = tpu.matmul %577, %576, %cst_369 {dimension_numbers = #tpu.dot_dimension_numbers<[1], [0], [0], [1], [0, 0, 1, 1], [], []>} : vector<32x16xf32>, vector<16x16xf32>, vector<32x16xf32> -> vector<32x16xf32>
    %579 = arith.addf %574, %578 : vector<32x16xf32>
    %c2_370 = arith.constant 2 : index
    %c0_371 = arith.constant 0 : index
    %c0_372 = arith.constant 0 : index
    %580 = vector.load %arg34[%c2_370, %c0_371, %c0_372] : memref<3x32x16xf32, #tpu.memory_space<vmem>>, vector<1x16x16xf32>
    %581 = vector.shape_cast %580 : vector<1x16x16xf32> to vector<16x16xf32>
    %582 = vector.extract_strided_slice %570 {offsets = [2, 0], sizes = [32, 16], strides = [1, 1]} : vector<34x16xf32> to vector<32x16xf32>
    %cst_373 = arith.constant dense<0.000000e+00> : vector<32x16xf32>
    %583 = tpu.matmul %582, %581, %cst_373 {dimension_numbers = #tpu.dot_dimension_numbers<[1], [0], [0], [1], [0, 0, 1, 1], [], []>} : vector<32x16xf32>, vector<16x16xf32>, vector<32x16xf32> -> vector<32x16xf32>
    %584 = arith.addf %579, %583 : vector<32x16xf32>
    %cst_374 = arith.constant 0.000000e+00 : f32
    %585 = vector.broadcast %cst_374 : f32 to vector<1x16xf32>
    %586 = tpu.concatenate %585, %43, %585 in 0 : vector<1x16xf32>, vector<32x16xf32>, vector<1x16xf32> -> vector<34x16xf32>
    %c0_375 = arith.constant 0 : index
    %c16 = arith.constant 16 : index
    %c0_376 = arith.constant 0 : index
    %587 = vector.load %arg34[%c0_375, %c16, %c0_376] : memref<3x32x16xf32, #tpu.memory_space<vmem>>, vector<1x16x16xf32>
    %588 = vector.shape_cast %587 : vector<1x16x16xf32> to vector<16x16xf32>
    %589 = vector.extract_strided_slice %586 {offsets = [0, 0], sizes = [32, 16], strides = [1, 1]} : vector<34x16xf32> to vector<32x16xf32>
    %cst_377 = arith.constant dense<0.000000e+00> : vector<32x16xf32>
    %590 = tpu.matmul %589, %588, %cst_377 {dimension_numbers = #tpu.dot_dimension_numbers<[1], [0], [0], [1], [0, 0, 1, 1], [], []>} : vector<32x16xf32>, vector<16x16xf32>, vector<32x16xf32> -> vector<32x16xf32>
    %c1_378 = arith.constant 1 : index
    %c16_379 = arith.constant 16 : index
    %c0_380 = arith.constant 0 : index
    %591 = vector.load %arg34[%c1_378, %c16_379, %c0_380] : memref<3x32x16xf32, #tpu.memory_space<vmem>>, vector<1x16x16xf32>
    %592 = vector.shape_cast %591 : vector<1x16x16xf32> to vector<16x16xf32>
    %593 = vector.extract_strided_slice %586 {offsets = [1, 0], sizes = [32, 16], strides = [1, 1]} : vector<34x16xf32> to vector<32x16xf32>
    %cst_381 = arith.constant dense<0.000000e+00> : vector<32x16xf32>
    %594 = tpu.matmul %593, %592, %cst_381 {dimension_numbers = #tpu.dot_dimension_numbers<[1], [0], [0], [1], [0, 0, 1, 1], [], []>} : vector<32x16xf32>, vector<16x16xf32>, vector<32x16xf32> -> vector<32x16xf32>
    %595 = arith.addf %590, %594 : vector<32x16xf32>
    %c2_382 = arith.constant 2 : index
    %c16_383 = arith.constant 16 : index
    %c0_384 = arith.constant 0 : index
    %596 = vector.load %arg34[%c2_382, %c16_383, %c0_384] : memref<3x32x16xf32, #tpu.memory_space<vmem>>, vector<1x16x16xf32>
    %597 = vector.shape_cast %596 : vector<1x16x16xf32> to vector<16x16xf32>
    %598 = vector.extract_strided_slice %586 {offsets = [2, 0], sizes = [32, 16], strides = [1, 1]} : vector<34x16xf32> to vector<32x16xf32>
    %cst_385 = arith.constant dense<0.000000e+00> : vector<32x16xf32>
    %599 = tpu.matmul %598, %597, %cst_385 {dimension_numbers = #tpu.dot_dimension_numbers<[1], [0], [0], [1], [0, 0, 1, 1], [], []>} : vector<32x16xf32>, vector<16x16xf32>, vector<32x16xf32> -> vector<32x16xf32>
    %600 = arith.addf %595, %599 : vector<32x16xf32>
    %601 = arith.addf %584, %600 : vector<32x16xf32>
    %c0_386 = arith.constant 0 : index
    %c0_387 = arith.constant 0 : index
    %602 = vector.load %arg35[%c0_386, %c0_387] : memref<1x16xf32, #tpu.memory_space<vmem>>, vector<1x16xf32>
    %603 = vector.broadcast %602 : vector<1x16xf32> to vector<32x16xf32>
    %604 = arith.addf %601, %603 : vector<32x16xf32>
    %cst_388 = arith.constant 0.000000e+00 : f32
    %605 = vector.broadcast %cst_388 : f32 to vector<32x16xf32>
    %606 = arith.maximumf %604, %605 : vector<32x16xf32>
    %cst_389 = arith.constant 0.000000e+00 : f32
    %607 = vector.broadcast %cst_389 : f32 to vector<1x16xf32>
    %608 = tpu.concatenate %607, %606, %607 in 0 : vector<1x16xf32>, vector<32x16xf32>, vector<1x16xf32> -> vector<34x16xf32>
    %c0_390 = arith.constant 0 : index
    %c0_391 = arith.constant 0 : index
    %c0_392 = arith.constant 0 : index
    %609 = vector.load %arg36[%c0_390, %c0_391, %c0_392] : memref<3x16x16xf32, #tpu.memory_space<vmem>>, vector<1x16x16xf32>
    %610 = vector.shape_cast %609 : vector<1x16x16xf32> to vector<16x16xf32>
    %611 = vector.extract_strided_slice %608 {offsets = [0, 0], sizes = [32, 16], strides = [1, 1]} : vector<34x16xf32> to vector<32x16xf32>
    %cst_393 = arith.constant dense<0.000000e+00> : vector<32x16xf32>
    %612 = tpu.matmul %611, %610, %cst_393 {dimension_numbers = #tpu.dot_dimension_numbers<[1], [0], [0], [1], [0, 0, 1, 1], [], []>} : vector<32x16xf32>, vector<16x16xf32>, vector<32x16xf32> -> vector<32x16xf32>
    %c1_394 = arith.constant 1 : index
    %c0_395 = arith.constant 0 : index
    %c0_396 = arith.constant 0 : index
    %613 = vector.load %arg36[%c1_394, %c0_395, %c0_396] : memref<3x16x16xf32, #tpu.memory_space<vmem>>, vector<1x16x16xf32>
    %614 = vector.shape_cast %613 : vector<1x16x16xf32> to vector<16x16xf32>
    %615 = vector.extract_strided_slice %608 {offsets = [1, 0], sizes = [32, 16], strides = [1, 1]} : vector<34x16xf32> to vector<32x16xf32>
    %cst_397 = arith.constant dense<0.000000e+00> : vector<32x16xf32>
    %616 = tpu.matmul %615, %614, %cst_397 {dimension_numbers = #tpu.dot_dimension_numbers<[1], [0], [0], [1], [0, 0, 1, 1], [], []>} : vector<32x16xf32>, vector<16x16xf32>, vector<32x16xf32> -> vector<32x16xf32>
    %617 = arith.addf %612, %616 : vector<32x16xf32>
    %c2_398 = arith.constant 2 : index
    %c0_399 = arith.constant 0 : index
    %c0_400 = arith.constant 0 : index
    %618 = vector.load %arg36[%c2_398, %c0_399, %c0_400] : memref<3x16x16xf32, #tpu.memory_space<vmem>>, vector<1x16x16xf32>
    %619 = vector.shape_cast %618 : vector<1x16x16xf32> to vector<16x16xf32>
    %620 = vector.extract_strided_slice %608 {offsets = [2, 0], sizes = [32, 16], strides = [1, 1]} : vector<34x16xf32> to vector<32x16xf32>
    %cst_401 = arith.constant dense<0.000000e+00> : vector<32x16xf32>
    %621 = tpu.matmul %620, %619, %cst_401 {dimension_numbers = #tpu.dot_dimension_numbers<[1], [0], [0], [1], [0, 0, 1, 1], [], []>} : vector<32x16xf32>, vector<16x16xf32>, vector<32x16xf32> -> vector<32x16xf32>
    %622 = arith.addf %617, %621 : vector<32x16xf32>
    %c0_402 = arith.constant 0 : index
    %c0_403 = arith.constant 0 : index
    %623 = vector.load %arg37[%c0_402, %c0_403] : memref<1x16xf32, #tpu.memory_space<vmem>>, vector<1x16xf32>
    %624 = vector.broadcast %623 : vector<1x16xf32> to vector<32x16xf32>
    %625 = arith.addf %622, %624 : vector<32x16xf32>
    %cst_404 = arith.constant 0.000000e+00 : f32
    %626 = vector.broadcast %cst_404 : f32 to vector<32x16xf32>
    %627 = arith.maximumf %625, %626 : vector<32x16xf32>
    %c0_405 = arith.constant 0 : index
    %c0_406 = arith.constant 0 : index
    %c0_407 = arith.constant 0 : index
    %628 = vector.load %arg38[%c0_405, %c0_406, %c0_407] : memref<1x16x3xf32, #tpu.memory_space<vmem>>, vector<1x16x3xf32>
    %629 = vector.shape_cast %628 : vector<1x16x3xf32> to vector<16x3xf32>
    %cst_408 = arith.constant dense<0.000000e+00> : vector<32x3xf32>
    %630 = tpu.matmul %627, %629, %cst_408 {dimension_numbers = #tpu.dot_dimension_numbers<[1], [0], [0], [1], [0, 0, 1, 1], [], []>} : vector<32x16xf32>, vector<16x3xf32>, vector<32x3xf32> -> vector<32x3xf32>
    %c0_409 = arith.constant 0 : index
    %c0_410 = arith.constant 0 : index
    %631 = vector.load %arg39[%c0_409, %c0_410] : memref<1x3xf32, #tpu.memory_space<vmem>>, vector<1x3xf32>
    %632 = vector.broadcast %631 : vector<1x3xf32> to vector<32x3xf32>
    %633 = arith.addf %630, %632 : vector<32x3xf32>
    %c0_411 = arith.constant 0 : index
    %c0_412 = arith.constant 0 : index
    %c0_413 = arith.constant 0 : index
    %634 = vector.load %arg40[%c0_411, %c0_412, %c0_413] : memref<1x32x3xf32, #tpu.memory_space<vmem>>, vector<1x32x3xf32>
    %635 = vector.shape_cast %634 : vector<1x32x3xf32> to vector<32x3xf32>
    %636 = vector.shape_cast %633 : vector<32x3xf32> to vector<1x32x3xf32>
    tpu.vector_store %arg40[%c0_411, %c0_412, %c0_413], %636 {strides = array<i32>} : memref<1x32x3xf32, #tpu.memory_space<vmem>>, vector<1x32x3xf32>,
    return
  }
  func.func @transform_0(%arg0: i32) -> (i32, i32, i32) {
    %c0_i32 = arith.constant 0 : i32
    %c0_i32_0 = arith.constant 0 : i32
    %c0_i32_1 = arith.constant 0 : i32
    return %arg0, %c0_i32, %c0_i32_0 : i32, i32, i32
  }
  func.func @transform_1(%arg0: i32) -> (i32, i32, i32) {
    %c0_i32 = arith.constant 0 : i32
    %c0_i32_0 = arith.constant 0 : i32
    %c0_i32_1 = arith.constant 0 : i32
    %c0_i32_2 = arith.constant 0 : i32
    return %c0_i32, %c0_i32_0, %c0_i32_1 : i32, i32, i32
  }
  func.func @transform_2(%arg0: i32) -> (i32, i32) {
    %c0_i32 = arith.constant 0 : i32
    %c0_i32_0 = arith.constant 0 : i32
    %c0_i32_1 = arith.constant 0 : i32
    return %c0_i32, %c0_i32_0 : i32, i32
  }
  func.func @transform_3(%arg0: i32) -> (i32, i32, i32) {
    %c0_i32 = arith.constant 0 : i32
    %c0_i32_0 = arith.constant 0 : i32
    %c0_i32_1 = arith.constant 0 : i32
    %c0_i32_2 = arith.constant 0 : i32
    return %c0_i32, %c0_i32_0, %c0_i32_1 : i32, i32, i32
  }
  func.func @transform_4(%arg0: i32) -> (i32, i32) {
    %c0_i32 = arith.constant 0 : i32
    %c0_i32_0 = arith.constant 0 : i32
    %c0_i32_1 = arith.constant 0 : i32
    return %c0_i32, %c0_i32_0 : i32, i32
  }
  func.func @transform_5(%arg0: i32) -> (i32, i32, i32) {
    %c0_i32 = arith.constant 0 : i32
    %c0_i32_0 = arith.constant 0 : i32
    %c0_i32_1 = arith.constant 0 : i32
    %c0_i32_2 = arith.constant 0 : i32
    return %c0_i32, %c0_i32_0, %c0_i32_1 : i32, i32, i32
  }
  func.func @transform_6(%arg0: i32) -> (i32, i32) {
    %c0_i32 = arith.constant 0 : i32
    %c0_i32_0 = arith.constant 0 : i32
    %c0_i32_1 = arith.constant 0 : i32
    return %c0_i32, %c0_i32_0 : i32, i32
  }
  func.func @transform_7(%arg0: i32) -> (i32, i32, i32) {
    %c0_i32 = arith.constant 0 : i32
    %c0_i32_0 = arith.constant 0 : i32
    %c0_i32_1 = arith.constant 0 : i32
    %c0_i32_2 = arith.constant 0 : i32
    return %c0_i32, %c0_i32_0, %c0_i32_1 : i32, i32, i32
  }
  func.func @transform_8(%arg0: i32) -> (i32, i32) {
    %c0_i32 = arith.constant 0 : i32
    %c0_i32_0 = arith.constant 0 : i32
    %c0_i32_1 = arith.constant 0 : i32
    return %c0_i32, %c0_i32_0 : i32, i32
  }
  func.func @transform_9(%arg0: i32) -> (i32, i32, i32) {
    %c0_i32 = arith.constant 0 : i32
    %c0_i32_0 = arith.constant 0 : i32
    %c0_i32_1 = arith.constant 0 : i32
    %c0_i32_2 = arith.constant 0 : i32
    return %c0_i32, %c0_i32_0, %c0_i32_1 : i32, i32, i32
  }
  func.func @transform_10(%arg0: i32) -> (i32, i32) {
    %c0_i32 = arith.constant 0 : i32
    %c0_i32_0 = arith.constant 0 : i32
    %c0_i32_1 = arith.constant 0 : i32
    return %c0_i32, %c0_i32_0 : i32, i32
  }
  func.func @transform_11(%arg0: i32) -> (i32, i32, i32) {
    %c0_i32 = arith.constant 0 : i32
    %c0_i32_0 = arith.constant 0 : i32
    %c0_i32_1 = arith.constant 0 : i32
    %c0_i32_2 = arith.constant 0 : i32
    return %c0_i32, %c0_i32_0, %c0_i32_1 : i32, i32, i32
  }
  func.func @transform_12(%arg0: i32) -> (i32, i32) {
    %c0_i32 = arith.constant 0 : i32
    %c0_i32_0 = arith.constant 0 : i32
    %c0_i32_1 = arith.constant 0 : i32
    return %c0_i32, %c0_i32_0 : i32, i32
  }
  func.func @transform_13(%arg0: i32) -> (i32, i32, i32) {
    %c0_i32 = arith.constant 0 : i32
    %c0_i32_0 = arith.constant 0 : i32
    %c0_i32_1 = arith.constant 0 : i32
    %c0_i32_2 = arith.constant 0 : i32
    return %c0_i32, %c0_i32_0, %c0_i32_1 : i32, i32, i32
  }
  func.func @transform_14(%arg0: i32) -> (i32, i32) {
    %c0_i32 = arith.constant 0 : i32
    %c0_i32_0 = arith.constant 0 : i32
    %c0_i32_1 = arith.constant 0 : i32
    return %c0_i32, %c0_i32_0 : i32, i32
  }
  func.func @transform_15(%arg0: i32) -> (i32, i32, i32) {
    %c0_i32 = arith.constant 0 : i32
    %c0_i32_0 = arith.constant 0 : i32
    %c0_i32_1 = arith.constant 0 : i32
    %c0_i32_2 = arith.constant 0 : i32
    return %c0_i32, %c0_i32_0, %c0_i32_1 : i32, i32, i32
  }
  func.func @transform_16(%arg0: i32) -> (i32, i32) {
    %c0_i32 = arith.constant 0 : i32
    %c0_i32_0 = arith.constant 0 : i32
    %c0_i32_1 = arith.constant 0 : i32
    return %c0_i32, %c0_i32_0 : i32, i32
  }
  func.func @transform_17(%arg0: i32) -> (i32, i32, i32) {
    %c0_i32 = arith.constant 0 : i32
    %c0_i32_0 = arith.constant 0 : i32
    %c0_i32_1 = arith.constant 0 : i32
    %c0_i32_2 = arith.constant 0 : i32
    return %c0_i32, %c0_i32_0, %c0_i32_1 : i32, i32, i32
  }
  func.func @transform_18(%arg0: i32) -> (i32, i32) {
    %c0_i32 = arith.constant 0 : i32
    %c0_i32_0 = arith.constant 0 : i32
    %c0_i32_1 = arith.constant 0 : i32
    return %c0_i32, %c0_i32_0 : i32, i32
  }
  func.func @transform_19(%arg0: i32) -> (i32, i32, i32) {
    %c0_i32 = arith.constant 0 : i32
    %c0_i32_0 = arith.constant 0 : i32
    %c0_i32_1 = arith.constant 0 : i32
    %c0_i32_2 = arith.constant 0 : i32
    return %c0_i32, %c0_i32_0, %c0_i32_1 : i32, i32, i32
  }
  func.func @transform_20(%arg0: i32) -> (i32, i32) {
    %c0_i32 = arith.constant 0 : i32
    %c0_i32_0 = arith.constant 0 : i32
    %c0_i32_1 = arith.constant 0 : i32
    return %c0_i32, %c0_i32_0 : i32, i32
  }
  func.func @transform_21(%arg0: i32) -> (i32, i32, i32) {
    %c0_i32 = arith.constant 0 : i32
    %c0_i32_0 = arith.constant 0 : i32
    %c0_i32_1 = arith.constant 0 : i32
    %c0_i32_2 = arith.constant 0 : i32
    return %c0_i32, %c0_i32_0, %c0_i32_1 : i32, i32, i32
  }
  func.func @transform_22(%arg0: i32) -> (i32, i32) {
    %c0_i32 = arith.constant 0 : i32
    %c0_i32_0 = arith.constant 0 : i32
    %c0_i32_1 = arith.constant 0 : i32
    return %c0_i32, %c0_i32_0 : i32, i32
  }
  func.func @transform_23(%arg0: i32) -> (i32, i32, i32) {
    %c0_i32 = arith.constant 0 : i32
    %c0_i32_0 = arith.constant 0 : i32
    %c0_i32_1 = arith.constant 0 : i32
    %c0_i32_2 = arith.constant 0 : i32
    return %c0_i32, %c0_i32_0, %c0_i32_1 : i32, i32, i32
  }
  func.func @transform_24(%arg0: i32) -> (i32, i32) {
    %c0_i32 = arith.constant 0 : i32
    %c0_i32_0 = arith.constant 0 : i32
    %c0_i32_1 = arith.constant 0 : i32
    return %c0_i32, %c0_i32_0 : i32, i32
  }
  func.func @transform_25(%arg0: i32) -> (i32, i32, i32) {
    %c0_i32 = arith.constant 0 : i32
    %c0_i32_0 = arith.constant 0 : i32
    %c0_i32_1 = arith.constant 0 : i32
    %c0_i32_2 = arith.constant 0 : i32
    return %c0_i32, %c0_i32_0, %c0_i32_1 : i32, i32, i32
  }
  func.func @transform_26(%arg0: i32) -> (i32, i32) {
    %c0_i32 = arith.constant 0 : i32
    %c0_i32_0 = arith.constant 0 : i32
    %c0_i32_1 = arith.constant 0 : i32
    return %c0_i32, %c0_i32_0 : i32, i32
  }
  func.func @transform_27(%arg0: i32) -> (i32, i32, i32) {
    %c0_i32 = arith.constant 0 : i32
    %c0_i32_0 = arith.constant 0 : i32
    %c0_i32_1 = arith.constant 0 : i32
    %c0_i32_2 = arith.constant 0 : i32
    return %c0_i32, %c0_i32_0, %c0_i32_1 : i32, i32, i32
  }
  func.func @transform_28(%arg0: i32) -> (i32, i32) {
    %c0_i32 = arith.constant 0 : i32
    %c0_i32_0 = arith.constant 0 : i32
    %c0_i32_1 = arith.constant 0 : i32
    return %c0_i32, %c0_i32_0 : i32, i32
  }
  func.func @transform_29(%arg0: i32) -> (i32, i32, i32) {
    %c0_i32 = arith.constant 0 : i32
    %c0_i32_0 = arith.constant 0 : i32
    %c0_i32_1 = arith.constant 0 : i32
    %c0_i32_2 = arith.constant 0 : i32
    return %c0_i32, %c0_i32_0, %c0_i32_1 : i32, i32, i32
  }
  func.func @transform_30(%arg0: i32) -> (i32, i32) {
    %c0_i32 = arith.constant 0 : i32
    %c0_i32_0 = arith.constant 0 : i32
    %c0_i32_1 = arith.constant 0 : i32
    return %c0_i32, %c0_i32_0 : i32, i32
  }
  func.func @transform_31(%arg0: i32) -> (i32, i32, i32) {
    %c0_i32 = arith.constant 0 : i32
    %c0_i32_0 = arith.constant 0 : i32
    %c0_i32_1 = arith.constant 0 : i32
    %c0_i32_2 = arith.constant 0 : i32
    return %c0_i32, %c0_i32_0, %c0_i32_1 : i32, i32, i32
  }
  func.func @transform_32(%arg0: i32) -> (i32, i32) {
    %c0_i32 = arith.constant 0 : i32
    %c0_i32_0 = arith.constant 0 : i32
    %c0_i32_1 = arith.constant 0 : i32
    return %c0_i32, %c0_i32_0 : i32, i32
  }
  func.func @transform_33(%arg0: i32) -> (i32, i32, i32) {
    %c0_i32 = arith.constant 0 : i32
    %c0_i32_0 = arith.constant 0 : i32
    %c0_i32_1 = arith.constant 0 : i32
    %c0_i32_2 = arith.constant 0 : i32
    return %c0_i32, %c0_i32_0, %c0_i32_1 : i32, i32, i32
  }
  func.func @transform_34(%arg0: i32) -> (i32, i32) {
    %c0_i32 = arith.constant 0 : i32
    %c0_i32_0 = arith.constant 0 : i32
    %c0_i32_1 = arith.constant 0 : i32
    return %c0_i32, %c0_i32_0 : i32, i32
  }
  func.func @transform_35(%arg0: i32) -> (i32, i32, i32) {
    %c0_i32 = arith.constant 0 : i32
    %c0_i32_0 = arith.constant 0 : i32
    %c0_i32_1 = arith.constant 0 : i32
    %c0_i32_2 = arith.constant 0 : i32
    return %c0_i32, %c0_i32_0, %c0_i32_1 : i32, i32, i32
  }
  func.func @transform_36(%arg0: i32) -> (i32, i32) {
    %c0_i32 = arith.constant 0 : i32
    %c0_i32_0 = arith.constant 0 : i32
    %c0_i32_1 = arith.constant 0 : i32
    return %c0_i32, %c0_i32_0 : i32, i32
  }
  func.func @transform_37(%arg0: i32) -> (i32, i32, i32) {
    %c0_i32 = arith.constant 0 : i32
    %c0_i32_0 = arith.constant 0 : i32
    %c0_i32_1 = arith.constant 0 : i32
    %c0_i32_2 = arith.constant 0 : i32
    return %c0_i32, %c0_i32_0, %c0_i32_1 : i32, i32, i32
  }
  func.func @transform_38(%arg0: i32) -> (i32, i32) {
    %c0_i32 = arith.constant 0 : i32
    %c0_i32_0 = arith.constant 0 : i32
    %c0_i32_1 = arith.constant 0 : i32
    return %c0_i32, %c0_i32_0 : i32, i32
  }
  func.func @transform_39(%arg0: i32) -> (i32, i32, i32) {
    %c0_i32 = arith.constant 0 : i32
    %c0_i32_0 = arith.constant 0 : i32
    %c0_i32_1 = arith.constant 0 : i32
    return %arg0, %c0_i32, %c0_i32_0 : i32, i32, i32
  }
}

</mosaic_0001>

<llo_original>
// kernel: tpu_custom_call.1
$region0: #{tpu_custom_call.1}
  #allocation0 [shape = 'u32[]', space=smem, size = 0x4, offset = 0x4, fixed_abs, tag = 'smem constant byte address 0x4 - core index']
  #allocation1 [shape = 'u32[72,128]{1,0:T(1,128)}', space=vmem, size = 0x9000, scoped, tag = 'internal scratch']
  %s0 = inlined_call_operand.smem [shape: u32[40], index: -1, kind: input, shape index: {}]
  %s1 = sld [smem:[%s0]]
  %s2 = scalar_lea.smem %s0, 1
  %s3 = sld [smem:[%s2]]
  %s4 = scalar_lea.smem %s0, 2
  %s5 = sld [smem:[%s4]]
  %s6 = scalar_lea.smem %s0, 3
  %s7 = sld [smem:[%s6]]
  %s8 = scalar_lea.smem %s0, 4
  %s9 = sld [smem:[%s8]]
  %s10 = scalar_lea.smem %s0, 5
  %s11 = sld [smem:[%s10]]
  %s12 = scalar_lea.smem %s0, 6
  %s13 = sld [smem:[%s12]]
  %s14 = scalar_lea.smem %s0, 7
  %s15 = sld [smem:[%s14]]
  %s16 = scalar_lea.smem %s0, 8
  %s17 = sld [smem:[%s16]]
  %s18 = scalar_lea.smem %s0, 9
  %s19 = sld [smem:[%s18]]
  %s20 = scalar_lea.smem %s0, 10
  %s21 = sld [smem:[%s20]]
  %s22 = scalar_lea.smem %s0, 11
  %s23 = sld [smem:[%s22]]
  %s24 = scalar_lea.smem %s0, 12
  %s25 = sld [smem:[%s24]]
  %s26 = scalar_lea.smem %s0, 13
  %s27 = sld [smem:[%s26]]
  %s28 = scalar_lea.smem %s0, 14
  %s29 = sld [smem:[%s28]]
  %s30 = scalar_lea.smem %s0, 15
  %s31 = sld [smem:[%s30]]
  %s32 = scalar_lea.smem %s0, 16
  %s33 = sld [smem:[%s32]]
  %s34 = scalar_lea.smem %s0, 17
  %s35 = sld [smem:[%s34]]
  %s36 = scalar_lea.smem %s0, 18
  %s37 = sld [smem:[%s36]]
  %s38 = scalar_lea.smem %s0, 19
  %s39 = sld [smem:[%s38]]
  %s40 = scalar_lea.smem %s0, 20
  %s41 = sld [smem:[%s40]]
  %s42 = scalar_lea.smem %s0, 21
  %s43 = sld [smem:[%s42]]
  %s44 = scalar_lea.smem %s0, 22
  %s45 = sld [smem:[%s44]]
  %s46 = scalar_lea.smem %s0, 23
  %s47 = sld [smem:[%s46]]
  %s48 = scalar_lea.smem %s0, 24
  %s49 = sld [smem:[%s48]]
  %s50 = scalar_lea.smem %s0, 25
  %s51 = sld [smem:[%s50]]
  %s52 = scalar_lea.smem %s0, 26
  %s53 = sld [smem:[%s52]]
  %s54 = scalar_lea.smem %s0, 27
  %s55 = sld [smem:[%s54]]
  %s56 = scalar_lea.smem %s0, 28
  %s57 = sld [smem:[%s56]]
  %s58 = scalar_lea.smem %s0, 29
  %s59 = sld [smem:[%s58]]
  %s60 = scalar_lea.smem %s0, 30
  %s61 = sld [smem:[%s60]]
  %s62 = scalar_lea.smem %s0, 31
  %s63 = sld [smem:[%s62]]
  %s64 = scalar_lea.smem %s0, 32
  %s65 = sld [smem:[%s64]]
  %s66 = scalar_lea.smem %s0, 33
  %s67 = sld [smem:[%s66]]
  %s68 = scalar_lea.smem %s0, 34
  %s69 = sld [smem:[%s68]]
  %s70 = scalar_lea.smem %s0, 35
  %s71 = sld [smem:[%s70]]
  %s72 = scalar_lea.smem %s0, 36
  %s73 = sld [smem:[%s72]]
  %s74 = scalar_lea.smem %s0, 37
  %s75 = sld [smem:[%s74]]
  %s76 = scalar_lea.smem %s0, 38
  %s77 = sld [smem:[%s76]]
  %s78 = scalar_lea.smem %s0, 39
  %s79 = sld [smem:[%s78]]
  %s80 = sld [smem:[#allocation0]]
  $region209: #{tpu_custom_call.1} parent=0
    _
  %s82 = ssub.s32 1, %s80
  %s83 = scalar_select 0, %s82, %s80
  $region1: #{tpu_custom_call.1} parent=0
    #allocation2 [shape = 'u8[24576]{0}', space=vmem, size = 0x6000, scoped, tag = 'input window, operand 5, single buffered']
    #allocation3 [shape = 's32[2]{0}', space=sflag, size = 0x8, scoped, tag = 'scoped memory for tpu_custom_call.1']
    #allocation4 [shape = 'u8[196608]{0}', space=vmem, size = 0x30000, scoped, tag = 'input window, operand 15, single buffered']
    #allocation5 [shape = 's32[1]{0}', space=sflag, size = 0x4, scoped, tag = 'scoped memory for tpu_custom_call.1']
    #allocation6 [shape = 'u8[393216]{0}', space=vmem, size = 0x60000, scoped, tag = 'input window, operand 19, single buffered']
    #allocation7 [shape = 'u8[393216]{0}', space=vmem, size = 0x60000, scoped, tag = 'input window, operand 21, single buffered']
    #allocation8 [shape = 's32[1]{0}', space=sflag, size = 0x4, scoped, tag = 'scoped memory for tpu_custom_call.1']
    #allocation9 [shape = 'u8[24576]{0}', space=vmem, size = 0x6000, scoped, tag = 'input window, operand 35, single buffered']
    %84 = vsyncpa [#allocation3], 0
    %85 = vsyncpa [#allocation5], 0
    %86 = vsyncpa [#allocation8], 0
    loop: start=0, step=1, limit=4
    $region2: #{tpu_custom_call.1} parent=1 // loop_pre_header
      _
    $region3: #{tpu_custom_call.1} parent=1 // loop_header
      %s88 = sphi 0, %s92
      %p89 = scmp.ge.s32.totalorder %s88, 4
      %s98 = sphi 0, %s100
      %s101 = sphi 0, %s98
      %s102 = sphi 0, %s101
      %s118 = sphi 0, %s102
      %s122 = sphi 0, %s122
      %s124 = sphi 0, %s122
      %s125 = sphi 0, %s124
      %s139 = sphi 0, %s125
      %s143 = sphi 0, %s143
      %s145 = sphi 0, %s143
      %s146 = sphi 0, %s145
      %s160 = sphi 0, %s146
      %s164 = sphi 0, %s164
      %s166 = sphi 0, %s164
      %s167 = sphi 0, %s166
      %s181 = sphi 0, %s167
      %s185 = sphi 0, %s185
      %s187 = sphi 0, %s185
      %s188 = sphi 0, %s187
      %s202 = sphi 0, %s188
      %s206 = sphi 0, %s206
      %s208 = sphi 0, %s206
      %s209 = sphi 0, %s208
      %s223 = sphi 0, %s209
      %s227 = sphi 0, %s227
      %s229 = sphi 0, %s227
      %s230 = sphi 0, %s229
      %s244 = sphi 0, %s230
      %s248 = sphi 0, %s248
      %s250 = sphi 0, %s248
      %s251 = sphi 0, %s250
      %s265 = sphi 0, %s251
      %s269 = sphi 0, %s269
      %s271 = sphi 0, %s269
      %s272 = sphi 0, %s271
      %s286 = sphi 0, %s272
      %s290 = sphi 0, %s290
      %s292 = sphi 0, %s290
      %s293 = sphi 0, %s292
      %s307 = sphi 0, %s293
      %s311 = sphi 0, %s311
      %s313 = sphi 0, %s311
      %s314 = sphi 0, %s313
      %s328 = sphi 0, %s314
      %s332 = sphi 0, %s332
      %s334 = sphi 0, %s332
      %s335 = sphi 0, %s334
      %s349 = sphi 0, %s335
      %s353 = sphi 0, %s353
      %s355 = sphi 0, %s353
      %s356 = sphi 0, %s355
      %s370 = sphi 0, %s356
      %s374 = sphi 0, %s374
      %s376 = sphi 0, %s374
      %s377 = sphi 0, %s376
      %s391 = sphi 0, %s377
      %s395 = sphi 0, %s395
      %s397 = sphi 0, %s395
      %s398 = sphi 0, %s397
      %s412 = sphi 0, %s398
      %s416 = sphi 0, %s416
      %s418 = sphi 0, %s416
      %s419 = sphi 0, %s418
      %s433 = sphi 0, %s419
      %s437 = sphi 0, %s437
      %s439 = sphi 0, %s437
      %s440 = sphi 0, %s439
      %s454 = sphi 0, %s440
      %s458 = sphi 0, %s458
      %s460 = sphi 0, %s458
      %s461 = sphi 0, %s460
      %s475 = sphi 0, %s461
      %s479 = sphi 0, %s479
      %s481 = sphi 0, %s479
      %s482 = sphi 0, %s481
      %s496 = sphi 0, %s482
      %s500 = sphi 0, %s500
      %s502 = sphi 0, %s500
      %s503 = sphi 0, %s502
      %s517 = sphi 0, %s503
      %s521 = sphi 0, %s521
      %s523 = sphi 0, %s521
      %s524 = sphi 0, %s523
      %s538 = sphi 0, %s524
      %s542 = sphi 0, %s542
      %s544 = sphi 0, %s542
      %s545 = sphi 0, %s544
      %s559 = sphi 0, %s545
      %s563 = sphi 0, %s563
      %s565 = sphi 0, %s563
      %s566 = sphi 0, %s565
      %s580 = sphi 0, %s566
      %s584 = sphi 0, %s584
      %s586 = sphi 0, %s584
      %s587 = sphi 0, %s586
      %s601 = sphi 0, %s587
      %s605 = sphi 0, %s605
      %s607 = sphi 0, %s605
      %s608 = sphi 0, %s607
      %s622 = sphi 0, %s608
      %s626 = sphi 0, %s626
      %s628 = sphi 0, %s626
      %s629 = sphi 0, %s628
      %s643 = sphi 0, %s629
      %s647 = sphi 0, %s647
      %s649 = sphi 0, %s647
      %s650 = sphi 0, %s649
      %s664 = sphi 0, %s650
      %s668 = sphi 0, %s668
      %s670 = sphi 0, %s668
      %s671 = sphi 0, %s670
      %s685 = sphi 0, %s671
      %s689 = sphi 0, %s689
      %s691 = sphi 0, %s689
      %s692 = sphi 0, %s691
      %s706 = sphi 0, %s692
      %s710 = sphi 0, %s710
      %s712 = sphi 0, %s710
      %s713 = sphi 0, %s712
      %s727 = sphi 0, %s713
      %s731 = sphi 0, %s731
      %s733 = sphi 0, %s731
      %s734 = sphi 0, %s733
      %s748 = sphi 0, %s734
      %s752 = sphi 0, %s752
      %s754 = sphi 0, %s752
      %s755 = sphi 0, %s754
      %s769 = sphi 0, %s755
      %s773 = sphi 0, %s773
      %s775 = sphi 0, %s773
      %s776 = sphi 0, %s775
      %s790 = sphi 0, %s776
      %s794 = sphi 0, %s794
      %s796 = sphi 0, %s794
      %s797 = sphi 0, %s796
      %s811 = sphi 0, %s797
      %s815 = sphi 0, %s815
      %s817 = sphi 0, %s815
      %s818 = sphi 0, %s817
      %s832 = sphi 0, %s818
      %s836 = sphi 0, %s836
      %s838 = sphi 0, %s836
      %s839 = sphi 0, %s838
      %s853 = sphi 0, %s839
      %s857 = sphi 0, %s857
      %s859 = sphi 0, %s857
      %s860 = sphi 0, %s859
      %s874 = sphi 0, %s860
      %s878 = sphi 0, %s878
      %s880 = sphi 0, %s878
      %s881 = sphi 0, %s880
      %s895 = sphi 0, %s881
      %s899 = sphi 0, %s899
      %s901 = sphi 0, %s899
      %s902 = sphi 0, %s901
      %s916 = sphi 0, %s902
      %s922 = sphi 0, %s924
      %s925 = sphi 0, %s922
      %s926 = sphi 0, %s925
      %s942 = sphi 0, %s926
    $region4: #{tpu_custom_call.1} parent=1 // loop_header_branch
      %91 = sbr.rel (%p89) target = $region8
    $region5: #{tpu_custom_call.1} parent=1 // loop_body
      %s93 = ssub.s32 %s88, 1
      %s94 = ssub.s32 %s88, 2
      %s95 = sadd.s32 %s88, 1
      %s96 = ssub.s32 %s88, %s95
      %p97 = scmp.eq.s32.totalorder %s96, 0
      %s99 = sadd.s32 %s98, 1
      %s100 = scalar_select %p97, %s98, %s99
      %p103 = pneg %p97
      %p104 = scmp.eq.s32.totalorder %s88, 1
      %p105 = por %p103, %p104
      %p106 = scmp.ne.s32.totalorder %s98, %s101
      %p107 = scmp.eq.s32.totalorder %s88, 0
      %p108 = por %p106, %p107
      %p109 = scmp.ne.s32.totalorder %s98, %s101
      %p110 = scmp.eq.s32.totalorder %s93, 1
      %p111 = por %p109, %p110
      %p112 = scmp.ne.s32.totalorder %s101, %s102
      %p113 = scmp.eq.s32.totalorder %s93, 0
      %p114 = por %p112, %p113
      %p115 = scmp.ne.s32.totalorder %s101, %s102
      %p116 = scmp.eq.s32.totalorder %s94, 1
      %p117 = por %p115, %p116
      %p119 = scmp.ne.s32.totalorder %s102, %s118
      %p120 = scmp.eq.s32.totalorder %s94, 0
      %p121 = por %p119, %p120
      %s123 = sadd.s32 %s122, 1
      %p126 = scmp.eq.s32.totalorder %s88, 1
      %p127 = scmp.ne.s32.totalorder %s122, %s124
      %p128 = scmp.eq.s32.totalorder %s88, 0
      %p129 = por %p127, %p128
      %p130 = scmp.ne.s32.totalorder %s122, %s124
      %p131 = scmp.eq.s32.totalorder %s93, 1
      %p132 = por %p130, %p131
      %p133 = scmp.ne.s32.totalorder %s124, %s125
      %p134 = scmp.eq.s32.totalorder %s93, 0
      %p135 = por %p133, %p134
      %p136 = scmp.ne.s32.totalorder %s124, %s125
      %p137 = scmp.eq.s32.totalorder %s94, 1
      %p138 = por %p136, %p137
      %p140 = scmp.ne.s32.totalorder %s125, %s139
      %p141 = scmp.eq.s32.totalorder %s94, 0
      %p142 = por %p140, %p141
      %s144 = sadd.s32 %s143, 1
      %p147 = scmp.eq.s32.totalorder %s88, 1
      %p148 = scmp.ne.s32.totalorder %s143, %s145
      %p149 = scmp.eq.s32.totalorder %s88, 0
      %p150 = por %p148, %p149
      %p151 = scmp.ne.s32.totalorder %s143, %s145
      %p152 = scmp.eq.s32.totalorder %s93, 1
      %p153 = por %p151, %p152
      %p154 = scmp.ne.s32.totalorder %s145, %s146
      %p155 = scmp.eq.s32.totalorder %s93, 0
      %p156 = por %p154, %p155
      %p157 = scmp.ne.s32.totalorder %s145, %s146
      %p158 = scmp.eq.s32.totalorder %s94, 1
      %p159 = por %p157, %p158
      %p161 = scmp.ne.s32.totalorder %s146, %s160
      %p162 = scmp.eq.s32.totalorder %s94, 0
      %p163 = por %p161, %p162
      %s165 = sadd.s32 %s164, 1
      %p168 = scmp.eq.s32.totalorder %s88, 1
      %p169 = scmp.ne.s32.totalorder %s164, %s166
      %p170 = scmp.eq.s32.totalorder %s88, 0
      %p171 = por %p169, %p170
      %p172 = scmp.ne.s32.totalorder %s164, %s166
      %p173 = scmp.eq.s32.totalorder %s93, 1
      %p174 = por %p172, %p173
      %p175 = scmp.ne.s32.totalorder %s166, %s167
      %p176 = scmp.eq.s32.totalorder %s93, 0
      %p177 = por %p175, %p176
      %p178 = scmp.ne.s32.totalorder %s166, %s167
      %p179 = scmp.eq.s32.totalorder %s94, 1
      %p180 = por %p178, %p179
      %p182 = scmp.ne.s32.totalorder %s167, %s181
      %p183 = scmp.eq.s32.totalorder %s94, 0
      %p184 = por %p182, %p183
      %s186 = sadd.s32 %s185, 1
      %p189 = scmp.eq.s32.totalorder %s88, 1
      %p190 = scmp.ne.s32.totalorder %s185, %s187
      %p191 = scmp.eq.s32.totalorder %s88, 0
      %p192 = por %p190, %p191
      %p193 = scmp.ne.s32.totalorder %s185, %s187
      %p194 = scmp.eq.s32.totalorder %s93, 1
      %p195 = por %p193, %p194
      %p196 = scmp.ne.s32.totalorder %s187, %s188
      %p197 = scmp.eq.s32.totalorder %s93, 0
      %p198 = por %p196, %p197
      %p199 = scmp.ne.s32.totalorder %s187, %s188
      %p200 = scmp.eq.s32.totalorder %s94, 1
      %p201 = por %p199, %p200
      %p203 = scmp.ne.s32.totalorder %s188, %s202
      %p204 = scmp.eq.s32.totalorder %s94, 0
      %p205 = por %p203, %p204
      %s207 = sadd.s32 %s206, 1
      %p210 = scmp.eq.s32.totalorder %s88, 1
      %p211 = scmp.ne.s32.totalorder %s206, %s208
      %p212 = scmp.eq.s32.totalorder %s88, 0
      %p213 = por %p211, %p212
      %p214 = scmp.ne.s32.totalorder %s206, %s208
      %p215 = scmp.eq.s32.totalorder %s93, 1
      %p216 = por %p214, %p215
      %p217 = scmp.ne.s32.totalorder %s208, %s209
      %p218 = scmp.eq.s32.totalorder %s93, 0
      %p219 = por %p217, %p218
      %p220 = scmp.ne.s32.totalorder %s208, %s209
      %p221 = scmp.eq.s32.totalorder %s94, 1
      %p222 = por %p220, %p221
      %p224 = scmp.ne.s32.totalorder %s209, %s223
      %p225 = scmp.eq.s32.totalorder %s94, 0
      %p226 = por %p224, %p225
      %s228 = sadd.s32 %s227, 1
      %p231 = scmp.eq.s32.totalorder %s88, 1
      %p232 = scmp.ne.s32.totalorder %s227, %s229
      %p233 = scmp.eq.s32.totalorder %s88, 0
      %p234 = por %p232, %p233
      %p235 = scmp.ne.s32.totalorder %s227, %s229
      %p236 = scmp.eq.s32.totalorder %s93, 1
      %p237 = por %p235, %p236
      %p238 = scmp.ne.s32.totalorder %s229, %s230
      %p239 = scmp.eq.s32.totalorder %s93, 0
      %p240 = por %p238, %p239
      %p241 = scmp.ne.s32.totalorder %s229, %s230
      %p242 = scmp.eq.s32.totalorder %s94, 1
      %p243 = por %p241, %p242
      %p245 = scmp.ne.s32.totalorder %s230, %s244
      %p246 = scmp.eq.s32.totalorder %s94, 0
      %p247 = por %p245, %p246
      %s249 = sadd.s32 %s248, 1
      %p252 = scmp.eq.s32.totalorder %s88, 1
      %p253 = scmp.ne.s32.totalorder %s248, %s250
      %p254 = scmp.eq.s32.totalorder %s88, 0
      %p255 = por %p253, %p254
      %p256 = scmp.ne.s32.totalorder %s248, %s250
      %p257 = scmp.eq.s32.totalorder %s93, 1
      %p258 = por %p256, %p257
      %p259 = scmp.ne.s32.totalorder %s250, %s251
      %p260 = scmp.eq.s32.totalorder %s93, 0
      %p261 = por %p259, %p260
      %p262 = scmp.ne.s32.totalorder %s250, %s251
      %p263 = scmp.eq.s32.totalorder %s94, 1
      %p264 = por %p262, %p263
      %p266 = scmp.ne.s32.totalorder %s251, %s265
      %p267 = scmp.eq.s32.totalorder %s94, 0
      %p268 = por %p266, %p267
      %s270 = sadd.s32 %s269, 1
      %p273 = scmp.eq.s32.totalorder %s88, 1
      %p274 = scmp.ne.s32.totalorder %s269, %s271
      %p275 = scmp.eq.s32.totalorder %s88, 0
      %p276 = por %p274, %p275
      %p277 = scmp.ne.s32.totalorder %s269, %s271
      %p278 = scmp.eq.s32.totalorder %s93, 1
      %p279 = por %p277, %p278
      %p280 = scmp.ne.s32.totalorder %s271, %s272
      %p281 = scmp.eq.s32.totalorder %s93, 0
      %p282 = por %p280, %p281
      %p283 = scmp.ne.s32.totalorder %s271, %s272
      %p284 = scmp.eq.s32.totalorder %s94, 1
      %p285 = por %p283, %p284
      %p287 = scmp.ne.s32.totalorder %s272, %s286
      %p288 = scmp.eq.s32.totalorder %s94, 0
      %p289 = por %p287, %p288
      %s291 = sadd.s32 %s290, 1
      %p294 = scmp.eq.s32.totalorder %s88, 1
      %p295 = scmp.ne.s32.totalorder %s290, %s292
      %p296 = scmp.eq.s32.totalorder %s88, 0
      %p297 = por %p295, %p296
      %p298 = scmp.ne.s32.totalorder %s290, %s292
      %p299 = scmp.eq.s32.totalorder %s93, 1
      %p300 = por %p298, %p299
      %p301 = scmp.ne.s32.totalorder %s292, %s293
      %p302 = scmp.eq.s32.totalorder %s93, 0
      %p303 = por %p301, %p302
      %p304 = scmp.ne.s32.totalorder %s292, %s293
      %p305 = scmp.eq.s32.totalorder %s94, 1
      %p306 = por %p304, %p305
      %p308 = scmp.ne.s32.totalorder %s293, %s307
      %p309 = scmp.eq.s32.totalorder %s94, 0
      %p310 = por %p308, %p309
      %s312 = sadd.s32 %s311, 1
      %p315 = scmp.eq.s32.totalorder %s88, 1
      %p316 = scmp.ne.s32.totalorder %s311, %s313
      %p317 = scmp.eq.s32.totalorder %s88, 0
      %p318 = por %p316, %p317
      %p319 = scmp.ne.s32.totalorder %s311, %s313
      %p320 = scmp.eq.s32.totalorder %s93, 1
      %p321 = por %p319, %p320
      %p322 = scmp.ne.s32.totalorder %s313, %s314
      %p323 = scmp.eq.s32.totalorder %s93, 0
      %p324 = por %p322, %p323
      %p325 = scmp.ne.s32.totalorder %s313, %s314
      %p326 = scmp.eq.s32.totalorder %s94, 1
      %p327 = por %p325, %p326
      %p329 = scmp.ne.s32.totalorder %s314, %s328
      %p330 = scmp.eq.s32.totalorder %s94, 0
      %p331 = por %p329, %p330
      %s333 = sadd.s32 %s332, 1
      %p336 = scmp.eq.s32.totalorder %s88, 1
      %p337 = scmp.ne.s32.totalorder %s332, %s334
      %p338 = scmp.eq.s32.totalorder %s88, 0
      %p339 = por %p337, %p338
      %p340 = scmp.ne.s32.totalorder %s332, %s334
      %p341 = scmp.eq.s32.totalorder %s93, 1
      %p342 = por %p340, %p341
      %p343 = scmp.ne.s32.totalorder %s334, %s335
      %p344 = scmp.eq.s32.totalorder %s93, 0
      %p345 = por %p343, %p344
      %p346 = scmp.ne.s32.totalorder %s334, %s335
      %p347 = scmp.eq.s32.totalorder %s94, 1
      %p348 = por %p346, %p347
      %p350 = scmp.ne.s32.totalorder %s335, %s349
      %p351 = scmp.eq.s32.totalorder %s94, 0
      %p352 = por %p350, %p351
      %s354 = sadd.s32 %s353, 1
      %p357 = scmp.eq.s32.totalorder %s88, 1
      %p358 = scmp.ne.s32.totalorder %s353, %s355
      %p359 = scmp.eq.s32.totalorder %s88, 0
      %p360 = por %p358, %p359
      %p361 = scmp.ne.s32.totalorder %s353, %s355
      %p362 = scmp.eq.s32.totalorder %s93, 1
      %p363 = por %p361, %p362
      %p364 = scmp.ne.s32.totalorder %s355, %s356
      %p365 = scmp.eq.s32.totalorder %s93, 0
      %p366 = por %p364, %p365
      %p367 = scmp.ne.s32.totalorder %s355, %s356
      %p368 = scmp.eq.s32.totalorder %s94, 1
      %p369 = por %p367, %p368
      %p371 = scmp.ne.s32.totalorder %s356, %s370
      %p372 = scmp.eq.s32.totalorder %s94, 0
      %p373 = por %p371, %p372
      %s375 = sadd.s32 %s374, 1
      %p378 = scmp.eq.s32.totalorder %s88, 1
      %p379 = scmp.ne.s32.totalorder %s374, %s376
      %p380 = scmp.eq.s32.totalorder %s88, 0
      %p381 = por %p379, %p380
      %p382 = scmp.ne.s32.totalorder %s374, %s376
      %p383 = scmp.eq.s32.totalorder %s93, 1
      %p384 = por %p382, %p383
      %p385 = scmp.ne.s32.totalorder %s376, %s377
      %p386 = scmp.eq.s32.totalorder %s93, 0
      %p387 = por %p385, %p386
      %p388 = scmp.ne.s32.totalorder %s376, %s377
      %p389 = scmp.eq.s32.totalorder %s94, 1
      %p390 = por %p388, %p389
      %p392 = scmp.ne.s32.totalorder %s377, %s391
      %p393 = scmp.eq.s32.totalorder %s94, 0
      %p394 = por %p392, %p393
      %s396 = sadd.s32 %s395, 1
      %p399 = scmp.eq.s32.totalorder %s88, 1
      %p400 = scmp.ne.s32.totalorder %s395, %s397
      %p401 = scmp.eq.s32.totalorder %s88, 0
      %p402 = por %p400, %p401
      %p403 = scmp.ne.s32.totalorder %s395, %s397
      %p404 = scmp.eq.s32.totalorder %s93, 1
      %p405 = por %p403, %p404
      %p406 = scmp.ne.s32.totalorder %s397, %s398
      %p407 = scmp.eq.s32.totalorder %s93, 0
      %p408 = por %p406, %p407
      %p409 = scmp.ne.s32.totalorder %s397, %s398
      %p410 = scmp.eq.s32.totalorder %s94, 1
      %p411 = por %p409, %p410
      %p413 = scmp.ne.s32.totalorder %s398, %s412
      %p414 = scmp.eq.s32.totalorder %s94, 0
      %p415 = por %p413, %p414
      %s417 = sadd.s32 %s416, 1
      %p420 = scmp.eq.s32.totalorder %s88, 1
      %p421 = scmp.ne.s32.totalorder %s416, %s418
      %p422 = scmp.eq.s32.totalorder %s88, 0
      %p423 = por %p421, %p422
      %p424 = scmp.ne.s32.totalorder %s416, %s418
      %p425 = scmp.eq.s32.totalorder %s93, 1
      %p426 = por %p424, %p425
      %p427 = scmp.ne.s32.totalorder %s418, %s419
      %p428 = scmp.eq.s32.totalorder %s93, 0
      %p429 = por %p427, %p428
      %p430 = scmp.ne.s32.totalorder %s418, %s419
      %p431 = scmp.eq.s32.totalorder %s94, 1
      %p432 = por %p430, %p431
      %p434 = scmp.ne.s32.totalorder %s419, %s433
      %p435 = scmp.eq.s32.totalorder %s94, 0
      %p436 = por %p434, %p435
      %s438 = sadd.s32 %s437, 1
      %p441 = scmp.eq.s32.totalorder %s88, 1
      %p442 = scmp.ne.s32.totalorder %s437, %s439
      %p443 = scmp.eq.s32.totalorder %s88, 0
      %p444 = por %p442, %p443
      %p445 = scmp.ne.s32.totalorder %s437, %s439
      %p446 = scmp.eq.s32.totalorder %s93, 1
      %p447 = por %p445, %p446
      %p448 = scmp.ne.s32.totalorder %s439, %s440
      %p449 = scmp.eq.s32.totalorder %s93, 0
      %p450 = por %p448, %p449
      %p451 = scmp.ne.s32.totalorder %s439, %s440
      %p452 = scmp.eq.s32.totalorder %s94, 1
      %p453 = por %p451, %p452
      %p455 = scmp.ne.s32.totalorder %s440, %s454
      %p456 = scmp.eq.s32.totalorder %s94, 0
      %p457 = por %p455, %p456
      %s459 = sadd.s32 %s458, 1
      %p462 = scmp.eq.s32.totalorder %s88, 1
      %p463 = scmp.ne.s32.totalorder %s458, %s460
      %p464 = scmp.eq.s32.totalorder %s88, 0
      %p465 = por %p463, %p464
      %p466 = scmp.ne.s32.totalorder %s458, %s460
      %p467 = scmp.eq.s32.totalorder %s93, 1
      %p468 = por %p466, %p467
      %p469 = scmp.ne.s32.totalorder %s460, %s461
      %p470 = scmp.eq.s32.totalorder %s93, 0
      %p471 = por %p469, %p470
      %p472 = scmp.ne.s32.totalorder %s460, %s461
      %p473 = scmp.eq.s32.totalorder %s94, 1
      %p474 = por %p472, %p473
      %p476 = scmp.ne.s32.totalorder %s461, %s475
      %p477 = scmp.eq.s32.totalorder %s94, 0
      %p478 = por %p476, %p477
      %s480 = sadd.s32 %s479, 1
      %p483 = scmp.eq.s32.totalorder %s88, 1
      %p484 = scmp.ne.s32.totalorder %s479, %s481
      %p485 = scmp.eq.s32.totalorder %s88, 0
      %p486 = por %p484, %p485
      %p487 = scmp.ne.s32.totalorder %s479, %s481
      %p488 = scmp.eq.s32.totalorder %s93, 1
      %p489 = por %p487, %p488
      %p490 = scmp.ne.s32.totalorder %s481, %s482
      %p491 = scmp.eq.s32.totalorder %s93, 0
      %p492 = por %p490, %p491
      %p493 = scmp.ne.s32.totalorder %s481, %s482
      %p494 = scmp.eq.s32.totalorder %s94, 1
      %p495 = por %p493, %p494
      %p497 = scmp.ne.s32.totalorder %s482, %s496
      %p498 = scmp.eq.s32.totalorder %s94, 0
      %p499 = por %p497, %p498
      %s501 = sadd.s32 %s500, 1
      %p504 = scmp.eq.s32.totalorder %s88, 1
      %p505 = scmp.ne.s32.totalorder %s500, %s502
      %p506 = scmp.eq.s32.totalorder %s88, 0
      %p507 = por %p505, %p506
      %p508 = scmp.ne.s32.totalorder %s500, %s502
      %p509 = scmp.eq.s32.totalorder %s93, 1
      %p510 = por %p508, %p509
      %p511 = scmp.ne.s32.totalorder %s502, %s503
      %p512 = scmp.eq.s32.totalorder %s93, 0
      %p513 = por %p511, %p512
      %p514 = scmp.ne.s32.totalorder %s502, %s503
      %p515 = scmp.eq.s32.totalorder %s94, 1
      %p516 = por %p514, %p515
      %p518 = scmp.ne.s32.totalorder %s503, %s517
      %p519 = scmp.eq.s32.totalorder %s94, 0
      %p520 = por %p518, %p519
      %s522 = sadd.s32 %s521, 1
      %p525 = scmp.eq.s32.totalorder %s88, 1
      %p526 = scmp.ne.s32.totalorder %s521, %s523
      %p527 = scmp.eq.s32.totalorder %s88, 0
      %p528 = por %p526, %p527
      %p529 = scmp.ne.s32.totalorder %s521, %s523
      %p530 = scmp.eq.s32.totalorder %s93, 1
      %p531 = por %p529, %p530
      %p532 = scmp.ne.s32.totalorder %s523, %s524
      %p533 = scmp.eq.s32.totalorder %s93, 0
      %p534 = por %p532, %p533
      %p535 = scmp.ne.s32.totalorder %s523, %s524
      %p536 = scmp.eq.s32.totalorder %s94, 1
      %p537 = por %p535, %p536
      %p539 = scmp.ne.s32.totalorder %s524, %s538
      %p540 = scmp.eq.s32.totalorder %s94, 0
      %p541 = por %p539, %p540
      %s543 = sadd.s32 %s542, 1
      %p546 = scmp.eq.s32.totalorder %s88, 1
      %p547 = scmp.ne.s32.totalorder %s542, %s544
      %p548 = scmp.eq.s32.totalorder %s88, 0
      %p549 = por %p547, %p548
      %p550 = scmp.ne.s32.totalorder %s542, %s544
      %p551 = scmp.eq.s32.totalorder %s93, 1
      %p552 = por %p550, %p551
      %p553 = scmp.ne.s32.totalorder %s544, %s545
      %p554 = scmp.eq.s32.totalorder %s93, 0
      %p555 = por %p553, %p554
      %p556 = scmp.ne.s32.totalorder %s544, %s545
      %p557 = scmp.eq.s32.totalorder %s94, 1
      %p558 = por %p556, %p557
      %p560 = scmp.ne.s32.totalorder %s545, %s559
      %p561 = scmp.eq.s32.totalorder %s94, 0
      %p562 = por %p560, %p561
      %s564 = sadd.s32 %s563, 1
      %p567 = scmp.eq.s32.totalorder %s88, 1
      %p568 = scmp.ne.s32.totalorder %s563, %s565
      %p569 = scmp.eq.s32.totalorder %s88, 0
      %p570 = por %p568, %p569
      %p571 = scmp.ne.s32.totalorder %s563, %s565
      %p572 = scmp.eq.s32.totalorder %s93, 1
      %p573 = por %p571, %p572
      %p574 = scmp.ne.s32.totalorder %s565, %s566
      %p575 = scmp.eq.s32.totalorder %s93, 0
      %p576 = por %p574, %p575
      %p577 = scmp.ne.s32.totalorder %s565, %s566
      %p578 = scmp.eq.s32.totalorder %s94, 1
      %p579 = por %p577, %p578
      %p581 = scmp.ne.s32.totalorder %s566, %s580
      %p582 = scmp.eq.s32.totalorder %s94, 0
      %p583 = por %p581, %p582
      %s585 = sadd.s32 %s584, 1
      %p588 = scmp.eq.s32.totalorder %s88, 1
      %p589 = scmp.ne.s32.totalorder %s584, %s586
      %p590 = scmp.eq.s32.totalorder %s88, 0
      %p591 = por %p589, %p590
      %p592 = scmp.ne.s32.totalorder %s584, %s586
      %p593 = scmp.eq.s32.totalorder %s93, 1
      %p594 = por %p592, %p593
      %p595 = scmp.ne.s32.totalorder %s586, %s587
      %p596 = scmp.eq.s32.totalorder %s93, 0
      %p597 = por %p595, %p596
      %p598 = scmp.ne.s32.totalorder %s586, %s587
      %p599 = scmp.eq.s32.totalorder %s94, 1
      %p600 = por %p598, %p599
      %p602 = scmp.ne.s32.totalorder %s587, %s601
      %p603 = scmp.eq.s32.totalorder %s94, 0
      %p604 = por %p602, %p603
      %s606 = sadd.s32 %s605, 1
      %p609 = scmp.eq.s32.totalorder %s88, 1
      %p610 = scmp.ne.s32.totalorder %s605, %s607
      %p611 = scmp.eq.s32.totalorder %s88, 0
      %p612 = por %p610, %p611
      %p613 = scmp.ne.s32.totalorder %s605, %s607
      %p614 = scmp.eq.s32.totalorder %s93, 1
      %p615 = por %p613, %p614
      %p616 = scmp.ne.s32.totalorder %s607, %s608
      %p617 = scmp.eq.s32.totalorder %s93, 0
      %p618 = por %p616, %p617
      %p619 = scmp.ne.s32.totalorder %s607, %s608
      %p620 = scmp.eq.s32.totalorder %s94, 1
      %p621 = por %p619, %p620
      %p623 = scmp.ne.s32.totalorder %s608, %s622
      %p624 = scmp.eq.s32.totalorder %s94, 0
      %p625 = por %p623, %p624
      %s627 = sadd.s32 %s626, 1
      %p630 = scmp.eq.s32.totalorder %s88, 1
      %p631 = scmp.ne.s32.totalorder %s626, %s628
      %p632 = scmp.eq.s32.totalorder %s88, 0
      %p633 = por %p631, %p632
      %p634 = scmp.ne.s32.totalorder %s626, %s628
      %p635 = scmp.eq.s32.totalorder %s93, 1
      %p636 = por %p634, %p635
      %p637 = scmp.ne.s32.totalorder %s628, %s629
      %p638 = scmp.eq.s32.totalorder %s93, 0
      %p639 = por %p637, %p638
      %p640 = scmp.ne.s32.totalorder %s628, %s629
      %p641 = scmp.eq.s32.totalorder %s94, 1
      %p642 = por %p640, %p641
      %p644 = scmp.ne.s32.totalorder %s629, %s643
      %p645 = scmp.eq.s32.totalorder %s94, 0
      %p646 = por %p644, %p645
      %s648 = sadd.s32 %s647, 1
      %p651 = scmp.eq.s32.totalorder %s88, 1
      %p652 = scmp.ne.s32.totalorder %s647, %s649
      %p653 = scmp.eq.s32.totalorder %s88, 0
      %p654 = por %p652, %p653
      %p655 = scmp.ne.s32.totalorder %s647, %s649
      %p656 = scmp.eq.s32.totalorder %s93, 1
      %p657 = por %p655, %p656
      %p658 = scmp.ne.s32.totalorder %s649, %s650
      %p659 = scmp.eq.s32.totalorder %s93, 0
      %p660 = por %p658, %p659
      %p661 = scmp.ne.s32.totalorder %s649, %s650
      %p662 = scmp.eq.s32.totalorder %s94, 1
      %p663 = por %p661, %p662
      %p665 = scmp.ne.s32.totalorder %s650, %s664
      %p666 = scmp.eq.s32.totalorder %s94, 0
      %p667 = por %p665, %p666
      %s669 = sadd.s32 %s668, 1
      %p672 = scmp.eq.s32.totalorder %s88, 1
      %p673 = scmp.ne.s32.totalorder %s668, %s670
      %p674 = scmp.eq.s32.totalorder %s88, 0
      %p675 = por %p673, %p674
      %p676 = scmp.ne.s32.totalorder %s668, %s670
      %p677 = scmp.eq.s32.totalorder %s93, 1
      %p678 = por %p676, %p677
      %p679 = scmp.ne.s32.totalorder %s670, %s671
      %p680 = scmp.eq.s32.totalorder %s93, 0
      %p681 = por %p679, %p680
      %p682 = scmp.ne.s32.totalorder %s670, %s671
      %p683 = scmp.eq.s32.totalorder %s94, 1
      %p684 = por %p682, %p683
      %p686 = scmp.ne.s32.totalorder %s671, %s685
      %p687 = scmp.eq.s32.totalorder %s94, 0
      %p688 = por %p686, %p687
      %s690 = sadd.s32 %s689, 1
      %p693 = scmp.eq.s32.totalorder %s88, 1
      %p694 = scmp.ne.s32.totalorder %s689, %s691
      %p695 = scmp.eq.s32.totalorder %s88, 0
      %p696 = por %p694, %p695
      %p697 = scmp.ne.s32.totalorder %s689, %s691
      %p698 = scmp.eq.s32.totalorder %s93, 1
      %p699 = por %p697, %p698
      %p700 = scmp.ne.s32.totalorder %s691, %s692
      %p701 = scmp.eq.s32.totalorder %s93, 0
      %p702 = por %p700, %p701
      %p703 = scmp.ne.s32.totalorder %s691, %s692
      %p704 = scmp.eq.s32.totalorder %s94, 1
      %p705 = por %p703, %p704
      %p707 = scmp.ne.s32.totalorder %s692, %s706
      %p708 = scmp.eq.s32.totalorder %s94, 0
      %p709 = por %p707, %p708
      %s711 = sadd.s32 %s710, 1
      %p714 = scmp.eq.s32.totalorder %s88, 1
      %p715 = scmp.ne.s32.totalorder %s710, %s712
      %p716 = scmp.eq.s32.totalorder %s88, 0
      %p717 = por %p715, %p716
      %p718 = scmp.ne.s32.totalorder %s710, %s712
      %p719 = scmp.eq.s32.totalorder %s93, 1
      %p720 = por %p718, %p719
      %p721 = scmp.ne.s32.totalorder %s712, %s713
      %p722 = scmp.eq.s32.totalorder %s93, 0
      %p723 = por %p721, %p722
      %p724 = scmp.ne.s32.totalorder %s712, %s713
      %p725 = scmp.eq.s32.totalorder %s94, 1
      %p726 = por %p724, %p725
      %p728 = scmp.ne.s32.totalorder %s713, %s727
      %p729 = scmp.eq.s32.totalorder %s94, 0
      %p730 = por %p728, %p729
      %s732 = sadd.s32 %s731, 1
      %p735 = scmp.eq.s32.totalorder %s88, 1
      %p736 = scmp.ne.s32.totalorder %s731, %s733
      %p737 = scmp.eq.s32.totalorder %s88, 0
      %p738 = por %p736, %p737
      %p739 = scmp.ne.s32.totalorder %s731, %s733
      %p740 = scmp.eq.s32.totalorder %s93, 1
      %p741 = por %p739, %p740
      %p742 = scmp.ne.s32.totalorder %s733, %s734
      %p743 = scmp.eq.s32.totalorder %s93, 0
      %p744 = por %p742, %p743
      %p745 = scmp.ne.s32.totalorder %s733, %s734
      %p746 = scmp.eq.s32.totalorder %s94, 1
      %p747 = por %p745, %p746
      %p749 = scmp.ne.s32.totalorder %s734, %s748
      %p750 = scmp.eq.s32.totalorder %s94, 0
      %p751 = por %p749, %p750
      %s753 = sadd.s32 %s752, 1
      %p756 = scmp.eq.s32.totalorder %s88, 1
      %p757 = scmp.ne.s32.totalorder %s752, %s754
      %p758 = scmp.eq.s32.totalorder %s88, 0
      %p759 = por %p757, %p758
      %p760 = scmp.ne.s32.totalorder %s752, %s754
      %p761 = scmp.eq.s32.totalorder %s93, 1
      %p762 = por %p760, %p761
      %p763 = scmp.ne.s32.totalorder %s754, %s755
      %p764 = scmp.eq.s32.totalorder %s93, 0
      %p765 = por %p763, %p764
      %p766 = scmp.ne.s32.totalorder %s754, %s755
      %p767 = scmp.eq.s32.totalorder %s94, 1
      %p768 = por %p766, %p767
      %p770 = scmp.ne.s32.totalorder %s755, %s769
      %p771 = scmp.eq.s32.totalorder %s94, 0
      %p772 = por %p770, %p771
      %s774 = sadd.s32 %s773, 1
      %p777 = scmp.eq.s32.totalorder %s88, 1
      %p778 = scmp.ne.s32.totalorder %s773, %s775
      %p779 = scmp.eq.s32.totalorder %s88, 0
      %p780 = por %p778, %p779
      %p781 = scmp.ne.s32.totalorder %s773, %s775
      %p782 = scmp.eq.s32.totalorder %s93, 1
      %p783 = por %p781, %p782
      %p784 = scmp.ne.s32.totalorder %s775, %s776
      %p785 = scmp.eq.s32.totalorder %s93, 0
      %p786 = por %p784, %p785
      %p787 = scmp.ne.s32.totalorder %s775, %s776
      %p788 = scmp.eq.s32.totalorder %s94, 1
      %p789 = por %p787, %p788
      %p791 = scmp.ne.s32.totalorder %s776, %s790
      %p792 = scmp.eq.s32.totalorder %s94, 0
      %p793 = por %p791, %p792
      %s795 = sadd.s32 %s794, 1
      %p798 = scmp.eq.s32.totalorder %s88, 1
      %p799 = scmp.ne.s32.totalorder %s794, %s796
      %p800 = scmp.eq.s32.totalorder %s88, 0
      %p801 = por %p799, %p800
      %p802 = scmp.ne.s32.totalorder %s794, %s796
      %p803 = scmp.eq.s32.totalorder %s93, 1
      %p804 = por %p802, %p803
      %p805 = scmp.ne.s32.totalorder %s796, %s797
      %p806 = scmp.eq.s32.totalorder %s93, 0
      %p807 = por %p805, %p806
      %p808 = scmp.ne.s32.totalorder %s796, %s797
      %p809 = scmp.eq.s32.totalorder %s94, 1
      %p810 = por %p808, %p809
      %p812 = scmp.ne.s32.totalorder %s797, %s811
      %p813 = scmp.eq.s32.totalorder %s94, 0
      %p814 = por %p812, %p813
      %s816 = sadd.s32 %s815, 1
      %p819 = scmp.eq.s32.totalorder %s88, 1
      %p820 = scmp.ne.s32.totalorder %s815, %s817
      %p821 = scmp.eq.s32.totalorder %s88, 0
      %p822 = por %p820, %p821
      %p823 = scmp.ne.s32.totalorder %s815, %s817
      %p824 = scmp.eq.s32.totalorder %s93, 1
      %p825 = por %p823, %p824
      %p826 = scmp.ne.s32.totalorder %s817, %s818
      %p827 = scmp.eq.s32.totalorder %s93, 0
      %p828 = por %p826, %p827
      %p829 = scmp.ne.s32.totalorder %s817, %s818
      %p830 = scmp.eq.s32.totalorder %s94, 1
      %p831 = por %p829, %p830
      %p833 = scmp.ne.s32.totalorder %s818, %s832
      %p834 = scmp.eq.s32.totalorder %s94, 0
      %p835 = por %p833, %p834
      %s837 = sadd.s32 %s836, 1
      %p840 = scmp.eq.s32.totalorder %s88, 1
      %p841 = scmp.ne.s32.totalorder %s836, %s838
      %p842 = scmp.eq.s32.totalorder %s88, 0
      %p843 = por %p841, %p842
      %p844 = scmp.ne.s32.totalorder %s836, %s838
      %p845 = scmp.eq.s32.totalorder %s93, 1
      %p846 = por %p844, %p845
      %p847 = scmp.ne.s32.totalorder %s838, %s839
      %p848 = scmp.eq.s32.totalorder %s93, 0
      %p849 = por %p847, %p848
      %p850 = scmp.ne.s32.totalorder %s838, %s839
      %p851 = scmp.eq.s32.totalorder %s94, 1
      %p852 = por %p850, %p851
      %p854 = scmp.ne.s32.totalorder %s839, %s853
      %p855 = scmp.eq.s32.totalorder %s94, 0
      %p856 = por %p854, %p855
      %s858 = sadd.s32 %s857, 1
      %p861 = scmp.eq.s32.totalorder %s88, 1
      %p862 = scmp.ne.s32.totalorder %s857, %s859
      %p863 = scmp.eq.s32.totalorder %s88, 0
      %p864 = por %p862, %p863
      %p865 = scmp.ne.s32.totalorder %s857, %s859
      %p866 = scmp.eq.s32.totalorder %s93, 1
      %p867 = por %p865, %p866
      %p868 = scmp.ne.s32.totalorder %s859, %s860
      %p869 = scmp.eq.s32.totalorder %s93, 0
      %p870 = por %p868, %p869
      %p871 = scmp.ne.s32.totalorder %s859, %s860
      %p872 = scmp.eq.s32.totalorder %s94, 1
      %p873 = por %p871, %p872
      %p875 = scmp.ne.s32.totalorder %s860, %s874
      %p876 = scmp.eq.s32.totalorder %s94, 0
      %p877 = por %p875, %p876
      %s879 = sadd.s32 %s878, 1
      %p882 = scmp.eq.s32.totalorder %s88, 1
      %p883 = scmp.ne.s32.totalorder %s878, %s880
      %p884 = scmp.eq.s32.totalorder %s88, 0
      %p885 = por %p883, %p884
      %p886 = scmp.ne.s32.totalorder %s878, %s880
      %p887 = scmp.eq.s32.totalorder %s93, 1
      %p888 = por %p886, %p887
      %p889 = scmp.ne.s32.totalorder %s880, %s881
      %p890 = scmp.eq.s32.totalorder %s93, 0
      %p891 = por %p889, %p890
      %p892 = scmp.ne.s32.totalorder %s880, %s881
      %p893 = scmp.eq.s32.totalorder %s94, 1
      %p894 = por %p892, %p893
      %p896 = scmp.ne.s32.totalorder %s881, %s895
      %p897 = scmp.eq.s32.totalorder %s94, 0
      %p898 = por %p896, %p897
      %s900 = sadd.s32 %s899, 1
      %p903 = scmp.eq.s32.totalorder %s88, 1
      %p904 = scmp.ne.s32.totalorder %s899, %s901
      %p905 = scmp.eq.s32.totalorder %s88, 0
      %p906 = por %p904, %p905
      %p907 = scmp.ne.s32.totalorder %s899, %s901
      %p908 = scmp.eq.s32.totalorder %s93, 1
      %p909 = por %p907, %p908
      %p910 = scmp.ne.s32.totalorder %s901, %s902
      %p911 = scmp.eq.s32.totalorder %s93, 0
      %p912 = por %p910, %p911
      %p913 = scmp.ne.s32.totalorder %s901, %s902
      %p914 = scmp.eq.s32.totalorder %s94, 1
      %p915 = por %p913, %p914
      %p917 = scmp.ne.s32.totalorder %s902, %s916
      %p918 = scmp.eq.s32.totalorder %s94, 0
      %p919 = por %p917, %p918
      %s920 = ssub.s32 %s88, %s95
      %p921 = scmp.eq.s32.totalorder %s920, 0
      %s923 = sadd.s32 %s922, 1
      %s924 = scalar_select %p921, %s922, %s923
      %p927 = pneg %p921
      %p928 = scmp.eq.s32.totalorder %s88, 1
      %p929 = por %p927, %p928
      %p930 = scmp.ne.s32.totalorder %s922, %s925
      %p931 = scmp.eq.s32.totalorder %s88, 0
      %p932 = por %p930, %p931
      %p933 = scmp.ne.s32.totalorder %s922, %s925
      %p934 = scmp.eq.s32.totalorder %s93, 1
      %p935 = por %p933, %p934
      %p936 = scmp.ne.s32.totalorder %s925, %s926
      %p937 = scmp.eq.s32.totalorder %s93, 0
      %p938 = por %p936, %p937
      %p939 = scmp.ne.s32.totalorder %s925, %s926
      %p940 = scmp.eq.s32.totalorder %s94, 1
      %p941 = por %p939, %p940
      %p943 = scmp.ne.s32.totalorder %s926, %s942
      %p944 = scmp.eq.s32.totalorder %s94, 0
      %p945 = por %p943, %p944
      %p946 = scmp.le.s32.totalorder 1, %s88
      %p947 = scmp.lt.s32.totalorder %s88, 3
      %p948 = pnand %p946, %p947
      %p949 = pneg %p948
      // Predicated region
      $region9: #{tpu_custom_call.1} parent=5 // pred_check
        _
      $region10: #{tpu_custom_call.1} parent=5 // pred_check_branch
        %951 = sbr.rel (%p948) target = $region12
      $region11: #{tpu_custom_call.1} parent=5 // pred_region
        %s952 = ssub.s32 %s88, 1
        // Predicated region
        $region13: #{tpu_custom_call.1} parent=11 // pred_check
          %p953 = pneg %p135
        $region14: #{tpu_custom_call.1} parent=11 // pred_check_branch
          %955 = sbr.rel (%p953) target = $region16
        $region15: #{tpu_custom_call.1} parent=11 // pred_region
          _
        $region16: #{tpu_custom_call.1} parent=11 // pred_fallthru
          _
        // Predicated region
        $region17: #{tpu_custom_call.1} parent=11 // pred_check
          %p956 = pneg %p156
        $region18: #{tpu_custom_call.1} parent=11 // pred_check_branch
          %958 = sbr.rel (%p956) target = $region20
        $region19: #{tpu_custom_call.1} parent=11 // pred_region
          _
        $region20: #{tpu_custom_call.1} parent=11 // pred_fallthru
          _
        // Predicated region
        $region21: #{tpu_custom_call.1} parent=11 // pred_check
          %p959 = pneg %p177
        $region22: #{tpu_custom_call.1} parent=11 // pred_check_branch
          %961 = sbr.rel (%p959) target = $region24
        $region23: #{tpu_custom_call.1} parent=11 // pred_region
          _
        $region24: #{tpu_custom_call.1} parent=11 // pred_fallthru
          _
        // Predicated region
        $region25: #{tpu_custom_call.1} parent=11 // pred_check
          %p962 = pneg %p198
        $region26: #{tpu_custom_call.1} parent=11 // pred_check_branch
          %964 = sbr.rel (%p962) target = $region28
        $region27: #{tpu_custom_call.1} parent=11 // pred_region
          _
        $region28: #{tpu_custom_call.1} parent=11 // pred_fallthru
          _
        // Predicated region
        $region29: #{tpu_custom_call.1} parent=11 // pred_check
          %p965 = pneg %p219
        $region30: #{tpu_custom_call.1} parent=11 // pred_check_branch
          %967 = sbr.rel (%p965) target = $region32
        $region31: #{tpu_custom_call.1} parent=11 // pred_region
          %969 = vsyncadd [#allocation3], 0
          %s970 = sshll.u32 %s11, 4
          %s971 = int_to_ptr.hbm [resolvable:$true] %s970
          %s972 = sshll.u32 [#allocation2], 4
          %s973 = int_to_ptr.vmem [resolvable:$true] %s972
          %978 = dma.hbm_to_vmem [thread:$0]  %s971, 768, %s973, [#allocation3], 128, 128, 8
        $region32: #{tpu_custom_call.1} parent=11 // pred_fallthru
          _
        // Predicated region
        $region33: #{tpu_custom_call.1} parent=11 // pred_check
          %p979 = pneg %p240
        $region34: #{tpu_custom_call.1} parent=11 // pred_check_branch
          %981 = sbr.rel (%p979) target = $region36
        $region35: #{tpu_custom_call.1} parent=11 // pred_region
          _
        $region36: #{tpu_custom_call.1} parent=11 // pred_fallthru
          _
        // Predicated region
        $region37: #{tpu_custom_call.1} parent=11 // pred_check
          %p982 = pneg %p261
        $region38: #{tpu_custom_call.1} parent=11 // pred_check_branch
          %984 = sbr.rel (%p982) target = $region40
        $region39: #{tpu_custom_call.1} parent=11 // pred_region
          _
        $region40: #{tpu_custom_call.1} parent=11 // pred_fallthru
          _
        // Predicated region
        $region41: #{tpu_custom_call.1} parent=11 // pred_check
          %p985 = pneg %p282
        $region42: #{tpu_custom_call.1} parent=11 // pred_check_branch
          %987 = sbr.rel (%p985) target = $region44
        $region43: #{tpu_custom_call.1} parent=11 // pred_region
          _
        $region44: #{tpu_custom_call.1} parent=11 // pred_fallthru
          _
        // Predicated region
        $region45: #{tpu_custom_call.1} parent=11 // pred_check
          %p988 = pneg %p303
        $region46: #{tpu_custom_call.1} parent=11 // pred_check_branch
          %990 = sbr.rel (%p988) target = $region48
        $region47: #{tpu_custom_call.1} parent=11 // pred_region
          _
        $region48: #{tpu_custom_call.1} parent=11 // pred_fallthru
          _
        // Predicated region
        $region49: #{tpu_custom_call.1} parent=11 // pred_check
          %p991 = pneg %p324
        $region50: #{tpu_custom_call.1} parent=11 // pred_check_branch
          %993 = sbr.rel (%p991) target = $region52
        $region51: #{tpu_custom_call.1} parent=11 // pred_region
          _
        $region52: #{tpu_custom_call.1} parent=11 // pred_fallthru
          _
        // Predicated region
        $region53: #{tpu_custom_call.1} parent=11 // pred_check
          %p994 = pneg %p345
        $region54: #{tpu_custom_call.1} parent=11 // pred_check_branch
          %996 = sbr.rel (%p994) target = $region56
        $region55: #{tpu_custom_call.1} parent=11 // pred_region
          _
        $region56: #{tpu_custom_call.1} parent=11 // pred_fallthru
          _
        // Predicated region
        $region57: #{tpu_custom_call.1} parent=11 // pred_check
          %p997 = pneg %p366
        $region58: #{tpu_custom_call.1} parent=11 // pred_check_branch
          %999 = sbr.rel (%p997) target = $region60
        $region59: #{tpu_custom_call.1} parent=11 // pred_region
          _
        $region60: #{tpu_custom_call.1} parent=11 // pred_fallthru
          _
        // Predicated region
        $region61: #{tpu_custom_call.1} parent=11 // pred_check
          %p1000 = pneg %p387
        $region62: #{tpu_custom_call.1} parent=11 // pred_check_branch
          %1002 = sbr.rel (%p1000) target = $region64
        $region63: #{tpu_custom_call.1} parent=11 // pred_region
          _
        $region64: #{tpu_custom_call.1} parent=11 // pred_fallthru
          _
        // Predicated region
        $region65: #{tpu_custom_call.1} parent=11 // pred_check
          %p1003 = pneg %p408
        $region66: #{tpu_custom_call.1} parent=11 // pred_check_branch
          %1005 = sbr.rel (%p1003) target = $region68
        $region67: #{tpu_custom_call.1} parent=11 // pred_region
          _
        $region68: #{tpu_custom_call.1} parent=11 // pred_fallthru
          _
        // Predicated region
        $region69: #{tpu_custom_call.1} parent=11 // pred_check
          %p1006 = pneg %p429
        $region70: #{tpu_custom_call.1} parent=11 // pred_check_branch
          %1008 = sbr.rel (%p1006) target = $region72
        $region71: #{tpu_custom_call.1} parent=11 // pred_region
          %1010 = vsyncadd [#allocation5], 0
          %s1011 = sshll.u32 %s31, 4
          %s1012 = int_to_ptr.hbm [resolvable:$true] %s1011
          %s1013 = sshll.u32 [#allocation4], 4
          %s1014 = int_to_ptr.vmem [resolvable:$true] %s1013
          %1019 = dma.hbm_to_vmem [thread:$0]  %s1012, 6144, %s1014, [#allocation5], 128, 128, 8
        $region72: #{tpu_custom_call.1} parent=11 // pred_fallthru
          _
        // Predicated region
        $region73: #{tpu_custom_call.1} parent=11 // pred_check
          %p1020 = pneg %p450
        $region74: #{tpu_custom_call.1} parent=11 // pred_check_branch
          %1022 = sbr.rel (%p1020) target = $region76
        $region75: #{tpu_custom_call.1} parent=11 // pred_region
          _
        $region76: #{tpu_custom_call.1} parent=11 // pred_fallthru
          _
        // Predicated region
        $region77: #{tpu_custom_call.1} parent=11 // pred_check
          %p1023 = pneg %p471
        $region78: #{tpu_custom_call.1} parent=11 // pred_check_branch
          %1025 = sbr.rel (%p1023) target = $region80
        $region79: #{tpu_custom_call.1} parent=11 // pred_region
          _
        $region80: #{tpu_custom_call.1} parent=11 // pred_fallthru
          _
        // Predicated region
        $region81: #{tpu_custom_call.1} parent=11 // pred_check
          %p1026 = pneg %p492
        $region82: #{tpu_custom_call.1} parent=11 // pred_check_branch
          %1028 = sbr.rel (%p1026) target = $region84
        $region83: #{tpu_custom_call.1} parent=11 // pred_region
          _
        $region84: #{tpu_custom_call.1} parent=11 // pred_fallthru
          _
        // Predicated region
        $region85: #{tpu_custom_call.1} parent=11 // pred_check
          %p1029 = pneg %p513
        $region86: #{tpu_custom_call.1} parent=11 // pred_check_branch
          %1031 = sbr.rel (%p1029) target = $region88
        $region87: #{tpu_custom_call.1} parent=11 // pred_region
          %1033 = vsyncadd [#allocation5], 0
          %s1034 = sshll.u32 %s39, 4
          %s1035 = int_to_ptr.hbm [resolvable:$true] %s1034
          %s1036 = sshll.u32 [#allocation6], 4
          %s1037 = int_to_ptr.vmem [resolvable:$true] %s1036
          %1042 = dma.hbm_to_vmem [thread:$0]  %s1035, 12288, %s1037, [#allocation5], 128, 128, 8
        $region88: #{tpu_custom_call.1} parent=11 // pred_fallthru
          _
        // Predicated region
        $region89: #{tpu_custom_call.1} parent=11 // pred_check
          %p1043 = pneg %p534
        $region90: #{tpu_custom_call.1} parent=11 // pred_check_branch
          %1045 = sbr.rel (%p1043) target = $region92
        $region91: #{tpu_custom_call.1} parent=11 // pred_region
          _
        $region92: #{tpu_custom_call.1} parent=11 // pred_fallthru
          _
        // Predicated region
        $region93: #{tpu_custom_call.1} parent=11 // pred_check
          %p1046 = pneg %p555
        $region94: #{tpu_custom_call.1} parent=11 // pred_check_branch
          %1048 = sbr.rel (%p1046) target = $region96
        $region95: #{tpu_custom_call.1} parent=11 // pred_region
          %1050 = vsyncadd [#allocation8], 0
          %s1051 = sshll.u32 %s43, 4
          %s1052 = int_to_ptr.hbm [resolvable:$true] %s1051
          %s1053 = sshll.u32 [#allocation7], 4
          %s1054 = int_to_ptr.vmem [resolvable:$true] %s1053
          %1059 = dma.hbm_to_vmem [thread:$0]  %s1052, 12288, %s1054, [#allocation8], 128, 128, 8
        $region96: #{tpu_custom_call.1} parent=11 // pred_fallthru
          _
        // Predicated region
        $region97: #{tpu_custom_call.1} parent=11 // pred_check
          %p1060 = pneg %p576
        $region98: #{tpu_custom_call.1} parent=11 // pred_check_branch
          %1062 = sbr.rel (%p1060) target = $region100
        $region99: #{tpu_custom_call.1} parent=11 // pred_region
          _
        $region100: #{tpu_custom_call.1} parent=11 // pred_fallthru
          _
        // Predicated region
        $region101: #{tpu_custom_call.1} parent=11 // pred_check
          %p1063 = pneg %p597
        $region102: #{tpu_custom_call.1} parent=11 // pred_check_branch
          %1065 = sbr.rel (%p1063) target = $region104
        $region103: #{tpu_custom_call.1} parent=11 // pred_region
          _
        $region104: #{tpu_custom_call.1} parent=11 // pred_fallthru
          _
        // Predicated region
        $region105: #{tpu_custom_call.1} parent=11 // pred_check
          %p1066 = pneg %p618
        $region106: #{tpu_custom_call.1} parent=11 // pred_check_branch
          %1068 = sbr.rel (%p1066) target = $region108
        $region107: #{tpu_custom_call.1} parent=11 // pred_region
          _
        $region108: #{tpu_custom_call.1} parent=11 // pred_fallthru
          _
        // Predicated region
        $region109: #{tpu_custom_call.1} parent=11 // pred_check
          %p1069 = pneg %p639
        $region110: #{tpu_custom_call.1} parent=11 // pred_check_branch
          %1071 = sbr.rel (%p1069) target = $region112
        $region111: #{tpu_custom_call.1} parent=11 // pred_region
          _
        $region112: #{tpu_custom_call.1} parent=11 // pred_fallthru
          _
        // Predicated region
        $region113: #{tpu_custom_call.1} parent=11 // pred_check
          %p1072 = pneg %p660
        $region114: #{tpu_custom_call.1} parent=11 // pred_check_branch
          %1074 = sbr.rel (%p1072) target = $region116
        $region115: #{tpu_custom_call.1} parent=11 // pred_region
          _
        $region116: #{tpu_custom_call.1} parent=11 // pred_fallthru
          _
        // Predicated region
        $region117: #{tpu_custom_call.1} parent=11 // pred_check
          %p1075 = pneg %p681
        $region118: #{tpu_custom_call.1} parent=11 // pred_check_branch
          %1077 = sbr.rel (%p1075) target = $region120
        $region119: #{tpu_custom_call.1} parent=11 // pred_region
          _
        $region120: #{tpu_custom_call.1} parent=11 // pred_fallthru
          _
        // Predicated region
        $region121: #{tpu_custom_call.1} parent=11 // pred_check
          %p1078 = pneg %p702
        $region122: #{tpu_custom_call.1} parent=11 // pred_check_branch
          %1080 = sbr.rel (%p1078) target = $region124
        $region123: #{tpu_custom_call.1} parent=11 // pred_region
          _
        $region124: #{tpu_custom_call.1} parent=11 // pred_fallthru
          _
        // Predicated region
        $region125: #{tpu_custom_call.1} parent=11 // pred_check
          %p1081 = pneg %p723
        $region126: #{tpu_custom_call.1} parent=11 // pred_check_branch
          %1083 = sbr.rel (%p1081) target = $region128
        $region127: #{tpu_custom_call.1} parent=11 // pred_region
          _
        $region128: #{tpu_custom_call.1} parent=11 // pred_fallthru
          _
        // Predicated region
        $region129: #{tpu_custom_call.1} parent=11 // pred_check
          %p1084 = pneg %p744
        $region130: #{tpu_custom_call.1} parent=11 // pred_check_branch
          %1086 = sbr.rel (%p1084) target = $region132
        $region131: #{tpu_custom_call.1} parent=11 // pred_region
          _
        $region132: #{tpu_custom_call.1} parent=11 // pred_fallthru
          _
        // Predicated region
        $region133: #{tpu_custom_call.1} parent=11 // pred_check
          %p1087 = pneg %p765
        $region134: #{tpu_custom_call.1} parent=11 // pred_check_branch
          %1089 = sbr.rel (%p1087) target = $region136
        $region135: #{tpu_custom_call.1} parent=11 // pred_region
          _
        $region136: #{tpu_custom_call.1} parent=11 // pred_fallthru
          _
        // Predicated region
        $region137: #{tpu_custom_call.1} parent=11 // pred_check
          %p1090 = pneg %p786
        $region138: #{tpu_custom_call.1} parent=11 // pred_check_branch
          %1092 = sbr.rel (%p1090) target = $region140
        $region139: #{tpu_custom_call.1} parent=11 // pred_region
          _
        $region140: #{tpu_custom_call.1} parent=11 // pred_fallthru
          _
        // Predicated region
        $region141: #{tpu_custom_call.1} parent=11 // pred_check
          %p1093 = pneg %p807
        $region142: #{tpu_custom_call.1} parent=11 // pred_check_branch
          %1095 = sbr.rel (%p1093) target = $region144
        $region143: #{tpu_custom_call.1} parent=11 // pred_region
          _
        $region144: #{tpu_custom_call.1} parent=11 // pred_fallthru
          _
        // Predicated region
        $region145: #{tpu_custom_call.1} parent=11 // pred_check
          %p1096 = pneg %p828
        $region146: #{tpu_custom_call.1} parent=11 // pred_check_branch
          %1098 = sbr.rel (%p1096) target = $region148
        $region147: #{tpu_custom_call.1} parent=11 // pred_region
          _
        $region148: #{tpu_custom_call.1} parent=11 // pred_fallthru
          _
        // Predicated region
        $region149: #{tpu_custom_call.1} parent=11 // pred_check
          %p1099 = pneg %p849
        $region150: #{tpu_custom_call.1} parent=11 // pred_check_branch
          %1101 = sbr.rel (%p1099) target = $region152
        $region151: #{tpu_custom_call.1} parent=11 // pred_region
          %1103 = vsyncadd [#allocation8], 0
          %s1104 = sshll.u32 %s71, 4
          %s1105 = int_to_ptr.hbm [resolvable:$true] %s1104
          %s1106 = sshll.u32 [#allocation9], 4
          %s1107 = int_to_ptr.vmem [resolvable:$true] %s1106
          %1112 = dma.hbm_to_vmem [thread:$0]  %s1105, 768, %s1107, [#allocation8], 128, 128, 8
        $region152: #{tpu_custom_call.1} parent=11 // pred_fallthru
          _
        // Predicated region
        $region153: #{tpu_custom_call.1} parent=11 // pred_check
          %p1113 = pneg %p870
        $region154: #{tpu_custom_call.1} parent=11 // pred_check_branch
          %1115 = sbr.rel (%p1113) target = $region156
        $region155: #{tpu_custom_call.1} parent=11 // pred_region
          _
        $region156: #{tpu_custom_call.1} parent=11 // pred_fallthru
          _
        // Predicated region
        $region157: #{tpu_custom_call.1} parent=11 // pred_check
          %p1116 = pneg %p891
        $region158: #{tpu_custom_call.1} parent=11 // pred_check_branch
          %1118 = sbr.rel (%p1116) target = $region160
        $region159: #{tpu_custom_call.1} parent=11 // pred_region
          _
        $region160: #{tpu_custom_call.1} parent=11 // pred_fallthru
          _
        // Predicated region
        $region161: #{tpu_custom_call.1} parent=11 // pred_check
          %p1119 = pneg %p912
        $region162: #{tpu_custom_call.1} parent=11 // pred_check_branch
          %1121 = sbr.rel (%p1119) target = $region164
        $region163: #{tpu_custom_call.1} parent=11 // pred_region
          _
        $region164: #{tpu_custom_call.1} parent=11 // pred_fallthru
          _
      $region12: #{tpu_custom_call.1} parent=5 // pred_fallthru
        _
      %p1122 = scmp.lt.s32.totalorder %s88, 2
      // Predicated region
      $region165: #{tpu_custom_call.1} parent=5 // pred_check
        %p1123 = pneg %p1122
      $region166: #{tpu_custom_call.1} parent=5 // pred_check_branch
        %1125 = sbr.rel (%p1123) target = $region168
      $region167: #{tpu_custom_call.1} parent=5 // pred_region
        // Predicated region
        $region169: #{tpu_custom_call.1} parent=167 // pred_check
          %p1126 = pneg %p108
        $region170: #{tpu_custom_call.1} parent=167 // pred_check_branch
          %1128 = sbr.rel (%p1126) target = $region172
        $region171: #{tpu_custom_call.1} parent=167 // pred_region
          %p1129 = scmp.lt.s32.totalorder %s88, 1
          %s1130 = scalar_select %p1129, %s88, 1
          %s1131 = smul.addr %s1130, 4
          %s1132 = smul.addr %s1131, 8
          %s1133 = scalar_lea.vmem %s1, %s1132
        $region172: #{tpu_custom_call.1} parent=167 // pred_fallthru
          _
      $region168: #{tpu_custom_call.1} parent=5 // pred_fallthru
        _
      %p1134 = scmp.le.s32.totalorder 1, %s88
      %p1135 = scmp.lt.s32.totalorder %s88, 3
      %p1136 = pnand %p1134, %p1135
      %p1137 = pneg %p1136
      // Predicated region
      $region173: #{tpu_custom_call.1} parent=5 // pred_check
        _
      $region174: #{tpu_custom_call.1} parent=5 // pred_check_branch
        %1139 = sbr.rel (%p1136) target = $region176
      $region175: #{tpu_custom_call.1} parent=5 // pred_region
        %s1140 = ssub.s32 %s88, 1
        // Predicated region
        $region177: #{tpu_custom_call.1} parent=175 // pred_check
          %p1141 = pneg %p219
        $region178: #{tpu_custom_call.1} parent=175 // pred_check_branch
          %1143 = sbr.rel (%p1141) target = $region180
        $region179: #{tpu_custom_call.1} parent=175 // pred_region
          %1145 = dma.done [#allocation3], 768
        $region180: #{tpu_custom_call.1} parent=175 // pred_fallthru
          _
        // Predicated region
        $region181: #{tpu_custom_call.1} parent=175 // pred_check
          %p1146 = pneg %p429
        $region182: #{tpu_custom_call.1} parent=175 // pred_check_branch
          %1148 = sbr.rel (%p1146) target = $region184
        $region183: #{tpu_custom_call.1} parent=175 // pred_region
          %1150 = dma.done [#allocation5], 6144
        $region184: #{tpu_custom_call.1} parent=175 // pred_fallthru
          _
        // Predicated region
        $region185: #{tpu_custom_call.1} parent=175 // pred_check
          %p1151 = pneg %p513
        $region186: #{tpu_custom_call.1} parent=175 // pred_check_branch
          %1153 = sbr.rel (%p1151) target = $region188
        $region187: #{tpu_custom_call.1} parent=175 // pred_region
          %1155 = dma.done [#allocation5], 12288
        $region188: #{tpu_custom_call.1} parent=175 // pred_fallthru
          _
        // Predicated region
        $region189: #{tpu_custom_call.1} parent=175 // pred_check
          %p1156 = pneg %p555
        $region190: #{tpu_custom_call.1} parent=175 // pred_check_branch
          %1158 = sbr.rel (%p1156) target = $region192
        $region191: #{tpu_custom_call.1} parent=175 // pred_region
          %1160 = dma.done [#allocation8], 12288
        $region192: #{tpu_custom_call.1} parent=175 // pred_fallthru
          _
        // Predicated region
        $region193: #{tpu_custom_call.1} parent=175 // pred_check
          %p1161 = pneg %p849
        $region194: #{tpu_custom_call.1} parent=175 // pred_check_branch
          %1163 = sbr.rel (%p1161) target = $region196
        $region195: #{tpu_custom_call.1} parent=175 // pred_region
          %1165 = dma.done [#allocation8], 768
        $region196: #{tpu_custom_call.1} parent=175 // pred_fallthru
          _
        %p1166 = scmp.lt.s32.totalorder %s93, 1
        %s1167 = scalar_select %p1166, %s93, 1
        %s1168 = smul.addr %s1167, 4
        %s1169 = smul.addr %s1168, 8
        %s1170 = scalar_lea.vmem %s1, %s1169
        %p1171 = pneg %p114
        %p1172 = pneg %p111
        %p1173 = pneg %p135
        %p1174 = pneg %p132
        %p1175 = pneg %p156
        %p1176 = pneg %p153
        %p1177 = pneg %p177
        %p1178 = pneg %p174
        %p1179 = pneg %p198
        %p1180 = pneg %p195
        %p1181 = pneg %p219
        %p1182 = pneg %p216
        %p1183 = pneg %p240
        %p1184 = pneg %p237
        %p1185 = pneg %p261
        %p1186 = pneg %p258
        %p1187 = pneg %p282
        %p1188 = pneg %p279
        %p1189 = pneg %p303
        %p1190 = pneg %p300
        %p1191 = pneg %p324
        %p1192 = pneg %p321
        %p1193 = pneg %p345
        %p1194 = pneg %p342
        %p1195 = pneg %p366
        %p1196 = pneg %p363
        %p1197 = pneg %p387
        %p1198 = pneg %p384
        %p1199 = pneg %p408
        %p1200 = pneg %p405
        %p1201 = pneg %p429
        %p1202 = pneg %p426
        %p1203 = pneg %p450
        %p1204 = pneg %p447
        %p1205 = pneg %p471
        %p1206 = pneg %p468
        %p1207 = pneg %p492
        %p1208 = pneg %p489
        %p1209 = pneg %p513
        %p1210 = pneg %p510
        %p1211 = pneg %p534
        %p1212 = pneg %p531
        %p1213 = pneg %p555
        %p1214 = pneg %p552
        %p1215 = pneg %p576
        %p1216 = pneg %p573
        %p1217 = pneg %p597
        %p1218 = pneg %p594
        %p1219 = pneg %p618
        %p1220 = pneg %p615
        %p1221 = pneg %p639
        %p1222 = pneg %p636
        %p1223 = pneg %p660
        %p1224 = pneg %p657
        %p1225 = pneg %p681
        %p1226 = pneg %p678
        %p1227 = pneg %p702
        %p1228 = pneg %p699
        %p1229 = pneg %p723
        %p1230 = pneg %p720
        %p1231 = pneg %p744
        %p1232 = pneg %p741
        %p1233 = pneg %p765
        %p1234 = pneg %p762
        %p1235 = pneg %p786
        %p1236 = pneg %p783
        %p1237 = pneg %p807
        %p1238 = pneg %p804
        %p1239 = pneg %p828
        %p1240 = pneg %p825
        %p1241 = pneg %p849
        %p1242 = pneg %p846
        %p1243 = pneg %p870
        %p1244 = pneg %p867
        %p1245 = pneg %p891
        %p1246 = pneg %p888
        %p1247 = pneg %p912
        %p1248 = pneg %p909
        %p1249 = pneg %p938
        %p1250 = pneg %p935
        %p1251 = scmp.lt.s32.totalorder %s93, 1
        %s1252 = scalar_select %p1251, %s93, 1
        %s1253 = smul.addr %s1252, 4
        %s1254 = smul.addr %s1253, 8
        %s1255 = scalar_lea.vmem %s79, %s1254
        %p1256 = scmp.lt.s32.totalorder %s93, 1
        %s1257 = scalar_select %p1256, %s93, 1
        %s1258 = smul.addr %s1257, 4
        %s1259 = smul.addr %s1258, 8
        %s1260 = scalar_lea.vmem %s1, %s1259
        %p1261 = scmp.lt.s32.totalorder %s93, 1
        %s1262 = scalar_select %p1261, %s93, 1
        %s1263 = smul.addr %s1262, 4
        %s1264 = smul.addr %s1263, 8
        %s1265 = scalar_lea.vmem %s79, %s1264
        %v1266 = vld [vmem:[%s1260] sm:$0xff]
        %v1267 = vld [vmem:[%s1260 + $0x8] sm:$0xff]
        %v1268 = vld [vmem:[%s1260 + $0x10] sm:$0xff]
        %v1269 = vld [vmem:[%s1260 + $0x18] sm:$0xff]
        %vm1274 = vcmask 1040384
        %v1275 = vrot.slane %v1266, 7
        %v1276 = vrot.slane %v1267, 7
        %v1277 = vsel %vm1274, %v1275, %v1276
        %v1278 = vrot.slane %v1268, 7
        %v1279 = vsel %vm1274, %v1276, %v1278
        %v1280 = vrot.slane %v1269, 7
        %v1281 = vsel %vm1274, %v1278, %v1280
        %v1284 = vsel %vm1274, 0.0, %v1275
        %v1285 = vsel %vm1274, %v1280, 0.0
        %v1286 = vld [vmem:[%s3] sm:$0xf]
        %s1287 = scalar_lea.vmem %s3, 4
        %v1288 = vld [vmem:[%s1287] sm:$0xf]
        %vm1291 = vcmask 1046528
        %v1292 = vrot.slane %v1284, 1
        %v1293 = vrot.slane %v1277, 1
        %v1294 = vsel %vm1291, %v1292, %v1293
        %v1295 = vrot.slane %v1279, 1
        %v1296 = vsel %vm1291, %v1293, %v1295
        %v1297 = vrot.slane %v1281, 1
        %v1298 = vsel %vm1291, %v1295, %v1297
        %v1299 = vrot.slane %v1285, 1
        %v1300 = vsel %vm1291, %v1297, %v1299
        %vm1301 = vcmask 31744
        %v1302 = vsel %vm1301, %v1294, 0
        %v1304 = vsel %vm1301, %v1296, 0
        %v1306 = vsel %vm1301, %v1298, 0
        %v1308 = vsel %vm1301, %v1300, 0
        %vm1310 = vcmask 1043456
        %v1312 = vsel %vm1310, %v1288, 0
        %1314 = vmatpush.msra.mxu0 0.0
        %1315 = vmatpush.msra.mxu0 0.0
        %1316 = vmatpush.msra.mxu0 0.0
        %1317 = vmatpush.msra.mxu0 0.0
        %1318 = vmatpush.msra.mxu0 0.0
        %1319 = vmatpush.msra.mxu0 0.0
        %1320 = vmatpush.msra.mxu0 0.0
        %1321 = vmatpush.msra.mxu0 0.0
        %1322 = vmatpush.msra.mxu0 0.0
        %1323 = vmatpush.msra.mxu0 0.0
        %1324 = vmatpush.msra.mxu0 0.0
        %1325 = vmatpush.msra.mxu0 0.0
        %1326 = vmatpush.msra.mxu0 0.0
        %1327 = vmatpush.msra.mxu0 0.0
        %1328 = vmatpush.msra.mxu0 0.0
        %1329 = vmatpush.msra.mxu0 %v1312
        %1330 = vmatmul.f32.gmra.mxu0 %v1302
        %v1331 = vpop.f32.mrf.mxu0
        %v1332 = vadd.f32 0.0, %v1331
        %1333 = vmatmul.f32.gmra.mxu0 %v1304
        %v1334 = vpop.f32.mrf.mxu0
        %v1335 = vadd.f32 0.0, %v1334
        %1336 = vmatmul.f32.gmra.mxu0 %v1306
        %v1337 = vpop.f32.mrf.mxu0
        %v1338 = vadd.f32 0.0, %v1337
        %1339 = vmatmul.f32.gmra.mxu0 %v1308
        %v1340 = vpop.f32.mrf.mxu0
        %v1341 = vadd.f32 0.0, %v1340
        %1342 = vdwg.mxu0
        %v1343 = vsel %vm1301, %v1284, 0
        %v1345 = vsel %vm1301, %v1277, 0
        %v1347 = vsel %vm1301, %v1279, 0
        %v1349 = vsel %vm1301, %v1281, 0
        %v1352 = vsel %vm1310, %v1286, 0
        %1354 = vmatpush.msra.mxu0 0.0
        %1355 = vmatpush.msra.mxu0 0.0
        %1356 = vmatpush.msra.mxu0 0.0
        %1357 = vmatpush.msra.mxu0 0.0
        %1358 = vmatpush.msra.mxu0 0.0
        %1359 = vmatpush.msra.mxu0 0.0
        %1360 = vmatpush.msra.mxu0 0.0
        %1361 = vmatpush.msra.mxu0 0.0
        %1362 = vmatpush.msra.mxu0 0.0
        %1363 = vmatpush.msra.mxu0 0.0
        %1364 = vmatpush.msra.mxu0 0.0
        %1365 = vmatpush.msra.mxu0 0.0
        %1366 = vmatpush.msra.mxu0 0.0
        %1367 = vmatpush.msra.mxu0 0.0
        %1368 = vmatpush.msra.mxu0 0.0
        %1369 = vmatpush.msra.mxu0 %v1352
        %1370 = vmatmul.f32.gmra.mxu0 %v1343
        %v1371 = vpop.f32.mrf.mxu0
        %v1372 = vadd.f32 %v1332, %v1371
        %1373 = vmatmul.f32.gmra.mxu0 %v1345
        %v1374 = vpop.f32.mrf.mxu0
        %v1375 = vadd.f32 %v1335, %v1374
        %1376 = vmatmul.f32.gmra.mxu0 %v1347
        %v1377 = vpop.f32.mrf.mxu0
        %v1378 = vadd.f32 %v1338, %v1377
        %1379 = vmatmul.f32.gmra.mxu0 %v1349
        %v1380 = vpop.f32.mrf.mxu0
        %v1381 = vadd.f32 %v1341, %v1380
        %1382 = vdwg.mxu0
        %s1383 = scalar_lea.vmem %s3, 8
        %v1384 = vld [vmem:[%s1383] sm:$0xf]
        %vm1385 = vcmask 1045504
        %v1386 = vrot.slane %v1284, 2
        %v1387 = vrot.slane %v1277, 2
        %v1388 = vsel %vm1385, %v1386, %v1387
        %v1389 = vrot.slane %v1279, 2
        %v1390 = vsel %vm1385, %v1387, %v1389
        %v1391 = vrot.slane %v1281, 2
        %v1392 = vsel %vm1385, %v1389, %v1391
        %v1393 = vrot.slane %v1285, 2
        %v1394 = vsel %vm1385, %v1391, %v1393
        %v1395 = vsel %vm1301, %v1388, 0
        %v1397 = vsel %vm1301, %v1390, 0
        %v1399 = vsel %vm1301, %v1392, 0
        %v1401 = vsel %vm1301, %v1394, 0
        %v1404 = vsel %vm1310, %v1384, 0
        %1406 = vmatpush.msra.mxu0 0.0
        %1407 = vmatpush.msra.mxu0 0.0
        %1408 = vmatpush.msra.mxu0 0.0
        %1409 = vmatpush.msra.mxu0 0.0
        %1410 = vmatpush.msra.mxu0 0.0
        %1411 = vmatpush.msra.mxu0 0.0
        %1412 = vmatpush.msra.mxu0 0.0
        %1413 = vmatpush.msra.mxu0 0.0
        %1414 = vmatpush.msra.mxu0 0.0
        %1415 = vmatpush.msra.mxu0 0.0
        %1416 = vmatpush.msra.mxu0 0.0
        %1417 = vmatpush.msra.mxu0 0.0
        %1418 = vmatpush.msra.mxu0 0.0
        %1419 = vmatpush.msra.mxu0 0.0
        %1420 = vmatpush.msra.mxu0 0.0
        %1421 = vmatpush.msra.mxu0 %v1404
        %1422 = vmatmul.f32.gmra.mxu0 %v1395
        %v1423 = vpop.f32.mrf.mxu0
        %v1424 = vadd.f32 0.0, %v1423
        %1425 = vmatmul.f32.gmra.mxu0 %v1397
        %v1426 = vpop.f32.mrf.mxu0
        %v1427 = vadd.f32 0.0, %v1426
        %1428 = vmatmul.f32.gmra.mxu0 %v1399
        %v1429 = vpop.f32.mrf.mxu0
        %v1430 = vadd.f32 0.0, %v1429
        %1431 = vmatmul.f32.gmra.mxu0 %v1401
        %v1432 = vpop.f32.mrf.mxu0
        %v1433 = vadd.f32 0.0, %v1432
        %1434 = vdwg.mxu0
        %v1435 = vadd.f32 %v1372, %v1424
        %v1436 = vadd.f32 %v1375, %v1427
        %v1437 = vadd.f32 %v1378, %v1430
        %v1438 = vadd.f32 %v1381, %v1433
        %v1439 = vld [vmem:[%s5] sm:$0x1]
        %v1441 = vperm.slane %v1439, 0
        %v1443 = vadd.f32 %v1435, %v1441
        %v1444 = vadd.f32 %v1436, %v1441
        %v1445 = vadd.f32 %v1437, %v1441
        %v1446 = vadd.f32 %v1438, %v1441
        %v1447 = vmax.f32 %v1443, 0.0
        %v1448 = vmax.f32 %v1444, 0.0
        %v1449 = vmax.f32 %v1445, 0.0
        %v1450 = vmax.f32 %v1446, 0.0
        %v1455 = vrot.slane %v1447, 7
        %v1456 = vrot.slane %v1448, 7
        %v1457 = vsel %vm1274, %v1455, %v1456
        %v1458 = vrot.slane %v1449, 7
        %v1459 = vsel %vm1274, %v1456, %v1458
        %v1460 = vrot.slane %v1450, 7
        %v1461 = vsel %vm1274, %v1458, %v1460
        %v1464 = vsel %vm1274, 0.0, %v1455
        %v1465 = vsel %vm1274, %v1460, 0.0
        %v1466 = vld [vmem:[%s7] sm:$0xff]
        %v1467 = vld [vmem:[%s7 + $0x8] sm:$0xff]
        %s1468 = scalar_lea.vmem %s7, 16
        %v1469 = vld [vmem:[%s1468] sm:$0xff]
        %v1470 = vld [vmem:[%s1468 + $0x8] sm:$0xff]
        %v1473 = vrot.slane %v1464, 1
        %v1474 = vrot.slane %v1457, 1
        %v1475 = vsel %vm1291, %v1473, %v1474
        %v1476 = vrot.slane %v1459, 1
        %v1477 = vsel %vm1291, %v1474, %v1476
        %v1478 = vrot.slane %v1461, 1
        %v1479 = vsel %vm1291, %v1476, %v1478
        %v1480 = vrot.slane %v1465, 1
        %v1481 = vsel %vm1291, %v1478, %v1480
        %vm1482 = vcmask 130048
        %v1483 = vsel %vm1482, %v1475, 0
        %v1485 = vsel %vm1482, %v1477, 0
        %v1487 = vsel %vm1482, %v1479, 0
        %v1489 = vsel %vm1482, %v1481, 0
        %1491 = vmatpush.msra.mxu0 0.0
        %1492 = vmatpush.msra.mxu0 0.0
        %1493 = vmatpush.msra.mxu0 0.0
        %1494 = vmatpush.msra.mxu0 0.0
        %1495 = vmatpush.msra.mxu0 0.0
        %1496 = vmatpush.msra.mxu0 0.0
        %1497 = vmatpush.msra.mxu0 0.0
        %1498 = vmatpush.msra.mxu0 0.0
        %1499 = vmatpush.msra.mxu0 0.0
        %1500 = vmatpush.msra.mxu0 0.0
        %1501 = vmatpush.msra.mxu0 0.0
        %1502 = vmatpush.msra.mxu0 0.0
        %1503 = vmatpush.msra.mxu0 0.0
        %1504 = vmatpush.msra.mxu0 0.0
        %1505 = vmatpush.msra.mxu0 %v1470
        %1506 = vmatpush.msra.mxu0 %v1469
        %1507 = vmatmul.f32.gmra.mxu0 %v1483
        %v1508 = vpop.f32.mrf.mxu0
        %v1509 = vadd.f32 0.0, %v1508
        %1510 = vmatmul.f32.gmra.mxu0 %v1485
        %v1511 = vpop.f32.mrf.mxu0
        %v1512 = vadd.f32 0.0, %v1511
        %1513 = vmatmul.f32.gmra.mxu0 %v1487
        %v1514 = vpop.f32.mrf.mxu0
        %v1515 = vadd.f32 0.0, %v1514
        %1516 = vmatmul.f32.gmra.mxu0 %v1489
        %v1517 = vpop.f32.mrf.mxu0
        %v1518 = vadd.f32 0.0, %v1517
        %1519 = vdwg.mxu0
        %v1520 = vsel %vm1482, %v1464, 0
        %v1522 = vsel %vm1482, %v1457, 0
        %v1524 = vsel %vm1482, %v1459, 0
        %v1526 = vsel %vm1482, %v1461, 0
        %1528 = vmatpush.msra.mxu0 0.0
        %1529 = vmatpush.msra.mxu0 0.0
        %1530 = vmatpush.msra.mxu0 0.0
        %1531 = vmatpush.msra.mxu0 0.0
        %1532 = vmatpush.msra.mxu0 0.0
        %1533 = vmatpush.msra.mxu0 0.0
        %1534 = vmatpush.msra.mxu0 0.0
        %1535 = vmatpush.msra.mxu0 0.0
        %1536 = vmatpush.msra.mxu0 0.0
        %1537 = vmatpush.msra.mxu0 0.0
        %1538 = vmatpush.msra.mxu0 0.0
        %1539 = vmatpush.msra.mxu0 0.0
        %1540 = vmatpush.msra.mxu0 0.0
        %1541 = vmatpush.msra.mxu0 0.0
        %1542 = vmatpush.msra.mxu0 %v1467
        %1543 = vmatpush.msra.mxu0 %v1466
        %1544 = vmatmul.f32.gmra.mxu0 %v1520
        %v1545 = vpop.f32.mrf.mxu0
        %v1546 = vadd.f32 %v1509, %v1545
        %1547 = vmatmul.f32.gmra.mxu0 %v1522
        %v1548 = vpop.f32.mrf.mxu0
        %v1549 = vadd.f32 %v1512, %v1548
        %1550 = vmatmul.f32.gmra.mxu0 %v1524
        %v1551 = vpop.f32.mrf.mxu0
        %v1552 = vadd.f32 %v1515, %v1551
        %1553 = vmatmul.f32.gmra.mxu0 %v1526
        %v1554 = vpop.f32.mrf.mxu0
        %v1555 = vadd.f32 %v1518, %v1554
        %1556 = vdwg.mxu0
        %s1557 = scalar_lea.vmem %s7, 32
        %v1558 = vld [vmem:[%s1557] sm:$0xff]
        %v1559 = vld [vmem:[%s1557 + $0x8] sm:$0xff]
        %v1560 = vrot.slane %v1464, 2
        %v1561 = vrot.slane %v1457, 2
        %v1562 = vsel %vm1385, %v1560, %v1561
        %v1563 = vrot.slane %v1459, 2
        %v1564 = vsel %vm1385, %v1561, %v1563
        %v1565 = vrot.slane %v1461, 2
        %v1566 = vsel %vm1385, %v1563, %v1565
        %v1567 = vrot.slane %v1465, 2
        %v1568 = vsel %vm1385, %v1565, %v1567
        %v1569 = vsel %vm1482, %v1562, 0
        %v1571 = vsel %vm1482, %v1564, 0
        %v1573 = vsel %vm1482, %v1566, 0
        %v1575 = vsel %vm1482, %v1568, 0
        %1577 = vmatpush.msra.mxu0 0.0
        %1578 = vmatpush.msra.mxu0 0.0
        %1579 = vmatpush.msra.mxu0 0.0
        %1580 = vmatpush.msra.mxu0 0.0
        %1581 = vmatpush.msra.mxu0 0.0
        %1582 = vmatpush.msra.mxu0 0.0
        %1583 = vmatpush.msra.mxu0 0.0
        %1584 = vmatpush.msra.mxu0 0.0
        %1585 = vmatpush.msra.mxu0 0.0
        %1586 = vmatpush.msra.mxu0 0.0
        %1587 = vmatpush.msra.mxu0 0.0
        %1588 = vmatpush.msra.mxu0 0.0
        %1589 = vmatpush.msra.mxu0 0.0
        %1590 = vmatpush.msra.mxu0 0.0
        %1591 = vmatpush.msra.mxu0 %v1559
        %1592 = vmatpush.msra.mxu0 %v1558
        %1593 = vmatmul.f32.gmra.mxu0 %v1569
        %v1594 = vpop.f32.mrf.mxu0
        %v1595 = vadd.f32 0.0, %v1594
        %1596 = vmatmul.f32.gmra.mxu0 %v1571
        %v1597 = vpop.f32.mrf.mxu0
        %v1598 = vadd.f32 0.0, %v1597
        %1599 = vmatmul.f32.gmra.mxu0 %v1573
        %v1600 = vpop.f32.mrf.mxu0
        %v1601 = vadd.f32 0.0, %v1600
        %1602 = vmatmul.f32.gmra.mxu0 %v1575
        %v1603 = vpop.f32.mrf.mxu0
        %v1604 = vadd.f32 0.0, %v1603
        %1605 = vdwg.mxu0
        %v1606 = vadd.f32 %v1546, %v1595
        %v1607 = vadd.f32 %v1549, %v1598
        %v1608 = vadd.f32 %v1552, %v1601
        %v1609 = vadd.f32 %v1555, %v1604
        %v1610 = vld [vmem:[%s9] sm:$0x1]
        %v1612 = vperm.slane %v1610, 0
        %v1614 = vadd.f32 %v1606, %v1612
        %v1615 = vadd.f32 %v1607, %v1612
        %v1616 = vadd.f32 %v1608, %v1612
        %v1617 = vadd.f32 %v1609, %v1612
        %v1618 = vmax.f32 %v1614, 0.0
        %v1619 = vmax.f32 %v1615, 0.0
        %v1620 = vmax.f32 %v1616, 0.0
        %v1621 = vmax.f32 %v1617, 0.0
        %v1622 = vlaneseq
        %v1623 = vshrl.u32 %v1622, 7
        %v1624 = vadd.s32 %v1623, 8
        %v1625 = vlaneseq
        %v1626 = vand.u32 %v1625, 127
        %v1627 = vmul.u32 %v1623, 2
        %v1628 = vmul.u32 %v1624, 2
        %vm1629 = vcmp.eq.s32.totalorder %v1626, %v1627
        %vm1630 = vcmp.eq.s32.totalorder %v1626, %v1628
        %v1631 = vsel %vm1629, 1.0, 0.0
        %v1632 = vsel %vm1630, 1.0, 0.0
        %v1633 = vadd.s32 %v1627, 1
        %v1634 = vadd.s32 %v1628, 1
        %vm1635 = vcmp.eq.s32.totalorder %v1626, %v1633
        %vm1636 = vcmp.eq.s32.totalorder %v1626, %v1634
        %v1637 = vsel %vm1635, 1.0, 0.0
        %v1638 = vsel %vm1636, 1.0, 0.0
        %vm1639 = vcmask 261120
        %v1641 = vsel %vm1639, %v1631, 0
        %v1644 = vsel %vm1639, %v1632, 0
        %1646 = vmatpush.msra.mxu0 0.0
        %1647 = vmatpush.msra.mxu0 0.0
        %1648 = vmatpush.msra.mxu0 0.0
        %1649 = vmatpush.msra.mxu0 0.0
        %1650 = vmatpush.msra.mxu0 0.0
        %1651 = vmatpush.msra.mxu0 0.0
        %1652 = vmatpush.msra.mxu0 0.0
        %1653 = vmatpush.msra.mxu0 0.0
        %1654 = vmatpush.msra.mxu0 0.0
        %1655 = vmatpush.msra.mxu0 0.0
        %1656 = vmatpush.msra.mxu0 0.0
        %1657 = vmatpush.msra.mxu0 0.0
        %1658 = vmatpush.msra.mxu0 %v1621
        %1659 = vmatpush.msra.mxu0 %v1620
        %1660 = vmatpush.msra.mxu0 %v1619
        %1661 = vmatpush.msra.mxu0 %v1618
        %1662 = vmatmul.f32.gmra.mxu0 %v1641
        %v1663 = vpop.f32.mrf.mxu0
        %v1664 = vadd.f32 0.0, %v1663
        %1665 = vmatmul.f32.gmra.mxu0 %v1644
        %v1666 = vpop.f32.mrf.mxu0
        %v1667 = vadd.f32 0.0, %v1666
        %1668 = vdwg.mxu0
        %v1670 = vsel %vm1639, %v1637, 0
        %v1673 = vsel %vm1639, %v1638, 0
        %1675 = vmatpush.msra.mxu0 0.0
        %1676 = vmatpush.msra.mxu0 0.0
        %1677 = vmatpush.msra.mxu0 0.0
        %1678 = vmatpush.msra.mxu0 0.0
        %1679 = vmatpush.msra.mxu0 0.0
        %1680 = vmatpush.msra.mxu0 0.0
        %1681 = vmatpush.msra.mxu0 0.0
        %1682 = vmatpush.msra.mxu0 0.0
        %1683 = vmatpush.msra.mxu0 0.0
        %1684 = vmatpush.msra.mxu0 0.0
        %1685 = vmatpush.msra.mxu0 0.0
        %1686 = vmatpush.msra.mxu0 0.0
        %1687 = vmatpush.msra.mxu0 %v1621
        %1688 = vmatpush.msra.mxu0 %v1620
        %1689 = vmatpush.msra.mxu0 %v1619
        %1690 = vmatpush.msra.mxu0 %v1618
        %1691 = vmatmul.f32.gmra.mxu0 %v1670
        %v1692 = vpop.f32.mrf.mxu0
        %v1693 = vadd.f32 0.0, %v1692
        %1694 = vmatmul.f32.gmra.mxu0 %v1673
        %v1695 = vpop.f32.mrf.mxu0
        %v1696 = vadd.f32 0.0, %v1695
        %1697 = vdwg.mxu0
        %v1698 = vmax.f32 %v1664, %v1693
        %v1699 = vmax.f32 %v1667, %v1696
        %v1702 = vrot.slane %v1698, 7
        %v1703 = vrot.slane %v1699, 7
        %v1704 = vsel %vm1274, %v1702, %v1703
        %v1707 = vsel %vm1274, 0.0, %v1702
        %v1708 = vsel %vm1274, %v1703, 0.0
        %v1709 = vld [vmem:[#allocation2] sm:$0xff]
        %v1710 = vld [vmem:[#allocation2 + $0x8] sm:$0xff]
        %s1711 = scalar_lea.vmem [#allocation2], 16
        %v1712 = vld [vmem:[%s1711] sm:$0xff]
        %v1713 = vld [vmem:[%s1711 + $0x8] sm:$0xff]
        %v1716 = vrot.slane %v1707, 1
        %v1717 = vrot.slane %v1704, 1
        %v1718 = vsel %vm1291, %v1716, %v1717
        %v1719 = vrot.slane %v1708, 1
        %v1720 = vsel %vm1291, %v1717, %v1719
        %v1721 = vsel %vm1482, %v1718, 0
        %v1723 = vsel %vm1482, %v1720, 0
        %1725 = vmatpush.msra.mxu0 0.0
        %1726 = vmatpush.msra.mxu0 0.0
        %1727 = vmatpush.msra.mxu0 0.0
        %1728 = vmatpush.msra.mxu0 0.0
        %1729 = vmatpush.msra.mxu0 0.0
        %1730 = vmatpush.msra.mxu0 0.0
        %1731 = vmatpush.msra.mxu0 0.0
        %1732 = vmatpush.msra.mxu0 0.0
        %1733 = vmatpush.msra.mxu0 0.0
        %1734 = vmatpush.msra.mxu0 0.0
        %1735 = vmatpush.msra.mxu0 0.0
        %1736 = vmatpush.msra.mxu0 0.0
        %1737 = vmatpush.msra.mxu0 0.0
        %1738 = vmatpush.msra.mxu0 0.0
        %1739 = vmatpush.msra.mxu0 %v1713
        %1740 = vmatpush.msra.mxu0 %v1712
        %1741 = vmatmul.f32.gmra.mxu0 %v1721
        %v1742 = vpop.f32.mrf.mxu0
        %v1743 = vadd.f32 0.0, %v1742
        %1744 = vmatmul.f32.gmra.mxu0 %v1723
        %v1745 = vpop.f32.mrf.mxu0
        %v1746 = vadd.f32 0.0, %v1745
        %1747 = vdwg.mxu0
        %v1748 = vsel %vm1482, %v1707, 0
        %v1750 = vsel %vm1482, %v1704, 0
        %1752 = vmatpush.msra.mxu0 0.0
        %1753 = vmatpush.msra.mxu0 0.0
        %1754 = vmatpush.msra.mxu0 0.0
        %1755 = vmatpush.msra.mxu0 0.0
        %1756 = vmatpush.msra.mxu0 0.0
        %1757 = vmatpush.msra.mxu0 0.0
        %1758 = vmatpush.msra.mxu0 0.0
        %1759 = vmatpush.msra.mxu0 0.0
        %1760 = vmatpush.msra.mxu0 0.0
        %1761 = vmatpush.msra.mxu0 0.0
        %1762 = vmatpush.msra.mxu0 0.0
        %1763 = vmatpush.msra.mxu0 0.0
        %1764 = vmatpush.msra.mxu0 0.0
        %1765 = vmatpush.msra.mxu0 0.0
        %1766 = vmatpush.msra.mxu0 %v1710
        %1767 = vmatpush.msra.mxu0 %v1709
        %1768 = vmatmul.f32.gmra.mxu0 %v1748
        %v1769 = vpop.f32.mrf.mxu0
        %v1770 = vadd.f32 %v1743, %v1769
        %1771 = vmatmul.f32.gmra.mxu0 %v1750
        %v1772 = vpop.f32.mrf.mxu0
        %v1773 = vadd.f32 %v1746, %v1772
        %1774 = vdwg.mxu0
        %s1775 = scalar_lea.vmem [#allocation2], 32
        %v1776 = vld [vmem:[%s1775] sm:$0xff]
        %v1777 = vld [vmem:[%s1775 + $0x8] sm:$0xff]
        %v1778 = vrot.slane %v1707, 2
        %v1779 = vrot.slane %v1704, 2
        %v1780 = vsel %vm1385, %v1778, %v1779
        %v1781 = vrot.slane %v1708, 2
        %v1782 = vsel %vm1385, %v1779, %v1781
        %v1783 = vsel %vm1482, %v1780, 0
        %v1785 = vsel %vm1482, %v1782, 0
        %1787 = vmatpush.msra.mxu0 0.0
        %1788 = vmatpush.msra.mxu0 0.0
        %1789 = vmatpush.msra.mxu0 0.0
        %1790 = vmatpush.msra.mxu0 0.0
        %1791 = vmatpush.msra.mxu0 0.0
        %1792 = vmatpush.msra.mxu0 0.0
        %1793 = vmatpush.msra.mxu0 0.0
        %1794 = vmatpush.msra.mxu0 0.0
        %1795 = vmatpush.msra.mxu0 0.0
        %1796 = vmatpush.msra.mxu0 0.0
        %1797 = vmatpush.msra.mxu0 0.0
        %1798 = vmatpush.msra.mxu0 0.0
        %1799 = vmatpush.msra.mxu0 0.0
        %1800 = vmatpush.msra.mxu0 0.0
        %1801 = vmatpush.msra.mxu0 %v1777
        %1802 = vmatpush.msra.mxu0 %v1776
        %1803 = vmatmul.f32.gmra.mxu0 %v1783
        %v1804 = vpop.f32.mrf.mxu0
        %v1805 = vadd.f32 0.0, %v1804
        %1806 = vmatmul.f32.gmra.mxu0 %v1785
        %v1807 = vpop.f32.mrf.mxu0
        %v1808 = vadd.f32 0.0, %v1807
        %1809 = vdwg.mxu0
        %v1810 = vadd.f32 %v1770, %v1805
        %v1811 = vadd.f32 %v1773, %v1808
        %v1812 = vld [vmem:[%s13] sm:$0x1]
        %v1814 = vperm.slane %v1812, 0
        %v1816 = vadd.f32 %v1810, %v1814
        %v1817 = vadd.f32 %v1811, %v1814
        %v1818 = vmax.f32 %v1816, 0.0
        %v1819 = vmax.f32 %v1817, 0.0
        %v1822 = vrot.slane %v1818, 7
        %v1823 = vrot.slane %v1819, 7
        %v1824 = vsel %vm1274, %v1822, %v1823
        %v1827 = vsel %vm1274, 0.0, %v1822
        %v1828 = vsel %vm1274, %v1823, 0.0
        %v1829 = vld [vmem:[%s15] sm:$0xff]
        %v1830 = vld [vmem:[%s15 + $0x8] sm:$0xff]
        %v1831 = vld [vmem:[%s15 + $0x10] sm:$0xff]
        %v1832 = vld [vmem:[%s15 + $0x18] sm:$0xff]
        %s1833 = scalar_lea.vmem %s15, 32
        %v1834 = vld [vmem:[%s1833] sm:$0xff]
        %v1835 = vld [vmem:[%s1833 + $0x8] sm:$0xff]
        %v1836 = vld [vmem:[%s1833 + $0x10] sm:$0xff]
        %v1837 = vld [vmem:[%s1833 + $0x18] sm:$0xff]
        %v1840 = vrot.slane %v1827, 1
        %v1841 = vrot.slane %v1824, 1
        %v1842 = vsel %vm1291, %v1840, %v1841
        %v1843 = vrot.slane %v1828, 1
        %v1844 = vsel %vm1291, %v1841, %v1843
        %v1845 = vsel %vm1639, %v1842, 0
        %v1847 = vsel %vm1639, %v1844, 0
        %1849 = vmatpush.msra.mxu0 0.0
        %1850 = vmatpush.msra.mxu0 0.0
        %1851 = vmatpush.msra.mxu0 0.0
        %1852 = vmatpush.msra.mxu0 0.0
        %1853 = vmatpush.msra.mxu0 0.0
        %1854 = vmatpush.msra.mxu0 0.0
        %1855 = vmatpush.msra.mxu0 0.0
        %1856 = vmatpush.msra.mxu0 0.0
        %1857 = vmatpush.msra.mxu0 0.0
        %1858 = vmatpush.msra.mxu0 0.0
        %1859 = vmatpush.msra.mxu0 0.0
        %1860 = vmatpush.msra.mxu0 0.0
        %1861 = vmatpush.msra.mxu0 %v1837
        %1862 = vmatpush.msra.mxu0 %v1836
        %1863 = vmatpush.msra.mxu0 %v1835
        %1864 = vmatpush.msra.mxu0 %v1834
        %1865 = vmatmul.f32.gmra.mxu0 %v1845
        %v1866 = vpop.f32.mrf.mxu0
        %v1867 = vadd.f32 0.0, %v1866
        %1868 = vmatmul.f32.gmra.mxu0 %v1847
        %v1869 = vpop.f32.mrf.mxu0
        %v1870 = vadd.f32 0.0, %v1869
        %1871 = vdwg.mxu0
        %v1872 = vsel %vm1639, %v1827, 0
        %v1874 = vsel %vm1639, %v1824, 0
        %1876 = vmatpush.msra.mxu0 0.0
        %1877 = vmatpush.msra.mxu0 0.0
        %1878 = vmatpush.msra.mxu0 0.0
        %1879 = vmatpush.msra.mxu0 0.0
        %1880 = vmatpush.msra.mxu0 0.0
        %1881 = vmatpush.msra.mxu0 0.0
        %1882 = vmatpush.msra.mxu0 0.0
        %1883 = vmatpush.msra.mxu0 0.0
        %1884 = vmatpush.msra.mxu0 0.0
        %1885 = vmatpush.msra.mxu0 0.0
        %1886 = vmatpush.msra.mxu0 0.0
        %1887 = vmatpush.msra.mxu0 0.0
        %1888 = vmatpush.msra.mxu0 %v1832
        %1889 = vmatpush.msra.mxu0 %v1831
        %1890 = vmatpush.msra.mxu0 %v1830
        %1891 = vmatpush.msra.mxu0 %v1829
        %1892 = vmatmul.f32.gmra.mxu0 %v1872
        %v1893 = vpop.f32.mrf.mxu0
        %v1894 = vadd.f32 %v1867, %v1893
        %1895 = vmatmul.f32.gmra.mxu0 %v1874
        %v1896 = vpop.f32.mrf.mxu0
        %v1897 = vadd.f32 %v1870, %v1896
        %1898 = vdwg.mxu0
        %s1899 = scalar_lea.vmem %s15, 64
        %v1900 = vld [vmem:[%s1899] sm:$0xff]
        %v1901 = vld [vmem:[%s1899 + $0x8] sm:$0xff]
        %v1902 = vld [vmem:[%s1899 + $0x10] sm:$0xff]
        %v1903 = vld [vmem:[%s1899 + $0x18] sm:$0xff]
        %v1904 = vrot.slane %v1827, 2
        %v1905 = vrot.slane %v1824, 2
        %v1906 = vsel %vm1385, %v1904, %v1905
        %v1907 = vrot.slane %v1828, 2
        %v1908 = vsel %vm1385, %v1905, %v1907
        %v1909 = vsel %vm1639, %v1906, 0
        %v1911 = vsel %vm1639, %v1908, 0
        %1913 = vmatpush.msra.mxu0 0.0
        %1914 = vmatpush.msra.mxu0 0.0
        %1915 = vmatpush.msra.mxu0 0.0
        %1916 = vmatpush.msra.mxu0 0.0
        %1917 = vmatpush.msra.mxu0 0.0
        %1918 = vmatpush.msra.mxu0 0.0
        %1919 = vmatpush.msra.mxu0 0.0
        %1920 = vmatpush.msra.mxu0 0.0
        %1921 = vmatpush.msra.mxu0 0.0
        %1922 = vmatpush.msra.mxu0 0.0
        %1923 = vmatpush.msra.mxu0 0.0
        %1924 = vmatpush.msra.mxu0 0.0
        %1925 = vmatpush.msra.mxu0 %v1903
        %1926 = vmatpush.msra.mxu0 %v1902
        %1927 = vmatpush.msra.mxu0 %v1901
        %1928 = vmatpush.msra.mxu0 %v1900
        %1929 = vmatmul.f32.gmra.mxu0 %v1909
        %v1930 = vpop.f32.mrf.mxu0
        %v1931 = vadd.f32 0.0, %v1930
        %1932 = vmatmul.f32.gmra.mxu0 %v1911
        %v1933 = vpop.f32.mrf.mxu0
        %v1934 = vadd.f32 0.0, %v1933
        %1935 = vdwg.mxu0
        %v1936 = vadd.f32 %v1894, %v1931
        %v1937 = vadd.f32 %v1897, %v1934
        %v1938 = vld [vmem:[%s17] sm:$0x1]
        %v1940 = vperm.slane %v1938, 0
        %v1942 = vadd.f32 %v1936, %v1940
        %v1943 = vadd.f32 %v1937, %v1940
        %v1944 = vmax.f32 %v1942, 0.0
        %v1945 = vmax.f32 %v1943, 0.0
        %v1946 = vsel %vm1482, %v1631, 0
        %1948 = vmatpush.msra.mxu0 0.0
        %1949 = vmatpush.msra.mxu0 0.0
        %1950 = vmatpush.msra.mxu0 0.0
        %1951 = vmatpush.msra.mxu0 0.0
        %1952 = vmatpush.msra.mxu0 0.0
        %1953 = vmatpush.msra.mxu0 0.0
        %1954 = vmatpush.msra.mxu0 0.0
        %1955 = vmatpush.msra.mxu0 0.0
        %1956 = vmatpush.msra.mxu0 0.0
        %1957 = vmatpush.msra.mxu0 0.0
        %1958 = vmatpush.msra.mxu0 0.0
        %1959 = vmatpush.msra.mxu0 0.0
        %1960 = vmatpush.msra.mxu0 0.0
        %1961 = vmatpush.msra.mxu0 0.0
        %1962 = vmatpush.msra.mxu0 %v1945
        %1963 = vmatpush.msra.mxu0 %v1944
        %1964 = vmatmul.f32.gmra.mxu0 %v1946
        %v1965 = vpop.f32.mrf.mxu0
        %v1966 = vadd.f32 0.0, %v1965
        %1967 = vdwg.mxu0
        %v1968 = vsel %vm1482, %v1637, 0
        %1970 = vmatpush.msra.mxu0 0.0
        %1971 = vmatpush.msra.mxu0 0.0
        %1972 = vmatpush.msra.mxu0 0.0
        %1973 = vmatpush.msra.mxu0 0.0
        %1974 = vmatpush.msra.mxu0 0.0
        %1975 = vmatpush.msra.mxu0 0.0
        %1976 = vmatpush.msra.mxu0 0.0
        %1977 = vmatpush.msra.mxu0 0.0
        %1978 = vmatpush.msra.mxu0 0.0
        %1979 = vmatpush.msra.mxu0 0.0
        %1980 = vmatpush.msra.mxu0 0.0
        %1981 = vmatpush.msra.mxu0 0.0
        %1982 = vmatpush.msra.mxu0 0.0
        %1983 = vmatpush.msra.mxu0 0.0
        %1984 = vmatpush.msra.mxu0 %v1945
        %1985 = vmatpush.msra.mxu0 %v1944
        %1986 = vmatmul.f32.gmra.mxu0 %v1968
        %v1987 = vpop.f32.mrf.mxu0
        %v1988 = vadd.f32 0.0, %v1987
        %1989 = vdwg.mxu0
        %v1990 = vmax.f32 %v1966, %v1988
        %v1992 = vrot.slane %v1990, 7
        %v1994 = vsel %vm1274, 0.0, %v1992
        %v1995 = vsel %vm1274, %v1992, 0.0
        %v1996 = vld [vmem:[%s19] sm:$0xff]
        %v1997 = vld [vmem:[%s19 + $0x8] sm:$0xff]
        %v1998 = vld [vmem:[%s19 + $0x10] sm:$0xff]
        %v1999 = vld [vmem:[%s19 + $0x18] sm:$0xff]
        %s2000 = scalar_lea.vmem %s19, 32
        %v2001 = vld [vmem:[%s2000] sm:$0xff]
        %v2002 = vld [vmem:[%s2000 + $0x8] sm:$0xff]
        %v2003 = vld [vmem:[%s2000 + $0x10] sm:$0xff]
        %v2004 = vld [vmem:[%s2000 + $0x18] sm:$0xff]
        %v2007 = vrot.slane %v1994, 1
        %v2008 = vrot.slane %v1995, 1
        %v2009 = vsel %vm1291, %v2007, %v2008
        %v2010 = vsel %vm1639, %v2009, 0
        %2012 = vmatpush.msra.mxu0 0.0
        %2013 = vmatpush.msra.mxu0 0.0
        %2014 = vmatpush.msra.mxu0 0.0
        %2015 = vmatpush.msra.mxu0 0.0
        %2016 = vmatpush.msra.mxu0 0.0
        %2017 = vmatpush.msra.mxu0 0.0
        %2018 = vmatpush.msra.mxu0 0.0
        %2019 = vmatpush.msra.mxu0 0.0
        %2020 = vmatpush.msra.mxu0 0.0
        %2021 = vmatpush.msra.mxu0 0.0
        %2022 = vmatpush.msra.mxu0 0.0
        %2023 = vmatpush.msra.mxu0 0.0
        %2024 = vmatpush.msra.mxu0 %v2004
        %2025 = vmatpush.msra.mxu0 %v2003
        %2026 = vmatpush.msra.mxu0 %v2002
        %2027 = vmatpush.msra.mxu0 %v2001
        %2028 = vmatmul.f32.gmra.mxu0 %v2010
        %v2029 = vpop.f32.mrf.mxu0
        %v2030 = vadd.f32 0.0, %v2029
        %2031 = vdwg.mxu0
        %v2032 = vsel %vm1639, %v1994, 0
        %2034 = vmatpush.msra.mxu0 0.0
        %2035 = vmatpush.msra.mxu0 0.0
        %2036 = vmatpush.msra.mxu0 0.0
        %2037 = vmatpush.msra.mxu0 0.0
        %2038 = vmatpush.msra.mxu0 0.0
        %2039 = vmatpush.msra.mxu0 0.0
        %2040 = vmatpush.msra.mxu0 0.0
        %2041 = vmatpush.msra.mxu0 0.0
        %2042 = vmatpush.msra.mxu0 0.0
        %2043 = vmatpush.msra.mxu0 0.0
        %2044 = vmatpush.msra.mxu0 0.0
        %2045 = vmatpush.msra.mxu0 0.0
        %2046 = vmatpush.msra.mxu0 %v1999
        %2047 = vmatpush.msra.mxu0 %v1998
        %2048 = vmatpush.msra.mxu0 %v1997
        %2049 = vmatpush.msra.mxu0 %v1996
        %2050 = vmatmul.f32.gmra.mxu0 %v2032
        %v2051 = vpop.f32.mrf.mxu0
        %v2052 = vadd.f32 %v2030, %v2051
        %2053 = vdwg.mxu0
        %s2054 = scalar_lea.vmem %s19, 64
        %v2055 = vld [vmem:[%s2054] sm:$0xff]
        %v2056 = vld [vmem:[%s2054 + $0x8] sm:$0xff]
        %v2057 = vld [vmem:[%s2054 + $0x10] sm:$0xff]
        %v2058 = vld [vmem:[%s2054 + $0x18] sm:$0xff]
        %v2059 = vrot.slane %v1994, 2
        %v2060 = vrot.slane %v1995, 2
        %v2061 = vsel %vm1385, %v2059, %v2060
        %v2062 = vsel %vm1639, %v2061, 0
        %2064 = vmatpush.msra.mxu0 0.0
        %2065 = vmatpush.msra.mxu0 0.0
        %2066 = vmatpush.msra.mxu0 0.0
        %2067 = vmatpush.msra.mxu0 0.0
        %2068 = vmatpush.msra.mxu0 0.0
        %2069 = vmatpush.msra.mxu0 0.0
        %2070 = vmatpush.msra.mxu0 0.0
        %2071 = vmatpush.msra.mxu0 0.0
        %2072 = vmatpush.msra.mxu0 0.0
        %2073 = vmatpush.msra.mxu0 0.0
        %2074 = vmatpush.msra.mxu0 0.0
        %2075 = vmatpush.msra.mxu0 0.0
        %2076 = vmatpush.msra.mxu0 %v2058
        %2077 = vmatpush.msra.mxu0 %v2057
        %2078 = vmatpush.msra.mxu0 %v2056
        %2079 = vmatpush.msra.mxu0 %v2055
        %2080 = vmatmul.f32.gmra.mxu0 %v2062
        %v2081 = vpop.f32.mrf.mxu0
        %v2082 = vadd.f32 0.0, %v2081
        %2083 = vdwg.mxu0
        %v2084 = vadd.f32 %v2052, %v2082
        %v2085 = vld [vmem:[%s21] sm:$0x1]
        %v2087 = vperm.slane %v2085, 0
        %v2089 = vadd.f32 %v2084, %v2087
        %v2090 = vmax.f32 %v2089, 0.0
        %v2092 = vrot.slane %v2090, 7
        %v2094 = vsel %vm1274, 0.0, %v2092
        %v2095 = vsel %vm1274, %v2092, 0.0
        %v2096 = vld [vmem:[%s23] sm:$0xff]
        %v2097 = vld [vmem:[%s23 + $0x8] sm:$0xff]
        %v2098 = vld [vmem:[%s23 + $0x10] sm:$0xff]
        %v2099 = vld [vmem:[%s23 + $0x18] sm:$0xff]
        %v2100 = vld [vmem:[%s23 + $0x20] sm:$0xff]
        %v2101 = vld [vmem:[%s23 + $0x28] sm:$0xff]
        %v2102 = vld [vmem:[%s23 + $0x30] sm:$0xff]
        %v2103 = vld [vmem:[%s23 + $0x38] sm:$0xff]
        %s2104 = scalar_lea.vmem %s23, 64
        %v2105 = vld [vmem:[%s2104] sm:$0xff]
        %v2106 = vld [vmem:[%s2104 + $0x8] sm:$0xff]
        %v2107 = vld [vmem:[%s2104 + $0x10] sm:$0xff]
        %v2108 = vld [vmem:[%s2104 + $0x18] sm:$0xff]
        %v2109 = vld [vmem:[%s2104 + $0x20] sm:$0xff]
        %v2110 = vld [vmem:[%s2104 + $0x28] sm:$0xff]
        %v2111 = vld [vmem:[%s2104 + $0x30] sm:$0xff]
        %v2112 = vld [vmem:[%s2104 + $0x38] sm:$0xff]
        %v2115 = vrot.slane %v2094, 1
        %v2116 = vrot.slane %v2095, 1
        %v2117 = vsel %vm1291, %v2115, %v2116
        %vm2118 = vcmask 523264
        %v2119 = vsel %vm2118, %v2117, 0
        %2121 = vmatpush.msra.mxu0 0.0
        %2122 = vmatpush.msra.mxu0 0.0
        %2123 = vmatpush.msra.mxu0 0.0
        %2124 = vmatpush.msra.mxu0 0.0
        %2125 = vmatpush.msra.mxu0 0.0
        %2126 = vmatpush.msra.mxu0 0.0
        %2127 = vmatpush.msra.mxu0 0.0
        %2128 = vmatpush.msra.mxu0 0.0
        %2129 = vmatpush.msra.mxu0 %v2112
        %2130 = vmatpush.msra.mxu0 %v2111
        %2131 = vmatpush.msra.mxu0 %v2110
        %2132 = vmatpush.msra.mxu0 %v2109
        %2133 = vmatpush.msra.mxu0 %v2108
        %2134 = vmatpush.msra.mxu0 %v2107
        %2135 = vmatpush.msra.mxu0 %v2106
        %2136 = vmatpush.msra.mxu0 %v2105
        %2137 = vmatmul.f32.gmra.mxu0 %v2119
        %v2138 = vpop.f32.mrf.mxu0
        %v2139 = vadd.f32 0.0, %v2138
        %2140 = vdwg.mxu0
        %v2141 = vsel %vm2118, %v2094, 0
        %2143 = vmatpush.msra.mxu0 0.0
        %2144 = vmatpush.msra.mxu0 0.0
        %2145 = vmatpush.msra.mxu0 0.0
        %2146 = vmatpush.msra.mxu0 0.0
        %2147 = vmatpush.msra.mxu0 0.0
        %2148 = vmatpush.msra.mxu0 0.0
        %2149 = vmatpush.msra.mxu0 0.0
        %2150 = vmatpush.msra.mxu0 0.0
        %2151 = vmatpush.msra.mxu0 %v2103
        %2152 = vmatpush.msra.mxu0 %v2102
        %2153 = vmatpush.msra.mxu0 %v2101
        %2154 = vmatpush.msra.mxu0 %v2100
        %2155 = vmatpush.msra.mxu0 %v2099
        %2156 = vmatpush.msra.mxu0 %v2098
        %2157 = vmatpush.msra.mxu0 %v2097
        %2158 = vmatpush.msra.mxu0 %v2096
        %2159 = vmatmul.f32.gmra.mxu0 %v2141
        %v2160 = vpop.f32.mrf.mxu0
        %v2161 = vadd.f32 %v2139, %v2160
        %2162 = vdwg.mxu0
        %s2163 = scalar_lea.vmem %s23, 128
        %v2164 = vld [vmem:[%s2163] sm:$0xff]
        %v2165 = vld [vmem:[%s2163 + $0x8] sm:$0xff]
        %v2166 = vld [vmem:[%s2163 + $0x10] sm:$0xff]
        %v2167 = vld [vmem:[%s2163 + $0x18] sm:$0xff]
        %v2168 = vld [vmem:[%s2163 + $0x20] sm:$0xff]
        %v2169 = vld [vmem:[%s2163 + $0x28] sm:$0xff]
        %v2170 = vld [vmem:[%s2163 + $0x30] sm:$0xff]
        %v2171 = vld [vmem:[%s2163 + $0x38] sm:$0xff]
        %v2172 = vrot.slane %v2094, 2
        %v2173 = vrot.slane %v2095, 2
        %v2174 = vsel %vm1385, %v2172, %v2173
        %v2175 = vsel %vm2118, %v2174, 0
        %2177 = vmatpush.msra.mxu0 0.0
        %2178 = vmatpush.msra.mxu0 0.0
        %2179 = vmatpush.msra.mxu0 0.0
        %2180 = vmatpush.msra.mxu0 0.0
        %2181 = vmatpush.msra.mxu0 0.0
        %2182 = vmatpush.msra.mxu0 0.0
        %2183 = vmatpush.msra.mxu0 0.0
        %2184 = vmatpush.msra.mxu0 0.0
        %2185 = vmatpush.msra.mxu0 %v2171
        %2186 = vmatpush.msra.mxu0 %v2170
        %2187 = vmatpush.msra.mxu0 %v2169
        %2188 = vmatpush.msra.mxu0 %v2168
        %2189 = vmatpush.msra.mxu0 %v2167
        %2190 = vmatpush.msra.mxu0 %v2166
        %2191 = vmatpush.msra.mxu0 %v2165
        %2192 = vmatpush.msra.mxu0 %v2164
        %2193 = vmatmul.f32.gmra.mxu0 %v2175
        %v2194 = vpop.f32.mrf.mxu0
        %v2195 = vadd.f32 0.0, %v2194
        %2196 = vdwg.mxu0
        %v2197 = vadd.f32 %v2161, %v2195
        %v2198 = vld [vmem:[%s25] sm:$0x1]
        %v2200 = vperm.slane %v2198, 0
        %v2202 = vadd.f32 %v2197, %v2200
        %v2203 = vmax.f32 %v2202, 0.0
        %vm2204 = vcmask 64512
        %v2205 = vsel %vm2204, %v1631, 0
        %2207 = vmatpush.msra.mxu0 0.0
        %2208 = vmatpush.msra.mxu0 0.0
        %2209 = vmatpush.msra.mxu0 0.0
        %2210 = vmatpush.msra.mxu0 0.0
        %2211 = vmatpush.msra.mxu0 0.0
        %2212 = vmatpush.msra.mxu0 0.0
        %2213 = vmatpush.msra.mxu0 0.0
        %2214 = vmatpush.msra.mxu0 0.0
        %2215 = vmatpush.msra.mxu0 0.0
        %2216 = vmatpush.msra.mxu0 0.0
        %2217 = vmatpush.msra.mxu0 0.0
        %2218 = vmatpush.msra.mxu0 0.0
        %2219 = vmatpush.msra.mxu0 0.0
        %2220 = vmatpush.msra.mxu0 0.0
        %2221 = vmatpush.msra.mxu0 0.0
        %2222 = vmatpush.msra.mxu0 %v2203
        %2223 = vmatmul.f32.gmra.mxu0 %v2205
        %v2224 = vpop.f32.mrf.mxu0
        %v2225 = vadd.f32 0.0, %v2224
        %2226 = vdwg.mxu0
        %v2227 = vsel %vm2204, %v1637, 0
        %2229 = vmatpush.msra.mxu0 0.0
        %2230 = vmatpush.msra.mxu0 0.0
        %2231 = vmatpush.msra.mxu0 0.0
        %2232 = vmatpush.msra.mxu0 0.0
        %2233 = vmatpush.msra.mxu0 0.0
        %2234 = vmatpush.msra.mxu0 0.0
        %2235 = vmatpush.msra.mxu0 0.0
        %2236 = vmatpush.msra.mxu0 0.0
        %2237 = vmatpush.msra.mxu0 0.0
        %2238 = vmatpush.msra.mxu0 0.0
        %2239 = vmatpush.msra.mxu0 0.0
        %2240 = vmatpush.msra.mxu0 0.0
        %2241 = vmatpush.msra.mxu0 0.0
        %2242 = vmatpush.msra.mxu0 0.0
        %2243 = vmatpush.msra.mxu0 0.0
        %2244 = vmatpush.msra.mxu0 %v2203
        %2245 = vmatmul.f32.gmra.mxu0 %v2227
        %v2246 = vpop.f32.mrf.mxu0
        %v2247 = vadd.f32 0.0, %v2246
        %2248 = vdwg.mxu0
        %v2249 = vmax.f32 %v2225, %v2247
        %v2251 = vrot.slane %v2249, 7
        %v2253 = vsel %vm1274, 0.0, %v2251
        %vm2254 = vcmask 1044480
        %v2255 = vsel %vm2254, %v2253, 0.0
        %v2256 = vld [vmem:[%s27] sm:$0xff]
        %v2257 = vld [vmem:[%s27 + $0x8] sm:$0xff]
        %v2258 = vld [vmem:[%s27 + $0x10] sm:$0xff]
        %v2259 = vld [vmem:[%s27 + $0x18] sm:$0xff]
        %v2260 = vld [vmem:[%s27 + $0x20] sm:$0xff]
        %v2261 = vld [vmem:[%s27 + $0x28] sm:$0xff]
        %v2262 = vld [vmem:[%s27 + $0x30] sm:$0xff]
        %v2263 = vld [vmem:[%s27 + $0x38] sm:$0xff]
        %s2264 = scalar_lea.vmem %s27, 64
        %v2265 = vld [vmem:[%s2264] sm:$0xff]
        %v2266 = vld [vmem:[%s2264 + $0x8] sm:$0xff]
        %v2267 = vld [vmem:[%s2264 + $0x10] sm:$0xff]
        %v2268 = vld [vmem:[%s2264 + $0x18] sm:$0xff]
        %v2269 = vld [vmem:[%s2264 + $0x20] sm:$0xff]
        %v2270 = vld [vmem:[%s2264 + $0x28] sm:$0xff]
        %v2271 = vld [vmem:[%s2264 + $0x30] sm:$0xff]
        %v2272 = vld [vmem:[%s2264 + $0x38] sm:$0xff]
        %v2274 = vrot.slane %v2255, 1
        %v2275 = vsel %vm2118, %v2274, 0
        %2277 = vmatpush.msra.mxu0 0.0
        %2278 = vmatpush.msra.mxu0 0.0
        %2279 = vmatpush.msra.mxu0 0.0
        %2280 = vmatpush.msra.mxu0 0.0
        %2281 = vmatpush.msra.mxu0 0.0
        %2282 = vmatpush.msra.mxu0 0.0
        %2283 = vmatpush.msra.mxu0 0.0
        %2284 = vmatpush.msra.mxu0 0.0
        %2285 = vmatpush.msra.mxu0 %v2272
        %2286 = vmatpush.msra.mxu0 %v2271
        %2287 = vmatpush.msra.mxu0 %v2270
        %2288 = vmatpush.msra.mxu0 %v2269
        %2289 = vmatpush.msra.mxu0 %v2268
        %2290 = vmatpush.msra.mxu0 %v2267
        %2291 = vmatpush.msra.mxu0 %v2266
        %2292 = vmatpush.msra.mxu0 %v2265
        %2293 = vmatmul.f32.gmra.mxu0 %v2275
        %v2294 = vpop.f32.mrf.mxu0
        %v2295 = vadd.f32 0.0, %v2294
        %2296 = vdwg.mxu0
        %v2297 = vsel %vm2118, %v2255, 0
        %2299 = vmatpush.msra.mxu0 0.0
        %2300 = vmatpush.msra.mxu0 0.0
        %2301 = vmatpush.msra.mxu0 0.0
        %2302 = vmatpush.msra.mxu0 0.0
        %2303 = vmatpush.msra.mxu0 0.0
        %2304 = vmatpush.msra.mxu0 0.0
        %2305 = vmatpush.msra.mxu0 0.0
        %2306 = vmatpush.msra.mxu0 0.0
        %2307 = vmatpush.msra.mxu0 %v2263
        %2308 = vmatpush.msra.mxu0 %v2262
        %2309 = vmatpush.msra.mxu0 %v2261
        %2310 = vmatpush.msra.mxu0 %v2260
        %2311 = vmatpush.msra.mxu0 %v2259
        %2312 = vmatpush.msra.mxu0 %v2258
        %2313 = vmatpush.msra.mxu0 %v2257
        %2314 = vmatpush.msra.mxu0 %v2256
        %2315 = vmatmul.f32.gmra.mxu0 %v2297
        %v2316 = vpop.f32.mrf.mxu0
        %v2317 = vadd.f32 %v2295, %v2316
        %2318 = vdwg.mxu0
        %s2319 = scalar_lea.vmem %s27, 128
        %v2320 = vld [vmem:[%s2319] sm:$0xff]
        %v2321 = vld [vmem:[%s2319 + $0x8] sm:$0xff]
        %v2322 = vld [vmem:[%s2319 + $0x10] sm:$0xff]
        %v2323 = vld [vmem:[%s2319 + $0x18] sm:$0xff]
        %v2324 = vld [vmem:[%s2319 + $0x20] sm:$0xff]
        %v2325 = vld [vmem:[%s2319 + $0x28] sm:$0xff]
        %v2326 = vld [vmem:[%s2319 + $0x30] sm:$0xff]
        %v2327 = vld [vmem:[%s2319 + $0x38] sm:$0xff]
        %v2328 = vrot.slane %v2255, 2
        %v2329 = vsel %vm2118, %v2328, 0
        %2331 = vmatpush.msra.mxu0 0.0
        %2332 = vmatpush.msra.mxu0 0.0
        %2333 = vmatpush.msra.mxu0 0.0
        %2334 = vmatpush.msra.mxu0 0.0
        %2335 = vmatpush.msra.mxu0 0.0
        %2336 = vmatpush.msra.mxu0 0.0
        %2337 = vmatpush.msra.mxu0 0.0
        %2338 = vmatpush.msra.mxu0 0.0
        %2339 = vmatpush.msra.mxu0 %v2327
        %2340 = vmatpush.msra.mxu0 %v2326
        %2341 = vmatpush.msra.mxu0 %v2325
        %2342 = vmatpush.msra.mxu0 %v2324
        %2343 = vmatpush.msra.mxu0 %v2323
        %2344 = vmatpush.msra.mxu0 %v2322
        %2345 = vmatpush.msra.mxu0 %v2321
        %2346 = vmatpush.msra.mxu0 %v2320
        %2347 = vmatmul.f32.gmra.mxu0 %v2329
        %v2348 = vpop.f32.mrf.mxu0
        %v2349 = vadd.f32 0.0, %v2348
        %2350 = vdwg.mxu0
        %v2351 = vadd.f32 %v2317, %v2349
        %v2352 = vld [vmem:[%s29] sm:$0x1]
        %v2354 = vperm.slane %v2352, 0
        %v2356 = vadd.f32 %v2351, %v2354
        %v2357 = vmax.f32 %v2356, 0.0
        %v2359 = vrot.slane %v2357, 7
        %v2361 = vsel %vm1274, 0.0, %v2359
        %v2362 = vsel %vm2254, %v2361, 0.0
        %v2363 = vld [vmem:[#allocation4] sm:$0xff]
        %v2364 = vld [vmem:[#allocation4 + $0x8] sm:$0xff]
        %v2365 = vld [vmem:[#allocation4 + $0x10] sm:$0xff]
        %v2366 = vld [vmem:[#allocation4 + $0x18] sm:$0xff]
        %v2367 = vld [vmem:[#allocation4 + $0x20] sm:$0xff]
        %v2368 = vld [vmem:[#allocation4 + $0x28] sm:$0xff]
        %v2369 = vld [vmem:[#allocation4 + $0x30] sm:$0xff]
        %v2370 = vld [vmem:[#allocation4 + $0x38] sm:$0xff]
        %v2371 = vld [vmem:[#allocation4 + $0x40] sm:$0xff]
        %v2372 = vld [vmem:[#allocation4 + $0x48] sm:$0xff]
        %v2373 = vld [vmem:[#allocation4 + $0x50] sm:$0xff]
        %v2374 = vld [vmem:[#allocation4 + $0x58] sm:$0xff]
        %v2375 = vld [vmem:[#allocation4 + $0x60] sm:$0xff]
        %v2376 = vld [vmem:[#allocation4 + $0x68] sm:$0xff]
        %v2377 = vld [vmem:[#allocation4 + $0x70] sm:$0xff]
        %v2378 = vld [vmem:[#allocation4 + $0x78] sm:$0xff]
        %s2379 = scalar_lea.vmem [#allocation4], 128
        %v2380 = vld [vmem:[%s2379] sm:$0xff]
        %v2381 = vld [vmem:[%s2379 + $0x8] sm:$0xff]
        %v2382 = vld [vmem:[%s2379 + $0x10] sm:$0xff]
        %v2383 = vld [vmem:[%s2379 + $0x18] sm:$0xff]
        %v2384 = vld [vmem:[%s2379 + $0x20] sm:$0xff]
        %v2385 = vld [vmem:[%s2379 + $0x28] sm:$0xff]
        %v2386 = vld [vmem:[%s2379 + $0x30] sm:$0xff]
        %v2387 = vld [vmem:[%s2379 + $0x38] sm:$0xff]
        %v2388 = vld [vmem:[%s2379 + $0x40] sm:$0xff]
        %v2389 = vld [vmem:[%s2379 + $0x48] sm:$0xff]
        %v2390 = vld [vmem:[%s2379 + $0x50] sm:$0xff]
        %v2391 = vld [vmem:[%s2379 + $0x58] sm:$0xff]
        %v2392 = vld [vmem:[%s2379 + $0x60] sm:$0xff]
        %v2393 = vld [vmem:[%s2379 + $0x68] sm:$0xff]
        %v2394 = vld [vmem:[%s2379 + $0x70] sm:$0xff]
        %v2395 = vld [vmem:[%s2379 + $0x78] sm:$0xff]
        %v2397 = vrot.slane %v2362, 1
        %2399 = vmatpush.msra.mxu0 %v2395
        %2400 = vmatpush.msra.mxu0 %v2394
        %2401 = vmatpush.msra.mxu0 %v2393
        %2402 = vmatpush.msra.mxu0 %v2392
        %2403 = vmatpush.msra.mxu0 %v2391
        %2404 = vmatpush.msra.mxu0 %v2390
        %2405 = vmatpush.msra.mxu0 %v2389
        %2406 = vmatpush.msra.mxu0 %v2388
        %2407 = vmatpush.msra.mxu0 %v2387
        %2408 = vmatpush.msra.mxu0 %v2386
        %2409 = vmatpush.msra.mxu0 %v2385
        %2410 = vmatpush.msra.mxu0 %v2384
        %2411 = vmatpush.msra.mxu0 %v2383
        %2412 = vmatpush.msra.mxu0 %v2382
        %2413 = vmatpush.msra.mxu0 %v2381
        %2414 = vmatpush.msra.mxu0 %v2380
        %2415 = vmatmul.f32.gmra.mxu0 %v2397
        %v2416 = vpop.f32.mrf.mxu0
        %v2417 = vadd.f32 0.0, %v2416
        %2418 = vdwg.mxu0
        %2419 = vmatpush.msra.mxu0 %v2378
        %2420 = vmatpush.msra.mxu0 %v2377
        %2421 = vmatpush.msra.mxu0 %v2376
        %2422 = vmatpush.msra.mxu0 %v2375
        %2423 = vmatpush.msra.mxu0 %v2374
        %2424 = vmatpush.msra.mxu0 %v2373
        %2425 = vmatpush.msra.mxu0 %v2372
        %2426 = vmatpush.msra.mxu0 %v2371
        %2427 = vmatpush.msra.mxu0 %v2370
        %2428 = vmatpush.msra.mxu0 %v2369
        %2429 = vmatpush.msra.mxu0 %v2368
        %2430 = vmatpush.msra.mxu0 %v2367
        %2431 = vmatpush.msra.mxu0 %v2366
        %2432 = vmatpush.msra.mxu0 %v2365
        %2433 = vmatpush.msra.mxu0 %v2364
        %2434 = vmatpush.msra.mxu0 %v2363
        %2435 = vmatmul.f32.gmra.mxu0 %v2362
        %v2436 = vpop.f32.mrf.mxu0
        %v2437 = vadd.f32 %v2417, %v2436
        %2438 = vdwg.mxu0
        %s2439 = scalar_lea.vmem [#allocation4], 256
        %v2440 = vld [vmem:[%s2439] sm:$0xff]
        %v2441 = vld [vmem:[%s2439 + $0x8] sm:$0xff]
        %v2442 = vld [vmem:[%s2439 + $0x10] sm:$0xff]
        %v2443 = vld [vmem:[%s2439 + $0x18] sm:$0xff]
        %v2444 = vld [vmem:[%s2439 + $0x20] sm:$0xff]
        %v2445 = vld [vmem:[%s2439 + $0x28] sm:$0xff]
        %v2446 = vld [vmem:[%s2439 + $0x30] sm:$0xff]
        %v2447 = vld [vmem:[%s2439 + $0x38] sm:$0xff]
        %v2448 = vld [vmem:[%s2439 + $0x40] sm:$0xff]
        %v2449 = vld [vmem:[%s2439 + $0x48] sm:$0xff]
        %v2450 = vld [vmem:[%s2439 + $0x50] sm:$0xff]
        %v2451 = vld [vmem:[%s2439 + $0x58] sm:$0xff]
        %v2452 = vld [vmem:[%s2439 + $0x60] sm:$0xff]
        %v2453 = vld [vmem:[%s2439 + $0x68] sm:$0xff]
        %v2454 = vld [vmem:[%s2439 + $0x70] sm:$0xff]
        %v2455 = vld [vmem:[%s2439 + $0x78] sm:$0xff]
        %v2456 = vrot.slane %v2362, 2
        %2458 = vmatpush.msra.mxu0 %v2455
        %2459 = vmatpush.msra.mxu0 %v2454
        %2460 = vmatpush.msra.mxu0 %v2453
        %2461 = vmatpush.msra.mxu0 %v2452
        %2462 = vmatpush.msra.mxu0 %v2451
        %2463 = vmatpush.msra.mxu0 %v2450
        %2464 = vmatpush.msra.mxu0 %v2449
        %2465 = vmatpush.msra.mxu0 %v2448
        %2466 = vmatpush.msra.mxu0 %v2447
        %2467 = vmatpush.msra.mxu0 %v2446
        %2468 = vmatpush.msra.mxu0 %v2445
        %2469 = vmatpush.msra.mxu0 %v2444
        %2470 = vmatpush.msra.mxu0 %v2443
        %2471 = vmatpush.msra.mxu0 %v2442
        %2472 = vmatpush.msra.mxu0 %v2441
        %2473 = vmatpush.msra.mxu0 %v2440
        %2474 = vmatmul.f32.gmra.mxu0 %v2456
        %v2475 = vpop.f32.mrf.mxu0
        %v2476 = vadd.f32 0.0, %v2475
        %2477 = vdwg.mxu0
        %v2478 = vadd.f32 %v2437, %v2476
        %v2479 = vld [vmem:[%s33] sm:$0x1]
        %v2481 = vperm.slane %v2479, 0
        %v2483 = vadd.f32 %v2478, %v2481
        %v2484 = vmax.f32 %v2483, 0.0
        %v2485 = vsel %vm1301, %v1631, 0
        %v2488 = vsel %vm1310, %v2484, 0
        %2490 = vmatpush.msra.mxu0 0.0
        %2491 = vmatpush.msra.mxu0 0.0
        %2492 = vmatpush.msra.mxu0 0.0
        %2493 = vmatpush.msra.mxu0 0.0
        %2494 = vmatpush.msra.mxu0 0.0
        %2495 = vmatpush.msra.mxu0 0.0
        %2496 = vmatpush.msra.mxu0 0.0
        %2497 = vmatpush.msra.mxu0 0.0
        %2498 = vmatpush.msra.mxu0 0.0
        %2499 = vmatpush.msra.mxu0 0.0
        %2500 = vmatpush.msra.mxu0 0.0
        %2501 = vmatpush.msra.mxu0 0.0
        %2502 = vmatpush.msra.mxu0 0.0
        %2503 = vmatpush.msra.mxu0 0.0
        %2504 = vmatpush.msra.mxu0 0.0
        %2505 = vmatpush.msra.mxu0 %v2488
        %2506 = vmatmul.f32.gmra.mxu0 %v2485
        %v2507 = vpop.f32.mrf.mxu0
        %v2508 = vadd.f32 0.0, %v2507
        %2509 = vdwg.mxu0
        %v2510 = vsel %vm1301, %v1637, 0
        %2512 = vmatpush.msra.mxu0 0.0
        %2513 = vmatpush.msra.mxu0 0.0
        %2514 = vmatpush.msra.mxu0 0.0
        %2515 = vmatpush.msra.mxu0 0.0
        %2516 = vmatpush.msra.mxu0 0.0
        %2517 = vmatpush.msra.mxu0 0.0
        %2518 = vmatpush.msra.mxu0 0.0
        %2519 = vmatpush.msra.mxu0 0.0
        %2520 = vmatpush.msra.mxu0 0.0
        %2521 = vmatpush.msra.mxu0 0.0
        %2522 = vmatpush.msra.mxu0 0.0
        %2523 = vmatpush.msra.mxu0 0.0
        %2524 = vmatpush.msra.mxu0 0.0
        %2525 = vmatpush.msra.mxu0 0.0
        %2526 = vmatpush.msra.mxu0 0.0
        %2527 = vmatpush.msra.mxu0 %v2488
        %2528 = vmatmul.f32.gmra.mxu0 %v2510
        %v2529 = vpop.f32.mrf.mxu0
        %v2530 = vadd.f32 0.0, %v2529
        %2531 = vdwg.mxu0
        %v2532 = vmax.f32 %v2508, %v2530
        %v2534 = vrot.slane %v2532, 7
        %v2536 = vsel %vm1274, 0.0, %v2534
        %vm2537 = vcmask 1042432
        %v2538 = vsel %vm2537, %v2536, 0.0
        %v2539 = vld [vmem:[%s35] sm:$0xff]
        %v2540 = vld [vmem:[%s35 + $0x8] sm:$0xff]
        %v2541 = vld [vmem:[%s35 + $0x10] sm:$0xff]
        %v2542 = vld [vmem:[%s35 + $0x18] sm:$0xff]
        %v2543 = vld [vmem:[%s35 + $0x20] sm:$0xff]
        %v2544 = vld [vmem:[%s35 + $0x28] sm:$0xff]
        %v2545 = vld [vmem:[%s35 + $0x30] sm:$0xff]
        %v2546 = vld [vmem:[%s35 + $0x38] sm:$0xff]
        %v2547 = vld [vmem:[%s35 + $0x40] sm:$0xff]
        %v2548 = vld [vmem:[%s35 + $0x48] sm:$0xff]
        %v2549 = vld [vmem:[%s35 + $0x50] sm:$0xff]
        %v2550 = vld [vmem:[%s35 + $0x58] sm:$0xff]
        %v2551 = vld [vmem:[%s35 + $0x60] sm:$0xff]
        %v2552 = vld [vmem:[%s35 + $0x68] sm:$0xff]
        %v2553 = vld [vmem:[%s35 + $0x70] sm:$0xff]
        %v2554 = vld [vmem:[%s35 + $0x78] sm:$0xff]
        %v2555 = vld [vmem:[%s35 + $0x80] sm:$0xff]
        %v2556 = vld [vmem:[%s35 + $0x88] sm:$0xff]
        %v2557 = vld [vmem:[%s35 + $0x90] sm:$0xff]
        %v2558 = vld [vmem:[%s35 + $0x98] sm:$0xff]
        %v2559 = vld [vmem:[%s35 + $0xa0] sm:$0xff]
        %v2560 = vld [vmem:[%s35 + $0xa8] sm:$0xff]
        %v2561 = vld [vmem:[%s35 + $0xb0] sm:$0xff]
        %v2562 = vld [vmem:[%s35 + $0xb8] sm:$0xff]
        %v2563 = vld [vmem:[%s35 + $0xc0] sm:$0xff]
        %v2564 = vld [vmem:[%s35 + $0xc8] sm:$0xff]
        %v2565 = vld [vmem:[%s35 + $0xd0] sm:$0xff]
        %v2566 = vld [vmem:[%s35 + $0xd8] sm:$0xff]
        %v2567 = vld [vmem:[%s35 + $0xe0] sm:$0xff]
        %v2568 = vld [vmem:[%s35 + $0xe8] sm:$0xff]
        %v2569 = vld [vmem:[%s35 + $0xf0] sm:$0xff]
        %v2570 = vld [vmem:[%s35 + $0xf8] sm:$0xff]
        %s2571 = scalar_lea.vmem %s35, 256
        %v2572 = vld [vmem:[%s2571] sm:$0xff]
        %v2573 = vld [vmem:[%s2571 + $0x8] sm:$0xff]
        %v2574 = vld [vmem:[%s2571 + $0x10] sm:$0xff]
        %v2575 = vld [vmem:[%s2571 + $0x18] sm:$0xff]
        %v2576 = vld [vmem:[%s2571 + $0x20] sm:$0xff]
        %v2577 = vld [vmem:[%s2571 + $0x28] sm:$0xff]
        %v2578 = vld [vmem:[%s2571 + $0x30] sm:$0xff]
        %v2579 = vld [vmem:[%s2571 + $0x38] sm:$0xff]
        %v2580 = vld [vmem:[%s2571 + $0x40] sm:$0xff]
        %v2581 = vld [vmem:[%s2571 + $0x48] sm:$0xff]
        %v2582 = vld [vmem:[%s2571 + $0x50] sm:$0xff]
        %v2583 = vld [vmem:[%s2571 + $0x58] sm:$0xff]
        %v2584 = vld [vmem:[%s2571 + $0x60] sm:$0xff]
        %v2585 = vld [vmem:[%s2571 + $0x68] sm:$0xff]
        %v2586 = vld [vmem:[%s2571 + $0x70] sm:$0xff]
        %v2587 = vld [vmem:[%s2571 + $0x78] sm:$0xff]
        %v2588 = vld [vmem:[%s2571 + $0x80] sm:$0xff]
        %v2589 = vld [vmem:[%s2571 + $0x88] sm:$0xff]
        %v2590 = vld [vmem:[%s2571 + $0x90] sm:$0xff]
        %v2591 = vld [vmem:[%s2571 + $0x98] sm:$0xff]
        %v2592 = vld [vmem:[%s2571 + $0xa0] sm:$0xff]
        %v2593 = vld [vmem:[%s2571 + $0xa8] sm:$0xff]
        %v2594 = vld [vmem:[%s2571 + $0xb0] sm:$0xff]
        %v2595 = vld [vmem:[%s2571 + $0xb8] sm:$0xff]
        %v2596 = vld [vmem:[%s2571 + $0xc0] sm:$0xff]
        %v2597 = vld [vmem:[%s2571 + $0xc8] sm:$0xff]
        %v2598 = vld [vmem:[%s2571 + $0xd0] sm:$0xff]
        %v2599 = vld [vmem:[%s2571 + $0xd8] sm:$0xff]
        %v2600 = vld [vmem:[%s2571 + $0xe0] sm:$0xff]
        %v2601 = vld [vmem:[%s2571 + $0xe8] sm:$0xff]
        %v2602 = vld [vmem:[%s2571 + $0xf0] sm:$0xff]
        %v2603 = vld [vmem:[%s2571 + $0xf8] sm:$0xff]
        %v2605 = vrot.slane %v2538, 1
        %2607 = vmatpush.msra.mxu0 %v2602
        %2608 = vmatpush.msra.mxu0 %v2600
        %2609 = vmatpush.msra.mxu0 %v2598
        %2610 = vmatpush.msra.mxu0 %v2596
        %2611 = vmatpush.msra.mxu0 %v2594
        %2612 = vmatpush.msra.mxu0 %v2592
        %2613 = vmatpush.msra.mxu0 %v2590
        %2614 = vmatpush.msra.mxu0 %v2588
        %2615 = vmatpush.msra.mxu0 %v2586
        %2616 = vmatpush.msra.mxu0 %v2584
        %2617 = vmatpush.msra.mxu0 %v2582
        %2618 = vmatpush.msra.mxu0 %v2580
        %2619 = vmatpush.msra.mxu0 %v2578
        %2620 = vmatpush.msra.mxu0 %v2576
        %2621 = vmatpush.msra.mxu0 %v2574
        %2622 = vmatpush.msra.mxu0 %v2572
        %2623 = vmatmul.f32.gmra.mxu0 %v2605
        %v2624 = vpop.f32.mrf.mxu0
        %v2625 = vadd.f32 0.0, %v2624
        %2626 = vdwg.mxu0
        %2627 = vmatpush.msra.mxu0 %v2603
        %2628 = vmatpush.msra.mxu0 %v2601
        %2629 = vmatpush.msra.mxu0 %v2599
        %2630 = vmatpush.msra.mxu0 %v2597
        %2631 = vmatpush.msra.mxu0 %v2595
        %2632 = vmatpush.msra.mxu0 %v2593
        %2633 = vmatpush.msra.mxu0 %v2591
        %2634 = vmatpush.msra.mxu0 %v2589
        %2635 = vmatpush.msra.mxu0 %v2587
        %2636 = vmatpush.msra.mxu0 %v2585
        %2637 = vmatpush.msra.mxu0 %v2583
        %2638 = vmatpush.msra.mxu0 %v2581
        %2639 = vmatpush.msra.mxu0 %v2579
        %2640 = vmatpush.msra.mxu0 %v2577
        %2641 = vmatpush.msra.mxu0 %v2575
        %2642 = vmatpush.msra.mxu0 %v2573
        %2643 = vmatmul.f32.gmra.mxu0 %v2605
        %v2644 = vpop.f32.mrf.mxu0
        %v2645 = vadd.f32 0.0, %v2644
        %2646 = vdwg.mxu0
        %2647 = vmatpush.msra.mxu0 %v2569
        %2648 = vmatpush.msra.mxu0 %v2567
        %2649 = vmatpush.msra.mxu0 %v2565
        %2650 = vmatpush.msra.mxu0 %v2563
        %2651 = vmatpush.msra.mxu0 %v2561
        %2652 = vmatpush.msra.mxu0 %v2559
        %2653 = vmatpush.msra.mxu0 %v2557
        %2654 = vmatpush.msra.mxu0 %v2555
        %2655 = vmatpush.msra.mxu0 %v2553
        %2656 = vmatpush.msra.mxu0 %v2551
        %2657 = vmatpush.msra.mxu0 %v2549
        %2658 = vmatpush.msra.mxu0 %v2547
        %2659 = vmatpush.msra.mxu0 %v2545
        %2660 = vmatpush.msra.mxu0 %v2543
        %2661 = vmatpush.msra.mxu0 %v2541
        %2662 = vmatpush.msra.mxu0 %v2539
        %2663 = vmatmul.f32.gmra.mxu0 %v2538
        %v2664 = vpop.f32.mrf.mxu0
        %v2665 = vadd.f32 %v2625, %v2664
        %2666 = vdwg.mxu0
        %2667 = vmatpush.msra.mxu0 %v2570
        %2668 = vmatpush.msra.mxu0 %v2568
        %2669 = vmatpush.msra.mxu0 %v2566
        %2670 = vmatpush.msra.mxu0 %v2564
        %2671 = vmatpush.msra.mxu0 %v2562
        %2672 = vmatpush.msra.mxu0 %v2560
        %2673 = vmatpush.msra.mxu0 %v2558
        %2674 = vmatpush.msra.mxu0 %v2556
        %2675 = vmatpush.msra.mxu0 %v2554
        %2676 = vmatpush.msra.mxu0 %v2552
        %2677 = vmatpush.msra.mxu0 %v2550
        %2678 = vmatpush.msra.mxu0 %v2548
        %2679 = vmatpush.msra.mxu0 %v2546
        %2680 = vmatpush.msra.mxu0 %v2544
        %2681 = vmatpush.msra.mxu0 %v2542
        %2682 = vmatpush.msra.mxu0 %v2540
        %2683 = vmatmul.f32.gmra.mxu0 %v2538
        %v2684 = vpop.f32.mrf.mxu0
        %v2685 = vadd.f32 %v2645, %v2684
        %2686 = vdwg.mxu0
        %s2687 = scalar_lea.vmem %s35, 512
        %v2688 = vld [vmem:[%s2687] sm:$0xff]
        %v2689 = vld [vmem:[%s2687 + $0x8] sm:$0xff]
        %v2690 = vld [vmem:[%s2687 + $0x10] sm:$0xff]
        %v2691 = vld [vmem:[%s2687 + $0x18] sm:$0xff]
        %v2692 = vld [vmem:[%s2687 + $0x20] sm:$0xff]
        %v2693 = vld [vmem:[%s2687 + $0x28] sm:$0xff]
        %v2694 = vld [vmem:[%s2687 + $0x30] sm:$0xff]
        %v2695 = vld [vmem:[%s2687 + $0x38] sm:$0xff]
        %v2696 = vld [vmem:[%s2687 + $0x40] sm:$0xff]
        %v2697 = vld [vmem:[%s2687 + $0x48] sm:$0xff]
        %v2698 = vld [vmem:[%s2687 + $0x50] sm:$0xff]
        %v2699 = vld [vmem:[%s2687 + $0x58] sm:$0xff]
        %v2700 = vld [vmem:[%s2687 + $0x60] sm:$0xff]
        %v2701 = vld [vmem:[%s2687 + $0x68] sm:$0xff]
        %v2702 = vld [vmem:[%s2687 + $0x70] sm:$0xff]
        %v2703 = vld [vmem:[%s2687 + $0x78] sm:$0xff]
        %v2704 = vld [vmem:[%s2687 + $0x80] sm:$0xff]
        %v2705 = vld [vmem:[%s2687 + $0x88] sm:$0xff]
        %v2706 = vld [vmem:[%s2687 + $0x90] sm:$0xff]
        %v2707 = vld [vmem:[%s2687 + $0x98] sm:$0xff]
        %v2708 = vld [vmem:[%s2687 + $0xa0] sm:$0xff]
        %v2709 = vld [vmem:[%s2687 + $0xa8] sm:$0xff]
        %v2710 = vld [vmem:[%s2687 + $0xb0] sm:$0xff]
        %v2711 = vld [vmem:[%s2687 + $0xb8] sm:$0xff]
        %v2712 = vld [vmem:[%s2687 + $0xc0] sm:$0xff]
        %v2713 = vld [vmem:[%s2687 + $0xc8] sm:$0xff]
        %v2714 = vld [vmem:[%s2687 + $0xd0] sm:$0xff]
        %v2715 = vld [vmem:[%s2687 + $0xd8] sm:$0xff]
        %v2716 = vld [vmem:[%s2687 + $0xe0] sm:$0xff]
        %v2717 = vld [vmem:[%s2687 + $0xe8] sm:$0xff]
        %v2718 = vld [vmem:[%s2687 + $0xf0] sm:$0xff]
        %v2719 = vld [vmem:[%s2687 + $0xf8] sm:$0xff]
        %v2720 = vrot.slane %v2538, 2
        %2722 = vmatpush.msra.mxu0 %v2718
        %2723 = vmatpush.msra.mxu0 %v2716
        %2724 = vmatpush.msra.mxu0 %v2714
        %2725 = vmatpush.msra.mxu0 %v2712
        %2726 = vmatpush.msra.mxu0 %v2710
        %2727 = vmatpush.msra.mxu0 %v2708
        %2728 = vmatpush.msra.mxu0 %v2706
        %2729 = vmatpush.msra.mxu0 %v2704
        %2730 = vmatpush.msra.mxu0 %v2702
        %2731 = vmatpush.msra.mxu0 %v2700
        %2732 = vmatpush.msra.mxu0 %v2698
        %2733 = vmatpush.msra.mxu0 %v2696
        %2734 = vmatpush.msra.mxu0 %v2694
        %2735 = vmatpush.msra.mxu0 %v2692
        %2736 = vmatpush.msra.mxu0 %v2690
        %2737 = vmatpush.msra.mxu0 %v2688
        %2738 = vmatmul.f32.gmra.mxu0 %v2720
        %v2739 = vpop.f32.mrf.mxu0
        %v2740 = vadd.f32 0.0, %v2739
        %2741 = vdwg.mxu0
        %2742 = vmatpush.msra.mxu0 %v2719
        %2743 = vmatpush.msra.mxu0 %v2717
        %2744 = vmatpush.msra.mxu0 %v2715
        %2745 = vmatpush.msra.mxu0 %v2713
        %2746 = vmatpush.msra.mxu0 %v2711
        %2747 = vmatpush.msra.mxu0 %v2709
        %2748 = vmatpush.msra.mxu0 %v2707
        %2749 = vmatpush.msra.mxu0 %v2705
        %2750 = vmatpush.msra.mxu0 %v2703
        %2751 = vmatpush.msra.mxu0 %v2701
        %2752 = vmatpush.msra.mxu0 %v2699
        %2753 = vmatpush.msra.mxu0 %v2697
        %2754 = vmatpush.msra.mxu0 %v2695
        %2755 = vmatpush.msra.mxu0 %v2693
        %2756 = vmatpush.msra.mxu0 %v2691
        %2757 = vmatpush.msra.mxu0 %v2689
        %2758 = vmatmul.f32.gmra.mxu0 %v2720
        %v2759 = vpop.f32.mrf.mxu0
        %v2760 = vadd.f32 0.0, %v2759
        %2761 = vdwg.mxu0
        %v2762 = vadd.f32 %v2665, %v2740
        %v2763 = vadd.f32 %v2685, %v2760
        %v2764 = vld [vmem:[%s37] sm:$0x3]
        %v2766 = vperm.slane %v2764, 0
        %v2767 = vperm.slane %v2764, 1
        %v2770 = vadd.f32 %v2762, %v2766
        %v2771 = vadd.f32 %v2763, %v2767
        %v2772 = vmax.f32 %v2770, 0.0
        %v2773 = vmax.f32 %v2771, 0.0
        %v2776 = vrot.slane %v2772, 7
        %v2777 = vrot.slane %v2773, 7
        %v2780 = vsel %vm1274, 0.0, %v2776
        %v2781 = vsel %vm1274, 0.0, %v2777
        %v2782 = vsel %vm2537, %v2780, 0.0
        %v2783 = vsel %vm2537, %v2781, 0.0
        %v2784 = vld [vmem:[#allocation6] sm:$0xff]
        %v2785 = vld [vmem:[#allocation6 + $0x8] sm:$0xff]
        %v2786 = vld [vmem:[#allocation6 + $0x10] sm:$0xff]
        %v2787 = vld [vmem:[#allocation6 + $0x18] sm:$0xff]
        %v2788 = vld [vmem:[#allocation6 + $0x20] sm:$0xff]
        %v2789 = vld [vmem:[#allocation6 + $0x28] sm:$0xff]
        %v2790 = vld [vmem:[#allocation6 + $0x30] sm:$0xff]
        %v2791 = vld [vmem:[#allocation6 + $0x38] sm:$0xff]
        %v2792 = vld [vmem:[#allocation6 + $0x40] sm:$0xff]
        %v2793 = vld [vmem:[#allocation6 + $0x48] sm:$0xff]
        %v2794 = vld [vmem:[#allocation6 + $0x50] sm:$0xff]
        %v2795 = vld [vmem:[#allocation6 + $0x58] sm:$0xff]
        %v2796 = vld [vmem:[#allocation6 + $0x60] sm:$0xff]
        %v2797 = vld [vmem:[#allocation6 + $0x68] sm:$0xff]
        %v2798 = vld [vmem:[#allocation6 + $0x70] sm:$0xff]
        %v2799 = vld [vmem:[#allocation6 + $0x78] sm:$0xff]
        %v2800 = vld [vmem:[#allocation6 + $0x80] sm:$0xff]
        %v2801 = vld [vmem:[#allocation6 + $0x88] sm:$0xff]
        %v2802 = vld [vmem:[#allocation6 + $0x90] sm:$0xff]
        %v2803 = vld [vmem:[#allocation6 + $0x98] sm:$0xff]
        %v2804 = vld [vmem:[#allocation6 + $0xa0] sm:$0xff]
        %v2805 = vld [vmem:[#allocation6 + $0xa8] sm:$0xff]
        %v2806 = vld [vmem:[#allocation6 + $0xb0] sm:$0xff]
        %v2807 = vld [vmem:[#allocation6 + $0xb8] sm:$0xff]
        %v2808 = vld [vmem:[#allocation6 + $0xc0] sm:$0xff]
        %v2809 = vld [vmem:[#allocation6 + $0xc8] sm:$0xff]
        %v2810 = vld [vmem:[#allocation6 + $0xd0] sm:$0xff]
        %v2811 = vld [vmem:[#allocation6 + $0xd8] sm:$0xff]
        %v2812 = vld [vmem:[#allocation6 + $0xe0] sm:$0xff]
        %v2813 = vld [vmem:[#allocation6 + $0xe8] sm:$0xff]
        %v2814 = vld [vmem:[#allocation6 + $0xf0] sm:$0xff]
        %v2815 = vld [vmem:[#allocation6 + $0xf8] sm:$0xff]
        %s2816 = scalar_lea.vmem [#allocation6], 256
        %v2817 = vld [vmem:[%s2816] sm:$0xff]
        %v2818 = vld [vmem:[%s2816 + $0x8] sm:$0xff]
        %v2819 = vld [vmem:[%s2816 + $0x10] sm:$0xff]
        %v2820 = vld [vmem:[%s2816 + $0x18] sm:$0xff]
        %v2821 = vld [vmem:[%s2816 + $0x20] sm:$0xff]
        %v2822 = vld [vmem:[%s2816 + $0x28] sm:$0xff]
        %v2823 = vld [vmem:[%s2816 + $0x30] sm:$0xff]
        %v2824 = vld [vmem:[%s2816 + $0x38] sm:$0xff]
        %v2825 = vld [vmem:[%s2816 + $0x40] sm:$0xff]
        %v2826 = vld [vmem:[%s2816 + $0x48] sm:$0xff]
        %v2827 = vld [vmem:[%s2816 + $0x50] sm:$0xff]
        %v2828 = vld [vmem:[%s2816 + $0x58] sm:$0xff]
        %v2829 = vld [vmem:[%s2816 + $0x60] sm:$0xff]
        %v2830 = vld [vmem:[%s2816 + $0x68] sm:$0xff]
        %v2831 = vld [vmem:[%s2816 + $0x70] sm:$0xff]
        %v2832 = vld [vmem:[%s2816 + $0x78] sm:$0xff]
        %v2833 = vld [vmem:[%s2816 + $0x80] sm:$0xff]
        %v2834 = vld [vmem:[%s2816 + $0x88] sm:$0xff]
        %v2835 = vld [vmem:[%s2816 + $0x90] sm:$0xff]
        %v2836 = vld [vmem:[%s2816 + $0x98] sm:$0xff]
        %v2837 = vld [vmem:[%s2816 + $0xa0] sm:$0xff]
        %v2838 = vld [vmem:[%s2816 + $0xa8] sm:$0xff]
        %v2839 = vld [vmem:[%s2816 + $0xb0] sm:$0xff]
        %v2840 = vld [vmem:[%s2816 + $0xb8] sm:$0xff]
        %v2841 = vld [vmem:[%s2816 + $0xc0] sm:$0xff]
        %v2842 = vld [vmem:[%s2816 + $0xc8] sm:$0xff]
        %v2843 = vld [vmem:[%s2816 + $0xd0] sm:$0xff]
        %v2844 = vld [vmem:[%s2816 + $0xd8] sm:$0xff]
        %v2845 = vld [vmem:[%s2816 + $0xe0] sm:$0xff]
        %v2846 = vld [vmem:[%s2816 + $0xe8] sm:$0xff]
        %v2847 = vld [vmem:[%s2816 + $0xf0] sm:$0xff]
        %v2848 = vld [vmem:[%s2816 + $0xf8] sm:$0xff]
        %v2851 = vrot.slane %v2782, 1
        %v2852 = vrot.slane %v2783, 1
        %2855 = vmatpush.msra.mxu0 %v2832
        %2856 = vmatpush.msra.mxu0 %v2831
        %2857 = vmatpush.msra.mxu0 %v2830
        %2858 = vmatpush.msra.mxu0 %v2829
        %2859 = vmatpush.msra.mxu0 %v2828
        %2860 = vmatpush.msra.mxu0 %v2827
        %2861 = vmatpush.msra.mxu0 %v2826
        %2862 = vmatpush.msra.mxu0 %v2825
        %2863 = vmatpush.msra.mxu0 %v2824
        %2864 = vmatpush.msra.mxu0 %v2823
        %2865 = vmatpush.msra.mxu0 %v2822
        %2866 = vmatpush.msra.mxu0 %v2821
        %2867 = vmatpush.msra.mxu0 %v2820
        %2868 = vmatpush.msra.mxu0 %v2819
        %2869 = vmatpush.msra.mxu0 %v2818
        %2870 = vmatpush.msra.mxu0 %v2817
        %2871 = vmatmul.f32.gmra.mxu0 %v2851
        %v2872 = vpop.f32.mrf.mxu0
        %v2873 = vadd.f32 0.0, %v2872
        %2874 = vdwg.mxu0
        %2875 = vmatpush.msra.mxu0 %v2848
        %2876 = vmatpush.msra.mxu0 %v2847
        %2877 = vmatpush.msra.mxu0 %v2846
        %2878 = vmatpush.msra.mxu0 %v2845
        %2879 = vmatpush.msra.mxu0 %v2844
        %2880 = vmatpush.msra.mxu0 %v2843
        %2881 = vmatpush.msra.mxu0 %v2842
        %2882 = vmatpush.msra.mxu0 %v2841
        %2883 = vmatpush.msra.mxu0 %v2840
        %2884 = vmatpush.msra.mxu0 %v2839
        %2885 = vmatpush.msra.mxu0 %v2838
        %2886 = vmatpush.msra.mxu0 %v2837
        %2887 = vmatpush.msra.mxu0 %v2836
        %2888 = vmatpush.msra.mxu0 %v2835
        %2889 = vmatpush.msra.mxu0 %v2834
        %2890 = vmatpush.msra.mxu0 %v2833
        %2891 = vmatmul.f32.gmra.mxu0 %v2852
        %v2892 = vpop.f32.mrf.mxu0
        %v2893 = vadd.f32 %v2873, %v2892
        %2894 = vdwg.mxu0
        %2895 = vmatpush.msra.mxu0 %v2799
        %2896 = vmatpush.msra.mxu0 %v2798
        %2897 = vmatpush.msra.mxu0 %v2797
        %2898 = vmatpush.msra.mxu0 %v2796
        %2899 = vmatpush.msra.mxu0 %v2795
        %2900 = vmatpush.msra.mxu0 %v2794
        %2901 = vmatpush.msra.mxu0 %v2793
        %2902 = vmatpush.msra.mxu0 %v2792
        %2903 = vmatpush.msra.mxu0 %v2791
        %2904 = vmatpush.msra.mxu0 %v2790
        %2905 = vmatpush.msra.mxu0 %v2789
        %2906 = vmatpush.msra.mxu0 %v2788
        %2907 = vmatpush.msra.mxu0 %v2787
        %2908 = vmatpush.msra.mxu0 %v2786
        %2909 = vmatpush.msra.mxu0 %v2785
        %2910 = vmatpush.msra.mxu0 %v2784
        %2911 = vmatmul.f32.gmra.mxu0 %v2782
        %v2912 = vpop.f32.mrf.mxu0
        %v2913 = vadd.f32 %v2893, %v2912
        %2914 = vdwg.mxu0
        %2915 = vmatpush.msra.mxu0 %v2815
        %2916 = vmatpush.msra.mxu0 %v2814
        %2917 = vmatpush.msra.mxu0 %v2813
        %2918 = vmatpush.msra.mxu0 %v2812
        %2919 = vmatpush.msra.mxu0 %v2811
        %2920 = vmatpush.msra.mxu0 %v2810
        %2921 = vmatpush.msra.mxu0 %v2809
        %2922 = vmatpush.msra.mxu0 %v2808
        %2923 = vmatpush.msra.mxu0 %v2807
        %2924 = vmatpush.msra.mxu0 %v2806
        %2925 = vmatpush.msra.mxu0 %v2805
        %2926 = vmatpush.msra.mxu0 %v2804
        %2927 = vmatpush.msra.mxu0 %v2803
        %2928 = vmatpush.msra.mxu0 %v2802
        %2929 = vmatpush.msra.mxu0 %v2801
        %2930 = vmatpush.msra.mxu0 %v2800
        %2931 = vmatmul.f32.gmra.mxu0 %v2783
        %v2932 = vpop.f32.mrf.mxu0
        %v2933 = vadd.f32 %v2913, %v2932
        %2934 = vdwg.mxu0
        %s2935 = scalar_lea.vmem [#allocation6], 512
        %v2936 = vld [vmem:[%s2935] sm:$0xff]
        %v2937 = vld [vmem:[%s2935 + $0x8] sm:$0xff]
        %v2938 = vld [vmem:[%s2935 + $0x10] sm:$0xff]
        %v2939 = vld [vmem:[%s2935 + $0x18] sm:$0xff]
        %v2940 = vld [vmem:[%s2935 + $0x20] sm:$0xff]
        %v2941 = vld [vmem:[%s2935 + $0x28] sm:$0xff]
        %v2942 = vld [vmem:[%s2935 + $0x30] sm:$0xff]
        %v2943 = vld [vmem:[%s2935 + $0x38] sm:$0xff]
        %v2944 = vld [vmem:[%s2935 + $0x40] sm:$0xff]
        %v2945 = vld [vmem:[%s2935 + $0x48] sm:$0xff]
        %v2946 = vld [vmem:[%s2935 + $0x50] sm:$0xff]
        %v2947 = vld [vmem:[%s2935 + $0x58] sm:$0xff]
        %v2948 = vld [vmem:[%s2935 + $0x60] sm:$0xff]
        %v2949 = vld [vmem:[%s2935 + $0x68] sm:$0xff]
        %v2950 = vld [vmem:[%s2935 + $0x70] sm:$0xff]
        %v2951 = vld [vmem:[%s2935 + $0x78] sm:$0xff]
        %v2952 = vld [vmem:[%s2935 + $0x80] sm:$0xff]
        %v2953 = vld [vmem:[%s2935 + $0x88] sm:$0xff]
        %v2954 = vld [vmem:[%s2935 + $0x90] sm:$0xff]
        %v2955 = vld [vmem:[%s2935 + $0x98] sm:$0xff]
        %v2956 = vld [vmem:[%s2935 + $0xa0] sm:$0xff]
        %v2957 = vld [vmem:[%s2935 + $0xa8] sm:$0xff]
        %v2958 = vld [vmem:[%s2935 + $0xb0] sm:$0xff]
        %v2959 = vld [vmem:[%s2935 + $0xb8] sm:$0xff]
        %v2960 = vld [vmem:[%s2935 + $0xc0] sm:$0xff]
        %v2961 = vld [vmem:[%s2935 + $0xc8] sm:$0xff]
        %v2962 = vld [vmem:[%s2935 + $0xd0] sm:$0xff]
        %v2963 = vld [vmem:[%s2935 + $0xd8] sm:$0xff]
        %v2964 = vld [vmem:[%s2935 + $0xe0] sm:$0xff]
        %v2965 = vld [vmem:[%s2935 + $0xe8] sm:$0xff]
        %v2966 = vld [vmem:[%s2935 + $0xf0] sm:$0xff]
        %v2967 = vld [vmem:[%s2935 + $0xf8] sm:$0xff]
        %v2968 = vrot.slane %v2782, 2
        %v2969 = vrot.slane %v2783, 2
        %2972 = vmatpush.msra.mxu0 %v2951
        %2973 = vmatpush.msra.mxu0 %v2950
        %2974 = vmatpush.msra.mxu0 %v2949
        %2975 = vmatpush.msra.mxu0 %v2948
        %2976 = vmatpush.msra.mxu0 %v2947
        %2977 = vmatpush.msra.mxu0 %v2946
        %2978 = vmatpush.msra.mxu0 %v2945
        %2979 = vmatpush.msra.mxu0 %v2944
        %2980 = vmatpush.msra.mxu0 %v2943
        %2981 = vmatpush.msra.mxu0 %v2942
        %2982 = vmatpush.msra.mxu0 %v2941
        %2983 = vmatpush.msra.mxu0 %v2940
        %2984 = vmatpush.msra.mxu0 %v2939
        %2985 = vmatpush.msra.mxu0 %v2938
        %2986 = vmatpush.msra.mxu0 %v2937
        %2987 = vmatpush.msra.mxu0 %v2936
        %2988 = vmatmul.f32.gmra.mxu0 %v2968
        %v2989 = vpop.f32.mrf.mxu0
        %v2990 = vadd.f32 0.0, %v2989
        %2991 = vdwg.mxu0
        %2992 = vmatpush.msra.mxu0 %v2967
        %2993 = vmatpush.msra.mxu0 %v2966
        %2994 = vmatpush.msra.mxu0 %v2965
        %2995 = vmatpush.msra.mxu0 %v2964
        %2996 = vmatpush.msra.mxu0 %v2963
        %2997 = vmatpush.msra.mxu0 %v2962
        %2998 = vmatpush.msra.mxu0 %v2961
        %2999 = vmatpush.msra.mxu0 %v2960
        %3000 = vmatpush.msra.mxu0 %v2959
        %3001 = vmatpush.msra.mxu0 %v2958
        %3002 = vmatpush.msra.mxu0 %v2957
        %3003 = vmatpush.msra.mxu0 %v2956
        %3004 = vmatpush.msra.mxu0 %v2955
        %3005 = vmatpush.msra.mxu0 %v2954
        %3006 = vmatpush.msra.mxu0 %v2953
        %3007 = vmatpush.msra.mxu0 %v2952
        %3008 = vmatmul.f32.gmra.mxu0 %v2969
        %v3009 = vpop.f32.mrf.mxu0
        %v3010 = vadd.f32 %v2990, %v3009
        %3011 = vdwg.mxu0
        %v3012 = vadd.f32 %v2933, %v3010
        %v3013 = vld [vmem:[%s41] sm:$0x1]
        %v3015 = vperm.slane %v3013, 0
        %v3017 = vadd.f32 %v3012, %v3015
        %v3018 = vmax.f32 %v3017, 0.0
        %v3019 = vcvt.s32.f32 %v1623
        %v3020 = vcvt.s32.f32 %v1626
        %v3021 = vmul.f32 %v3019, 0.5
        %v3022 = vsub.f32 %v3021, 0.25
        %v3023 = vmax.f32 %v3022, 0.0
        %v3024 = vfloor.f32 %v3023
        %v3025 = vsub.f32 %v3023, %v3024
        %v3026 = vadd.f32 %v3024, 1.0
        %v3027 = vmin.f32 %v3026, 1.0
        %vm3028 = vcmp.eq.f32.partialorder %v3020, %v3024
        %v3029 = vsub.f32 1.0, %v3025
        %v3030 = vsel %vm3028, %v3029, 0.0
        %vm3031 = vcmp.eq.f32.partialorder %v3020, %v3027
        %v3032 = vsel %vm3031, %v3025, 0.0
        %v3033 = vadd.f32 %v3030, %v3032
        %vm3034 = vcmask 15360
        %v3036 = vsel %vm3034, %v3033, 0
        %vm3038 = vcmask 1041408
        %v3040 = vsel %vm3038, %v3018, 0
        %3042 = vmatpush.msra.mxu0 0.0
        %3043 = vmatpush.msra.mxu0 0.0
        %3044 = vmatpush.msra.mxu0 0.0
        %3045 = vmatpush.msra.mxu0 0.0
        %3046 = vmatpush.msra.mxu0 0.0
        %3047 = vmatpush.msra.mxu0 0.0
        %3048 = vmatpush.msra.mxu0 0.0
        %3049 = vmatpush.msra.mxu0 0.0
        %3050 = vmatpush.msra.mxu0 0.0
        %3051 = vmatpush.msra.mxu0 0.0
        %3052 = vmatpush.msra.mxu0 0.0
        %3053 = vmatpush.msra.mxu0 0.0
        %3054 = vmatpush.msra.mxu0 0.0
        %3055 = vmatpush.msra.mxu0 0.0
        %3056 = vmatpush.msra.mxu0 0.0
        %3057 = vmatpush.msra.mxu0 %v3040
        %3058 = vmatmul.f32.gmra.mxu0 %v3036
        %v3059 = vpop.f32.mrf.mxu0
        %v3060 = vadd.f32 0.0, %v3059
        %3061 = vdwg.mxu0
        %v3063 = vrot.slane %v3060, 7
        %v3065 = vsel %vm1274, 0.0, %v3063
        %v3066 = vsel %vm2254, %v3065, 0.0
        %v3067 = vld [vmem:[#allocation7] sm:$0xff]
        %v3068 = vld [vmem:[#allocation7 + $0x8] sm:$0xff]
        %v3069 = vld [vmem:[#allocation7 + $0x10] sm:$0xff]
        %v3070 = vld [vmem:[#allocation7 + $0x18] sm:$0xff]
        %v3071 = vld [vmem:[#allocation7 + $0x20] sm:$0xff]
        %v3072 = vld [vmem:[#allocation7 + $0x28] sm:$0xff]
        %v3073 = vld [vmem:[#allocation7 + $0x30] sm:$0xff]
        %v3074 = vld [vmem:[#allocation7 + $0x38] sm:$0xff]
        %v3075 = vld [vmem:[#allocation7 + $0x40] sm:$0xff]
        %v3076 = vld [vmem:[#allocation7 + $0x48] sm:$0xff]
        %v3077 = vld [vmem:[#allocation7 + $0x50] sm:$0xff]
        %v3078 = vld [vmem:[#allocation7 + $0x58] sm:$0xff]
        %v3079 = vld [vmem:[#allocation7 + $0x60] sm:$0xff]
        %v3080 = vld [vmem:[#allocation7 + $0x68] sm:$0xff]
        %v3081 = vld [vmem:[#allocation7 + $0x70] sm:$0xff]
        %v3082 = vld [vmem:[#allocation7 + $0x78] sm:$0xff]
        %s3083 = scalar_lea.vmem [#allocation7], 256
        %v3084 = vld [vmem:[%s3083] sm:$0xff]
        %v3085 = vld [vmem:[%s3083 + $0x8] sm:$0xff]
        %v3086 = vld [vmem:[%s3083 + $0x10] sm:$0xff]
        %v3087 = vld [vmem:[%s3083 + $0x18] sm:$0xff]
        %v3088 = vld [vmem:[%s3083 + $0x20] sm:$0xff]
        %v3089 = vld [vmem:[%s3083 + $0x28] sm:$0xff]
        %v3090 = vld [vmem:[%s3083 + $0x30] sm:$0xff]
        %v3091 = vld [vmem:[%s3083 + $0x38] sm:$0xff]
        %v3092 = vld [vmem:[%s3083 + $0x40] sm:$0xff]
        %v3093 = vld [vmem:[%s3083 + $0x48] sm:$0xff]
        %v3094 = vld [vmem:[%s3083 + $0x50] sm:$0xff]
        %v3095 = vld [vmem:[%s3083 + $0x58] sm:$0xff]
        %v3096 = vld [vmem:[%s3083 + $0x60] sm:$0xff]
        %v3097 = vld [vmem:[%s3083 + $0x68] sm:$0xff]
        %v3098 = vld [vmem:[%s3083 + $0x70] sm:$0xff]
        %v3099 = vld [vmem:[%s3083 + $0x78] sm:$0xff]
        %v3101 = vrot.slane %v3066, 1
        %3103 = vmatpush.msra.mxu0 %v3099
        %3104 = vmatpush.msra.mxu0 %v3098
        %3105 = vmatpush.msra.mxu0 %v3097
        %3106 = vmatpush.msra.mxu0 %v3096
        %3107 = vmatpush.msra.mxu0 %v3095
        %3108 = vmatpush.msra.mxu0 %v3094
        %3109 = vmatpush.msra.mxu0 %v3093
        %3110 = vmatpush.msra.mxu0 %v3092
        %3111 = vmatpush.msra.mxu0 %v3091
        %3112 = vmatpush.msra.mxu0 %v3090
        %3113 = vmatpush.msra.mxu0 %v3089
        %3114 = vmatpush.msra.mxu0 %v3088
        %3115 = vmatpush.msra.mxu0 %v3087
        %3116 = vmatpush.msra.mxu0 %v3086
        %3117 = vmatpush.msra.mxu0 %v3085
        %3118 = vmatpush.msra.mxu0 %v3084
        %3119 = vmatmul.f32.gmra.mxu0 %v3101
        %v3120 = vpop.f32.mrf.mxu0
        %v3121 = vadd.f32 0.0, %v3120
        %3122 = vdwg.mxu0
        %3123 = vmatpush.msra.mxu0 %v3082
        %3124 = vmatpush.msra.mxu0 %v3081
        %3125 = vmatpush.msra.mxu0 %v3080
        %3126 = vmatpush.msra.mxu0 %v3079
        %3127 = vmatpush.msra.mxu0 %v3078
        %3128 = vmatpush.msra.mxu0 %v3077
        %3129 = vmatpush.msra.mxu0 %v3076
        %3130 = vmatpush.msra.mxu0 %v3075
        %3131 = vmatpush.msra.mxu0 %v3074
        %3132 = vmatpush.msra.mxu0 %v3073
        %3133 = vmatpush.msra.mxu0 %v3072
        %3134 = vmatpush.msra.mxu0 %v3071
        %3135 = vmatpush.msra.mxu0 %v3070
        %3136 = vmatpush.msra.mxu0 %v3069
        %3137 = vmatpush.msra.mxu0 %v3068
        %3138 = vmatpush.msra.mxu0 %v3067
        %3139 = vmatmul.f32.gmra.mxu0 %v3066
        %v3140 = vpop.f32.mrf.mxu0
        %v3141 = vadd.f32 %v3121, %v3140
        %3142 = vdwg.mxu0
        %s3143 = scalar_lea.vmem [#allocation7], 512
        %v3144 = vld [vmem:[%s3143] sm:$0xff]
        %v3145 = vld [vmem:[%s3143 + $0x8] sm:$0xff]
        %v3146 = vld [vmem:[%s3143 + $0x10] sm:$0xff]
        %v3147 = vld [vmem:[%s3143 + $0x18] sm:$0xff]
        %v3148 = vld [vmem:[%s3143 + $0x20] sm:$0xff]
        %v3149 = vld [vmem:[%s3143 + $0x28] sm:$0xff]
        %v3150 = vld [vmem:[%s3143 + $0x30] sm:$0xff]
        %v3151 = vld [vmem:[%s3143 + $0x38] sm:$0xff]
        %v3152 = vld [vmem:[%s3143 + $0x40] sm:$0xff]
        %v3153 = vld [vmem:[%s3143 + $0x48] sm:$0xff]
        %v3154 = vld [vmem:[%s3143 + $0x50] sm:$0xff]
        %v3155 = vld [vmem:[%s3143 + $0x58] sm:$0xff]
        %v3156 = vld [vmem:[%s3143 + $0x60] sm:$0xff]
        %v3157 = vld [vmem:[%s3143 + $0x68] sm:$0xff]
        %v3158 = vld [vmem:[%s3143 + $0x70] sm:$0xff]
        %v3159 = vld [vmem:[%s3143 + $0x78] sm:$0xff]
        %v3160 = vrot.slane %v3066, 2
        %3162 = vmatpush.msra.mxu0 %v3159
        %3163 = vmatpush.msra.mxu0 %v3158
        %3164 = vmatpush.msra.mxu0 %v3157
        %3165 = vmatpush.msra.mxu0 %v3156
        %3166 = vmatpush.msra.mxu0 %v3155
        %3167 = vmatpush.msra.mxu0 %v3154
        %3168 = vmatpush.msra.mxu0 %v3153
        %3169 = vmatpush.msra.mxu0 %v3152
        %3170 = vmatpush.msra.mxu0 %v3151
        %3171 = vmatpush.msra.mxu0 %v3150
        %3172 = vmatpush.msra.mxu0 %v3149
        %3173 = vmatpush.msra.mxu0 %v3148
        %3174 = vmatpush.msra.mxu0 %v3147
        %3175 = vmatpush.msra.mxu0 %v3146
        %3176 = vmatpush.msra.mxu0 %v3145
        %3177 = vmatpush.msra.mxu0 %v3144
        %3178 = vmatmul.f32.gmra.mxu0 %v3160
        %v3179 = vpop.f32.mrf.mxu0
        %v3180 = vadd.f32 0.0, %v3179
        %3181 = vdwg.mxu0
        %v3182 = vadd.f32 %v3141, %v3180
        %v3183 = vrot.slane %v2484, 7
        %v3185 = vsel %vm1274, 0.0, %v3183
        %v3186 = vsel %vm2254, %v3185, 0.0
        %v3187 = vld [vmem:[#allocation7 + $0x80] sm:$0xff]
        %v3188 = vld [vmem:[#allocation7 + $0x88] sm:$0xff]
        %v3189 = vld [vmem:[#allocation7 + $0x90] sm:$0xff]
        %v3190 = vld [vmem:[#allocation7 + $0x98] sm:$0xff]
        %v3191 = vld [vmem:[#allocation7 + $0xa0] sm:$0xff]
        %v3192 = vld [vmem:[#allocation7 + $0xa8] sm:$0xff]
        %v3193 = vld [vmem:[#allocation7 + $0xb0] sm:$0xff]
        %v3194 = vld [vmem:[#allocation7 + $0xb8] sm:$0xff]
        %v3195 = vld [vmem:[#allocation7 + $0xc0] sm:$0xff]
        %v3196 = vld [vmem:[#allocation7 + $0xc8] sm:$0xff]
        %v3197 = vld [vmem:[#allocation7 + $0xd0] sm:$0xff]
        %v3198 = vld [vmem:[#allocation7 + $0xd8] sm:$0xff]
        %v3199 = vld [vmem:[#allocation7 + $0xe0] sm:$0xff]
        %v3200 = vld [vmem:[#allocation7 + $0xe8] sm:$0xff]
        %v3201 = vld [vmem:[#allocation7 + $0xf0] sm:$0xff]
        %v3202 = vld [vmem:[#allocation7 + $0xf8] sm:$0xff]
        %v3203 = vld [vmem:[%s3083 + $0x80] sm:$0xff]
        %v3204 = vld [vmem:[%s3083 + $0x88] sm:$0xff]
        %v3205 = vld [vmem:[%s3083 + $0x90] sm:$0xff]
        %v3206 = vld [vmem:[%s3083 + $0x98] sm:$0xff]
        %v3207 = vld [vmem:[%s3083 + $0xa0] sm:$0xff]
        %v3208 = vld [vmem:[%s3083 + $0xa8] sm:$0xff]
        %v3209 = vld [vmem:[%s3083 + $0xb0] sm:$0xff]
        %v3210 = vld [vmem:[%s3083 + $0xb8] sm:$0xff]
        %v3211 = vld [vmem:[%s3083 + $0xc0] sm:$0xff]
        %v3212 = vld [vmem:[%s3083 + $0xc8] sm:$0xff]
        %v3213 = vld [vmem:[%s3083 + $0xd0] sm:$0xff]
        %v3214 = vld [vmem:[%s3083 + $0xd8] sm:$0xff]
        %v3215 = vld [vmem:[%s3083 + $0xe0] sm:$0xff]
        %v3216 = vld [vmem:[%s3083 + $0xe8] sm:$0xff]
        %v3217 = vld [vmem:[%s3083 + $0xf0] sm:$0xff]
        %v3218 = vld [vmem:[%s3083 + $0xf8] sm:$0xff]
        %v3220 = vrot.slane %v3186, 1
        %3222 = vmatpush.msra.mxu0 %v3218
        %3223 = vmatpush.msra.mxu0 %v3217
        %3224 = vmatpush.msra.mxu0 %v3216
        %3225 = vmatpush.msra.mxu0 %v3215
        %3226 = vmatpush.msra.mxu0 %v3214
        %3227 = vmatpush.msra.mxu0 %v3213
        %3228 = vmatpush.msra.mxu0 %v3212
        %3229 = vmatpush.msra.mxu0 %v3211
        %3230 = vmatpush.msra.mxu0 %v3210
        %3231 = vmatpush.msra.mxu0 %v3209
        %3232 = vmatpush.msra.mxu0 %v3208
        %3233 = vmatpush.msra.mxu0 %v3207
        %3234 = vmatpush.msra.mxu0 %v3206
        %3235 = vmatpush.msra.mxu0 %v3205
        %3236 = vmatpush.msra.mxu0 %v3204
        %3237 = vmatpush.msra.mxu0 %v3203
        %3238 = vmatmul.f32.gmra.mxu0 %v3220
        %v3239 = vpop.f32.mrf.mxu0
        %v3240 = vadd.f32 0.0, %v3239
        %3241 = vdwg.mxu0
        %3242 = vmatpush.msra.mxu0 %v3202
        %3243 = vmatpush.msra.mxu0 %v3201
        %3244 = vmatpush.msra.mxu0 %v3200
        %3245 = vmatpush.msra.mxu0 %v3199
        %3246 = vmatpush.msra.mxu0 %v3198
        %3247 = vmatpush.msra.mxu0 %v3197
        %3248 = vmatpush.msra.mxu0 %v3196
        %3249 = vmatpush.msra.mxu0 %v3195
        %3250 = vmatpush.msra.mxu0 %v3194
        %3251 = vmatpush.msra.mxu0 %v3193
        %3252 = vmatpush.msra.mxu0 %v3192
        %3253 = vmatpush.msra.mxu0 %v3191
        %3254 = vmatpush.msra.mxu0 %v3190
        %3255 = vmatpush.msra.mxu0 %v3189
        %3256 = vmatpush.msra.mxu0 %v3188
        %3257 = vmatpush.msra.mxu0 %v3187
        %3258 = vmatmul.f32.gmra.mxu0 %v3186
        %v3259 = vpop.f32.mrf.mxu0
        %v3260 = vadd.f32 %v3240, %v3259
        %3261 = vdwg.mxu0
        %v3262 = vld [vmem:[%s3143 + $0x80] sm:$0xff]
        %v3263 = vld [vmem:[%s3143 + $0x88] sm:$0xff]
        %v3264 = vld [vmem:[%s3143 + $0x90] sm:$0xff]
        %v3265 = vld [vmem:[%s3143 + $0x98] sm:$0xff]
        %v3266 = vld [vmem:[%s3143 + $0xa0] sm:$0xff]
        %v3267 = vld [vmem:[%s3143 + $0xa8] sm:$0xff]
        %v3268 = vld [vmem:[%s3143 + $0xb0] sm:$0xff]
        %v3269 = vld [vmem:[%s3143 + $0xb8] sm:$0xff]
        %v3270 = vld [vmem:[%s3143 + $0xc0] sm:$0xff]
        %v3271 = vld [vmem:[%s3143 + $0xc8] sm:$0xff]
        %v3272 = vld [vmem:[%s3143 + $0xd0] sm:$0xff]
        %v3273 = vld [vmem:[%s3143 + $0xd8] sm:$0xff]
        %v3274 = vld [vmem:[%s3143 + $0xe0] sm:$0xff]
        %v3275 = vld [vmem:[%s3143 + $0xe8] sm:$0xff]
        %v3276 = vld [vmem:[%s3143 + $0xf0] sm:$0xff]
        %v3277 = vld [vmem:[%s3143 + $0xf8] sm:$0xff]
        %v3278 = vrot.slane %v3186, 2
        %3280 = vmatpush.msra.mxu0 %v3277
        %3281 = vmatpush.msra.mxu0 %v3276
        %3282 = vmatpush.msra.mxu0 %v3275
        %3283 = vmatpush.msra.mxu0 %v3274
        %3284 = vmatpush.msra.mxu0 %v3273
        %3285 = vmatpush.msra.mxu0 %v3272
        %3286 = vmatpush.msra.mxu0 %v3271
        %3287 = vmatpush.msra.mxu0 %v3270
        %3288 = vmatpush.msra.mxu0 %v3269
        %3289 = vmatpush.msra.mxu0 %v3268
        %3290 = vmatpush.msra.mxu0 %v3267
        %3291 = vmatpush.msra.mxu0 %v3266
        %3292 = vmatpush.msra.mxu0 %v3265
        %3293 = vmatpush.msra.mxu0 %v3264
        %3294 = vmatpush.msra.mxu0 %v3263
        %3295 = vmatpush.msra.mxu0 %v3262
        %3296 = vmatmul.f32.gmra.mxu0 %v3278
        %v3297 = vpop.f32.mrf.mxu0
        %v3298 = vadd.f32 0.0, %v3297
        %3299 = vdwg.mxu0
        %v3300 = vadd.f32 %v3260, %v3298
        %v3301 = vadd.f32 %v3182, %v3300
        %v3302 = vld [vmem:[%s45] sm:$0x1]
        %v3304 = vperm.slane %v3302, 0
        %v3306 = vadd.f32 %v3301, %v3304
        %v3307 = vmax.f32 %v3306, 0.0
        %v3309 = vrot.slane %v3307, 7
        %v3311 = vsel %vm1274, 0.0, %v3309
        %v3312 = vsel %vm2254, %v3311, 0.0
        %v3313 = vld [vmem:[%s47] sm:$0xff]
        %v3314 = vld [vmem:[%s47 + $0x8] sm:$0xff]
        %v3315 = vld [vmem:[%s47 + $0x10] sm:$0xff]
        %v3316 = vld [vmem:[%s47 + $0x18] sm:$0xff]
        %v3317 = vld [vmem:[%s47 + $0x20] sm:$0xff]
        %v3318 = vld [vmem:[%s47 + $0x28] sm:$0xff]
        %v3319 = vld [vmem:[%s47 + $0x30] sm:$0xff]
        %v3320 = vld [vmem:[%s47 + $0x38] sm:$0xff]
        %v3321 = vld [vmem:[%s47 + $0x40] sm:$0xff]
        %v3322 = vld [vmem:[%s47 + $0x48] sm:$0xff]
        %v3323 = vld [vmem:[%s47 + $0x50] sm:$0xff]
        %v3324 = vld [vmem:[%s47 + $0x58] sm:$0xff]
        %v3325 = vld [vmem:[%s47 + $0x60] sm:$0xff]
        %v3326 = vld [vmem:[%s47 + $0x68] sm:$0xff]
        %v3327 = vld [vmem:[%s47 + $0x70] sm:$0xff]
        %v3328 = vld [vmem:[%s47 + $0x78] sm:$0xff]
        %s3329 = scalar_lea.vmem %s47, 128
        %v3330 = vld [vmem:[%s3329] sm:$0xff]
        %v3331 = vld [vmem:[%s3329 + $0x8] sm:$0xff]
        %v3332 = vld [vmem:[%s3329 + $0x10] sm:$0xff]
        %v3333 = vld [vmem:[%s3329 + $0x18] sm:$0xff]
        %v3334 = vld [vmem:[%s3329 + $0x20] sm:$0xff]
        %v3335 = vld [vmem:[%s3329 + $0x28] sm:$0xff]
        %v3336 = vld [vmem:[%s3329 + $0x30] sm:$0xff]
        %v3337 = vld [vmem:[%s3329 + $0x38] sm:$0xff]
        %v3338 = vld [vmem:[%s3329 + $0x40] sm:$0xff]
        %v3339 = vld [vmem:[%s3329 + $0x48] sm:$0xff]
        %v3340 = vld [vmem:[%s3329 + $0x50] sm:$0xff]
        %v3341 = vld [vmem:[%s3329 + $0x58] sm:$0xff]
        %v3342 = vld [vmem:[%s3329 + $0x60] sm:$0xff]
        %v3343 = vld [vmem:[%s3329 + $0x68] sm:$0xff]
        %v3344 = vld [vmem:[%s3329 + $0x70] sm:$0xff]
        %v3345 = vld [vmem:[%s3329 + $0x78] sm:$0xff]
        %v3347 = vrot.slane %v3312, 1
        %3349 = vmatpush.msra.mxu0 %v3345
        %3350 = vmatpush.msra.mxu0 %v3344
        %3351 = vmatpush.msra.mxu0 %v3343
        %3352 = vmatpush.msra.mxu0 %v3342
        %3353 = vmatpush.msra.mxu0 %v3341
        %3354 = vmatpush.msra.mxu0 %v3340
        %3355 = vmatpush.msra.mxu0 %v3339
        %3356 = vmatpush.msra.mxu0 %v3338
        %3357 = vmatpush.msra.mxu0 %v3337
        %3358 = vmatpush.msra.mxu0 %v3336
        %3359 = vmatpush.msra.mxu0 %v3335
        %3360 = vmatpush.msra.mxu0 %v3334
        %3361 = vmatpush.msra.mxu0 %v3333
        %3362 = vmatpush.msra.mxu0 %v3332
        %3363 = vmatpush.msra.mxu0 %v3331
        %3364 = vmatpush.msra.mxu0 %v3330
        %3365 = vmatmul.f32.gmra.mxu0 %v3347
        %v3366 = vpop.f32.mrf.mxu0
        %v3367 = vadd.f32 0.0, %v3366
        %3368 = vdwg.mxu0
        %3369 = vmatpush.msra.mxu0 %v3328
        %3370 = vmatpush.msra.mxu0 %v3327
        %3371 = vmatpush.msra.mxu0 %v3326
        %3372 = vmatpush.msra.mxu0 %v3325
        %3373 = vmatpush.msra.mxu0 %v3324
        %3374 = vmatpush.msra.mxu0 %v3323
        %3375 = vmatpush.msra.mxu0 %v3322
        %3376 = vmatpush.msra.mxu0 %v3321
        %3377 = vmatpush.msra.mxu0 %v3320
        %3378 = vmatpush.msra.mxu0 %v3319
        %3379 = vmatpush.msra.mxu0 %v3318
        %3380 = vmatpush.msra.mxu0 %v3317
        %3381 = vmatpush.msra.mxu0 %v3316
        %3382 = vmatpush.msra.mxu0 %v3315
        %3383 = vmatpush.msra.mxu0 %v3314
        %3384 = vmatpush.msra.mxu0 %v3313
        %3385 = vmatmul.f32.gmra.mxu0 %v3312
        %v3386 = vpop.f32.mrf.mxu0
        %v3387 = vadd.f32 %v3367, %v3386
        %3388 = vdwg.mxu0
        %s3389 = scalar_lea.vmem %s47, 256
        %v3390 = vld [vmem:[%s3389] sm:$0xff]
        %v3391 = vld [vmem:[%s3389 + $0x8] sm:$0xff]
        %v3392 = vld [vmem:[%s3389 + $0x10] sm:$0xff]
        %v3393 = vld [vmem:[%s3389 + $0x18] sm:$0xff]
        %v3394 = vld [vmem:[%s3389 + $0x20] sm:$0xff]
        %v3395 = vld [vmem:[%s3389 + $0x28] sm:$0xff]
        %v3396 = vld [vmem:[%s3389 + $0x30] sm:$0xff]
        %v3397 = vld [vmem:[%s3389 + $0x38] sm:$0xff]
        %v3398 = vld [vmem:[%s3389 + $0x40] sm:$0xff]
        %v3399 = vld [vmem:[%s3389 + $0x48] sm:$0xff]
        %v3400 = vld [vmem:[%s3389 + $0x50] sm:$0xff]
        %v3401 = vld [vmem:[%s3389 + $0x58] sm:$0xff]
        %v3402 = vld [vmem:[%s3389 + $0x60] sm:$0xff]
        %v3403 = vld [vmem:[%s3389 + $0x68] sm:$0xff]
        %v3404 = vld [vmem:[%s3389 + $0x70] sm:$0xff]
        %v3405 = vld [vmem:[%s3389 + $0x78] sm:$0xff]
        %v3406 = vrot.slane %v3312, 2
        %3408 = vmatpush.msra.mxu0 %v3405
        %3409 = vmatpush.msra.mxu0 %v3404
        %3410 = vmatpush.msra.mxu0 %v3403
        %3411 = vmatpush.msra.mxu0 %v3402
        %3412 = vmatpush.msra.mxu0 %v3401
        %3413 = vmatpush.msra.mxu0 %v3400
        %3414 = vmatpush.msra.mxu0 %v3399
        %3415 = vmatpush.msra.mxu0 %v3398
        %3416 = vmatpush.msra.mxu0 %v3397
        %3417 = vmatpush.msra.mxu0 %v3396
        %3418 = vmatpush.msra.mxu0 %v3395
        %3419 = vmatpush.msra.mxu0 %v3394
        %3420 = vmatpush.msra.mxu0 %v3393
        %3421 = vmatpush.msra.mxu0 %v3392
        %3422 = vmatpush.msra.mxu0 %v3391
        %3423 = vmatpush.msra.mxu0 %v3390
        %3424 = vmatmul.f32.gmra.mxu0 %v3406
        %v3425 = vpop.f32.mrf.mxu0
        %v3426 = vadd.f32 0.0, %v3425
        %3427 = vdwg.mxu0
        %v3428 = vadd.f32 %v3387, %v3426
        %v3429 = vld [vmem:[%s49] sm:$0x1]
        %v3431 = vperm.slane %v3429, 0
        %v3433 = vadd.f32 %v3428, %v3431
        %v3434 = vmax.f32 %v3433, 0.0
        %v3435 = vmin.f32 %v3026, 3.0
        %vm3436 = vcmp.eq.f32.partialorder %v3020, %v3435
        %v3437 = vsel %vm3436, %v3025, 0.0
        %v3438 = vadd.f32 %v3030, %v3437
        %v3440 = vsel %vm1301, %v3438, 0
        %v3443 = vsel %vm1310, %v3434, 0
        %3445 = vmatpush.msra.mxu0 0.0
        %3446 = vmatpush.msra.mxu0 0.0
        %3447 = vmatpush.msra.mxu0 0.0
        %3448 = vmatpush.msra.mxu0 0.0
        %3449 = vmatpush.msra.mxu0 0.0
        %3450 = vmatpush.msra.mxu0 0.0
        %3451 = vmatpush.msra.mxu0 0.0
        %3452 = vmatpush.msra.mxu0 0.0
        %3453 = vmatpush.msra.mxu0 0.0
        %3454 = vmatpush.msra.mxu0 0.0
        %3455 = vmatpush.msra.mxu0 0.0
        %3456 = vmatpush.msra.mxu0 0.0
        %3457 = vmatpush.msra.mxu0 0.0
        %3458 = vmatpush.msra.mxu0 0.0
        %3459 = vmatpush.msra.mxu0 0.0
        %3460 = vmatpush.msra.mxu0 %v3443
        %3461 = vmatmul.f32.gmra.mxu0 %v3440
        %v3462 = vpop.f32.mrf.mxu0
        %v3463 = vadd.f32 0.0, %v3462
        %3464 = vdwg.mxu0
        %v3466 = vrot.slane %v3463, 7
        %v3468 = vsel %vm1274, 0.0, %v3466
        %v3469 = vsel %vm1274, %v3466, 0.0
        %v3470 = vld [vmem:[%s51] sm:$0xff]
        %v3471 = vld [vmem:[%s51 + $0x8] sm:$0xff]
        %v3472 = vld [vmem:[%s51 + $0x10] sm:$0xff]
        %v3473 = vld [vmem:[%s51 + $0x18] sm:$0xff]
        %v3474 = vld [vmem:[%s51 + $0x20] sm:$0xff]
        %v3475 = vld [vmem:[%s51 + $0x28] sm:$0xff]
        %v3476 = vld [vmem:[%s51 + $0x30] sm:$0xff]
        %v3477 = vld [vmem:[%s51 + $0x38] sm:$0xff]
        %s3478 = scalar_lea.vmem %s51, 128
        %v3479 = vld [vmem:[%s3478] sm:$0xff]
        %v3480 = vld [vmem:[%s3478 + $0x8] sm:$0xff]
        %v3481 = vld [vmem:[%s3478 + $0x10] sm:$0xff]
        %v3482 = vld [vmem:[%s3478 + $0x18] sm:$0xff]
        %v3483 = vld [vmem:[%s3478 + $0x20] sm:$0xff]
        %v3484 = vld [vmem:[%s3478 + $0x28] sm:$0xff]
        %v3485 = vld [vmem:[%s3478 + $0x30] sm:$0xff]
        %v3486 = vld [vmem:[%s3478 + $0x38] sm:$0xff]
        %v3489 = vrot.slane %v3468, 1
        %v3490 = vrot.slane %v3469, 1
        %v3491 = vsel %vm1291, %v3489, %v3490
        %v3492 = vsel %vm2118, %v3491, 0
        %3494 = vmatpush.msra.mxu0 0.0
        %3495 = vmatpush.msra.mxu0 0.0
        %3496 = vmatpush.msra.mxu0 0.0
        %3497 = vmatpush.msra.mxu0 0.0
        %3498 = vmatpush.msra.mxu0 0.0
        %3499 = vmatpush.msra.mxu0 0.0
        %3500 = vmatpush.msra.mxu0 0.0
        %3501 = vmatpush.msra.mxu0 0.0
        %3502 = vmatpush.msra.mxu0 %v3486
        %3503 = vmatpush.msra.mxu0 %v3485
        %3504 = vmatpush.msra.mxu0 %v3484
        %3505 = vmatpush.msra.mxu0 %v3483
        %3506 = vmatpush.msra.mxu0 %v3482
        %3507 = vmatpush.msra.mxu0 %v3481
        %3508 = vmatpush.msra.mxu0 %v3480
        %3509 = vmatpush.msra.mxu0 %v3479
        %3510 = vmatmul.f32.gmra.mxu0 %v3492
        %v3511 = vpop.f32.mrf.mxu0
        %v3512 = vadd.f32 0.0, %v3511
        %3513 = vdwg.mxu0
        %v3514 = vsel %vm2118, %v3468, 0
        %3516 = vmatpush.msra.mxu0 0.0
        %3517 = vmatpush.msra.mxu0 0.0
        %3518 = vmatpush.msra.mxu0 0.0
        %3519 = vmatpush.msra.mxu0 0.0
        %3520 = vmatpush.msra.mxu0 0.0
        %3521 = vmatpush.msra.mxu0 0.0
        %3522 = vmatpush.msra.mxu0 0.0
        %3523 = vmatpush.msra.mxu0 0.0
        %3524 = vmatpush.msra.mxu0 %v3477
        %3525 = vmatpush.msra.mxu0 %v3476
        %3526 = vmatpush.msra.mxu0 %v3475
        %3527 = vmatpush.msra.mxu0 %v3474
        %3528 = vmatpush.msra.mxu0 %v3473
        %3529 = vmatpush.msra.mxu0 %v3472
        %3530 = vmatpush.msra.mxu0 %v3471
        %3531 = vmatpush.msra.mxu0 %v3470
        %3532 = vmatmul.f32.gmra.mxu0 %v3514
        %v3533 = vpop.f32.mrf.mxu0
        %v3534 = vadd.f32 %v3512, %v3533
        %3535 = vdwg.mxu0
        %s3536 = scalar_lea.vmem %s51, 256
        %v3537 = vld [vmem:[%s3536] sm:$0xff]
        %v3538 = vld [vmem:[%s3536 + $0x8] sm:$0xff]
        %v3539 = vld [vmem:[%s3536 + $0x10] sm:$0xff]
        %v3540 = vld [vmem:[%s3536 + $0x18] sm:$0xff]
        %v3541 = vld [vmem:[%s3536 + $0x20] sm:$0xff]
        %v3542 = vld [vmem:[%s3536 + $0x28] sm:$0xff]
        %v3543 = vld [vmem:[%s3536 + $0x30] sm:$0xff]
        %v3544 = vld [vmem:[%s3536 + $0x38] sm:$0xff]
        %v3545 = vrot.slane %v3468, 2
        %v3546 = vrot.slane %v3469, 2
        %v3547 = vsel %vm1385, %v3545, %v3546
        %v3548 = vsel %vm2118, %v3547, 0
        %3550 = vmatpush.msra.mxu0 0.0
        %3551 = vmatpush.msra.mxu0 0.0
        %3552 = vmatpush.msra.mxu0 0.0
        %3553 = vmatpush.msra.mxu0 0.0
        %3554 = vmatpush.msra.mxu0 0.0
        %3555 = vmatpush.msra.mxu0 0.0
        %3556 = vmatpush.msra.mxu0 0.0
        %3557 = vmatpush.msra.mxu0 0.0
        %3558 = vmatpush.msra.mxu0 %v3544
        %3559 = vmatpush.msra.mxu0 %v3543
        %3560 = vmatpush.msra.mxu0 %v3542
        %3561 = vmatpush.msra.mxu0 %v3541
        %3562 = vmatpush.msra.mxu0 %v3540
        %3563 = vmatpush.msra.mxu0 %v3539
        %3564 = vmatpush.msra.mxu0 %v3538
        %3565 = vmatpush.msra.mxu0 %v3537
        %3566 = vmatmul.f32.gmra.mxu0 %v3548
        %v3567 = vpop.f32.mrf.mxu0
        %v3568 = vadd.f32 0.0, %v3567
        %3569 = vdwg.mxu0
        %v3570 = vadd.f32 %v3534, %v3568
        %v3572 = vrot.slane %v2203, 7
        %v3574 = vsel %vm1274, 0.0, %v3572
        %v3575 = vsel %vm1274, %v3572, 0.0
        %v3576 = vld [vmem:[%s51 + $0x40] sm:$0xff]
        %v3577 = vld [vmem:[%s51 + $0x48] sm:$0xff]
        %v3578 = vld [vmem:[%s51 + $0x50] sm:$0xff]
        %v3579 = vld [vmem:[%s51 + $0x58] sm:$0xff]
        %v3580 = vld [vmem:[%s51 + $0x60] sm:$0xff]
        %v3581 = vld [vmem:[%s51 + $0x68] sm:$0xff]
        %v3582 = vld [vmem:[%s51 + $0x70] sm:$0xff]
        %v3583 = vld [vmem:[%s51 + $0x78] sm:$0xff]
        %v3584 = vld [vmem:[%s3478 + $0x40] sm:$0xff]
        %v3585 = vld [vmem:[%s3478 + $0x48] sm:$0xff]
        %v3586 = vld [vmem:[%s3478 + $0x50] sm:$0xff]
        %v3587 = vld [vmem:[%s3478 + $0x58] sm:$0xff]
        %v3588 = vld [vmem:[%s3478 + $0x60] sm:$0xff]
        %v3589 = vld [vmem:[%s3478 + $0x68] sm:$0xff]
        %v3590 = vld [vmem:[%s3478 + $0x70] sm:$0xff]
        %v3591 = vld [vmem:[%s3478 + $0x78] sm:$0xff]
        %v3594 = vrot.slane %v3574, 1
        %v3595 = vrot.slane %v3575, 1
        %v3596 = vsel %vm1291, %v3594, %v3595
        %v3597 = vsel %vm2118, %v3596, 0
        %3599 = vmatpush.msra.mxu0 0.0
        %3600 = vmatpush.msra.mxu0 0.0
        %3601 = vmatpush.msra.mxu0 0.0
        %3602 = vmatpush.msra.mxu0 0.0
        %3603 = vmatpush.msra.mxu0 0.0
        %3604 = vmatpush.msra.mxu0 0.0
        %3605 = vmatpush.msra.mxu0 0.0
        %3606 = vmatpush.msra.mxu0 0.0
        %3607 = vmatpush.msra.mxu0 %v3591
        %3608 = vmatpush.msra.mxu0 %v3590
        %3609 = vmatpush.msra.mxu0 %v3589
        %3610 = vmatpush.msra.mxu0 %v3588
        %3611 = vmatpush.msra.mxu0 %v3587
        %3612 = vmatpush.msra.mxu0 %v3586
        %3613 = vmatpush.msra.mxu0 %v3585
        %3614 = vmatpush.msra.mxu0 %v3584
        %3615 = vmatmul.f32.gmra.mxu0 %v3597
        %v3616 = vpop.f32.mrf.mxu0
        %v3617 = vadd.f32 0.0, %v3616
        %3618 = vdwg.mxu0
        %v3619 = vsel %vm2118, %v3574, 0
        %3621 = vmatpush.msra.mxu0 0.0
        %3622 = vmatpush.msra.mxu0 0.0
        %3623 = vmatpush.msra.mxu0 0.0
        %3624 = vmatpush.msra.mxu0 0.0
        %3625 = vmatpush.msra.mxu0 0.0
        %3626 = vmatpush.msra.mxu0 0.0
        %3627 = vmatpush.msra.mxu0 0.0
        %3628 = vmatpush.msra.mxu0 0.0
        %3629 = vmatpush.msra.mxu0 %v3583
        %3630 = vmatpush.msra.mxu0 %v3582
        %3631 = vmatpush.msra.mxu0 %v3581
        %3632 = vmatpush.msra.mxu0 %v3580
        %3633 = vmatpush.msra.mxu0 %v3579
        %3634 = vmatpush.msra.mxu0 %v3578
        %3635 = vmatpush.msra.mxu0 %v3577
        %3636 = vmatpush.msra.mxu0 %v3576
        %3637 = vmatmul.f32.gmra.mxu0 %v3619
        %v3638 = vpop.f32.mrf.mxu0
        %v3639 = vadd.f32 %v3617, %v3638
        %3640 = vdwg.mxu0
        %v3641 = vld [vmem:[%s3536 + $0x40] sm:$0xff]
        %v3642 = vld [vmem:[%s3536 + $0x48] sm:$0xff]
        %v3643 = vld [vmem:[%s3536 + $0x50] sm:$0xff]
        %v3644 = vld [vmem:[%s3536 + $0x58] sm:$0xff]
        %v3645 = vld [vmem:[%s3536 + $0x60] sm:$0xff]
        %v3646 = vld [vmem:[%s3536 + $0x68] sm:$0xff]
        %v3647 = vld [vmem:[%s3536 + $0x70] sm:$0xff]
        %v3648 = vld [vmem:[%s3536 + $0x78] sm:$0xff]
        %v3649 = vrot.slane %v3574, 2
        %v3650 = vrot.slane %v3575, 2
        %v3651 = vsel %vm1385, %v3649, %v3650
        %v3652 = vsel %vm2118, %v3651, 0
        %3654 = vmatpush.msra.mxu0 0.0
        %3655 = vmatpush.msra.mxu0 0.0
        %3656 = vmatpush.msra.mxu0 0.0
        %3657 = vmatpush.msra.mxu0 0.0
        %3658 = vmatpush.msra.mxu0 0.0
        %3659 = vmatpush.msra.mxu0 0.0
        %3660 = vmatpush.msra.mxu0 0.0
        %3661 = vmatpush.msra.mxu0 0.0
        %3662 = vmatpush.msra.mxu0 %v3648
        %3663 = vmatpush.msra.mxu0 %v3647
        %3664 = vmatpush.msra.mxu0 %v3646
        %3665 = vmatpush.msra.mxu0 %v3645
        %3666 = vmatpush.msra.mxu0 %v3644
        %3667 = vmatpush.msra.mxu0 %v3643
        %3668 = vmatpush.msra.mxu0 %v3642
        %3669 = vmatpush.msra.mxu0 %v3641
        %3670 = vmatmul.f32.gmra.mxu0 %v3652
        %v3671 = vpop.f32.mrf.mxu0
        %v3672 = vadd.f32 0.0, %v3671
        %3673 = vdwg.mxu0
        %v3674 = vadd.f32 %v3639, %v3672
        %v3675 = vadd.f32 %v3570, %v3674
        %v3676 = vld [vmem:[%s53] sm:$0x1]
        %v3678 = vperm.slane %v3676, 0
        %v3680 = vadd.f32 %v3675, %v3678
        %v3681 = vmax.f32 %v3680, 0.0
        %v3683 = vrot.slane %v3681, 7
        %v3685 = vsel %vm1274, 0.0, %v3683
        %v3686 = vsel %vm1274, %v3683, 0.0
        %v3687 = vld [vmem:[%s55] sm:$0xff]
        %v3688 = vld [vmem:[%s55 + $0x8] sm:$0xff]
        %v3689 = vld [vmem:[%s55 + $0x10] sm:$0xff]
        %v3690 = vld [vmem:[%s55 + $0x18] sm:$0xff]
        %v3691 = vld [vmem:[%s55 + $0x20] sm:$0xff]
        %v3692 = vld [vmem:[%s55 + $0x28] sm:$0xff]
        %v3693 = vld [vmem:[%s55 + $0x30] sm:$0xff]
        %v3694 = vld [vmem:[%s55 + $0x38] sm:$0xff]
        %s3695 = scalar_lea.vmem %s55, 64
        %v3696 = vld [vmem:[%s3695] sm:$0xff]
        %v3697 = vld [vmem:[%s3695 + $0x8] sm:$0xff]
        %v3698 = vld [vmem:[%s3695 + $0x10] sm:$0xff]
        %v3699 = vld [vmem:[%s3695 + $0x18] sm:$0xff]
        %v3700 = vld [vmem:[%s3695 + $0x20] sm:$0xff]
        %v3701 = vld [vmem:[%s3695 + $0x28] sm:$0xff]
        %v3702 = vld [vmem:[%s3695 + $0x30] sm:$0xff]
        %v3703 = vld [vmem:[%s3695 + $0x38] sm:$0xff]
        %v3706 = vrot.slane %v3685, 1
        %v3707 = vrot.slane %v3686, 1
        %v3708 = vsel %vm1291, %v3706, %v3707
        %v3709 = vsel %vm2118, %v3708, 0
        %3711 = vmatpush.msra.mxu0 0.0
        %3712 = vmatpush.msra.mxu0 0.0
        %3713 = vmatpush.msra.mxu0 0.0
        %3714 = vmatpush.msra.mxu0 0.0
        %3715 = vmatpush.msra.mxu0 0.0
        %3716 = vmatpush.msra.mxu0 0.0
        %3717 = vmatpush.msra.mxu0 0.0
        %3718 = vmatpush.msra.mxu0 0.0
        %3719 = vmatpush.msra.mxu0 %v3703
        %3720 = vmatpush.msra.mxu0 %v3702
        %3721 = vmatpush.msra.mxu0 %v3701
        %3722 = vmatpush.msra.mxu0 %v3700
        %3723 = vmatpush.msra.mxu0 %v3699
        %3724 = vmatpush.msra.mxu0 %v3698
        %3725 = vmatpush.msra.mxu0 %v3697
        %3726 = vmatpush.msra.mxu0 %v3696
        %3727 = vmatmul.f32.gmra.mxu0 %v3709
        %v3728 = vpop.f32.mrf.mxu0
        %v3729 = vadd.f32 0.0, %v3728
        %3730 = vdwg.mxu0
        %v3731 = vsel %vm2118, %v3685, 0
        %3733 = vmatpush.msra.mxu0 0.0
        %3734 = vmatpush.msra.mxu0 0.0
        %3735 = vmatpush.msra.mxu0 0.0
        %3736 = vmatpush.msra.mxu0 0.0
        %3737 = vmatpush.msra.mxu0 0.0
        %3738 = vmatpush.msra.mxu0 0.0
        %3739 = vmatpush.msra.mxu0 0.0
        %3740 = vmatpush.msra.mxu0 0.0
        %3741 = vmatpush.msra.mxu0 %v3694
        %3742 = vmatpush.msra.mxu0 %v3693
        %3743 = vmatpush.msra.mxu0 %v3692
        %3744 = vmatpush.msra.mxu0 %v3691
        %3745 = vmatpush.msra.mxu0 %v3690
        %3746 = vmatpush.msra.mxu0 %v3689
        %3747 = vmatpush.msra.mxu0 %v3688
        %3748 = vmatpush.msra.mxu0 %v3687
        %3749 = vmatmul.f32.gmra.mxu0 %v3731
        %v3750 = vpop.f32.mrf.mxu0
        %v3751 = vadd.f32 %v3729, %v3750
        %3752 = vdwg.mxu0
        %s3753 = scalar_lea.vmem %s55, 128
        %v3754 = vld [vmem:[%s3753] sm:$0xff]
        %v3755 = vld [vmem:[%s3753 + $0x8] sm:$0xff]
        %v3756 = vld [vmem:[%s3753 + $0x10] sm:$0xff]
        %v3757 = vld [vmem:[%s3753 + $0x18] sm:$0xff]
        %v3758 = vld [vmem:[%s3753 + $0x20] sm:$0xff]
        %v3759 = vld [vmem:[%s3753 + $0x28] sm:$0xff]
        %v3760 = vld [vmem:[%s3753 + $0x30] sm:$0xff]
        %v3761 = vld [vmem:[%s3753 + $0x38] sm:$0xff]
        %v3762 = vrot.slane %v3685, 2
        %v3763 = vrot.slane %v3686, 2
        %v3764 = vsel %vm1385, %v3762, %v3763
        %v3765 = vsel %vm2118, %v3764, 0
        %3767 = vmatpush.msra.mxu0 0.0
        %3768 = vmatpush.msra.mxu0 0.0
        %3769 = vmatpush.msra.mxu0 0.0
        %3770 = vmatpush.msra.mxu0 0.0
        %3771 = vmatpush.msra.mxu0 0.0
        %3772 = vmatpush.msra.mxu0 0.0
        %3773 = vmatpush.msra.mxu0 0.0
        %3774 = vmatpush.msra.mxu0 0.0
        %3775 = vmatpush.msra.mxu0 %v3761
        %3776 = vmatpush.msra.mxu0 %v3760
        %3777 = vmatpush.msra.mxu0 %v3759
        %3778 = vmatpush.msra.mxu0 %v3758
        %3779 = vmatpush.msra.mxu0 %v3757
        %3780 = vmatpush.msra.mxu0 %v3756
        %3781 = vmatpush.msra.mxu0 %v3755
        %3782 = vmatpush.msra.mxu0 %v3754
        %3783 = vmatmul.f32.gmra.mxu0 %v3765
        %v3784 = vpop.f32.mrf.mxu0
        %v3785 = vadd.f32 0.0, %v3784
        %3786 = vdwg.mxu0
        %v3787 = vadd.f32 %v3751, %v3785
        %v3788 = vld [vmem:[%s57] sm:$0x1]
        %v3790 = vperm.slane %v3788, 0
        %v3792 = vadd.f32 %v3787, %v3790
        %v3793 = vmax.f32 %v3792, 0.0
        %v3794 = vcvt.s32.f32 %v1624
        %v3795 = vmul.f32 %v3794, 0.5
        %v3796 = vsub.f32 %v3795, 0.25
        %v3797 = vmax.f32 %v3796, 0.0
        %v3798 = vfloor.f32 %v3797
        %v3799 = vsub.f32 %v3797, %v3798
        %v3800 = vadd.f32 %v3798, 1.0
        %v3801 = vmin.f32 %v3026, 7.0
        %v3802 = vmin.f32 %v3800, 7.0
        %vm3803 = vcmp.eq.f32.partialorder %v3020, %v3798
        %v3804 = vsub.f32 1.0, %v3799
        %v3805 = vsel %vm3803, %v3804, 0.0
        %vm3806 = vcmp.eq.f32.partialorder %v3020, %v3801
        %vm3807 = vcmp.eq.f32.partialorder %v3020, %v3802
        %v3808 = vsel %vm3806, %v3025, 0.0
        %v3809 = vsel %vm3807, %v3799, 0.0
        %v3810 = vadd.f32 %v3030, %v3808
        %v3811 = vadd.f32 %v3805, %v3809
        %v3813 = vsel %vm2204, %v3810, 0
        %v3816 = vsel %vm2204, %v3811, 0
        %3818 = vmatpush.msra.mxu0 0.0
        %3819 = vmatpush.msra.mxu0 0.0
        %3820 = vmatpush.msra.mxu0 0.0
        %3821 = vmatpush.msra.mxu0 0.0
        %3822 = vmatpush.msra.mxu0 0.0
        %3823 = vmatpush.msra.mxu0 0.0
        %3824 = vmatpush.msra.mxu0 0.0
        %3825 = vmatpush.msra.mxu0 0.0
        %3826 = vmatpush.msra.mxu0 0.0
        %3827 = vmatpush.msra.mxu0 0.0
        %3828 = vmatpush.msra.mxu0 0.0
        %3829 = vmatpush.msra.mxu0 0.0
        %3830 = vmatpush.msra.mxu0 0.0
        %3831 = vmatpush.msra.mxu0 0.0
        %3832 = vmatpush.msra.mxu0 0.0
        %3833 = vmatpush.msra.mxu0 %v3793
        %3834 = vmatmul.f32.gmra.mxu0 %v3813
        %v3835 = vpop.f32.mrf.mxu0
        %v3836 = vadd.f32 0.0, %v3835
        %3837 = vmatmul.f32.gmra.mxu0 %v3816
        %v3838 = vpop.f32.mrf.mxu0
        %v3839 = vadd.f32 0.0, %v3838
        %3840 = vdwg.mxu0
        %v3843 = vrot.slane %v3836, 7
        %v3844 = vrot.slane %v3839, 7
        %v3845 = vsel %vm1274, %v3843, %v3844
        %v3848 = vsel %vm1274, 0.0, %v3843
        %v3849 = vsel %vm1274, %v3844, 0.0
        %v3850 = vld [vmem:[%s59] sm:$0xff]
        %v3851 = vld [vmem:[%s59 + $0x8] sm:$0xff]
        %v3852 = vld [vmem:[%s59 + $0x10] sm:$0xff]
        %v3853 = vld [vmem:[%s59 + $0x18] sm:$0xff]
        %s3854 = scalar_lea.vmem %s59, 64
        %v3855 = vld [vmem:[%s3854] sm:$0xff]
        %v3856 = vld [vmem:[%s3854 + $0x8] sm:$0xff]
        %v3857 = vld [vmem:[%s3854 + $0x10] sm:$0xff]
        %v3858 = vld [vmem:[%s3854 + $0x18] sm:$0xff]
        %v3861 = vrot.slane %v3848, 1
        %v3862 = vrot.slane %v3845, 1
        %v3863 = vsel %vm1291, %v3861, %v3862
        %v3864 = vrot.slane %v3849, 1
        %v3865 = vsel %vm1291, %v3862, %v3864
        %v3866 = vsel %vm1639, %v3863, 0
        %v3868 = vsel %vm1639, %v3865, 0
        %3870 = vmatpush.msra.mxu0 0.0
        %3871 = vmatpush.msra.mxu0 0.0
        %3872 = vmatpush.msra.mxu0 0.0
        %3873 = vmatpush.msra.mxu0 0.0
        %3874 = vmatpush.msra.mxu0 0.0
        %3875 = vmatpush.msra.mxu0 0.0
        %3876 = vmatpush.msra.mxu0 0.0
        %3877 = vmatpush.msra.mxu0 0.0
        %3878 = vmatpush.msra.mxu0 0.0
        %3879 = vmatpush.msra.mxu0 0.0
        %3880 = vmatpush.msra.mxu0 0.0
        %3881 = vmatpush.msra.mxu0 0.0
        %3882 = vmatpush.msra.mxu0 %v3858
        %3883 = vmatpush.msra.mxu0 %v3857
        %3884 = vmatpush.msra.mxu0 %v3856
        %3885 = vmatpush.msra.mxu0 %v3855
        %3886 = vmatmul.f32.gmra.mxu0 %v3866
        %v3887 = vpop.f32.mrf.mxu0
        %v3888 = vadd.f32 0.0, %v3887
        %3889 = vmatmul.f32.gmra.mxu0 %v3868
        %v3890 = vpop.f32.mrf.mxu0
        %v3891 = vadd.f32 0.0, %v3890
        %3892 = vdwg.mxu0
        %v3893 = vsel %vm1639, %v3848, 0
        %v3895 = vsel %vm1639, %v3845, 0
        %3897 = vmatpush.msra.mxu0 0.0
        %3898 = vmatpush.msra.mxu0 0.0
        %3899 = vmatpush.msra.mxu0 0.0
        %3900 = vmatpush.msra.mxu0 0.0
        %3901 = vmatpush.msra.mxu0 0.0
        %3902 = vmatpush.msra.mxu0 0.0
        %3903 = vmatpush.msra.mxu0 0.0
        %3904 = vmatpush.msra.mxu0 0.0
        %3905 = vmatpush.msra.mxu0 0.0
        %3906 = vmatpush.msra.mxu0 0.0
        %3907 = vmatpush.msra.mxu0 0.0
        %3908 = vmatpush.msra.mxu0 0.0
        %3909 = vmatpush.msra.mxu0 %v3853
        %3910 = vmatpush.msra.mxu0 %v3852
        %3911 = vmatpush.msra.mxu0 %v3851
        %3912 = vmatpush.msra.mxu0 %v3850
        %3913 = vmatmul.f32.gmra.mxu0 %v3893
        %v3914 = vpop.f32.mrf.mxu0
        %v3915 = vadd.f32 %v3888, %v3914
        %3916 = vmatmul.f32.gmra.mxu0 %v3895
        %v3917 = vpop.f32.mrf.mxu0
        %v3918 = vadd.f32 %v3891, %v3917
        %3919 = vdwg.mxu0
        %s3920 = scalar_lea.vmem %s59, 128
        %v3921 = vld [vmem:[%s3920] sm:$0xff]
        %v3922 = vld [vmem:[%s3920 + $0x8] sm:$0xff]
        %v3923 = vld [vmem:[%s3920 + $0x10] sm:$0xff]
        %v3924 = vld [vmem:[%s3920 + $0x18] sm:$0xff]
        %v3925 = vrot.slane %v3848, 2
        %v3926 = vrot.slane %v3845, 2
        %v3927 = vsel %vm1385, %v3925, %v3926
        %v3928 = vrot.slane %v3849, 2
        %v3929 = vsel %vm1385, %v3926, %v3928
        %v3930 = vsel %vm1639, %v3927, 0
        %v3932 = vsel %vm1639, %v3929, 0
        %3934 = vmatpush.msra.mxu0 0.0
        %3935 = vmatpush.msra.mxu0 0.0
        %3936 = vmatpush.msra.mxu0 0.0
        %3937 = vmatpush.msra.mxu0 0.0
        %3938 = vmatpush.msra.mxu0 0.0
        %3939 = vmatpush.msra.mxu0 0.0
        %3940 = vmatpush.msra.mxu0 0.0
        %3941 = vmatpush.msra.mxu0 0.0
        %3942 = vmatpush.msra.mxu0 0.0
        %3943 = vmatpush.msra.mxu0 0.0
        %3944 = vmatpush.msra.mxu0 0.0
        %3945 = vmatpush.msra.mxu0 0.0
        %3946 = vmatpush.msra.mxu0 %v3924
        %3947 = vmatpush.msra.mxu0 %v3923
        %3948 = vmatpush.msra.mxu0 %v3922
        %3949 = vmatpush.msra.mxu0 %v3921
        %3950 = vmatmul.f32.gmra.mxu0 %v3930
        %v3951 = vpop.f32.mrf.mxu0
        %v3952 = vadd.f32 0.0, %v3951
        %3953 = vmatmul.f32.gmra.mxu0 %v3932
        %v3954 = vpop.f32.mrf.mxu0
        %v3955 = vadd.f32 0.0, %v3954
        %3956 = vdwg.mxu0
        %v3957 = vadd.f32 %v3915, %v3952
        %v3958 = vadd.f32 %v3918, %v3955
        %v3961 = vrot.slane %v1944, 7
        %v3962 = vrot.slane %v1945, 7
        %v3963 = vsel %vm1274, %v3961, %v3962
        %v3966 = vsel %vm1274, 0.0, %v3961
        %v3967 = vsel %vm1274, %v3962, 0.0
        %v3968 = vld [vmem:[%s59 + $0x20] sm:$0xff]
        %v3969 = vld [vmem:[%s59 + $0x28] sm:$0xff]
        %v3970 = vld [vmem:[%s59 + $0x30] sm:$0xff]
        %v3971 = vld [vmem:[%s59 + $0x38] sm:$0xff]
        %v3972 = vld [vmem:[%s3854 + $0x20] sm:$0xff]
        %v3973 = vld [vmem:[%s3854 + $0x28] sm:$0xff]
        %v3974 = vld [vmem:[%s3854 + $0x30] sm:$0xff]
        %v3975 = vld [vmem:[%s3854 + $0x38] sm:$0xff]
        %v3978 = vrot.slane %v3966, 1
        %v3979 = vrot.slane %v3963, 1
        %v3980 = vsel %vm1291, %v3978, %v3979
        %v3981 = vrot.slane %v3967, 1
        %v3982 = vsel %vm1291, %v3979, %v3981
        %v3983 = vsel %vm1639, %v3980, 0
        %v3985 = vsel %vm1639, %v3982, 0
        %3987 = vmatpush.msra.mxu0 0.0
        %3988 = vmatpush.msra.mxu0 0.0
        %3989 = vmatpush.msra.mxu0 0.0
        %3990 = vmatpush.msra.mxu0 0.0
        %3991 = vmatpush.msra.mxu0 0.0
        %3992 = vmatpush.msra.mxu0 0.0
        %3993 = vmatpush.msra.mxu0 0.0
        %3994 = vmatpush.msra.mxu0 0.0
        %3995 = vmatpush.msra.mxu0 0.0
        %3996 = vmatpush.msra.mxu0 0.0
        %3997 = vmatpush.msra.mxu0 0.0
        %3998 = vmatpush.msra.mxu0 0.0
        %3999 = vmatpush.msra.mxu0 %v3975
        %4000 = vmatpush.msra.mxu0 %v3974
        %4001 = vmatpush.msra.mxu0 %v3973
        %4002 = vmatpush.msra.mxu0 %v3972
        %4003 = vmatmul.f32.gmra.mxu0 %v3983
        %v4004 = vpop.f32.mrf.mxu0
        %v4005 = vadd.f32 0.0, %v4004
        %4006 = vmatmul.f32.gmra.mxu0 %v3985
        %v4007 = vpop.f32.mrf.mxu0
        %v4008 = vadd.f32 0.0, %v4007
        %4009 = vdwg.mxu0
        %v4010 = vsel %vm1639, %v3966, 0
        %v4012 = vsel %vm1639, %v3963, 0
        %4014 = vmatpush.msra.mxu0 0.0
        %4015 = vmatpush.msra.mxu0 0.0
        %4016 = vmatpush.msra.mxu0 0.0
        %4017 = vmatpush.msra.mxu0 0.0
        %4018 = vmatpush.msra.mxu0 0.0
        %4019 = vmatpush.msra.mxu0 0.0
        %4020 = vmatpush.msra.mxu0 0.0
        %4021 = vmatpush.msra.mxu0 0.0
        %4022 = vmatpush.msra.mxu0 0.0
        %4023 = vmatpush.msra.mxu0 0.0
        %4024 = vmatpush.msra.mxu0 0.0
        %4025 = vmatpush.msra.mxu0 0.0
        %4026 = vmatpush.msra.mxu0 %v3971
        %4027 = vmatpush.msra.mxu0 %v3970
        %4028 = vmatpush.msra.mxu0 %v3969
        %4029 = vmatpush.msra.mxu0 %v3968
        %4030 = vmatmul.f32.gmra.mxu0 %v4010
        %v4031 = vpop.f32.mrf.mxu0
        %v4032 = vadd.f32 %v4005, %v4031
        %4033 = vmatmul.f32.gmra.mxu0 %v4012
        %v4034 = vpop.f32.mrf.mxu0
        %v4035 = vadd.f32 %v4008, %v4034
        %4036 = vdwg.mxu0
        %v4037 = vld [vmem:[%s3920 + $0x20] sm:$0xff]
        %v4038 = vld [vmem:[%s3920 + $0x28] sm:$0xff]
        %v4039 = vld [vmem:[%s3920 + $0x30] sm:$0xff]
        %v4040 = vld [vmem:[%s3920 + $0x38] sm:$0xff]
        %v4041 = vrot.slane %v3966, 2
        %v4042 = vrot.slane %v3963, 2
        %v4043 = vsel %vm1385, %v4041, %v4042
        %v4044 = vrot.slane %v3967, 2
        %v4045 = vsel %vm1385, %v4042, %v4044
        %v4046 = vsel %vm1639, %v4043, 0
        %v4048 = vsel %vm1639, %v4045, 0
        %4050 = vmatpush.msra.mxu0 0.0
        %4051 = vmatpush.msra.mxu0 0.0
        %4052 = vmatpush.msra.mxu0 0.0
        %4053 = vmatpush.msra.mxu0 0.0
        %4054 = vmatpush.msra.mxu0 0.0
        %4055 = vmatpush.msra.mxu0 0.0
        %4056 = vmatpush.msra.mxu0 0.0
        %4057 = vmatpush.msra.mxu0 0.0
        %4058 = vmatpush.msra.mxu0 0.0
        %4059 = vmatpush.msra.mxu0 0.0
        %4060 = vmatpush.msra.mxu0 0.0
        %4061 = vmatpush.msra.mxu0 0.0
        %4062 = vmatpush.msra.mxu0 %v4040
        %4063 = vmatpush.msra.mxu0 %v4039
        %4064 = vmatpush.msra.mxu0 %v4038
        %4065 = vmatpush.msra.mxu0 %v4037
        %4066 = vmatmul.f32.gmra.mxu0 %v4046
        %v4067 = vpop.f32.mrf.mxu0
        %v4068 = vadd.f32 0.0, %v4067
        %4069 = vmatmul.f32.gmra.mxu0 %v4048
        %v4070 = vpop.f32.mrf.mxu0
        %v4071 = vadd.f32 0.0, %v4070
        %4072 = vdwg.mxu0
        %v4073 = vadd.f32 %v4032, %v4068
        %v4074 = vadd.f32 %v4035, %v4071
        %v4075 = vadd.f32 %v3957, %v4073
        %v4076 = vadd.f32 %v3958, %v4074
        %v4077 = vld [vmem:[%s61] sm:$0x1]
        %v4079 = vperm.slane %v4077, 0
        %v4081 = vadd.f32 %v4075, %v4079
        %v4082 = vadd.f32 %v4076, %v4079
        %v4083 = vmax.f32 %v4081, 0.0
        %v4084 = vmax.f32 %v4082, 0.0
        %v4087 = vrot.slane %v4083, 7
        %v4088 = vrot.slane %v4084, 7
        %v4089 = vsel %vm1274, %v4087, %v4088
        %v4092 = vsel %vm1274, 0.0, %v4087
        %v4093 = vsel %vm1274, %v4088, 0.0
        %v4094 = vld [vmem:[%s63] sm:$0xff]
        %v4095 = vld [vmem:[%s63 + $0x8] sm:$0xff]
        %v4096 = vld [vmem:[%s63 + $0x10] sm:$0xff]
        %v4097 = vld [vmem:[%s63 + $0x18] sm:$0xff]
        %s4098 = scalar_lea.vmem %s63, 32
        %v4099 = vld [vmem:[%s4098] sm:$0xff]
        %v4100 = vld [vmem:[%s4098 + $0x8] sm:$0xff]
        %v4101 = vld [vmem:[%s4098 + $0x10] sm:$0xff]
        %v4102 = vld [vmem:[%s4098 + $0x18] sm:$0xff]
        %v4105 = vrot.slane %v4092, 1
        %v4106 = vrot.slane %v4089, 1
        %v4107 = vsel %vm1291, %v4105, %v4106
        %v4108 = vrot.slane %v4093, 1
        %v4109 = vsel %vm1291, %v4106, %v4108
        %v4110 = vsel %vm1639, %v4107, 0
        %v4112 = vsel %vm1639, %v4109, 0
        %4114 = vmatpush.msra.mxu0 0.0
        %4115 = vmatpush.msra.mxu0 0.0
        %4116 = vmatpush.msra.mxu0 0.0
        %4117 = vmatpush.msra.mxu0 0.0
        %4118 = vmatpush.msra.mxu0 0.0
        %4119 = vmatpush.msra.mxu0 0.0
        %4120 = vmatpush.msra.mxu0 0.0
        %4121 = vmatpush.msra.mxu0 0.0
        %4122 = vmatpush.msra.mxu0 0.0
        %4123 = vmatpush.msra.mxu0 0.0
        %4124 = vmatpush.msra.mxu0 0.0
        %4125 = vmatpush.msra.mxu0 0.0
        %4126 = vmatpush.msra.mxu0 %v4102
        %4127 = vmatpush.msra.mxu0 %v4101
        %4128 = vmatpush.msra.mxu0 %v4100
        %4129 = vmatpush.msra.mxu0 %v4099
        %4130 = vmatmul.f32.gmra.mxu0 %v4110
        %v4131 = vpop.f32.mrf.mxu0
        %v4132 = vadd.f32 0.0, %v4131
        %4133 = vmatmul.f32.gmra.mxu0 %v4112
        %v4134 = vpop.f32.mrf.mxu0
        %v4135 = vadd.f32 0.0, %v4134
        %4136 = vdwg.mxu0
        %v4137 = vsel %vm1639, %v4092, 0
        %v4139 = vsel %vm1639, %v4089, 0
        %4141 = vmatpush.msra.mxu0 0.0
        %4142 = vmatpush.msra.mxu0 0.0
        %4143 = vmatpush.msra.mxu0 0.0
        %4144 = vmatpush.msra.mxu0 0.0
        %4145 = vmatpush.msra.mxu0 0.0
        %4146 = vmatpush.msra.mxu0 0.0
        %4147 = vmatpush.msra.mxu0 0.0
        %4148 = vmatpush.msra.mxu0 0.0
        %4149 = vmatpush.msra.mxu0 0.0
        %4150 = vmatpush.msra.mxu0 0.0
        %4151 = vmatpush.msra.mxu0 0.0
        %4152 = vmatpush.msra.mxu0 0.0
        %4153 = vmatpush.msra.mxu0 %v4097
        %4154 = vmatpush.msra.mxu0 %v4096
        %4155 = vmatpush.msra.mxu0 %v4095
        %4156 = vmatpush.msra.mxu0 %v4094
        %4157 = vmatmul.f32.gmra.mxu0 %v4137
        %v4158 = vpop.f32.mrf.mxu0
        %v4159 = vadd.f32 %v4132, %v4158
        %4160 = vmatmul.f32.gmra.mxu0 %v4139
        %v4161 = vpop.f32.mrf.mxu0
        %v4162 = vadd.f32 %v4135, %v4161
        %4163 = vdwg.mxu0
        %s4164 = scalar_lea.vmem %s63, 64
        %v4165 = vld [vmem:[%s4164] sm:$0xff]
        %v4166 = vld [vmem:[%s4164 + $0x8] sm:$0xff]
        %v4167 = vld [vmem:[%s4164 + $0x10] sm:$0xff]
        %v4168 = vld [vmem:[%s4164 + $0x18] sm:$0xff]
        %v4169 = vrot.slane %v4092, 2
        %v4170 = vrot.slane %v4089, 2
        %v4171 = vsel %vm1385, %v4169, %v4170
        %v4172 = vrot.slane %v4093, 2
        %v4173 = vsel %vm1385, %v4170, %v4172
        %v4174 = vsel %vm1639, %v4171, 0
        %v4176 = vsel %vm1639, %v4173, 0
        %4178 = vmatpush.msra.mxu0 0.0
        %4179 = vmatpush.msra.mxu0 0.0
        %4180 = vmatpush.msra.mxu0 0.0
        %4181 = vmatpush.msra.mxu0 0.0
        %4182 = vmatpush.msra.mxu0 0.0
        %4183 = vmatpush.msra.mxu0 0.0
        %4184 = vmatpush.msra.mxu0 0.0
        %4185 = vmatpush.msra.mxu0 0.0
        %4186 = vmatpush.msra.mxu0 0.0
        %4187 = vmatpush.msra.mxu0 0.0
        %4188 = vmatpush.msra.mxu0 0.0
        %4189 = vmatpush.msra.mxu0 0.0
        %4190 = vmatpush.msra.mxu0 %v4168
        %4191 = vmatpush.msra.mxu0 %v4167
        %4192 = vmatpush.msra.mxu0 %v4166
        %4193 = vmatpush.msra.mxu0 %v4165
        %4194 = vmatmul.f32.gmra.mxu0 %v4174
        %v4195 = vpop.f32.mrf.mxu0
        %v4196 = vadd.f32 0.0, %v4195
        %4197 = vmatmul.f32.gmra.mxu0 %v4176
        %v4198 = vpop.f32.mrf.mxu0
        %v4199 = vadd.f32 0.0, %v4198
        %4200 = vdwg.mxu0
        %v4201 = vadd.f32 %v4159, %v4196
        %v4202 = vadd.f32 %v4162, %v4199
        %v4203 = vld [vmem:[%s65] sm:$0x1]
        %v4205 = vperm.slane %v4203, 0
        %v4207 = vadd.f32 %v4201, %v4205
        %v4208 = vadd.f32 %v4202, %v4205
        %v4209 = vmax.f32 %v4207, 0.0
        %v4210 = vmax.f32 %v4208, 0.0
        %v4211 = vadd.s32 %v1623, 16
        %v4212 = vadd.s32 %v1623, 24
        %v4213 = vcvt.s32.f32 %v4211
        %v4214 = vcvt.s32.f32 %v4212
        %v4215 = vmul.f32 %v4213, 0.5
        %v4216 = vmul.f32 %v4214, 0.5
        %v4217 = vsub.f32 %v4215, 0.25
        %v4218 = vsub.f32 %v4216, 0.25
        %v4219 = vmax.f32 %v4217, 0.0
        %v4220 = vmax.f32 %v4218, 0.0
        %v4221 = vfloor.f32 %v4219
        %v4222 = vfloor.f32 %v4220
        %v4223 = vsub.f32 %v4219, %v4221
        %v4224 = vsub.f32 %v4220, %v4222
        %v4225 = vadd.f32 %v4221, 1.0
        %v4226 = vadd.f32 %v4222, 1.0
        %v4227 = vmin.f32 %v3026, 15.0
        %v4228 = vmin.f32 %v3800, 15.0
        %v4229 = vmin.f32 %v4225, 15.0
        %v4230 = vmin.f32 %v4226, 15.0
        %vm4231 = vcmp.eq.f32.partialorder %v3020, %v4221
        %vm4232 = vcmp.eq.f32.partialorder %v3020, %v4222
        %v4233 = vsub.f32 1.0, %v4223
        %v4234 = vsub.f32 1.0, %v4224
        %v4235 = vsel %vm4231, %v4233, 0.0
        %v4236 = vsel %vm4232, %v4234, 0.0
        %vm4237 = vcmp.eq.f32.partialorder %v3020, %v4227
        %vm4238 = vcmp.eq.f32.partialorder %v3020, %v4228
        %vm4239 = vcmp.eq.f32.partialorder %v3020, %v4229
        %vm4240 = vcmp.eq.f32.partialorder %v3020, %v4230
        %v4241 = vsel %vm4237, %v3025, 0.0
        %v4242 = vsel %vm4238, %v3799, 0.0
        %v4243 = vsel %vm4239, %v4223, 0.0
        %v4244 = vsel %vm4240, %v4224, 0.0
        %v4245 = vadd.f32 %v3030, %v4241
        %v4246 = vadd.f32 %v3805, %v4242
        %v4247 = vadd.f32 %v4235, %v4243
        %v4248 = vadd.f32 %v4236, %v4244
        %v4250 = vsel %vm1482, %v4245, 0
        %v4253 = vsel %vm1482, %v4246, 0
        %v4256 = vsel %vm1482, %v4247, 0
        %v4259 = vsel %vm1482, %v4248, 0
        %4261 = vmatpush.msra.mxu0 0.0
        %4262 = vmatpush.msra.mxu0 0.0
        %4263 = vmatpush.msra.mxu0 0.0
        %4264 = vmatpush.msra.mxu0 0.0
        %4265 = vmatpush.msra.mxu0 0.0
        %4266 = vmatpush.msra.mxu0 0.0
        %4267 = vmatpush.msra.mxu0 0.0
        %4268 = vmatpush.msra.mxu0 0.0
        %4269 = vmatpush.msra.mxu0 0.0
        %4270 = vmatpush.msra.mxu0 0.0
        %4271 = vmatpush.msra.mxu0 0.0
        %4272 = vmatpush.msra.mxu0 0.0
        %4273 = vmatpush.msra.mxu0 0.0
        %4274 = vmatpush.msra.mxu0 0.0
        %4275 = vmatpush.msra.mxu0 %v4210
        %4276 = vmatpush.msra.mxu0 %v4209
        %4277 = vmatmul.f32.gmra.mxu0 %v4250
        %v4278 = vpop.f32.mrf.mxu0
        %v4279 = vadd.f32 0.0, %v4278
        %4280 = vmatmul.f32.gmra.mxu0 %v4253
        %v4281 = vpop.f32.mrf.mxu0
        %v4282 = vadd.f32 0.0, %v4281
        %4283 = vmatmul.f32.gmra.mxu0 %v4256
        %v4284 = vpop.f32.mrf.mxu0
        %v4285 = vadd.f32 0.0, %v4284
        %4286 = vmatmul.f32.gmra.mxu0 %v4259
        %v4287 = vpop.f32.mrf.mxu0
        %v4288 = vadd.f32 0.0, %v4287
        %4289 = vdwg.mxu0
        %v4294 = vrot.slane %v4279, 7
        %v4295 = vrot.slane %v4282, 7
        %v4296 = vsel %vm1274, %v4294, %v4295
        %v4297 = vrot.slane %v4285, 7
        %v4298 = vsel %vm1274, %v4295, %v4297
        %v4299 = vrot.slane %v4288, 7
        %v4300 = vsel %vm1274, %v4297, %v4299
        %v4303 = vsel %vm1274, 0.0, %v4294
        %v4304 = vsel %vm1274, %v4299, 0.0
        %v4305 = vld [vmem:[%s67] sm:$0xff]
        %v4306 = vld [vmem:[%s67 + $0x8] sm:$0xff]
        %s4307 = scalar_lea.vmem %s67, 32
        %v4308 = vld [vmem:[%s4307] sm:$0xff]
        %v4309 = vld [vmem:[%s4307 + $0x8] sm:$0xff]
        %v4312 = vrot.slane %v4303, 1
        %v4313 = vrot.slane %v4296, 1
        %v4314 = vsel %vm1291, %v4312, %v4313
        %v4315 = vrot.slane %v4298, 1
        %v4316 = vsel %vm1291, %v4313, %v4315
        %v4317 = vrot.slane %v4300, 1
        %v4318 = vsel %vm1291, %v4315, %v4317
        %v4319 = vrot.slane %v4304, 1
        %v4320 = vsel %vm1291, %v4317, %v4319
        %v4321 = vsel %vm1482, %v4314, 0
        %v4323 = vsel %vm1482, %v4316, 0
        %v4325 = vsel %vm1482, %v4318, 0
        %v4327 = vsel %vm1482, %v4320, 0
        %4329 = vmatpush.msra.mxu0 0.0
        %4330 = vmatpush.msra.mxu0 0.0
        %4331 = vmatpush.msra.mxu0 0.0
        %4332 = vmatpush.msra.mxu0 0.0
        %4333 = vmatpush.msra.mxu0 0.0
        %4334 = vmatpush.msra.mxu0 0.0
        %4335 = vmatpush.msra.mxu0 0.0
        %4336 = vmatpush.msra.mxu0 0.0
        %4337 = vmatpush.msra.mxu0 0.0
        %4338 = vmatpush.msra.mxu0 0.0
        %4339 = vmatpush.msra.mxu0 0.0
        %4340 = vmatpush.msra.mxu0 0.0
        %4341 = vmatpush.msra.mxu0 0.0
        %4342 = vmatpush.msra.mxu0 0.0
        %4343 = vmatpush.msra.mxu0 %v4309
        %4344 = vmatpush.msra.mxu0 %v4308
        %4345 = vmatmul.f32.gmra.mxu0 %v4321
        %v4346 = vpop.f32.mrf.mxu0
        %v4347 = vadd.f32 0.0, %v4346
        %4348 = vmatmul.f32.gmra.mxu0 %v4323
        %v4349 = vpop.f32.mrf.mxu0
        %v4350 = vadd.f32 0.0, %v4349
        %4351 = vmatmul.f32.gmra.mxu0 %v4325
        %v4352 = vpop.f32.mrf.mxu0
        %v4353 = vadd.f32 0.0, %v4352
        %4354 = vmatmul.f32.gmra.mxu0 %v4327
        %v4355 = vpop.f32.mrf.mxu0
        %v4356 = vadd.f32 0.0, %v4355
        %4357 = vdwg.mxu0
        %v4358 = vsel %vm1482, %v4303, 0
        %v4360 = vsel %vm1482, %v4296, 0
        %v4362 = vsel %vm1482, %v4298, 0
        %v4364 = vsel %vm1482, %v4300, 0
        %4366 = vmatpush.msra.mxu0 0.0
        %4367 = vmatpush.msra.mxu0 0.0
        %4368 = vmatpush.msra.mxu0 0.0
        %4369 = vmatpush.msra.mxu0 0.0
        %4370 = vmatpush.msra.mxu0 0.0
        %4371 = vmatpush.msra.mxu0 0.0
        %4372 = vmatpush.msra.mxu0 0.0
        %4373 = vmatpush.msra.mxu0 0.0
        %4374 = vmatpush.msra.mxu0 0.0
        %4375 = vmatpush.msra.mxu0 0.0
        %4376 = vmatpush.msra.mxu0 0.0
        %4377 = vmatpush.msra.mxu0 0.0
        %4378 = vmatpush.msra.mxu0 0.0
        %4379 = vmatpush.msra.mxu0 0.0
        %4380 = vmatpush.msra.mxu0 %v4306
        %4381 = vmatpush.msra.mxu0 %v4305
        %4382 = vmatmul.f32.gmra.mxu0 %v4358
        %v4383 = vpop.f32.mrf.mxu0
        %v4384 = vadd.f32 %v4347, %v4383
        %4385 = vmatmul.f32.gmra.mxu0 %v4360
        %v4386 = vpop.f32.mrf.mxu0
        %v4387 = vadd.f32 %v4350, %v4386
        %4388 = vmatmul.f32.gmra.mxu0 %v4362
        %v4389 = vpop.f32.mrf.mxu0
        %v4390 = vadd.f32 %v4353, %v4389
        %4391 = vmatmul.f32.gmra.mxu0 %v4364
        %v4392 = vpop.f32.mrf.mxu0
        %v4393 = vadd.f32 %v4356, %v4392
        %4394 = vdwg.mxu0
        %s4395 = scalar_lea.vmem %s67, 64
        %v4396 = vld [vmem:[%s4395] sm:$0xff]
        %v4397 = vld [vmem:[%s4395 + $0x8] sm:$0xff]
        %v4398 = vrot.slane %v4303, 2
        %v4399 = vrot.slane %v4296, 2
        %v4400 = vsel %vm1385, %v4398, %v4399
        %v4401 = vrot.slane %v4298, 2
        %v4402 = vsel %vm1385, %v4399, %v4401
        %v4403 = vrot.slane %v4300, 2
        %v4404 = vsel %vm1385, %v4401, %v4403
        %v4405 = vrot.slane %v4304, 2
        %v4406 = vsel %vm1385, %v4403, %v4405
        %v4407 = vsel %vm1482, %v4400, 0
        %v4409 = vsel %vm1482, %v4402, 0
        %v4411 = vsel %vm1482, %v4404, 0
        %v4413 = vsel %vm1482, %v4406, 0
        %4415 = vmatpush.msra.mxu0 0.0
        %4416 = vmatpush.msra.mxu0 0.0
        %4417 = vmatpush.msra.mxu0 0.0
        %4418 = vmatpush.msra.mxu0 0.0
        %4419 = vmatpush.msra.mxu0 0.0
        %4420 = vmatpush.msra.mxu0 0.0
        %4421 = vmatpush.msra.mxu0 0.0
        %4422 = vmatpush.msra.mxu0 0.0
        %4423 = vmatpush.msra.mxu0 0.0
        %4424 = vmatpush.msra.mxu0 0.0
        %4425 = vmatpush.msra.mxu0 0.0
        %4426 = vmatpush.msra.mxu0 0.0
        %4427 = vmatpush.msra.mxu0 0.0
        %4428 = vmatpush.msra.mxu0 0.0
        %4429 = vmatpush.msra.mxu0 %v4397
        %4430 = vmatpush.msra.mxu0 %v4396
        %4431 = vmatmul.f32.gmra.mxu0 %v4407
        %v4432 = vpop.f32.mrf.mxu0
        %v4433 = vadd.f32 0.0, %v4432
        %4434 = vmatmul.f32.gmra.mxu0 %v4409
        %v4435 = vpop.f32.mrf.mxu0
        %v4436 = vadd.f32 0.0, %v4435
        %4437 = vmatmul.f32.gmra.mxu0 %v4411
        %v4438 = vpop.f32.mrf.mxu0
        %v4439 = vadd.f32 0.0, %v4438
        %4440 = vmatmul.f32.gmra.mxu0 %v4413
        %v4441 = vpop.f32.mrf.mxu0
        %v4442 = vadd.f32 0.0, %v4441
        %4443 = vdwg.mxu0
        %v4444 = vadd.f32 %v4384, %v4433
        %v4445 = vadd.f32 %v4387, %v4436
        %v4446 = vadd.f32 %v4390, %v4439
        %v4447 = vadd.f32 %v4393, %v4442
        %v4452 = vrot.slane %v1618, 7
        %v4453 = vrot.slane %v1619, 7
        %v4454 = vsel %vm1274, %v4452, %v4453
        %v4455 = vrot.slane %v1620, 7
        %v4456 = vsel %vm1274, %v4453, %v4455
        %v4457 = vrot.slane %v1621, 7
        %v4458 = vsel %vm1274, %v4455, %v4457
        %v4461 = vsel %vm1274, 0.0, %v4452
        %v4462 = vsel %vm1274, %v4457, 0.0
        %v4463 = vld [vmem:[%s67 + $0x10] sm:$0xff]
        %v4464 = vld [vmem:[%s67 + $0x18] sm:$0xff]
        %v4465 = vld [vmem:[%s4307 + $0x10] sm:$0xff]
        %v4466 = vld [vmem:[%s4307 + $0x18] sm:$0xff]
        %v4469 = vrot.slane %v4461, 1
        %v4470 = vrot.slane %v4454, 1
        %v4471 = vsel %vm1291, %v4469, %v4470
        %v4472 = vrot.slane %v4456, 1
        %v4473 = vsel %vm1291, %v4470, %v4472
        %v4474 = vrot.slane %v4458, 1
        %v4475 = vsel %vm1291, %v4472, %v4474
        %v4476 = vrot.slane %v4462, 1
        %v4477 = vsel %vm1291, %v4474, %v4476
        %v4478 = vsel %vm1482, %v4471, 0
        %v4480 = vsel %vm1482, %v4473, 0
        %v4482 = vsel %vm1482, %v4475, 0
        %v4484 = vsel %vm1482, %v4477, 0
        %4486 = vmatpush.msra.mxu0 0.0
        %4487 = vmatpush.msra.mxu0 0.0
        %4488 = vmatpush.msra.mxu0 0.0
        %4489 = vmatpush.msra.mxu0 0.0
        %4490 = vmatpush.msra.mxu0 0.0
        %4491 = vmatpush.msra.mxu0 0.0
        %4492 = vmatpush.msra.mxu0 0.0
        %4493 = vmatpush.msra.mxu0 0.0
        %4494 = vmatpush.msra.mxu0 0.0
        %4495 = vmatpush.msra.mxu0 0.0
        %4496 = vmatpush.msra.mxu0 0.0
        %4497 = vmatpush.msra.mxu0 0.0
        %4498 = vmatpush.msra.mxu0 0.0
        %4499 = vmatpush.msra.mxu0 0.0
        %4500 = vmatpush.msra.mxu0 %v4466
        %4501 = vmatpush.msra.mxu0 %v4465
        %4502 = vmatmul.f32.gmra.mxu0 %v4478
        %v4503 = vpop.f32.mrf.mxu0
        %v4504 = vadd.f32 0.0, %v4503
        %4505 = vmatmul.f32.gmra.mxu0 %v4480
        %v4506 = vpop.f32.mrf.mxu0
        %v4507 = vadd.f32 0.0, %v4506
        %4508 = vmatmul.f32.gmra.mxu0 %v4482
        %v4509 = vpop.f32.mrf.mxu0
        %v4510 = vadd.f32 0.0, %v4509
        %4511 = vmatmul.f32.gmra.mxu0 %v4484
        %v4512 = vpop.f32.mrf.mxu0
        %v4513 = vadd.f32 0.0, %v4512
        %4514 = vdwg.mxu0
        %v4515 = vsel %vm1482, %v4461, 0
        %v4517 = vsel %vm1482, %v4454, 0
        %v4519 = vsel %vm1482, %v4456, 0
        %v4521 = vsel %vm1482, %v4458, 0
        %4523 = vmatpush.msra.mxu0 0.0
        %4524 = vmatpush.msra.mxu0 0.0
        %4525 = vmatpush.msra.mxu0 0.0
        %4526 = vmatpush.msra.mxu0 0.0
        %4527 = vmatpush.msra.mxu0 0.0
        %4528 = vmatpush.msra.mxu0 0.0
        %4529 = vmatpush.msra.mxu0 0.0
        %4530 = vmatpush.msra.mxu0 0.0
        %4531 = vmatpush.msra.mxu0 0.0
        %4532 = vmatpush.msra.mxu0 0.0
        %4533 = vmatpush.msra.mxu0 0.0
        %4534 = vmatpush.msra.mxu0 0.0
        %4535 = vmatpush.msra.mxu0 0.0
        %4536 = vmatpush.msra.mxu0 0.0
        %4537 = vmatpush.msra.mxu0 %v4464
        %4538 = vmatpush.msra.mxu0 %v4463
        %4539 = vmatmul.f32.gmra.mxu0 %v4515
        %v4540 = vpop.f32.mrf.mxu0
        %v4541 = vadd.f32 %v4504, %v4540
        %4542 = vmatmul.f32.gmra.mxu0 %v4517
        %v4543 = vpop.f32.mrf.mxu0
        %v4544 = vadd.f32 %v4507, %v4543
        %4545 = vmatmul.f32.gmra.mxu0 %v4519
        %v4546 = vpop.f32.mrf.mxu0
        %v4547 = vadd.f32 %v4510, %v4546
        %4548 = vmatmul.f32.gmra.mxu0 %v4521
        %v4549 = vpop.f32.mrf.mxu0
        %v4550 = vadd.f32 %v4513, %v4549
        %4551 = vdwg.mxu0
        %v4552 = vld [vmem:[%s4395 + $0x10] sm:$0xff]
        %v4553 = vld [vmem:[%s4395 + $0x18] sm:$0xff]
        %v4554 = vrot.slane %v4461, 2
        %v4555 = vrot.slane %v4454, 2
        %v4556 = vsel %vm1385, %v4554, %v4555
        %v4557 = vrot.slane %v4456, 2
        %v4558 = vsel %vm1385, %v4555, %v4557
        %v4559 = vrot.slane %v4458, 2
        %v4560 = vsel %vm1385, %v4557, %v4559
        %v4561 = vrot.slane %v4462, 2
        %v4562 = vsel %vm1385, %v4559, %v4561
        %v4563 = vsel %vm1482, %v4556, 0
        %v4565 = vsel %vm1482, %v4558, 0
        %v4567 = vsel %vm1482, %v4560, 0
        %v4569 = vsel %vm1482, %v4562, 0
        %4571 = vmatpush.msra.mxu0 0.0
        %4572 = vmatpush.msra.mxu0 0.0
        %4573 = vmatpush.msra.mxu0 0.0
        %4574 = vmatpush.msra.mxu0 0.0
        %4575 = vmatpush.msra.mxu0 0.0
        %4576 = vmatpush.msra.mxu0 0.0
        %4577 = vmatpush.msra.mxu0 0.0
        %4578 = vmatpush.msra.mxu0 0.0
        %4579 = vmatpush.msra.mxu0 0.0
        %4580 = vmatpush.msra.mxu0 0.0
        %4581 = vmatpush.msra.mxu0 0.0
        %4582 = vmatpush.msra.mxu0 0.0
        %4583 = vmatpush.msra.mxu0 0.0
        %4584 = vmatpush.msra.mxu0 0.0
        %4585 = vmatpush.msra.mxu0 %v4553
        %4586 = vmatpush.msra.mxu0 %v4552
        %4587 = vmatmul.f32.gmra.mxu0 %v4563
        %v4588 = vpop.f32.mrf.mxu0
        %v4589 = vadd.f32 0.0, %v4588
        %4590 = vmatmul.f32.gmra.mxu0 %v4565
        %v4591 = vpop.f32.mrf.mxu0
        %v4592 = vadd.f32 0.0, %v4591
        %4593 = vmatmul.f32.gmra.mxu0 %v4567
        %v4594 = vpop.f32.mrf.mxu0
        %v4595 = vadd.f32 0.0, %v4594
        %4596 = vmatmul.f32.gmra.mxu0 %v4569
        %v4597 = vpop.f32.mrf.mxu0
        %v4598 = vadd.f32 0.0, %v4597
        %4599 = vdwg.mxu0
        %v4600 = vadd.f32 %v4541, %v4589
        %v4601 = vadd.f32 %v4544, %v4592
        %v4602 = vadd.f32 %v4547, %v4595
        %v4603 = vadd.f32 %v4550, %v4598
        %v4604 = vadd.f32 %v4444, %v4600
        %v4605 = vadd.f32 %v4445, %v4601
        %v4606 = vadd.f32 %v4446, %v4602
        %v4607 = vadd.f32 %v4447, %v4603
        %v4608 = vld [vmem:[%s69] sm:$0x1]
        %v4610 = vperm.slane %v4608, 0
        %v4612 = vadd.f32 %v4604, %v4610
        %v4613 = vadd.f32 %v4605, %v4610
        %v4614 = vadd.f32 %v4606, %v4610
        %v4615 = vadd.f32 %v4607, %v4610
        %v4616 = vmax.f32 %v4612, 0.0
        %v4617 = vmax.f32 %v4613, 0.0
        %v4618 = vmax.f32 %v4614, 0.0
        %v4619 = vmax.f32 %v4615, 0.0
        %v4624 = vrot.slane %v4616, 7
        %v4625 = vrot.slane %v4617, 7
        %v4626 = vsel %vm1274, %v4624, %v4625
        %v4627 = vrot.slane %v4618, 7
        %v4628 = vsel %vm1274, %v4625, %v4627
        %v4629 = vrot.slane %v4619, 7
        %v4630 = vsel %vm1274, %v4627, %v4629
        %v4633 = vsel %vm1274, 0.0, %v4624
        %v4634 = vsel %vm1274, %v4629, 0.0
        %v4635 = vld [vmem:[#allocation9] sm:$0xff]
        %v4636 = vld [vmem:[#allocation9 + $0x8] sm:$0xff]
        %s4637 = scalar_lea.vmem [#allocation9], 16
        %v4638 = vld [vmem:[%s4637] sm:$0xff]
        %v4639 = vld [vmem:[%s4637 + $0x8] sm:$0xff]
        %v4642 = vrot.slane %v4633, 1
        %v4643 = vrot.slane %v4626, 1
        %v4644 = vsel %vm1291, %v4642, %v4643
        %v4645 = vrot.slane %v4628, 1
        %v4646 = vsel %vm1291, %v4643, %v4645
        %v4647 = vrot.slane %v4630, 1
        %v4648 = vsel %vm1291, %v4645, %v4647
        %v4649 = vrot.slane %v4634, 1
        %v4650 = vsel %vm1291, %v4647, %v4649
        %v4651 = vsel %vm1482, %v4644, 0
        %v4653 = vsel %vm1482, %v4646, 0
        %v4655 = vsel %vm1482, %v4648, 0
        %v4657 = vsel %vm1482, %v4650, 0
        %4659 = vmatpush.msra.mxu0 0.0
        %4660 = vmatpush.msra.mxu0 0.0
        %4661 = vmatpush.msra.mxu0 0.0
        %4662 = vmatpush.msra.mxu0 0.0
        %4663 = vmatpush.msra.mxu0 0.0
        %4664 = vmatpush.msra.mxu0 0.0
        %4665 = vmatpush.msra.mxu0 0.0
        %4666 = vmatpush.msra.mxu0 0.0
        %4667 = vmatpush.msra.mxu0 0.0
        %4668 = vmatpush.msra.mxu0 0.0
        %4669 = vmatpush.msra.mxu0 0.0
        %4670 = vmatpush.msra.mxu0 0.0
        %4671 = vmatpush.msra.mxu0 0.0
        %4672 = vmatpush.msra.mxu0 0.0
        %4673 = vmatpush.msra.mxu0 %v4639
        %4674 = vmatpush.msra.mxu0 %v4638
        %4675 = vmatmul.f32.gmra.mxu0 %v4651
        %v4676 = vpop.f32.mrf.mxu0
        %v4677 = vadd.f32 0.0, %v4676
        %4678 = vmatmul.f32.gmra.mxu0 %v4653
        %v4679 = vpop.f32.mrf.mxu0
        %v4680 = vadd.f32 0.0, %v4679
        %4681 = vmatmul.f32.gmra.mxu0 %v4655
        %v4682 = vpop.f32.mrf.mxu0
        %v4683 = vadd.f32 0.0, %v4682
        %4684 = vmatmul.f32.gmra.mxu0 %v4657
        %v4685 = vpop.f32.mrf.mxu0
        %v4686 = vadd.f32 0.0, %v4685
        %4687 = vdwg.mxu0
        %v4688 = vsel %vm1482, %v4633, 0
        %v4690 = vsel %vm1482, %v4626, 0
        %v4692 = vsel %vm1482, %v4628, 0
        %v4694 = vsel %vm1482, %v4630, 0
        %4696 = vmatpush.msra.mxu0 0.0
        %4697 = vmatpush.msra.mxu0 0.0
        %4698 = vmatpush.msra.mxu0 0.0
        %4699 = vmatpush.msra.mxu0 0.0
        %4700 = vmatpush.msra.mxu0 0.0
        %4701 = vmatpush.msra.mxu0 0.0
        %4702 = vmatpush.msra.mxu0 0.0
        %4703 = vmatpush.msra.mxu0 0.0
        %4704 = vmatpush.msra.mxu0 0.0
        %4705 = vmatpush.msra.mxu0 0.0
        %4706 = vmatpush.msra.mxu0 0.0
        %4707 = vmatpush.msra.mxu0 0.0
        %4708 = vmatpush.msra.mxu0 0.0
        %4709 = vmatpush.msra.mxu0 0.0
        %4710 = vmatpush.msra.mxu0 %v4636
        %4711 = vmatpush.msra.mxu0 %v4635
        %4712 = vmatmul.f32.gmra.mxu0 %v4688
        %v4713 = vpop.f32.mrf.mxu0
        %v4714 = vadd.f32 %v4677, %v4713
        %4715 = vmatmul.f32.gmra.mxu0 %v4690
        %v4716 = vpop.f32.mrf.mxu0
        %v4717 = vadd.f32 %v4680, %v4716
        %4718 = vmatmul.f32.gmra.mxu0 %v4692
        %v4719 = vpop.f32.mrf.mxu0
        %v4720 = vadd.f32 %v4683, %v4719
        %4721 = vmatmul.f32.gmra.mxu0 %v4694
        %v4722 = vpop.f32.mrf.mxu0
        %v4723 = vadd.f32 %v4686, %v4722
        %4724 = vdwg.mxu0
        %s4725 = scalar_lea.vmem [#allocation9], 32
        %v4726 = vld [vmem:[%s4725] sm:$0xff]
        %v4727 = vld [vmem:[%s4725 + $0x8] sm:$0xff]
        %v4728 = vrot.slane %v4633, 2
        %v4729 = vrot.slane %v4626, 2
        %v4730 = vsel %vm1385, %v4728, %v4729
        %v4731 = vrot.slane %v4628, 2
        %v4732 = vsel %vm1385, %v4729, %v4731
        %v4733 = vrot.slane %v4630, 2
        %v4734 = vsel %vm1385, %v4731, %v4733
        %v4735 = vrot.slane %v4634, 2
        %v4736 = vsel %vm1385, %v4733, %v4735
        %v4737 = vsel %vm1482, %v4730, 0
        %v4739 = vsel %vm1482, %v4732, 0
        %v4741 = vsel %vm1482, %v4734, 0
        %v4743 = vsel %vm1482, %v4736, 0
        %4745 = vmatpush.msra.mxu0 0.0
        %4746 = vmatpush.msra.mxu0 0.0
        %4747 = vmatpush.msra.mxu0 0.0
        %4748 = vmatpush.msra.mxu0 0.0
        %4749 = vmatpush.msra.mxu0 0.0
        %4750 = vmatpush.msra.mxu0 0.0
        %4751 = vmatpush.msra.mxu0 0.0
        %4752 = vmatpush.msra.mxu0 0.0
        %4753 = vmatpush.msra.mxu0 0.0
        %4754 = vmatpush.msra.mxu0 0.0
        %4755 = vmatpush.msra.mxu0 0.0
        %4756 = vmatpush.msra.mxu0 0.0
        %4757 = vmatpush.msra.mxu0 0.0
        %4758 = vmatpush.msra.mxu0 0.0
        %4759 = vmatpush.msra.mxu0 %v4727
        %4760 = vmatpush.msra.mxu0 %v4726
        %4761 = vmatmul.f32.gmra.mxu0 %v4737
        %v4762 = vpop.f32.mrf.mxu0
        %v4763 = vadd.f32 0.0, %v4762
        %4764 = vmatmul.f32.gmra.mxu0 %v4739
        %v4765 = vpop.f32.mrf.mxu0
        %v4766 = vadd.f32 0.0, %v4765
        %4767 = vmatmul.f32.gmra.mxu0 %v4741
        %v4768 = vpop.f32.mrf.mxu0
        %v4769 = vadd.f32 0.0, %v4768
        %4770 = vmatmul.f32.gmra.mxu0 %v4743
        %v4771 = vpop.f32.mrf.mxu0
        %v4772 = vadd.f32 0.0, %v4771
        %4773 = vdwg.mxu0
        %v4774 = vadd.f32 %v4714, %v4763
        %v4775 = vadd.f32 %v4717, %v4766
        %v4776 = vadd.f32 %v4720, %v4769
        %v4777 = vadd.f32 %v4723, %v4772
        %v4778 = vld [vmem:[%s73] sm:$0x1]
        %v4780 = vperm.slane %v4778, 0
        %v4782 = vadd.f32 %v4774, %v4780
        %v4783 = vadd.f32 %v4775, %v4780
        %v4784 = vadd.f32 %v4776, %v4780
        %v4785 = vadd.f32 %v4777, %v4780
        %v4786 = vmax.f32 %v4782, 0.0
        %v4787 = vmax.f32 %v4783, 0.0
        %v4788 = vmax.f32 %v4784, 0.0
        %v4789 = vmax.f32 %v4785, 0.0
        %v4790 = vld [vmem:[%s75] sm:$0xff]
        %v4791 = vld [vmem:[%s75 + $0x8] sm:$0xff]
        %v4792 = vld [vmem:[%s77] sm:$0x1]
        %v4794 = vperm.slane %v4792, 0
        %v4797 = vsel %vm1482, %v4786, 0
        %v4800 = vsel %vm1482, %v4787, 0
        %v4803 = vsel %vm1482, %v4788, 0
        %v4806 = vsel %vm1482, %v4789, 0
        %4808 = vmatpush.msra.mxu0 0.0
        %4809 = vmatpush.msra.mxu0 0.0
        %4810 = vmatpush.msra.mxu0 0.0
        %4811 = vmatpush.msra.mxu0 0.0
        %4812 = vmatpush.msra.mxu0 0.0
        %4813 = vmatpush.msra.mxu0 0.0
        %4814 = vmatpush.msra.mxu0 0.0
        %4815 = vmatpush.msra.mxu0 0.0
        %4816 = vmatpush.msra.mxu0 0.0
        %4817 = vmatpush.msra.mxu0 0.0
        %4818 = vmatpush.msra.mxu0 0.0
        %4819 = vmatpush.msra.mxu0 0.0
        %4820 = vmatpush.msra.mxu0 0.0
        %4821 = vmatpush.msra.mxu0 0.0
        %4822 = vmatpush.msra.mxu0 %v4791
        %4823 = vmatpush.msra.mxu0 %v4790
        %4824 = vmatmul.f32.gmra.mxu0 %v4797
        %v4825 = vpop.f32.mrf.mxu0
        %v4826 = vadd.f32 %v4794, %v4825
        %4827 = vmatmul.f32.gmra.mxu0 %v4800
        %v4828 = vpop.f32.mrf.mxu0
        %v4829 = vadd.f32 %v4794, %v4828
        %4830 = vmatmul.f32.gmra.mxu0 %v4803
        %v4831 = vpop.f32.mrf.mxu0
        %v4832 = vadd.f32 %v4794, %v4831
        %4833 = vmatmul.f32.gmra.mxu0 %v4806
        %v4834 = vpop.f32.mrf.mxu0
        %v4835 = vadd.f32 %v4794, %v4834
        %4836 = vdwg.mxu0
        %vm4837 = vcmask 23552
        %4838 = vst.msk [vmem:[%s1265] sm:$0xff] %vm4837, %v4826
        %4839 = vst.msk [vmem:[%s1265 + $0x8] sm:$0xff] %vm4837, %v4829
        %4840 = vst.msk [vmem:[%s1265 + $0x10] sm:$0xff] %vm4837, %v4832
        %4841 = vst.msk [vmem:[%s1265 + $0x18] sm:$0xff] %vm4837, %v4835
        %p4842 = scmp.lt.s32.totalorder %s93, 1
        %s4843 = scalar_select %p4842, %s93, 1
        %s4844 = smul.addr %s4843, 4
        %s4845 = smul.addr %s4844, 8
        %s4846 = scalar_lea.vmem %s79, %s4845
        // Predicated region
        $region197: #{tpu_custom_call.1} parent=175 // pred_check
          %p4847 = pneg %p935
        $region198: #{tpu_custom_call.1} parent=175 // pred_check_branch
          %4849 = sbr.rel (%p4847) target = $region200
        $region199: #{tpu_custom_call.1} parent=175 // pred_region
          _
        $region200: #{tpu_custom_call.1} parent=175 // pred_fallthru
          _
      $region176: #{tpu_custom_call.1} parent=5 // pred_fallthru
        _
      %p4850 = scmp.le.s32.totalorder 2, %s88
      // Predicated region
      $region201: #{tpu_custom_call.1} parent=5 // pred_check
        %p4851 = pneg %p4850
      $region202: #{tpu_custom_call.1} parent=5 // pred_check_branch
        %4853 = sbr.rel (%p4851) target = $region204
      $region203: #{tpu_custom_call.1} parent=5 // pred_region
        %s4854 = ssub.s32 %s88, 2
        // Predicated region
        $region205: #{tpu_custom_call.1} parent=203 // pred_check
          %p4855 = pneg %p941
        $region206: #{tpu_custom_call.1} parent=203 // pred_check_branch
          %4857 = sbr.rel (%p4855) target = $region208
        $region207: #{tpu_custom_call.1} parent=203 // pred_region
          %p4858 = scmp.lt.s32.totalorder %s94, 1
          %s4859 = scalar_select %p4858, %s94, 1
          %s4860 = smul.addr %s4859, 4
          %s4861 = smul.addr %s4860, 8
          %s4862 = scalar_lea.vmem %s79, %s4861
        $region208: #{tpu_custom_call.1} parent=203 // pred_fallthru
          _
      $region204: #{tpu_custom_call.1} parent=5 // pred_fallthru
        _
    $region6: #{tpu_custom_call.1} parent=1 // loop_footer
      %s92 = sadd.s32 1, %s88
    $region7: #{tpu_custom_call.1} parent=1 // loop_footer_branch
      %87 = sbr.rel target = $region3
    $region8: #{tpu_custom_call.1} parent=1 // loop_exit
      _
    %4863 = vsyncpa [#allocation3], 1
    %s4864 = scalar_lea.sflag [#allocation3], 1
    %4865 = vsyncpa %s4864, 1
    %4866 = vsyncpa [#allocation5], 1
    %4867 = vsyncpa [#allocation8], 1

</llo_original>
